<compile_context>
chip_gen: v5e
topology: v5e:2x2
jax: 0.10.0
libtpu: 0.0.40
codegen_flags: <defaults>
</compile_context>

<pallas_src>
import functools

import jax
import jax.numpy as jnp
from jax.experimental import pallas as pl
from jax.experimental.pallas import tpu as pltpu

_BN_EPS = 1e-5
_LANES = 128


def _round_up(v, m):
    return (v + m - 1) // m * m


# ----------------------------------------------------------------------------
# Fused Pallas kernel: one whole BasicBlock_NonShared per grid step (one image)
# ----------------------------------------------------------------------------
def _block_kernel(xpad_ref, res_ref, wb1_ref, wc1_ref, b1_ref,
                  wb2_ref, wc2_ref, b2_ref, out_ref,
                  acc_ref, upad_ref, *, Ho, Wo, stride):
    M = Ho * Wo
    Pp = out_ref.shape[-1]

    def conv3x3(load_tap, w_ref):
        """3x3 / pad=1 conv as nine shifted bf16 matmuls, f32 accumulation."""
        acc_ref[...] = jnp.zeros_like(acc_ref)
        for kh in range(3):
            for kw in range(3):
                tap = load_tap(kh, kw).astype(jnp.bfloat16)
                acc_ref[...] += jnp.dot(tap.reshape(M, tap.shape[-1]),
                                        w_ref[kh * 3 + kw],
                                        preferred_element_type=jnp.float32)
        return acc_ref[...]

    if stride == 1:
        load_x = lambda kh, kw: xpad_ref[0, pl.ds(kh, Ho), pl.ds(kw, Wo), :]
    else:
        # TODO(synk): stride>1 path uses strided VMEM loads (pl.ds stride);
        #             not exercised by the demo below.
        load_x = lambda kh, kw: xpad_ref[0, pl.ds(kh, Ho, stride),
                                         pl.ds(kw, Wo, stride), :]

    # --- basis_conv1 -> (basis_bn1 + coeff_conv1 + bn1 folded) -> ReLU -------
    t1 = conv3x3(load_x, wb1_ref)                               # [M, Rp] f32
    u = jnp.dot(t1.astype(jnp.bfloat16), wc1_ref[...],
                preferred_element_type=jnp.float32)
    u = jnp.maximum(u + b1_ref[...], 0.0)                       # [M, Pp] f32

    # --- zero-padded intermediate stays entirely in VMEM for the 2nd conv ---
    upad_ref[...] = jnp.zeros_like(upad_ref)
    upad_ref[pl.ds(1, Ho), pl.ds(1, Wo), :] = u.reshape(Ho, Wo, Pp)

    # --- basis_conv2 -> (basis_bn2 + coeff_conv2 + bn2 folded) ---------------
    load_u = lambda kh, kw: upad_ref[pl.ds(kh, Ho), pl.ds(kw, Wo), :]
    t2 = conv3x3(load_u, wb2_ref)                               # [M, Rp] f32
    v = jnp.dot(t2.astype(jnp.bfloat16), wc2_ref[...],
                preferred_element_type=jnp.float32)

    # --- + shortcut, ReLU (f32 epilogue), lane-dense store -------------------
    v = v + b2_ref[...] + res_ref[0].reshape(M, Pp)
    out_ref[0] = jnp.maximum(v, 0.0).reshape(Ho, Wo, Pp)


# ----------------------------------------------------------------------------
# Parameter prep: fold BN into the 1x1 coeff matmuls, pad channels, cast bf16
# ----------------------------------------------------------------------------
def _fold_and_pad(params, Cin, R, P, Cp, Rp, Pp):
    def bn(name):
        g, b, m, v = params[name]
        s = g * jax.lax.rsqrt(v + _BN_EPS)
        return s, b - m * s

    sb1, bb1 = bn("basis_bn1")
    s1, c1 = bn("bn1")
    sb2, bb2 = bn("basis_bn2")
    s2, c2 = bn("bn2")

    # 3x3 basis convs: [O, I, 3, 3] -> per-tap [I, O] matrices, tap = kh*3+kw
    wb1 = jnp.transpose(params["basis_conv1"], (2, 3, 1, 0)).reshape(9, Cin, R)
    wb2 = jnp.transpose(params["basis_conv2"], (2, 3, 1, 0)).reshape(9, P, R)

    # 1x1 coeff convs: [P, R, 1, 1] -> [R, P], fold basis_bn and bn scale/bias
    wc1 = params["coeff_conv1"].reshape(P, R).T
    wc2 = params["coeff_conv2"].reshape(P, R).T
    wc1_eff = sb1[:, None] * wc1 * s1[None, :]
    b1_eff = (bb1 @ wc1) * s1 + c1
    wc2_eff = sb2[:, None] * wc2 * s2[None, :]
    b2_eff = (bb2 @ wc2) * s2 + c2

    pad2 = lambda a, d0, d1: jnp.pad(a, ((0, d0 - a.shape[0]),
                                         (0, d1 - a.shape[1])))
    pad3 = lambda a, d1, d2: jnp.pad(a, ((0, 0), (0, d1 - a.shape[1]),
                                         (0, d2 - a.shape[2])))
    return (
        pad3(wb1, Cp, Rp).astype(jnp.bfloat16),
        pad2(wc1_eff, Rp, Pp).astype(jnp.bfloat16),
        pad2(b1_eff.reshape(1, P), 1, Pp).astype(jnp.float32),
        pad3(wb2, Pp, Rp).astype(jnp.bfloat16),
        pad2(wc2_eff, Rp, Pp).astype(jnp.bfloat16),
        pad2(b2_eff.reshape(1, P), 1, Pp).astype(jnp.float32),
    )


# ----------------------------------------------------------------------------
# Forward wrapper (NCHW in / NCHW out, mirrors BasicBlock_NonShared.forward)
# ----------------------------------------------------------------------------
@functools.partial(jax.jit, static_argnames=("stride", "option"))
def basic_block_nonshared(x_nchw, params, *, stride=1, option="A"):
    N, Cin, H, W = x_nchw.shape
    R = params["basis_conv1"].shape[0]
    P = params["coeff_conv1"].shape[0]
    Cp, Rp, Pp = (_round_up(c, _LANES) for c in (Cin, R, P))

    Ho = (H + 2 - 3) // stride + 1
    Wo = (W + 2 - 3) // stride + 1

    # NCHW -> NHWC, zero-pad spatially (conv pad=1) and channels (to 128 lanes)
    x = jnp.transpose(x_nchw, (0, 2, 3, 1)).astype(jnp.float32)
    xpad = jnp.pad(x, ((0, 0), (1, 1), (1, 1), (0, Cp - Cin)))

    # Shortcut branch (pure data movement -> plain JAX), padded to Pp channels
    if stride == 1 and Cin == P:
        res = jnp.pad(x, ((0, 0), (0, 0), (0, 0), (0, Pp - Cin)))
    elif option == "A":
        xd = x[:, ::2, ::2, :]                       # F.pad(x[:, :, ::2, ::2])
        res = jnp.pad(xd, ((0, 0), (0, 0), (0, 0), (P // 4, P // 4)))
        res = jnp.pad(res, ((0, 0), (0, 0), (0, 0), (0, Pp - res.shape[-1])))
    else:
        # TODO(synk): option='B' projection shortcut (1x1 conv + BN) not implemented.
        raise NotImplementedError("option='B' shortcut not implemented")

    wb1, wc1, b1, wb2, wc2, b2 = _fold_and_pad(params, Cin, R, P, Cp, Rp, Pp)

    kernel = functools.partial(_block_kernel, Ho=Ho, Wo=Wo, stride=stride)
    grid_spec = pltpu.PrefetchScalarGridSpec(
        num_scalar_prefetch=0,
        grid=(N,),
        in_specs=[
            pl.BlockSpec((1, H + 2, W + 2, Cp), lambda n: (n, 0, 0, 0)),
            pl.BlockSpec((1, Ho, Wo, Pp), lambda n: (n, 0, 0, 0)),
            pl.BlockSpec((9, Cp, Rp), lambda n: (0, 0, 0)),
            pl.BlockSpec((Rp, Pp), lambda n: (0, 0)),
            pl.BlockSpec((1, Pp), lambda n: (0, 0)),
            pl.BlockSpec((9, Pp, Rp), lambda n: (0, 0, 0)),
            pl.BlockSpec((Rp, Pp), lambda n: (0, 0)),
            pl.BlockSpec((1, Pp), lambda n: (0, 0)),
        ],
        out_specs=pl.BlockSpec((1, Ho, Wo, Pp), lambda n: (n, 0, 0, 0)),
        scratch_shapes=[
            pltpu.VMEM((Ho * Wo, Rp), jnp.float32),          # conv accumulator
            pltpu.VMEM((Ho + 2, Wo + 2, Pp), jnp.float32),   # padded intermediate
        ],
    )
    out = pl.pallas_call(
        kernel,
        out_shape=jax.ShapeDtypeStruct((N, Ho, Wo, Pp), jnp.float32),
        grid_spec=grid_spec,
        compiler_params=pltpu.CompilerParams(
            dimension_semantics=("parallel",),
            vmem_limit_bytes=32 * 1024 * 1024,
        ),
    )(xpad, res, wb1, wc1, b1, wb2, wc2, b2)

    # un-pad channels, back to NCHW (PyTorch convention)
    return jnp.transpose(out[..., :P], (0, 3, 1, 2))


# ----------------------------------------------------------------------------
# Parameter init (mirrors the PyTorch module; eval-mode BN with running stats)
# ----------------------------------------------------------------------------
def init_block_params(key, in_planes, planes, unique_rank):
    ks = jax.random.split(key, 8)

    def conv(k, cout, cin, ksz):                     # kaiming-normal, fan_out
        std = (2.0 / (cout * ksz * ksz)) ** 0.5
        return jax.random.normal(k, (cout, cin, ksz, ksz), jnp.float32) * std

    def bn(k, c):                                    # non-trivial eval-mode BN
        k1, k2, k3, k4 = jax.random.split(k, 4)
        gamma = jax.random.uniform(k1, (c,), jnp.float32, 0.5, 1.5)
        beta = 0.5 * jax.random.normal(k2, (c,), jnp.float32)
        mean = 0.5 * jax.random.normal(k3, (c,), jnp.float32)
        var = jax.random.uniform(k4, (c,), jnp.float32, 0.5, 1.5)
        return gamma, beta, mean, var

    return {
        "basis_conv1": conv(ks[0], unique_rank, in_planes, 3),
        "basis_bn1": bn(ks[1], unique_rank),
        "coeff_conv1": conv(ks[2], planes, unique_rank, 1),
        "bn1": bn(ks[3], planes),
        "basis_conv2": conv(ks[4], unique_rank, planes, 3),
        "basis_bn2": bn(ks[5], unique_rank),
        "coeff_conv2": conv(ks[6], planes, unique_rank, 1),
        "bn2": bn(ks[7], planes),
    }


# ----------------------------------------------------------------------------
# Pure-JAX f32 reference (mirrors the PyTorch forward, eval-mode BN)
# ----------------------------------------------------------------------------
def basic_block_nonshared_reference(x_nchw, params, *, stride=1, option="A"):
    def conv(x, w, s):
        pad = [(1, 1), (1, 1)] if w.shape[-1] == 3 else [(0, 0), (0, 0)]
        return jax.lax.conv_general_dilated(
            x, w, (s, s), pad, dimension_numbers=("NCHW", "OIHW", "NCHW"))

    def bn(x, name):
        g, b, m, v = params[name]
        s = g / jnp.sqrt(v + _BN_EPS)
        return x * s[None, :, None, None] + (b - m * s)[None, :, None, None]

    P = params["coeff_conv1"].shape[0]
    Cin = x_nchw.shape[1]
    out = conv(x_nchw, params["basis_conv1"], stride)
    out = bn(out, "basis_bn1")
    out = conv(out, params["coeff_conv1"], 1)
    out = bn(out, "bn1")
    out = jax.nn.relu(out)
    out = conv(out, params["basis_conv2"], 1)
    out = bn(out, "basis_bn2")
    out = conv(out, params["coeff_conv2"], 1)
    out = bn(out, "bn2")
    if stride != 1 or Cin != P:                      # option 'A' shortcut
        sc = jnp.pad(x_nchw[:, :, ::2, ::2],
                     ((0, 0), (P // 4, P // 4), (0, 0), (0, 0)))
    else:
        sc = x_nchw
    return jax.nn.relu(out + sc)


# ----------------------------------------------------------------------------
if __name__ == "__main__":
    key = jax.random.PRNGKey(0)
    kp, kx = jax.random.split(key)
    in_planes = planes = 16
    unique_rank = 8
    params = init_block_params(kp, in_planes, planes, unique_rank)
    x = jax.random.normal(kx, (2, in_planes, 16, 16), jnp.float32)

    out = basic_block_nonshared(x, params, stride=1, option="A")
    jax.block_until_ready(out)
    assert out.shape == (2, planes, 16, 16)
    assert out.dtype == jnp.float32

    ref = basic_block_nonshared_reference(x, params, stride=1, option="A")
    err = float(jnp.max(jnp.abs(out - ref)))
    tol = 5e-2 * float(jnp.max(jnp.abs(ref))) + 5e-2   # loose: bf16 MXU inputs
    assert err < tol, f"max |pallas - reference| = {err} (tol {tol})"
    print("KERNEL_OK")
</pallas_src>

<mosaic_0001>
module attributes {stable_mosaic.version = 11 : i64} {
  func.func @_block_kernel(%arg0: i32, %arg1: memref<1x18x18x128xf32, #tpu.memory_space<vmem>>, %arg2: memref<1x16x16x128xf32, #tpu.memory_space<vmem>>, %arg3: memref<9x128x128xbf16, #tpu.memory_space<vmem>>, %arg4: memref<128x128xbf16, #tpu.memory_space<vmem>>, %arg5: memref<1x128xf32, #tpu.memory_space<vmem>>, %arg6: memref<9x128x128xbf16, #tpu.memory_space<vmem>>, %arg7: memref<128x128xbf16, #tpu.memory_space<vmem>>, %arg8: memref<1x128xf32, #tpu.memory_space<vmem>>, %arg9: memref<1x16x16x128xf32, #tpu.memory_space<vmem>>, %arg10: memref<256x128xf32, #tpu.memory_space<vmem>>, %arg11: memref<18x18x128xf32, #tpu.memory_space<vmem>>) attributes {dimension_semantics = [#tpu.dimension_semantics<parallel>], iteration_bounds = array<i64: 2>, scalar_prefetch = 0 : i64, scratch_operands = 2 : i64, tpu.core_type = #tpu.core_type<tc>, window_params = [{transform_indices = @transform_0, window_bounds = array<i64: 1, 18, 18, 128>}, {transform_indices = @transform_1, window_bounds = array<i64: 1, 16, 16, 128>}, {pipeline_mode = #tpu.pipeline_mode<synchronous>, transform_indices = @transform_2, window_bounds = array<i64: 9, 128, 128>}, {pipeline_mode = #tpu.pipeline_mode<synchronous>, transform_indices = @transform_3, window_bounds = array<i64: 128, 128>}, {pipeline_mode = #tpu.pipeline_mode<synchronous>, transform_indices = @transform_4, window_bounds = array<i64: 1, 128>}, {pipeline_mode = #tpu.pipeline_mode<synchronous>, transform_indices = @transform_5, window_bounds = array<i64: 9, 128, 128>}, {pipeline_mode = #tpu.pipeline_mode<synchronous>, transform_indices = @transform_6, window_bounds = array<i64: 128, 128>}, {pipeline_mode = #tpu.pipeline_mode<synchronous>, transform_indices = @transform_7, window_bounds = array<i64: 1, 128>}, {transform_indices = @transform_8, window_bounds = array<i64: 1, 16, 16, 128>}]} {
    %cst = arith.constant 0.000000e+00 : f32
    %0 = vector.broadcast %cst : f32 to vector<256x128xf32>
    %c0 = arith.constant 0 : index
    %c0_0 = arith.constant 0 : index
    %1 = vector.load %arg10[%c0, %c0_0] : memref<256x128xf32, #tpu.memory_space<vmem>>, vector<256x128xf32>
    tpu.vector_store %arg10[%c0, %c0_0], %0 {strides = array<i32>} : memref<256x128xf32, #tpu.memory_space<vmem>>, vector<256x128xf32>,
    %c0_1 = arith.constant 0 : index
    %c0_2 = arith.constant 0 : index
    %c0_3 = arith.constant 0 : index
    %c0_4 = arith.constant 0 : index
    %2 = vector.load %arg1[%c0_1, %c0_2, %c0_3, %c0_4] : memref<1x18x18x128xf32, #tpu.memory_space<vmem>>, vector<1x16x16x128xf32>
    %3 = vector.shape_cast %2 : vector<1x16x16x128xf32> to vector<16x16x128xf32>
    %4 = arith.truncf %3 : vector<16x16x128xf32> to vector<16x16x128xbf16>
    %c0_5 = arith.constant 0 : index
    %c0_6 = arith.constant 0 : index
    %5 = vector.load %arg10[%c0_5, %c0_6] : memref<256x128xf32, #tpu.memory_space<vmem>>, vector<256x128xf32>
    %6 = vector.shape_cast %4 : vector<16x16x128xbf16> to vector<256x128xbf16>
    %c0_7 = arith.constant 0 : index
    %c0_8 = arith.constant 0 : index
    %c0_9 = arith.constant 0 : index
    %7 = vector.load %arg3[%c0_7, %c0_8, %c0_9] : memref<9x128x128xbf16, #tpu.memory_space<vmem>>, vector<1x128x128xbf16>
    %8 = vector.shape_cast %7 : vector<1x128x128xbf16> to vector<128x128xbf16>
    %cst_10 = arith.constant dense<0.000000e+00> : vector<256x128xf32>
    %9 = tpu.matmul %6, %8, %cst_10 {dimension_numbers = #tpu.dot_dimension_numbers<[1], [0], [0], [1], [0, 0, 1, 1], [], []>} : vector<256x128xbf16>, vector<128x128xbf16>, vector<256x128xf32> -> vector<256x128xf32>
    %10 = arith.addf %5, %9 : vector<256x128xf32>
    %c0_11 = arith.constant 0 : index
    %c0_12 = arith.constant 0 : index
    %11 = vector.load %arg10[%c0_11, %c0_12] : memref<256x128xf32, #tpu.memory_space<vmem>>, vector<256x128xf32>
    tpu.vector_store %arg10[%c0_11, %c0_12], %10 {strides = array<i32>} : memref<256x128xf32, #tpu.memory_space<vmem>>, vector<256x128xf32>,
    %c0_13 = arith.constant 0 : index
    %c0_14 = arith.constant 0 : index
    %c1 = arith.constant 1 : index
    %c0_15 = arith.constant 0 : index
    %12 = vector.load %arg1[%c0_13, %c0_14, %c1, %c0_15] : memref<1x18x18x128xf32, #tpu.memory_space<vmem>>, vector<1x16x16x128xf32>
    %13 = vector.shape_cast %12 : vector<1x16x16x128xf32> to vector<16x16x128xf32>
    %14 = arith.truncf %13 : vector<16x16x128xf32> to vector<16x16x128xbf16>
    %c0_16 = arith.constant 0 : index
    %c0_17 = arith.constant 0 : index
    %15 = vector.load %arg10[%c0_16, %c0_17] : memref<256x128xf32, #tpu.memory_space<vmem>>, vector<256x128xf32>
    %16 = vector.shape_cast %14 : vector<16x16x128xbf16> to vector<256x128xbf16>
    %c1_18 = arith.constant 1 : index
    %c0_19 = arith.constant 0 : index
    %c0_20 = arith.constant 0 : index
    %17 = vector.load %arg3[%c1_18, %c0_19, %c0_20] : memref<9x128x128xbf16, #tpu.memory_space<vmem>>, vector<1x128x128xbf16>
    %18 = vector.shape_cast %17 : vector<1x128x128xbf16> to vector<128x128xbf16>
    %cst_21 = arith.constant dense<0.000000e+00> : vector<256x128xf32>
    %19 = tpu.matmul %16, %18, %cst_21 {dimension_numbers = #tpu.dot_dimension_numbers<[1], [0], [0], [1], [0, 0, 1, 1], [], []>} : vector<256x128xbf16>, vector<128x128xbf16>, vector<256x128xf32> -> vector<256x128xf32>
    %20 = arith.addf %15, %19 : vector<256x128xf32>
    %c0_22 = arith.constant 0 : index
    %c0_23 = arith.constant 0 : index
    %21 = vector.load %arg10[%c0_22, %c0_23] : memref<256x128xf32, #tpu.memory_space<vmem>>, vector<256x128xf32>
    tpu.vector_store %arg10[%c0_22, %c0_23], %20 {strides = array<i32>} : memref<256x128xf32, #tpu.memory_space<vmem>>, vector<256x128xf32>,
    %c0_24 = arith.constant 0 : index
    %c0_25 = arith.constant 0 : index
    %c2 = arith.constant 2 : index
    %c0_26 = arith.constant 0 : index
    %22 = vector.load %arg1[%c0_24, %c0_25, %c2, %c0_26] : memref<1x18x18x128xf32, #tpu.memory_space<vmem>>, vector<1x16x16x128xf32>
    %23 = vector.shape_cast %22 : vector<1x16x16x128xf32> to vector<16x16x128xf32>
    %24 = arith.truncf %23 : vector<16x16x128xf32> to vector<16x16x128xbf16>
    %c0_27 = arith.constant 0 : index
    %c0_28 = arith.constant 0 : index
    %25 = vector.load %arg10[%c0_27, %c0_28] : memref<256x128xf32, #tpu.memory_space<vmem>>, vector<256x128xf32>
    %26 = vector.shape_cast %24 : vector<16x16x128xbf16> to vector<256x128xbf16>
    %c2_29 = arith.constant 2 : index
    %c0_30 = arith.constant 0 : index
    %c0_31 = arith.constant 0 : index
    %27 = vector.load %arg3[%c2_29, %c0_30, %c0_31] : memref<9x128x128xbf16, #tpu.memory_space<vmem>>, vector<1x128x128xbf16>
    %28 = vector.shape_cast %27 : vector<1x128x128xbf16> to vector<128x128xbf16>
    %cst_32 = arith.constant dense<0.000000e+00> : vector<256x128xf32>
    %29 = tpu.matmul %26, %28, %cst_32 {dimension_numbers = #tpu.dot_dimension_numbers<[1], [0], [0], [1], [0, 0, 1, 1], [], []>} : vector<256x128xbf16>, vector<128x128xbf16>, vector<256x128xf32> -> vector<256x128xf32>
    %30 = arith.addf %25, %29 : vector<256x128xf32>
    %c0_33 = arith.constant 0 : index
    %c0_34 = arith.constant 0 : index
    %31 = vector.load %arg10[%c0_33, %c0_34] : memref<256x128xf32, #tpu.memory_space<vmem>>, vector<256x128xf32>
    tpu.vector_store %arg10[%c0_33, %c0_34], %30 {strides = array<i32>} : memref<256x128xf32, #tpu.memory_space<vmem>>, vector<256x128xf32>,
    %c0_35 = arith.constant 0 : index
    %c1_36 = arith.constant 1 : index
    %c0_37 = arith.constant 0 : index
    %c0_38 = arith.constant 0 : index
    %32 = vector.load %arg1[%c0_35, %c1_36, %c0_37, %c0_38] : memref<1x18x18x128xf32, #tpu.memory_space<vmem>>, vector<1x16x16x128xf32>
    %33 = vector.shape_cast %32 : vector<1x16x16x128xf32> to vector<16x16x128xf32>
    %34 = arith.truncf %33 : vector<16x16x128xf32> to vector<16x16x128xbf16>
    %c0_39 = arith.constant 0 : index
    %c0_40 = arith.constant 0 : index
    %35 = vector.load %arg10[%c0_39, %c0_40] : memref<256x128xf32, #tpu.memory_space<vmem>>, vector<256x128xf32>
    %36 = vector.shape_cast %34 : vector<16x16x128xbf16> to vector<256x128xbf16>
    %c3 = arith.constant 3 : index
    %c0_41 = arith.constant 0 : index
    %c0_42 = arith.constant 0 : index
    %37 = vector.load %arg3[%c3, %c0_41, %c0_42] : memref<9x128x128xbf16, #tpu.memory_space<vmem>>, vector<1x128x128xbf16>
    %38 = vector.shape_cast %37 : vector<1x128x128xbf16> to vector<128x128xbf16>
    %cst_43 = arith.constant dense<0.000000e+00> : vector<256x128xf32>
    %39 = tpu.matmul %36, %38, %cst_43 {dimension_numbers = #tpu.dot_dimension_numbers<[1], [0], [0], [1], [0, 0, 1, 1], [], []>} : vector<256x128xbf16>, vector<128x128xbf16>, vector<256x128xf32> -> vector<256x128xf32>
    %40 = arith.addf %35, %39 : vector<256x128xf32>
    %c0_44 = arith.constant 0 : index
    %c0_45 = arith.constant 0 : index
    %41 = vector.load %arg10[%c0_44, %c0_45] : memref<256x128xf32, #tpu.memory_space<vmem>>, vector<256x128xf32>
    tpu.vector_store %arg10[%c0_44, %c0_45], %40 {strides = array<i32>} : memref<256x128xf32, #tpu.memory_space<vmem>>, vector<256x128xf32>,
    %c0_46 = arith.constant 0 : index
    %c1_47 = arith.constant 1 : index
    %c1_48 = arith.constant 1 : index
    %c0_49 = arith.constant 0 : index
    %42 = vector.load %arg1[%c0_46, %c1_47, %c1_48, %c0_49] : memref<1x18x18x128xf32, #tpu.memory_space<vmem>>, vector<1x16x16x128xf32>
    %43 = vector.shape_cast %42 : vector<1x16x16x128xf32> to vector<16x16x128xf32>
    %44 = arith.truncf %43 : vector<16x16x128xf32> to vector<16x16x128xbf16>
    %c0_50 = arith.constant 0 : index
    %c0_51 = arith.constant 0 : index
    %45 = vector.load %arg10[%c0_50, %c0_51] : memref<256x128xf32, #tpu.memory_space<vmem>>, vector<256x128xf32>
    %46 = vector.shape_cast %44 : vector<16x16x128xbf16> to vector<256x128xbf16>
    %c4 = arith.constant 4 : index
    %c0_52 = arith.constant 0 : index
    %c0_53 = arith.constant 0 : index
    %47 = vector.load %arg3[%c4, %c0_52, %c0_53] : memref<9x128x128xbf16, #tpu.memory_space<vmem>>, vector<1x128x128xbf16>
    %48 = vector.shape_cast %47 : vector<1x128x128xbf16> to vector<128x128xbf16>
    %cst_54 = arith.constant dense<0.000000e+00> : vector<256x128xf32>
    %49 = tpu.matmul %46, %48, %cst_54 {dimension_numbers = #tpu.dot_dimension_numbers<[1], [0], [0], [1], [0, 0, 1, 1], [], []>} : vector<256x128xbf16>, vector<128x128xbf16>, vector<256x128xf32> -> vector<256x128xf32>
    %50 = arith.addf %45, %49 : vector<256x128xf32>
    %c0_55 = arith.constant 0 : index
    %c0_56 = arith.constant 0 : index
    %51 = vector.load %arg10[%c0_55, %c0_56] : memref<256x128xf32, #tpu.memory_space<vmem>>, vector<256x128xf32>
    tpu.vector_store %arg10[%c0_55, %c0_56], %50 {strides = array<i32>} : memref<256x128xf32, #tpu.memory_space<vmem>>, vector<256x128xf32>,
    %c0_57 = arith.constant 0 : index
    %c1_58 = arith.constant 1 : index
    %c2_59 = arith.constant 2 : index
    %c0_60 = arith.constant 0 : index
    %52 = vector.load %arg1[%c0_57, %c1_58, %c2_59, %c0_60] : memref<1x18x18x128xf32, #tpu.memory_space<vmem>>, vector<1x16x16x128xf32>
    %53 = vector.shape_cast %52 : vector<1x16x16x128xf32> to vector<16x16x128xf32>
    %54 = arith.truncf %53 : vector<16x16x128xf32> to vector<16x16x128xbf16>
    %c0_61 = arith.constant 0 : index
    %c0_62 = arith.constant 0 : index
    %55 = vector.load %arg10[%c0_61, %c0_62] : memref<256x128xf32, #tpu.memory_space<vmem>>, vector<256x128xf32>
    %56 = vector.shape_cast %54 : vector<16x16x128xbf16> to vector<256x128xbf16>
    %c5 = arith.constant 5 : index
    %c0_63 = arith.constant 0 : index
    %c0_64 = arith.constant 0 : index
    %57 = vector.load %arg3[%c5, %c0_63, %c0_64] : memref<9x128x128xbf16, #tpu.memory_space<vmem>>, vector<1x128x128xbf16>
    %58 = vector.shape_cast %57 : vector<1x128x128xbf16> to vector<128x128xbf16>
    %cst_65 = arith.constant dense<0.000000e+00> : vector<256x128xf32>
    %59 = tpu.matmul %56, %58, %cst_65 {dimension_numbers = #tpu.dot_dimension_numbers<[1], [0], [0], [1], [0, 0, 1, 1], [], []>} : vector<256x128xbf16>, vector<128x128xbf16>, vector<256x128xf32> -> vector<256x128xf32>
    %60 = arith.addf %55, %59 : vector<256x128xf32>
    %c0_66 = arith.constant 0 : index
    %c0_67 = arith.constant 0 : index
    %61 = vector.load %arg10[%c0_66, %c0_67] : memref<256x128xf32, #tpu.memory_space<vmem>>, vector<256x128xf32>
    tpu.vector_store %arg10[%c0_66, %c0_67], %60 {strides = array<i32>} : memref<256x128xf32, #tpu.memory_space<vmem>>, vector<256x128xf32>,
    %c0_68 = arith.constant 0 : index
    %c2_69 = arith.constant 2 : index
    %c0_70 = arith.constant 0 : index
    %c0_71 = arith.constant 0 : index
    %62 = vector.load %arg1[%c0_68, %c2_69, %c0_70, %c0_71] : memref<1x18x18x128xf32, #tpu.memory_space<vmem>>, vector<1x16x16x128xf32>
    %63 = vector.shape_cast %62 : vector<1x16x16x128xf32> to vector<16x16x128xf32>
    %64 = arith.truncf %63 : vector<16x16x128xf32> to vector<16x16x128xbf16>
    %c0_72 = arith.constant 0 : index
    %c0_73 = arith.constant 0 : index
    %65 = vector.load %arg10[%c0_72, %c0_73] : memref<256x128xf32, #tpu.memory_space<vmem>>, vector<256x128xf32>
    %66 = vector.shape_cast %64 : vector<16x16x128xbf16> to vector<256x128xbf16>
    %c6 = arith.constant 6 : index
    %c0_74 = arith.constant 0 : index
    %c0_75 = arith.constant 0 : index
    %67 = vector.load %arg3[%c6, %c0_74, %c0_75] : memref<9x128x128xbf16, #tpu.memory_space<vmem>>, vector<1x128x128xbf16>
    %68 = vector.shape_cast %67 : vector<1x128x128xbf16> to vector<128x128xbf16>
    %cst_76 = arith.constant dense<0.000000e+00> : vector<256x128xf32>
    %69 = tpu.matmul %66, %68, %cst_76 {dimension_numbers = #tpu.dot_dimension_numbers<[1], [0], [0], [1], [0, 0, 1, 1], [], []>} : vector<256x128xbf16>, vector<128x128xbf16>, vector<256x128xf32> -> vector<256x128xf32>
    %70 = arith.addf %65, %69 : vector<256x128xf32>
    %c0_77 = arith.constant 0 : index
    %c0_78 = arith.constant 0 : index
    %71 = vector.load %arg10[%c0_77, %c0_78] : memref<256x128xf32, #tpu.memory_space<vmem>>, vector<256x128xf32>
    tpu.vector_store %arg10[%c0_77, %c0_78], %70 {strides = array<i32>} : memref<256x128xf32, #tpu.memory_space<vmem>>, vector<256x128xf32>,
    %c0_79 = arith.constant 0 : index
    %c2_80 = arith.constant 2 : index
    %c1_81 = arith.constant 1 : index
    %c0_82 = arith.constant 0 : index
    %72 = vector.load %arg1[%c0_79, %c2_80, %c1_81, %c0_82] : memref<1x18x18x128xf32, #tpu.memory_space<vmem>>, vector<1x16x16x128xf32>
    %73 = vector.shape_cast %72 : vector<1x16x16x128xf32> to vector<16x16x128xf32>
    %74 = arith.truncf %73 : vector<16x16x128xf32> to vector<16x16x128xbf16>
    %c0_83 = arith.constant 0 : index
    %c0_84 = arith.constant 0 : index
    %75 = vector.load %arg10[%c0_83, %c0_84] : memref<256x128xf32, #tpu.memory_space<vmem>>, vector<256x128xf32>
    %76 = vector.shape_cast %74 : vector<16x16x128xbf16> to vector<256x128xbf16>
    %c7 = arith.constant 7 : index
    %c0_85 = arith.constant 0 : index
    %c0_86 = arith.constant 0 : index
    %77 = vector.load %arg3[%c7, %c0_85, %c0_86] : memref<9x128x128xbf16, #tpu.memory_space<vmem>>, vector<1x128x128xbf16>
    %78 = vector.shape_cast %77 : vector<1x128x128xbf16> to vector<128x128xbf16>
    %cst_87 = arith.constant dense<0.000000e+00> : vector<256x128xf32>
    %79 = tpu.matmul %76, %78, %cst_87 {dimension_numbers = #tpu.dot_dimension_numbers<[1], [0], [0], [1], [0, 0, 1, 1], [], []>} : vector<256x128xbf16>, vector<128x128xbf16>, vector<256x128xf32> -> vector<256x128xf32>
    %80 = arith.addf %75, %79 : vector<256x128xf32>
    %c0_88 = arith.constant 0 : index
    %c0_89 = arith.constant 0 : index
    %81 = vector.load %arg10[%c0_88, %c0_89] : memref<256x128xf32, #tpu.memory_space<vmem>>, vector<256x128xf32>
    tpu.vector_store %arg10[%c0_88, %c0_89], %80 {strides = array<i32>} : memref<256x128xf32, #tpu.memory_space<vmem>>, vector<256x128xf32>,
    %c0_90 = arith.constant 0 : index
    %c2_91 = arith.constant 2 : index
    %c2_92 = arith.constant 2 : index
    %c0_93 = arith.constant 0 : index
    %82 = vector.load %arg1[%c0_90, %c2_91, %c2_92, %c0_93] : memref<1x18x18x128xf32, #tpu.memory_space<vmem>>, vector<1x16x16x128xf32>
    %83 = vector.shape_cast %82 : vector<1x16x16x128xf32> to vector<16x16x128xf32>
    %84 = arith.truncf %83 : vector<16x16x128xf32> to vector<16x16x128xbf16>
    %c0_94 = arith.constant 0 : index
    %c0_95 = arith.constant 0 : index
    %85 = vector.load %arg10[%c0_94, %c0_95] : memref<256x128xf32, #tpu.memory_space<vmem>>, vector<256x128xf32>
    %86 = vector.shape_cast %84 : vector<16x16x128xbf16> to vector<256x128xbf16>
    %c8 = arith.constant 8 : index
    %c0_96 = arith.constant 0 : index
    %c0_97 = arith.constant 0 : index
    %87 = vector.load %arg3[%c8, %c0_96, %c0_97] : memref<9x128x128xbf16, #tpu.memory_space<vmem>>, vector<1x128x128xbf16>
    %88 = vector.shape_cast %87 : vector<1x128x128xbf16> to vector<128x128xbf16>
    %cst_98 = arith.constant dense<0.000000e+00> : vector<256x128xf32>
    %89 = tpu.matmul %86, %88, %cst_98 {dimension_numbers = #tpu.dot_dimension_numbers<[1], [0], [0], [1], [0, 0, 1, 1], [], []>} : vector<256x128xbf16>, vector<128x128xbf16>, vector<256x128xf32> -> vector<256x128xf32>
    %90 = arith.addf %85, %89 : vector<256x128xf32>
    %c0_99 = arith.constant 0 : index
    %c0_100 = arith.constant 0 : index
    %91 = vector.load %arg10[%c0_99, %c0_100] : memref<256x128xf32, #tpu.memory_space<vmem>>, vector<256x128xf32>
    tpu.vector_store %arg10[%c0_99, %c0_100], %90 {strides = array<i32>} : memref<256x128xf32, #tpu.memory_space<vmem>>, vector<256x128xf32>,
    %c0_101 = arith.constant 0 : index
    %c0_102 = arith.constant 0 : index
    %92 = vector.load %arg10[%c0_101, %c0_102] : memref<256x128xf32, #tpu.memory_space<vmem>>, vector<256x128xf32>
    %93 = arith.truncf %92 : vector<256x128xf32> to vector<256x128xbf16>
    %c0_103 = arith.constant 0 : index
    %c0_104 = arith.constant 0 : index
    %94 = vector.load %arg4[%c0_103, %c0_104] : memref<128x128xbf16, #tpu.memory_space<vmem>>, vector<128x128xbf16>
    %cst_105 = arith.constant dense<0.000000e+00> : vector<256x128xf32>
    %95 = tpu.matmul %93, %94, %cst_105 {dimension_numbers = #tpu.dot_dimension_numbers<[1], [0], [0], [1], [0, 0, 1, 1], [], []>} : vector<256x128xbf16>, vector<128x128xbf16>, vector<256x128xf32> -> vector<256x128xf32>
    %c0_106 = arith.constant 0 : index
    %c0_107 = arith.constant 0 : index
    %96 = vector.load %arg5[%c0_106, %c0_107] : memref<1x128xf32, #tpu.memory_space<vmem>>, vector<1x128xf32>
    %97 = vector.broadcast %96 : vector<1x128xf32> to vector<256x128xf32>
    %98 = arith.addf %95, %97 : vector<256x128xf32>
    %cst_108 = arith.constant 0.000000e+00 : f32
    %99 = vector.broadcast %cst_108 : f32 to vector<256x128xf32>
    %100 = arith.maximumf %98, %99 : vector<256x128xf32>
    %cst_109 = arith.constant 0.000000e+00 : f32
    %101 = vector.broadcast %cst_109 : f32 to vector<18x18x128xf32>
    %c0_110 = arith.constant 0 : index
    %c0_111 = arith.constant 0 : index
    %c0_112 = arith.constant 0 : index
    %102 = vector.load %arg11[%c0_110, %c0_111, %c0_112] : memref<18x18x128xf32, #tpu.memory_space<vmem>>, vector<18x18x128xf32>
    tpu.vector_store %arg11[%c0_110, %c0_111, %c0_112], %101 {strides = array<i32>} : memref<18x18x128xf32, #tpu.memory_space<vmem>>, vector<18x18x128xf32>,
    %103 = vector.shape_cast %100 : vector<256x128xf32> to vector<16x16x128xf32>
    %c1_113 = arith.constant 1 : index
    %c1_114 = arith.constant 1 : index
    %c0_115 = arith.constant 0 : index
    %104 = vector.load %arg11[%c1_113, %c1_114, %c0_115] : memref<18x18x128xf32, #tpu.memory_space<vmem>>, vector<16x16x128xf32>
    tpu.vector_store %arg11[%c1_113, %c1_114, %c0_115], %103 {strides = array<i32>} : memref<18x18x128xf32, #tpu.memory_space<vmem>>, vector<16x16x128xf32>,
    %cst_116 = arith.constant 0.000000e+00 : f32
    %105 = vector.broadcast %cst_116 : f32 to vector<256x128xf32>
    %c0_117 = arith.constant 0 : index
    %c0_118 = arith.constant 0 : index
    %106 = vector.load %arg10[%c0_117, %c0_118] : memref<256x128xf32, #tpu.memory_space<vmem>>, vector<256x128xf32>
    tpu.vector_store %arg10[%c0_117, %c0_118], %105 {strides = array<i32>} : memref<256x128xf32, #tpu.memory_space<vmem>>, vector<256x128xf32>,
    %c0_119 = arith.constant 0 : index
    %c0_120 = arith.constant 0 : index
    %c0_121 = arith.constant 0 : index
    %107 = vector.load %arg11[%c0_119, %c0_120, %c0_121] : memref<18x18x128xf32, #tpu.memory_space<vmem>>, vector<16x16x128xf32>
    %108 = arith.truncf %107 : vector<16x16x128xf32> to vector<16x16x128xbf16>
    %c0_122 = arith.constant 0 : index
    %c0_123 = arith.constant 0 : index
    %109 = vector.load %arg10[%c0_122, %c0_123] : memref<256x128xf32, #tpu.memory_space<vmem>>, vector<256x128xf32>
    %110 = vector.shape_cast %108 : vector<16x16x128xbf16> to vector<256x128xbf16>
    %c0_124 = arith.constant 0 : index
    %c0_125 = arith.constant 0 : index
    %c0_126 = arith.constant 0 : index
    %111 = vector.load %arg6[%c0_124, %c0_125, %c0_126] : memref<9x128x128xbf16, #tpu.memory_space<vmem>>, vector<1x128x128xbf16>
    %112 = vector.shape_cast %111 : vector<1x128x128xbf16> to vector<128x128xbf16>
    %cst_127 = arith.constant dense<0.000000e+00> : vector<256x128xf32>
    %113 = tpu.matmul %110, %112, %cst_127 {dimension_numbers = #tpu.dot_dimension_numbers<[1], [0], [0], [1], [0, 0, 1, 1], [], []>} : vector<256x128xbf16>, vector<128x128xbf16>, vector<256x128xf32> -> vector<256x128xf32>
    %114 = arith.addf %109, %113 : vector<256x128xf32>
    %c0_128 = arith.constant 0 : index
    %c0_129 = arith.constant 0 : index
    %115 = vector.load %arg10[%c0_128, %c0_129] : memref<256x128xf32, #tpu.memory_space<vmem>>, vector<256x128xf32>
    tpu.vector_store %arg10[%c0_128, %c0_129], %114 {strides = array<i32>} : memref<256x128xf32, #tpu.memory_space<vmem>>, vector<256x128xf32>,
    %c0_130 = arith.constant 0 : index
    %c1_131 = arith.constant 1 : index
    %c0_132 = arith.constant 0 : index
    %116 = vector.load %arg11[%c0_130, %c1_131, %c0_132] : memref<18x18x128xf32, #tpu.memory_space<vmem>>, vector<16x16x128xf32>
    %117 = arith.truncf %116 : vector<16x16x128xf32> to vector<16x16x128xbf16>
    %c0_133 = arith.constant 0 : index
    %c0_134 = arith.constant 0 : index
    %118 = vector.load %arg10[%c0_133, %c0_134] : memref<256x128xf32, #tpu.memory_space<vmem>>, vector<256x128xf32>
    %119 = vector.shape_cast %117 : vector<16x16x128xbf16> to vector<256x128xbf16>
    %c1_135 = arith.constant 1 : index
    %c0_136 = arith.constant 0 : index
    %c0_137 = arith.constant 0 : index
    %120 = vector.load %arg6[%c1_135, %c0_136, %c0_137] : memref<9x128x128xbf16, #tpu.memory_space<vmem>>, vector<1x128x128xbf16>
    %121 = vector.shape_cast %120 : vector<1x128x128xbf16> to vector<128x128xbf16>
    %cst_138 = arith.constant dense<0.000000e+00> : vector<256x128xf32>
    %122 = tpu.matmul %119, %121, %cst_138 {dimension_numbers = #tpu.dot_dimension_numbers<[1], [0], [0], [1], [0, 0, 1, 1], [], []>} : vector<256x128xbf16>, vector<128x128xbf16>, vector<256x128xf32> -> vector<256x128xf32>
    %123 = arith.addf %118, %122 : vector<256x128xf32>
    %c0_139 = arith.constant 0 : index
    %c0_140 = arith.constant 0 : index
    %124 = vector.load %arg10[%c0_139, %c0_140] : memref<256x128xf32, #tpu.memory_space<vmem>>, vector<256x128xf32>
    tpu.vector_store %arg10[%c0_139, %c0_140], %123 {strides = array<i32>} : memref<256x128xf32, #tpu.memory_space<vmem>>, vector<256x128xf32>,
    %c0_141 = arith.constant 0 : index
    %c2_142 = arith.constant 2 : index
    %c0_143 = arith.constant 0 : index
    %125 = vector.load %arg11[%c0_141, %c2_142, %c0_143] : memref<18x18x128xf32, #tpu.memory_space<vmem>>, vector<16x16x128xf32>
    %126 = arith.truncf %125 : vector<16x16x128xf32> to vector<16x16x128xbf16>
    %c0_144 = arith.constant 0 : index
    %c0_145 = arith.constant 0 : index
    %127 = vector.load %arg10[%c0_144, %c0_145] : memref<256x128xf32, #tpu.memory_space<vmem>>, vector<256x128xf32>
    %128 = vector.shape_cast %126 : vector<16x16x128xbf16> to vector<256x128xbf16>
    %c2_146 = arith.constant 2 : index
    %c0_147 = arith.constant 0 : index
    %c0_148 = arith.constant 0 : index
    %129 = vector.load %arg6[%c2_146, %c0_147, %c0_148] : memref<9x128x128xbf16, #tpu.memory_space<vmem>>, vector<1x128x128xbf16>
    %130 = vector.shape_cast %129 : vector<1x128x128xbf16> to vector<128x128xbf16>
    %cst_149 = arith.constant dense<0.000000e+00> : vector<256x128xf32>
    %131 = tpu.matmul %128, %130, %cst_149 {dimension_numbers = #tpu.dot_dimension_numbers<[1], [0], [0], [1], [0, 0, 1, 1], [], []>} : vector<256x128xbf16>, vector<128x128xbf16>, vector<256x128xf32> -> vector<256x128xf32>
    %132 = arith.addf %127, %131 : vector<256x128xf32>
    %c0_150 = arith.constant 0 : index
    %c0_151 = arith.constant 0 : index
    %133 = vector.load %arg10[%c0_150, %c0_151] : memref<256x128xf32, #tpu.memory_space<vmem>>, vector<256x128xf32>
    tpu.vector_store %arg10[%c0_150, %c0_151], %132 {strides = array<i32>} : memref<256x128xf32, #tpu.memory_space<vmem>>, vector<256x128xf32>,
    %c1_152 = arith.constant 1 : index
    %c0_153 = arith.constant 0 : index
    %c0_154 = arith.constant 0 : index
    %134 = vector.load %arg11[%c1_152, %c0_153, %c0_154] : memref<18x18x128xf32, #tpu.memory_space<vmem>>, vector<16x16x128xf32>
    %135 = arith.truncf %134 : vector<16x16x128xf32> to vector<16x16x128xbf16>
    %c0_155 = arith.constant 0 : index
    %c0_156 = arith.constant 0 : index
    %136 = vector.load %arg10[%c0_155, %c0_156] : memref<256x128xf32, #tpu.memory_space<vmem>>, vector<256x128xf32>
    %137 = vector.shape_cast %135 : vector<16x16x128xbf16> to vector<256x128xbf16>
    %c3_157 = arith.constant 3 : index
    %c0_158 = arith.constant 0 : index
    %c0_159 = arith.constant 0 : index
    %138 = vector.load %arg6[%c3_157, %c0_158, %c0_159] : memref<9x128x128xbf16, #tpu.memory_space<vmem>>, vector<1x128x128xbf16>
    %139 = vector.shape_cast %138 : vector<1x128x128xbf16> to vector<128x128xbf16>
    %cst_160 = arith.constant dense<0.000000e+00> : vector<256x128xf32>
    %140 = tpu.matmul %137, %139, %cst_160 {dimension_numbers = #tpu.dot_dimension_numbers<[1], [0], [0], [1], [0, 0, 1, 1], [], []>} : vector<256x128xbf16>, vector<128x128xbf16>, vector<256x128xf32> -> vector<256x128xf32>
    %141 = arith.addf %136, %140 : vector<256x128xf32>
    %c0_161 = arith.constant 0 : index
    %c0_162 = arith.constant 0 : index
    %142 = vector.load %arg10[%c0_161, %c0_162] : memref<256x128xf32, #tpu.memory_space<vmem>>, vector<256x128xf32>
    tpu.vector_store %arg10[%c0_161, %c0_162], %141 {strides = array<i32>} : memref<256x128xf32, #tpu.memory_space<vmem>>, vector<256x128xf32>,
    %c1_163 = arith.constant 1 : index
    %c1_164 = arith.constant 1 : index
    %c0_165 = arith.constant 0 : index
    %143 = vector.load %arg11[%c1_163, %c1_164, %c0_165] : memref<18x18x128xf32, #tpu.memory_space<vmem>>, vector<16x16x128xf32>
    %144 = arith.truncf %143 : vector<16x16x128xf32> to vector<16x16x128xbf16>
    %c0_166 = arith.constant 0 : index
    %c0_167 = arith.constant 0 : index
    %145 = vector.load %arg10[%c0_166, %c0_167] : memref<256x128xf32, #tpu.memory_space<vmem>>, vector<256x128xf32>
    %146 = vector.shape_cast %144 : vector<16x16x128xbf16> to vector<256x128xbf16>
    %c4_168 = arith.constant 4 : index
    %c0_169 = arith.constant 0 : index
    %c0_170 = arith.constant 0 : index
    %147 = vector.load %arg6[%c4_168, %c0_169, %c0_170] : memref<9x128x128xbf16, #tpu.memory_space<vmem>>, vector<1x128x128xbf16>
    %148 = vector.shape_cast %147 : vector<1x128x128xbf16> to vector<128x128xbf16>
    %cst_171 = arith.constant dense<0.000000e+00> : vector<256x128xf32>
    %149 = tpu.matmul %146, %148, %cst_171 {dimension_numbers = #tpu.dot_dimension_numbers<[1], [0], [0], [1], [0, 0, 1, 1], [], []>} : vector<256x128xbf16>, vector<128x128xbf16>, vector<256x128xf32> -> vector<256x128xf32>
    %150 = arith.addf %145, %149 : vector<256x128xf32>
    %c0_172 = arith.constant 0 : index
    %c0_173 = arith.constant 0 : index
    %151 = vector.load %arg10[%c0_172, %c0_173] : memref<256x128xf32, #tpu.memory_space<vmem>>, vector<256x128xf32>
    tpu.vector_store %arg10[%c0_172, %c0_173], %150 {strides = array<i32>} : memref<256x128xf32, #tpu.memory_space<vmem>>, vector<256x128xf32>,
    %c1_174 = arith.constant 1 : index
    %c2_175 = arith.constant 2 : index
    %c0_176 = arith.constant 0 : index
    %152 = vector.load %arg11[%c1_174, %c2_175, %c0_176] : memref<18x18x128xf32, #tpu.memory_space<vmem>>, vector<16x16x128xf32>
    %153 = arith.truncf %152 : vector<16x16x128xf32> to vector<16x16x128xbf16>
    %c0_177 = arith.constant 0 : index
    %c0_178 = arith.constant 0 : index
    %154 = vector.load %arg10[%c0_177, %c0_178] : memref<256x128xf32, #tpu.memory_space<vmem>>, vector<256x128xf32>
    %155 = vector.shape_cast %153 : vector<16x16x128xbf16> to vector<256x128xbf16>
    %c5_179 = arith.constant 5 : index
    %c0_180 = arith.constant 0 : index
    %c0_181 = arith.constant 0 : index
    %156 = vector.load %arg6[%c5_179, %c0_180, %c0_181] : memref<9x128x128xbf16, #tpu.memory_space<vmem>>, vector<1x128x128xbf16>
    %157 = vector.shape_cast %156 : vector<1x128x128xbf16> to vector<128x128xbf16>
    %cst_182 = arith.constant dense<0.000000e+00> : vector<256x128xf32>
    %158 = tpu.matmul %155, %157, %cst_182 {dimension_numbers = #tpu.dot_dimension_numbers<[1], [0], [0], [1], [0, 0, 1, 1], [], []>} : vector<256x128xbf16>, vector<128x128xbf16>, vector<256x128xf32> -> vector<256x128xf32>
    %159 = arith.addf %154, %158 : vector<256x128xf32>
    %c0_183 = arith.constant 0 : index
    %c0_184 = arith.constant 0 : index
    %160 = vector.load %arg10[%c0_183, %c0_184] : memref<256x128xf32, #tpu.memory_space<vmem>>, vector<256x128xf32>
    tpu.vector_store %arg10[%c0_183, %c0_184], %159 {strides = array<i32>} : memref<256x128xf32, #tpu.memory_space<vmem>>, vector<256x128xf32>,
    %c2_185 = arith.constant 2 : index
    %c0_186 = arith.constant 0 : index
    %c0_187 = arith.constant 0 : index
    %161 = vector.load %arg11[%c2_185, %c0_186, %c0_187] : memref<18x18x128xf32, #tpu.memory_space<vmem>>, vector<16x16x128xf32>
    %162 = arith.truncf %161 : vector<16x16x128xf32> to vector<16x16x128xbf16>
    %c0_188 = arith.constant 0 : index
    %c0_189 = arith.constant 0 : index
    %163 = vector.load %arg10[%c0_188, %c0_189] : memref<256x128xf32, #tpu.memory_space<vmem>>, vector<256x128xf32>
    %164 = vector.shape_cast %162 : vector<16x16x128xbf16> to vector<256x128xbf16>
    %c6_190 = arith.constant 6 : index
    %c0_191 = arith.constant 0 : index
    %c0_192 = arith.constant 0 : index
    %165 = vector.load %arg6[%c6_190, %c0_191, %c0_192] : memref<9x128x128xbf16, #tpu.memory_space<vmem>>, vector<1x128x128xbf16>
    %166 = vector.shape_cast %165 : vector<1x128x128xbf16> to vector<128x128xbf16>
    %cst_193 = arith.constant dense<0.000000e+00> : vector<256x128xf32>
    %167 = tpu.matmul %164, %166, %cst_193 {dimension_numbers = #tpu.dot_dimension_numbers<[1], [0], [0], [1], [0, 0, 1, 1], [], []>} : vector<256x128xbf16>, vector<128x128xbf16>, vector<256x128xf32> -> vector<256x128xf32>
    %168 = arith.addf %163, %167 : vector<256x128xf32>
    %c0_194 = arith.constant 0 : index
    %c0_195 = arith.constant 0 : index
    %169 = vector.load %arg10[%c0_194, %c0_195] : memref<256x128xf32, #tpu.memory_space<vmem>>, vector<256x128xf32>
    tpu.vector_store %arg10[%c0_194, %c0_195], %168 {strides = array<i32>} : memref<256x128xf32, #tpu.memory_space<vmem>>, vector<256x128xf32>,
    %c2_196 = arith.constant 2 : index
    %c1_197 = arith.constant 1 : index
    %c0_198 = arith.constant 0 : index
    %170 = vector.load %arg11[%c2_196, %c1_197, %c0_198] : memref<18x18x128xf32, #tpu.memory_space<vmem>>, vector<16x16x128xf32>
    %171 = arith.truncf %170 : vector<16x16x128xf32> to vector<16x16x128xbf16>
    %c0_199 = arith.constant 0 : index
    %c0_200 = arith.constant 0 : index
    %172 = vector.load %arg10[%c0_199, %c0_200] : memref<256x128xf32, #tpu.memory_space<vmem>>, vector<256x128xf32>
    %173 = vector.shape_cast %171 : vector<16x16x128xbf16> to vector<256x128xbf16>
    %c7_201 = arith.constant 7 : index
    %c0_202 = arith.constant 0 : index
    %c0_203 = arith.constant 0 : index
    %174 = vector.load %arg6[%c7_201, %c0_202, %c0_203] : memref<9x128x128xbf16, #tpu.memory_space<vmem>>, vector<1x128x128xbf16>
    %175 = vector.shape_cast %174 : vector<1x128x128xbf16> to vector<128x128xbf16>
    %cst_204 = arith.constant dense<0.000000e+00> : vector<256x128xf32>
    %176 = tpu.matmul %173, %175, %cst_204 {dimension_numbers = #tpu.dot_dimension_numbers<[1], [0], [0], [1], [0, 0, 1, 1], [], []>} : vector<256x128xbf16>, vector<128x128xbf16>, vector<256x128xf32> -> vector<256x128xf32>
    %177 = arith.addf %172, %176 : vector<256x128xf32>
    %c0_205 = arith.constant 0 : index
    %c0_206 = arith.constant 0 : index
    %178 = vector.load %arg10[%c0_205, %c0_206] : memref<256x128xf32, #tpu.memory_space<vmem>>, vector<256x128xf32>
    tpu.vector_store %arg10[%c0_205, %c0_206], %177 {strides = array<i32>} : memref<256x128xf32, #tpu.memory_space<vmem>>, vector<256x128xf32>,
    %c2_207 = arith.constant 2 : index
    %c2_208 = arith.constant 2 : index
    %c0_209 = arith.constant 0 : index
    %179 = vector.load %arg11[%c2_207, %c2_208, %c0_209] : memref<18x18x128xf32, #tpu.memory_space<vmem>>, vector<16x16x128xf32>
    %180 = arith.truncf %179 : vector<16x16x128xf32> to vector<16x16x128xbf16>
    %c0_210 = arith.constant 0 : index
    %c0_211 = arith.constant 0 : index
    %181 = vector.load %arg10[%c0_210, %c0_211] : memref<256x128xf32, #tpu.memory_space<vmem>>, vector<256x128xf32>
    %182 = vector.shape_cast %180 : vector<16x16x128xbf16> to vector<256x128xbf16>
    %c8_212 = arith.constant 8 : index
    %c0_213 = arith.constant 0 : index
    %c0_214 = arith.constant 0 : index
    %183 = vector.load %arg6[%c8_212, %c0_213, %c0_214] : memref<9x128x128xbf16, #tpu.memory_space<vmem>>, vector<1x128x128xbf16>
    %184 = vector.shape_cast %183 : vector<1x128x128xbf16> to vector<128x128xbf16>
    %cst_215 = arith.constant dense<0.000000e+00> : vector<256x128xf32>
    %185 = tpu.matmul %182, %184, %cst_215 {dimension_numbers = #tpu.dot_dimension_numbers<[1], [0], [0], [1], [0, 0, 1, 1], [], []>} : vector<256x128xbf16>, vector<128x128xbf16>, vector<256x128xf32> -> vector<256x128xf32>
    %186 = arith.addf %181, %185 : vector<256x128xf32>
    %c0_216 = arith.constant 0 : index
    %c0_217 = arith.constant 0 : index
    %187 = vector.load %arg10[%c0_216, %c0_217] : memref<256x128xf32, #tpu.memory_space<vmem>>, vector<256x128xf32>
    tpu.vector_store %arg10[%c0_216, %c0_217], %186 {strides = array<i32>} : memref<256x128xf32, #tpu.memory_space<vmem>>, vector<256x128xf32>,
    %c0_218 = arith.constant 0 : index
    %c0_219 = arith.constant 0 : index
    %188 = vector.load %arg10[%c0_218, %c0_219] : memref<256x128xf32, #tpu.memory_space<vmem>>, vector<256x128xf32>
    %189 = arith.truncf %188 : vector<256x128xf32> to vector<256x128xbf16>
    %c0_220 = arith.constant 0 : index
    %c0_221 = arith.constant 0 : index
    %190 = vector.load %arg7[%c0_220, %c0_221] : memref<128x128xbf16, #tpu.memory_space<vmem>>, vector<128x128xbf16>
    %cst_222 = arith.constant dense<0.000000e+00> : vector<256x128xf32>
    %191 = tpu.matmul %189, %190, %cst_222 {dimension_numbers = #tpu.dot_dimension_numbers<[1], [0], [0], [1], [0, 0, 1, 1], [], []>} : vector<256x128xbf16>, vector<128x128xbf16>, vector<256x128xf32> -> vector<256x128xf32>
    %c0_223 = arith.constant 0 : index
    %c0_224 = arith.constant 0 : index
    %192 = vector.load %arg8[%c0_223, %c0_224] : memref<1x128xf32, #tpu.memory_space<vmem>>, vector<1x128xf32>
    %193 = vector.broadcast %192 : vector<1x128xf32> to vector<256x128xf32>
    %194 = arith.addf %191, %193 : vector<256x128xf32>
    %c0_225 = arith.constant 0 : index
    %c0_226 = arith.constant 0 : index
    %c0_227 = arith.constant 0 : index
    %c0_228 = arith.constant 0 : index
    %195 = vector.load %arg2[%c0_225, %c0_226, %c0_227, %c0_228] : memref<1x16x16x128xf32, #tpu.memory_space<vmem>>, vector<1x16x16x128xf32>
    %196 = vector.shape_cast %195 : vector<1x16x16x128xf32> to vector<16x16x128xf32>
    %197 = vector.shape_cast %196 : vector<16x16x128xf32> to vector<256x128xf32>
    %198 = arith.addf %194, %197 : vector<256x128xf32>
    %cst_229 = arith.constant 0.000000e+00 : f32
    %199 = vector.broadcast %cst_229 : f32 to vector<256x128xf32>
    %200 = arith.maximumf %198, %199 : vector<256x128xf32>
    %201 = vector.shape_cast %200 : vector<256x128xf32> to vector<16x16x128xf32>
    %c0_230 = arith.constant 0 : index
    %c0_231 = arith.constant 0 : index
    %c0_232 = arith.constant 0 : index
    %c0_233 = arith.constant 0 : index
    %202 = vector.load %arg9[%c0_230, %c0_231, %c0_232, %c0_233] : memref<1x16x16x128xf32, #tpu.memory_space<vmem>>, vector<1x16x16x128xf32>
    %203 = vector.shape_cast %202 : vector<1x16x16x128xf32> to vector<16x16x128xf32>
    %204 = vector.shape_cast %201 : vector<16x16x128xf32> to vector<1x16x16x128xf32>
    tpu.vector_store %arg9[%c0_230, %c0_231, %c0_232, %c0_233], %204 {strides = array<i32>} : memref<1x16x16x128xf32, #tpu.memory_space<vmem>>, vector<1x16x16x128xf32>,
    return
  }
  func.func @transform_0(%arg0: i32) -> (i32, i32, i32, i32) {
    %c0_i32 = arith.constant 0 : i32
    %c0_i32_0 = arith.constant 0 : i32
    %c0_i32_1 = arith.constant 0 : i32
    %c0_i32_2 = arith.constant 0 : i32
    return %arg0, %c0_i32, %c0_i32_0, %c0_i32_1 : i32, i32, i32, i32
  }
  func.func @transform_1(%arg0: i32) -> (i32, i32, i32, i32) {
    %c0_i32 = arith.constant 0 : i32
    %c0_i32_0 = arith.constant 0 : i32
    %c0_i32_1 = arith.constant 0 : i32
    %c0_i32_2 = arith.constant 0 : i32
    return %arg0, %c0_i32, %c0_i32_0, %c0_i32_1 : i32, i32, i32, i32
  }
  func.func @transform_2(%arg0: i32) -> (i32, i32, i32) {
    %c0_i32 = arith.constant 0 : i32
    %c0_i32_0 = arith.constant 0 : i32
    %c0_i32_1 = arith.constant 0 : i32
    %c0_i32_2 = arith.constant 0 : i32
    return %c0_i32, %c0_i32_0, %c0_i32_1 : i32, i32, i32
  }
  func.func @transform_3(%arg0: i32) -> (i32, i32) {
    %c0_i32 = arith.constant 0 : i32
    %c0_i32_0 = arith.constant 0 : i32
    %c0_i32_1 = arith.constant 0 : i32
    return %c0_i32, %c0_i32_0 : i32, i32
  }
  func.func @transform_4(%arg0: i32) -> (i32, i32) {
    %c0_i32 = arith.constant 0 : i32
    %c0_i32_0 = arith.constant 0 : i32
    %c0_i32_1 = arith.constant 0 : i32
    return %c0_i32, %c0_i32_0 : i32, i32
  }
  func.func @transform_5(%arg0: i32) -> (i32, i32, i32) {
    %c0_i32 = arith.constant 0 : i32
    %c0_i32_0 = arith.constant 0 : i32
    %c0_i32_1 = arith.constant 0 : i32
    %c0_i32_2 = arith.constant 0 : i32
    return %c0_i32, %c0_i32_0, %c0_i32_1 : i32, i32, i32
  }
  func.func @transform_6(%arg0: i32) -> (i32, i32) {
    %c0_i32 = arith.constant 0 : i32
    %c0_i32_0 = arith.constant 0 : i32
    %c0_i32_1 = arith.constant 0 : i32
    return %c0_i32, %c0_i32_0 : i32, i32
  }
  func.func @transform_7(%arg0: i32) -> (i32, i32) {
    %c0_i32 = arith.constant 0 : i32
    %c0_i32_0 = arith.constant 0 : i32
    %c0_i32_1 = arith.constant 0 : i32
    return %c0_i32, %c0_i32_0 : i32, i32
  }
  func.func @transform_8(%arg0: i32) -> (i32, i32, i32, i32) {
    %c0_i32 = arith.constant 0 : i32
    %c0_i32_0 = arith.constant 0 : i32
    %c0_i32_1 = arith.constant 0 : i32
    %c0_i32_2 = arith.constant 0 : i32
    return %arg0, %c0_i32, %c0_i32_0, %c0_i32_1 : i32, i32, i32, i32
  }
}

</mosaic_0001>

<llo_original>
// kernel: basic_block_nonshared.1
$region0: #{basic_block_nonshared.1}
  #allocation0 [shape = 'u32[]', space=smem, size = 0x4, offset = 0x4, fixed_abs, tag = 'smem constant byte address 0x4 - core index']
  #allocation1 [shape = 'u32[72,128]{1,0:T(1,128)}', space=vmem, size = 0x9000, scoped, tag = 'internal scratch']
  #allocation2 [shape = 'f32[256,128]{1,0:T(8,128)}', space=vmem, size = 0x20000, scoped, tag = 'scratch operand']
  #allocation3 [shape = 'f32[18,18,128]{2,1,0:T(8,128)}', space=vmem, size = 0x36000, scoped, tag = 'scratch operand']
  %s0 = inlined_call_operand.vmem [shape: f32[2,18,18,128], index: 0, kind: input, shape index: {}]
  %s1 = inlined_call_operand.vmem [shape: f32[2,16,16,128], index: 1, kind: input, shape index: {}]
  %s2 = inlined_call_operand.vmem [shape: bf16[9,128,128], index: 2, kind: input, shape index: {}]
  %s3 = inlined_call_operand.vmem [shape: bf16[128,128], index: 3, kind: input, shape index: {}]
  %s4 = inlined_call_operand.vmem [shape: f32[1,128], index: 4, kind: input, shape index: {}]
  %s5 = inlined_call_operand.vmem [shape: bf16[9,128,128], index: 5, kind: input, shape index: {}]
  %s6 = inlined_call_operand.vmem [shape: bf16[128,128], index: 6, kind: input, shape index: {}]
  %s7 = inlined_call_operand.vmem [shape: f32[1,128], index: 7, kind: input, shape index: {}]
  %s8 = inlined_call_operand.vmem [shape: f32[2,16,16,128], index: 8, kind: output, shape index: {}]
  %s9 = sld [smem:[#allocation0]]
  $region65: #{basic_block_nonshared.1} parent=0
    _
  %s11 = ssub.s32 1, %s9
  %s12 = scalar_select 0, %s11, %s9
  loop: start=0, step=1, limit=4
  $region2: #{basic_block_nonshared.1} parent=0 // loop_pre_header
    _
  $region3: #{basic_block_nonshared.1} parent=0 // loop_header
    %s14 = sphi 0, %s18
    %p15 = scmp.ge.s32.totalorder %s14, 4
    %s24 = sphi 0, %s26
    %s27 = sphi 0, %s24
    %s28 = sphi 0, %s27
    %s44 = sphi 0, %s28
    %s50 = sphi 0, %s52
    %s53 = sphi 0, %s50
    %s54 = sphi 0, %s53
    %s70 = sphi 0, %s54
    %s74 = sphi 0, %s74
    %s76 = sphi 0, %s74
    %s77 = sphi 0, %s76
    %s91 = sphi 0, %s77
    %s95 = sphi 0, %s95
    %s97 = sphi 0, %s95
    %s98 = sphi 0, %s97
    %s112 = sphi 0, %s98
    %s116 = sphi 0, %s116
    %s118 = sphi 0, %s116
    %s119 = sphi 0, %s118
    %s133 = sphi 0, %s119
    %s137 = sphi 0, %s137
    %s139 = sphi 0, %s137
    %s140 = sphi 0, %s139
    %s154 = sphi 0, %s140
    %s158 = sphi 0, %s158
    %s160 = sphi 0, %s158
    %s161 = sphi 0, %s160
    %s175 = sphi 0, %s161
    %s179 = sphi 0, %s179
    %s181 = sphi 0, %s179
    %s182 = sphi 0, %s181
    %s196 = sphi 0, %s182
    %s202 = sphi 0, %s204
    %s205 = sphi 0, %s202
    %s206 = sphi 0, %s205
    %s222 = sphi 0, %s206
  $region4: #{basic_block_nonshared.1} parent=0 // loop_header_branch
    %17 = sbr.rel (%p15) target = $region8
  $region5: #{basic_block_nonshared.1} parent=0 // loop_body
    %s19 = ssub.s32 %s14, 1
    %s20 = ssub.s32 %s14, 2
    %s21 = sadd.s32 %s14, 1
    %s22 = ssub.s32 %s14, %s21
    %p23 = scmp.eq.s32.totalorder %s22, 0
    %s25 = sadd.s32 %s24, 1
    %s26 = scalar_select %p23, %s24, %s25
    %p29 = pneg %p23
    %p30 = scmp.eq.s32.totalorder %s14, 1
    %p31 = por %p29, %p30
    %p32 = scmp.ne.s32.totalorder %s24, %s27
    %p33 = scmp.eq.s32.totalorder %s14, 0
    %p34 = por %p32, %p33
    %p35 = scmp.ne.s32.totalorder %s24, %s27
    %p36 = scmp.eq.s32.totalorder %s19, 1
    %p37 = por %p35, %p36
    %p38 = scmp.ne.s32.totalorder %s27, %s28
    %p39 = scmp.eq.s32.totalorder %s19, 0
    %p40 = por %p38, %p39
    %p41 = scmp.ne.s32.totalorder %s27, %s28
    %p42 = scmp.eq.s32.totalorder %s20, 1
    %p43 = por %p41, %p42
    %p45 = scmp.ne.s32.totalorder %s28, %s44
    %p46 = scmp.eq.s32.totalorder %s20, 0
    %p47 = por %p45, %p46
    %s48 = ssub.s32 %s14, %s21
    %p49 = scmp.eq.s32.totalorder %s48, 0
    %s51 = sadd.s32 %s50, 1
    %s52 = scalar_select %p49, %s50, %s51
    %p55 = pneg %p49
    %p56 = scmp.eq.s32.totalorder %s14, 1
    %p57 = por %p55, %p56
    %p58 = scmp.ne.s32.totalorder %s50, %s53
    %p59 = scmp.eq.s32.totalorder %s14, 0
    %p60 = por %p58, %p59
    %p61 = scmp.ne.s32.totalorder %s50, %s53
    %p62 = scmp.eq.s32.totalorder %s19, 1
    %p63 = por %p61, %p62
    %p64 = scmp.ne.s32.totalorder %s53, %s54
    %p65 = scmp.eq.s32.totalorder %s19, 0
    %p66 = por %p64, %p65
    %p67 = scmp.ne.s32.totalorder %s53, %s54
    %p68 = scmp.eq.s32.totalorder %s20, 1
    %p69 = por %p67, %p68
    %p71 = scmp.ne.s32.totalorder %s54, %s70
    %p72 = scmp.eq.s32.totalorder %s20, 0
    %p73 = por %p71, %p72
    %s75 = sadd.s32 %s74, 1
    %p78 = scmp.eq.s32.totalorder %s14, 1
    %p79 = scmp.ne.s32.totalorder %s74, %s76
    %p80 = scmp.eq.s32.totalorder %s14, 0
    %p81 = por %p79, %p80
    %p82 = scmp.ne.s32.totalorder %s74, %s76
    %p83 = scmp.eq.s32.totalorder %s19, 1
    %p84 = por %p82, %p83
    %p85 = scmp.ne.s32.totalorder %s76, %s77
    %p86 = scmp.eq.s32.totalorder %s19, 0
    %p87 = por %p85, %p86
    %p88 = scmp.ne.s32.totalorder %s76, %s77
    %p89 = scmp.eq.s32.totalorder %s20, 1
    %p90 = por %p88, %p89
    %p92 = scmp.ne.s32.totalorder %s77, %s91
    %p93 = scmp.eq.s32.totalorder %s20, 0
    %p94 = por %p92, %p93
    %s96 = sadd.s32 %s95, 1
    %p99 = scmp.eq.s32.totalorder %s14, 1
    %p100 = scmp.ne.s32.totalorder %s95, %s97
    %p101 = scmp.eq.s32.totalorder %s14, 0
    %p102 = por %p100, %p101
    %p103 = scmp.ne.s32.totalorder %s95, %s97
    %p104 = scmp.eq.s32.totalorder %s19, 1
    %p105 = por %p103, %p104
    %p106 = scmp.ne.s32.totalorder %s97, %s98
    %p107 = scmp.eq.s32.totalorder %s19, 0
    %p108 = por %p106, %p107
    %p109 = scmp.ne.s32.totalorder %s97, %s98
    %p110 = scmp.eq.s32.totalorder %s20, 1
    %p111 = por %p109, %p110
    %p113 = scmp.ne.s32.totalorder %s98, %s112
    %p114 = scmp.eq.s32.totalorder %s20, 0
    %p115 = por %p113, %p114
    %s117 = sadd.s32 %s116, 1
    %p120 = scmp.eq.s32.totalorder %s14, 1
    %p121 = scmp.ne.s32.totalorder %s116, %s118
    %p122 = scmp.eq.s32.totalorder %s14, 0
    %p123 = por %p121, %p122
    %p124 = scmp.ne.s32.totalorder %s116, %s118
    %p125 = scmp.eq.s32.totalorder %s19, 1
    %p126 = por %p124, %p125
    %p127 = scmp.ne.s32.totalorder %s118, %s119
    %p128 = scmp.eq.s32.totalorder %s19, 0
    %p129 = por %p127, %p128
    %p130 = scmp.ne.s32.totalorder %s118, %s119
    %p131 = scmp.eq.s32.totalorder %s20, 1
    %p132 = por %p130, %p131
    %p134 = scmp.ne.s32.totalorder %s119, %s133
    %p135 = scmp.eq.s32.totalorder %s20, 0
    %p136 = por %p134, %p135
    %s138 = sadd.s32 %s137, 1
    %p141 = scmp.eq.s32.totalorder %s14, 1
    %p142 = scmp.ne.s32.totalorder %s137, %s139
    %p143 = scmp.eq.s32.totalorder %s14, 0
    %p144 = por %p142, %p143
    %p145 = scmp.ne.s32.totalorder %s137, %s139
    %p146 = scmp.eq.s32.totalorder %s19, 1
    %p147 = por %p145, %p146
    %p148 = scmp.ne.s32.totalorder %s139, %s140
    %p149 = scmp.eq.s32.totalorder %s19, 0
    %p150 = por %p148, %p149
    %p151 = scmp.ne.s32.totalorder %s139, %s140
    %p152 = scmp.eq.s32.totalorder %s20, 1
    %p153 = por %p151, %p152
    %p155 = scmp.ne.s32.totalorder %s140, %s154
    %p156 = scmp.eq.s32.totalorder %s20, 0
    %p157 = por %p155, %p156
    %s159 = sadd.s32 %s158, 1
    %p162 = scmp.eq.s32.totalorder %s14, 1
    %p163 = scmp.ne.s32.totalorder %s158, %s160
    %p164 = scmp.eq.s32.totalorder %s14, 0
    %p165 = por %p163, %p164
    %p166 = scmp.ne.s32.totalorder %s158, %s160
    %p167 = scmp.eq.s32.totalorder %s19, 1
    %p168 = por %p166, %p167
    %p169 = scmp.ne.s32.totalorder %s160, %s161
    %p170 = scmp.eq.s32.totalorder %s19, 0
    %p171 = por %p169, %p170
    %p172 = scmp.ne.s32.totalorder %s160, %s161
    %p173 = scmp.eq.s32.totalorder %s20, 1
    %p174 = por %p172, %p173
    %p176 = scmp.ne.s32.totalorder %s161, %s175
    %p177 = scmp.eq.s32.totalorder %s20, 0
    %p178 = por %p176, %p177
    %s180 = sadd.s32 %s179, 1
    %p183 = scmp.eq.s32.totalorder %s14, 1
    %p184 = scmp.ne.s32.totalorder %s179, %s181
    %p185 = scmp.eq.s32.totalorder %s14, 0
    %p186 = por %p184, %p185
    %p187 = scmp.ne.s32.totalorder %s179, %s181
    %p188 = scmp.eq.s32.totalorder %s19, 1
    %p189 = por %p187, %p188
    %p190 = scmp.ne.s32.totalorder %s181, %s182
    %p191 = scmp.eq.s32.totalorder %s19, 0
    %p192 = por %p190, %p191
    %p193 = scmp.ne.s32.totalorder %s181, %s182
    %p194 = scmp.eq.s32.totalorder %s20, 1
    %p195 = por %p193, %p194
    %p197 = scmp.ne.s32.totalorder %s182, %s196
    %p198 = scmp.eq.s32.totalorder %s20, 0
    %p199 = por %p197, %p198
    %s200 = ssub.s32 %s14, %s21
    %p201 = scmp.eq.s32.totalorder %s200, 0
    %s203 = sadd.s32 %s202, 1
    %s204 = scalar_select %p201, %s202, %s203
    %p207 = pneg %p201
    %p208 = scmp.eq.s32.totalorder %s14, 1
    %p209 = por %p207, %p208
    %p210 = scmp.ne.s32.totalorder %s202, %s205
    %p211 = scmp.eq.s32.totalorder %s14, 0
    %p212 = por %p210, %p211
    %p213 = scmp.ne.s32.totalorder %s202, %s205
    %p214 = scmp.eq.s32.totalorder %s19, 1
    %p215 = por %p213, %p214
    %p216 = scmp.ne.s32.totalorder %s205, %s206
    %p217 = scmp.eq.s32.totalorder %s19, 0
    %p218 = por %p216, %p217
    %p219 = scmp.ne.s32.totalorder %s205, %s206
    %p220 = scmp.eq.s32.totalorder %s20, 1
    %p221 = por %p219, %p220
    %p223 = scmp.ne.s32.totalorder %s206, %s222
    %p224 = scmp.eq.s32.totalorder %s20, 0
    %p225 = por %p223, %p224
    %p226 = scmp.le.s32.totalorder 1, %s14
    %p227 = scmp.lt.s32.totalorder %s14, 3
    %p228 = pnand %p226, %p227
    %p229 = pneg %p228
    // Predicated region
    $region9: #{basic_block_nonshared.1} parent=5 // pred_check
      _
    $region10: #{basic_block_nonshared.1} parent=5 // pred_check_branch
      %231 = sbr.rel (%p228) target = $region12
    $region11: #{basic_block_nonshared.1} parent=5 // pred_region
      %s232 = ssub.s32 %s14, 1
      // Predicated region
      $region13: #{basic_block_nonshared.1} parent=11 // pred_check
        %p233 = pneg %p87
      $region14: #{basic_block_nonshared.1} parent=11 // pred_check_branch
        %235 = sbr.rel (%p233) target = $region16
      $region15: #{basic_block_nonshared.1} parent=11 // pred_region
        _
      $region16: #{basic_block_nonshared.1} parent=11 // pred_fallthru
        _
      // Predicated region
      $region17: #{basic_block_nonshared.1} parent=11 // pred_check
        %p236 = pneg %p108
      $region18: #{basic_block_nonshared.1} parent=11 // pred_check_branch
        %238 = sbr.rel (%p236) target = $region20
      $region19: #{basic_block_nonshared.1} parent=11 // pred_region
        _
      $region20: #{basic_block_nonshared.1} parent=11 // pred_fallthru
        _
      // Predicated region
      $region21: #{basic_block_nonshared.1} parent=11 // pred_check
        %p239 = pneg %p129
      $region22: #{basic_block_nonshared.1} parent=11 // pred_check_branch
        %241 = sbr.rel (%p239) target = $region24
      $region23: #{basic_block_nonshared.1} parent=11 // pred_region
        _
      $region24: #{basic_block_nonshared.1} parent=11 // pred_fallthru
        _
      // Predicated region
      $region25: #{basic_block_nonshared.1} parent=11 // pred_check
        %p242 = pneg %p150
      $region26: #{basic_block_nonshared.1} parent=11 // pred_check_branch
        %244 = sbr.rel (%p242) target = $region28
      $region27: #{basic_block_nonshared.1} parent=11 // pred_region
        _
      $region28: #{basic_block_nonshared.1} parent=11 // pred_fallthru
        _
      // Predicated region
      $region29: #{basic_block_nonshared.1} parent=11 // pred_check
        %p245 = pneg %p171
      $region30: #{basic_block_nonshared.1} parent=11 // pred_check_branch
        %247 = sbr.rel (%p245) target = $region32
      $region31: #{basic_block_nonshared.1} parent=11 // pred_region
        _
      $region32: #{basic_block_nonshared.1} parent=11 // pred_fallthru
        _
      // Predicated region
      $region33: #{basic_block_nonshared.1} parent=11 // pred_check
        %p248 = pneg %p192
      $region34: #{basic_block_nonshared.1} parent=11 // pred_check_branch
        %250 = sbr.rel (%p248) target = $region36
      $region35: #{basic_block_nonshared.1} parent=11 // pred_region
        _
      $region36: #{basic_block_nonshared.1} parent=11 // pred_fallthru
        _
    $region12: #{basic_block_nonshared.1} parent=5 // pred_fallthru
      _
    %p251 = scmp.lt.s32.totalorder %s14, 2
    // Predicated region
    $region37: #{basic_block_nonshared.1} parent=5 // pred_check
      %p252 = pneg %p251
    $region38: #{basic_block_nonshared.1} parent=5 // pred_check_branch
      %254 = sbr.rel (%p252) target = $region40
    $region39: #{basic_block_nonshared.1} parent=5 // pred_region
      // Predicated region
      $region41: #{basic_block_nonshared.1} parent=39 // pred_check
        %p255 = pneg %p34
      $region42: #{basic_block_nonshared.1} parent=39 // pred_check_branch
        %257 = sbr.rel (%p255) target = $region44
      $region43: #{basic_block_nonshared.1} parent=39 // pred_region
        %p258 = scmp.lt.s32.totalorder %s14, 1
        %s259 = scalar_select %p258, %s14, 1
        %s260 = smul.addr %s259, 54
        %s261 = smul.addr %s260, 8
        %s262 = scalar_lea.vmem %s0, %s261
      $region44: #{basic_block_nonshared.1} parent=39 // pred_fallthru
        _
      // Predicated region
      $region45: #{basic_block_nonshared.1} parent=39 // pred_check
        %p263 = pneg %p60
      $region46: #{basic_block_nonshared.1} parent=39 // pred_check_branch
        %265 = sbr.rel (%p263) target = $region48
      $region47: #{basic_block_nonshared.1} parent=39 // pred_region
        %p266 = scmp.lt.s32.totalorder %s14, 1
        %s267 = scalar_select %p266, %s14, 1
        %s268 = smul.addr %s267, 32
        %s269 = smul.addr %s268, 8
        %s270 = scalar_lea.vmem %s1, %s269
      $region48: #{basic_block_nonshared.1} parent=39 // pred_fallthru
        _
    $region40: #{basic_block_nonshared.1} parent=5 // pred_fallthru
      _
    %p271 = scmp.le.s32.totalorder 1, %s14
    %p272 = scmp.lt.s32.totalorder %s14, 3
    %p273 = pnand %p271, %p272
    %p274 = pneg %p273
    // Predicated region
    $region49: #{basic_block_nonshared.1} parent=5 // pred_check
      _
    $region50: #{basic_block_nonshared.1} parent=5 // pred_check_branch
      %276 = sbr.rel (%p273) target = $region52
    $region51: #{basic_block_nonshared.1} parent=5 // pred_region
      %s277 = ssub.s32 %s14, 1
      %p278 = scmp.lt.s32.totalorder %s19, 1
      %s279 = scalar_select %p278, %s19, 1
      %s280 = smul.addr %s279, 54
      %s281 = smul.addr %s280, 8
      %s282 = scalar_lea.vmem %s0, %s281
      %p283 = pneg %p40
      %p284 = pneg %p37
      %p285 = scmp.lt.s32.totalorder %s19, 1
      %s286 = scalar_select %p285, %s19, 1
      %s287 = smul.addr %s286, 32
      %s288 = smul.addr %s287, 8
      %s289 = scalar_lea.vmem %s1, %s288
      %p290 = pneg %p66
      %p291 = pneg %p63
      %p292 = pneg %p87
      %p293 = pneg %p84
      %p294 = pneg %p108
      %p295 = pneg %p105
      %p296 = pneg %p129
      %p297 = pneg %p126
      %p298 = pneg %p150
      %p299 = pneg %p147
      %p300 = pneg %p171
      %p301 = pneg %p168
      %p302 = pneg %p192
      %p303 = pneg %p189
      %p304 = pneg %p218
      %p305 = pneg %p215
      %p306 = scmp.lt.s32.totalorder %s19, 1
      %s307 = scalar_select %p306, %s19, 1
      %s308 = smul.addr %s307, 32
      %s309 = smul.addr %s308, 8
      %s310 = scalar_lea.vmem %s8, %s309
      %p311 = scmp.lt.s32.totalorder %s19, 1
      %s312 = scalar_select %p311, %s19, 1
      %s313 = smul.addr %s312, 54
      %s314 = smul.addr %s313, 8
      %s315 = scalar_lea.vmem %s0, %s314
      %p316 = scmp.lt.s32.totalorder %s19, 1
      %s317 = scalar_select %p316, %s19, 1
      %s318 = smul.addr %s317, 32
      %s319 = smul.addr %s318, 8
      %s320 = scalar_lea.vmem %s1, %s319
      %p321 = scmp.lt.s32.totalorder %s19, 1
      %s322 = scalar_select %p321, %s19, 1
      %s323 = smul.addr %s322, 32
      %s324 = smul.addr %s323, 8
      %s325 = scalar_lea.vmem %s8, %s324
      %326 = vst [vmem:[#allocation2] sm:$0xff] 0.0
      %327 = vst [vmem:[#allocation2 + $0x8] sm:$0xff] 0.0
      %328 = vst [vmem:[#allocation2 + $0x10] sm:$0xff] 0.0
      %329 = vst [vmem:[#allocation2 + $0x18] sm:$0xff] 0.0
      %330 = vst [vmem:[#allocation2 + $0x20] sm:$0xff] 0.0
      %331 = vst [vmem:[#allocation2 + $0x28] sm:$0xff] 0.0
      %332 = vst [vmem:[#allocation2 + $0x30] sm:$0xff] 0.0
      %333 = vst [vmem:[#allocation2 + $0x38] sm:$0xff] 0.0
      %334 = vst [vmem:[#allocation2 + $0x40] sm:$0xff] 0.0
      %335 = vst [vmem:[#allocation2 + $0x48] sm:$0xff] 0.0
      %336 = vst [vmem:[#allocation2 + $0x50] sm:$0xff] 0.0
      %337 = vst [vmem:[#allocation2 + $0x58] sm:$0xff] 0.0
      %338 = vst [vmem:[#allocation2 + $0x60] sm:$0xff] 0.0
      %339 = vst [vmem:[#allocation2 + $0x68] sm:$0xff] 0.0
      %340 = vst [vmem:[#allocation2 + $0x70] sm:$0xff] 0.0
      %341 = vst [vmem:[#allocation2 + $0x78] sm:$0xff] 0.0
      %342 = vst [vmem:[#allocation2 + $0x80] sm:$0xff] 0.0
      %343 = vst [vmem:[#allocation2 + $0x88] sm:$0xff] 0.0
      %344 = vst [vmem:[#allocation2 + $0x90] sm:$0xff] 0.0
      %345 = vst [vmem:[#allocation2 + $0x98] sm:$0xff] 0.0
      %346 = vst [vmem:[#allocation2 + $0xa0] sm:$0xff] 0.0
      %347 = vst [vmem:[#allocation2 + $0xa8] sm:$0xff] 0.0
      %348 = vst [vmem:[#allocation2 + $0xb0] sm:$0xff] 0.0
      %349 = vst [vmem:[#allocation2 + $0xb8] sm:$0xff] 0.0
      %350 = vst [vmem:[#allocation2 + $0xc0] sm:$0xff] 0.0
      %351 = vst [vmem:[#allocation2 + $0xc8] sm:$0xff] 0.0
      %352 = vst [vmem:[#allocation2 + $0xd0] sm:$0xff] 0.0
      %353 = vst [vmem:[#allocation2 + $0xd8] sm:$0xff] 0.0
      %354 = vst [vmem:[#allocation2 + $0xe0] sm:$0xff] 0.0
      %355 = vst [vmem:[#allocation2 + $0xe8] sm:$0xff] 0.0
      %356 = vst [vmem:[#allocation2 + $0xf0] sm:$0xff] 0.0
      %357 = vst [vmem:[#allocation2 + $0xf8] sm:$0xff] 0.0
      %v358 = vld [vmem:[%s315] sm:$0xff]
      %v359 = vld [vmem:[%s315 + $0x8] sm:$0xff]
      %v360 = vld [vmem:[%s315 + $0x18] sm:$0xff]
      %v361 = vld [vmem:[%s315 + $0x20] sm:$0xff]
      %v362 = vld [vmem:[%s315 + $0x30] sm:$0xff]
      %v363 = vld [vmem:[%s315 + $0x38] sm:$0xff]
      %v364 = vld [vmem:[%s315 + $0x48] sm:$0xff]
      %v365 = vld [vmem:[%s315 + $0x50] sm:$0xff]
      %v366 = vld [vmem:[%s315 + $0x60] sm:$0xff]
      %v367 = vld [vmem:[%s315 + $0x68] sm:$0xff]
      %v368 = vld [vmem:[%s315 + $0x78] sm:$0xff]
      %v369 = vld [vmem:[%s315 + $0x80] sm:$0xff]
      %v370 = vld [vmem:[%s315 + $0x90] sm:$0xff]
      %v371 = vld [vmem:[%s315 + $0x98] sm:$0xff]
      %v372 = vld [vmem:[%s315 + $0xa8] sm:$0xff]
      %v373 = vld [vmem:[%s315 + $0xb0] sm:$0xff]
      %v374 = vld [vmem:[%s315 + $0xc0] sm:$0xff]
      %v375 = vld [vmem:[%s315 + $0xc8] sm:$0xff]
      %v376 = vld [vmem:[%s315 + $0xd8] sm:$0xff]
      %v377 = vld [vmem:[%s315 + $0xe0] sm:$0xff]
      %v378 = vld [vmem:[%s315 + $0xf0] sm:$0xff]
      %v379 = vld [vmem:[%s315 + $0xf8] sm:$0xff]
      %v380 = vld [vmem:[%s315 + $0x108] sm:$0xff]
      %v381 = vld [vmem:[%s315 + $0x110] sm:$0xff]
      %v382 = vld [vmem:[%s315 + $0x120] sm:$0xff]
      %v383 = vld [vmem:[%s315 + $0x128] sm:$0xff]
      %v384 = vld [vmem:[%s315 + $0x138] sm:$0xff]
      %v385 = vld [vmem:[%s315 + $0x140] sm:$0xff]
      %v386 = vld [vmem:[%s315 + $0x150] sm:$0xff]
      %v387 = vld [vmem:[%s315 + $0x158] sm:$0xff]
      %v388 = vld [vmem:[%s315 + $0x168] sm:$0xff]
      %v389 = vld [vmem:[%s315 + $0x170] sm:$0xff]
      %v390 = vpack.c.bf16 %v358, %v358
      %v391 = vpack.c.bf16 %v359, %v359
      %v392 = vpack.c.bf16 %v360, %v360
      %v393 = vpack.c.bf16 %v361, %v361
      %v394 = vpack.c.bf16 %v362, %v362
      %v395 = vpack.c.bf16 %v363, %v363
      %v396 = vpack.c.bf16 %v364, %v364
      %v397 = vpack.c.bf16 %v365, %v365
      %v398 = vpack.c.bf16 %v366, %v366
      %v399 = vpack.c.bf16 %v367, %v367
      %v400 = vpack.c.bf16 %v368, %v368
      %v401 = vpack.c.bf16 %v369, %v369
      %v402 = vpack.c.bf16 %v370, %v370
      %v403 = vpack.c.bf16 %v371, %v371
      %v404 = vpack.c.bf16 %v372, %v372
      %v405 = vpack.c.bf16 %v373, %v373
      %v406 = vpack.c.bf16 %v374, %v374
      %v407 = vpack.c.bf16 %v375, %v375
      %v408 = vpack.c.bf16 %v376, %v376
      %v409 = vpack.c.bf16 %v377, %v377
      %v410 = vpack.c.bf16 %v378, %v378
      %v411 = vpack.c.bf16 %v379, %v379
      %v412 = vpack.c.bf16 %v380, %v380
      %v413 = vpack.c.bf16 %v381, %v381
      %v414 = vpack.c.bf16 %v382, %v382
      %v415 = vpack.c.bf16 %v383, %v383
      %v416 = vpack.c.bf16 %v384, %v384
      %v417 = vpack.c.bf16 %v385, %v385
      %v418 = vpack.c.bf16 %v386, %v386
      %v419 = vpack.c.bf16 %v387, %v387
      %v420 = vpack.c.bf16 %v388, %v388
      %v421 = vpack.c.bf16 %v389, %v389
      %v422 = vld [vmem:[#allocation2] sm:$0xff]
      %v423 = vld [vmem:[#allocation2 + $0x8] sm:$0xff]
      %v424 = vld [vmem:[#allocation2 + $0x10] sm:$0xff]
      %v425 = vld [vmem:[#allocation2 + $0x18] sm:$0xff]
      %v426 = vld [vmem:[#allocation2 + $0x20] sm:$0xff]
      %v427 = vld [vmem:[#allocation2 + $0x28] sm:$0xff]
      %v428 = vld [vmem:[#allocation2 + $0x30] sm:$0xff]
      %v429 = vld [vmem:[#allocation2 + $0x38] sm:$0xff]
      %v430 = vld [vmem:[#allocation2 + $0x40] sm:$0xff]
      %v431 = vld [vmem:[#allocation2 + $0x48] sm:$0xff]
      %v432 = vld [vmem:[#allocation2 + $0x50] sm:$0xff]
      %v433 = vld [vmem:[#allocation2 + $0x58] sm:$0xff]
      %v434 = vld [vmem:[#allocation2 + $0x60] sm:$0xff]
      %v435 = vld [vmem:[#allocation2 + $0x68] sm:$0xff]
      %v436 = vld [vmem:[#allocation2 + $0x70] sm:$0xff]
      %v437 = vld [vmem:[#allocation2 + $0x78] sm:$0xff]
      %v438 = vld [vmem:[#allocation2 + $0x80] sm:$0xff]
      %v439 = vld [vmem:[#allocation2 + $0x88] sm:$0xff]
      %v440 = vld [vmem:[#allocation2 + $0x90] sm:$0xff]
      %v441 = vld [vmem:[#allocation2 + $0x98] sm:$0xff]
      %v442 = vld [vmem:[#allocation2 + $0xa0] sm:$0xff]
      %v443 = vld [vmem:[#allocation2 + $0xa8] sm:$0xff]
      %v444 = vld [vmem:[#allocation2 + $0xb0] sm:$0xff]
      %v445 = vld [vmem:[#allocation2 + $0xb8] sm:$0xff]
      %v446 = vld [vmem:[#allocation2 + $0xc0] sm:$0xff]
      %v447 = vld [vmem:[#allocation2 + $0xc8] sm:$0xff]
      %v448 = vld [vmem:[#allocation2 + $0xd0] sm:$0xff]
      %v449 = vld [vmem:[#allocation2 + $0xd8] sm:$0xff]
      %v450 = vld [vmem:[#allocation2 + $0xe0] sm:$0xff]
      %v451 = vld [vmem:[#allocation2 + $0xe8] sm:$0xff]
      %v452 = vld [vmem:[#allocation2 + $0xf0] sm:$0xff]
      %v453 = vld [vmem:[#allocation2 + $0xf8] sm:$0xff]
      %v454 = vld [vmem:[%s2] sm:$0xf]
      %v455 = vld [vmem:[%s2 + $0x4] sm:$0xf]
      %v456 = vld [vmem:[%s2 + $0x8] sm:$0xf]
      %v457 = vld [vmem:[%s2 + $0xc] sm:$0xf]
      %v458 = vld [vmem:[%s2 + $0x10] sm:$0xf]
      %v459 = vld [vmem:[%s2 + $0x14] sm:$0xf]
      %v460 = vld [vmem:[%s2 + $0x18] sm:$0xf]
      %v461 = vld [vmem:[%s2 + $0x1c] sm:$0xf]
      %v462 = vld [vmem:[%s2 + $0x20] sm:$0xf]
      %v463 = vld [vmem:[%s2 + $0x24] sm:$0xf]
      %v464 = vld [vmem:[%s2 + $0x28] sm:$0xf]
      %v465 = vld [vmem:[%s2 + $0x2c] sm:$0xf]
      %v466 = vld [vmem:[%s2 + $0x30] sm:$0xf]
      %v467 = vld [vmem:[%s2 + $0x34] sm:$0xf]
      %v468 = vld [vmem:[%s2 + $0x38] sm:$0xf]
      %v469 = vld [vmem:[%s2 + $0x3c] sm:$0xf]
      %v502 = vunpack.c.l.b16 %v390
      %v503 = vunpack.c.l.b16 %v391
      %v504 = vunpack.c.l.b16 %v392
      %v505 = vunpack.c.l.b16 %v393
      %v506 = vunpack.c.l.b16 %v394
      %v507 = vunpack.c.l.b16 %v395
      %v508 = vunpack.c.l.b16 %v396
      %v509 = vunpack.c.l.b16 %v397
      %v510 = vunpack.c.l.b16 %v398
      %v511 = vunpack.c.l.b16 %v399
      %v512 = vunpack.c.l.b16 %v400
      %v513 = vunpack.c.l.b16 %v401
      %v514 = vunpack.c.l.b16 %v402
      %v515 = vunpack.c.l.b16 %v403
      %v516 = vunpack.c.l.b16 %v404
      %v517 = vunpack.c.l.b16 %v405
      %v518 = vunpack.c.l.b16 %v406
      %v519 = vunpack.c.l.b16 %v407
      %v520 = vunpack.c.l.b16 %v408
      %v521 = vunpack.c.l.b16 %v409
      %v522 = vunpack.c.l.b16 %v410
      %v523 = vunpack.c.l.b16 %v411
      %v524 = vunpack.c.l.b16 %v412
      %v525 = vunpack.c.l.b16 %v413
      %v526 = vunpack.c.l.b16 %v414
      %v527 = vunpack.c.l.b16 %v415
      %v528 = vunpack.c.l.b16 %v416
      %v529 = vunpack.c.l.b16 %v417
      %v530 = vunpack.c.l.b16 %v418
      %v531 = vunpack.c.l.b16 %v419
      %v532 = vunpack.c.l.b16 %v420
      %v533 = vunpack.c.l.b16 %v421
      %v534 = vpack.c.b16 %v503, %v502
      %v535 = vpack.c.b16 %v505, %v504
      %v536 = vpack.c.b16 %v507, %v506
      %v537 = vpack.c.b16 %v509, %v508
      %v538 = vpack.c.b16 %v511, %v510
      %v539 = vpack.c.b16 %v513, %v512
      %v540 = vpack.c.b16 %v515, %v514
      %v541 = vpack.c.b16 %v517, %v516
      %v542 = vpack.c.b16 %v519, %v518
      %v543 = vpack.c.b16 %v521, %v520
      %v544 = vpack.c.b16 %v523, %v522
      %v545 = vpack.c.b16 %v525, %v524
      %v546 = vpack.c.b16 %v527, %v526
      %v547 = vpack.c.b16 %v529, %v528
      %v548 = vpack.c.b16 %v531, %v530
      %v549 = vpack.c.b16 %v533, %v532
      %v582 = vunpack.c.l.b16 %v454
      %v583 = vunpack.c.l.b16 %v455
      %v584 = vunpack.c.l.b16 %v456
      %v585 = vunpack.c.l.b16 %v457
      %v586 = vunpack.c.l.b16 %v458
      %v587 = vunpack.c.l.b16 %v459
      %v588 = vunpack.c.l.b16 %v460
      %v589 = vunpack.c.l.b16 %v461
      %v590 = vunpack.c.l.b16 %v462
      %v591 = vunpack.c.l.b16 %v463
      %v592 = vunpack.c.l.b16 %v464
      %v593 = vunpack.c.l.b16 %v465
      %v594 = vunpack.c.l.b16 %v466
      %v595 = vunpack.c.l.b16 %v467
      %v596 = vunpack.c.l.b16 %v468
      %v597 = vunpack.c.l.b16 %v469
      %v598 = vpack.c.b16 %v583, %v582
      %v599 = vpack.c.b16 %v585, %v584
      %v600 = vpack.c.b16 %v587, %v586
      %v601 = vpack.c.b16 %v589, %v588
      %v602 = vpack.c.b16 %v591, %v590
      %v603 = vpack.c.b16 %v593, %v592
      %v604 = vpack.c.b16 %v595, %v594
      %v605 = vpack.c.b16 %v597, %v596
      %614 = vmatpush.bf16.msra.mxu0 %v605
      %615 = vmatpush.bf16.msra.mxu0 %v604
      %616 = vmatpush.bf16.msra.mxu0 %v603
      %617 = vmatpush.bf16.msra.mxu0 %v602
      %618 = vmatpush.bf16.msra.mxu0 %v601
      %619 = vmatpush.bf16.msra.mxu0 %v600
      %620 = vmatpush.bf16.msra.mxu0 %v599
      %621 = vmatpush.bf16.msra.mxu0 %v598
      %622 = vmatmul.bf16.gmra.mxu0 %v534
      %v623 = vpop.f32.mrf.mxu0
      %v624 = vadd.f32 0.0, %v623
      %v625 = vpop.f32.mrf.mxu0
      %v626 = vadd.f32 0.0, %v625
      %627 = vmatmul.bf16.gmra.mxu0 %v535
      %v628 = vpop.f32.mrf.mxu0
      %v629 = vadd.f32 0.0, %v628
      %v630 = vpop.f32.mrf.mxu0
      %v631 = vadd.f32 0.0, %v630
      %632 = vmatmul.bf16.gmra.mxu0 %v536
      %v633 = vpop.f32.mrf.mxu0
      %v634 = vadd.f32 0.0, %v633
      %v635 = vpop.f32.mrf.mxu0
      %v636 = vadd.f32 0.0, %v635
      %637 = vmatmul.bf16.gmra.mxu0 %v537
      %v638 = vpop.f32.mrf.mxu0
      %v639 = vadd.f32 0.0, %v638
      %v640 = vpop.f32.mrf.mxu0
      %v641 = vadd.f32 0.0, %v640
      %642 = vmatmul.bf16.gmra.mxu0 %v538
      %v643 = vpop.f32.mrf.mxu0
      %v644 = vadd.f32 0.0, %v643
      %v645 = vpop.f32.mrf.mxu0
      %v646 = vadd.f32 0.0, %v645
      %647 = vmatmul.bf16.gmra.mxu0 %v539
      %v648 = vpop.f32.mrf.mxu0
      %v649 = vadd.f32 0.0, %v648
      %v650 = vpop.f32.mrf.mxu0
      %v651 = vadd.f32 0.0, %v650
      %652 = vmatmul.bf16.gmra.mxu0 %v540
      %v653 = vpop.f32.mrf.mxu0
      %v654 = vadd.f32 0.0, %v653
      %v655 = vpop.f32.mrf.mxu0
      %v656 = vadd.f32 0.0, %v655
      %657 = vmatmul.bf16.gmra.mxu0 %v541
      %v658 = vpop.f32.mrf.mxu0
      %v659 = vadd.f32 0.0, %v658
      %v660 = vpop.f32.mrf.mxu0
      %v661 = vadd.f32 0.0, %v660
      %662 = vmatmul.bf16.gmra.mxu0 %v542
      %v663 = vpop.f32.mrf.mxu0
      %v664 = vadd.f32 0.0, %v663
      %v665 = vpop.f32.mrf.mxu0
      %v666 = vadd.f32 0.0, %v665
      %667 = vmatmul.bf16.gmra.mxu0 %v543
      %v668 = vpop.f32.mrf.mxu0
      %v669 = vadd.f32 0.0, %v668
      %v670 = vpop.f32.mrf.mxu0
      %v671 = vadd.f32 0.0, %v670
      %672 = vmatmul.bf16.gmra.mxu0 %v544
      %v673 = vpop.f32.mrf.mxu0
      %v674 = vadd.f32 0.0, %v673
      %v675 = vpop.f32.mrf.mxu0
      %v676 = vadd.f32 0.0, %v675
      %677 = vmatmul.bf16.gmra.mxu0 %v545
      %v678 = vpop.f32.mrf.mxu0
      %v679 = vadd.f32 0.0, %v678
      %v680 = vpop.f32.mrf.mxu0
      %v681 = vadd.f32 0.0, %v680
      %682 = vmatmul.bf16.gmra.mxu0 %v546
      %v683 = vpop.f32.mrf.mxu0
      %v684 = vadd.f32 0.0, %v683
      %v685 = vpop.f32.mrf.mxu0
      %v686 = vadd.f32 0.0, %v685
      %687 = vmatmul.bf16.gmra.mxu0 %v547
      %v688 = vpop.f32.mrf.mxu0
      %v689 = vadd.f32 0.0, %v688
      %v690 = vpop.f32.mrf.mxu0
      %v691 = vadd.f32 0.0, %v690
      %692 = vmatmul.bf16.gmra.mxu0 %v548
      %v693 = vpop.f32.mrf.mxu0
      %v694 = vadd.f32 0.0, %v693
      %v695 = vpop.f32.mrf.mxu0
      %v696 = vadd.f32 0.0, %v695
      %697 = vmatmul.bf16.gmra.mxu0 %v549
      %v698 = vpop.f32.mrf.mxu0
      %v699 = vadd.f32 0.0, %v698
      %v700 = vpop.f32.mrf.mxu0
      %v701 = vadd.f32 0.0, %v700
      %702 = vdwg.mxu0
      %v703 = vadd.f32 %v422, %v624
      %v704 = vadd.f32 %v423, %v626
      %v705 = vadd.f32 %v424, %v629
      %v706 = vadd.f32 %v425, %v631
      %v707 = vadd.f32 %v426, %v634
      %v708 = vadd.f32 %v427, %v636
      %v709 = vadd.f32 %v428, %v639
      %v710 = vadd.f32 %v429, %v641
      %v711 = vadd.f32 %v430, %v644
      %v712 = vadd.f32 %v431, %v646
      %v713 = vadd.f32 %v432, %v649
      %v714 = vadd.f32 %v433, %v651
      %v715 = vadd.f32 %v434, %v654
      %v716 = vadd.f32 %v435, %v656
      %v717 = vadd.f32 %v436, %v659
      %v718 = vadd.f32 %v437, %v661
      %v719 = vadd.f32 %v438, %v664
      %v720 = vadd.f32 %v439, %v666
      %v721 = vadd.f32 %v440, %v669
      %v722 = vadd.f32 %v441, %v671
      %v723 = vadd.f32 %v442, %v674
      %v724 = vadd.f32 %v443, %v676
      %v725 = vadd.f32 %v444, %v679
      %v726 = vadd.f32 %v445, %v681
      %v727 = vadd.f32 %v446, %v684
      %v728 = vadd.f32 %v447, %v686
      %v729 = vadd.f32 %v448, %v689
      %v730 = vadd.f32 %v449, %v691
      %v731 = vadd.f32 %v450, %v694
      %v732 = vadd.f32 %v451, %v696
      %v733 = vadd.f32 %v452, %v699
      %v734 = vadd.f32 %v453, %v701
      %735 = vst [vmem:[#allocation2] sm:$0xff] %v703
      %736 = vst [vmem:[#allocation2 + $0x8] sm:$0xff] %v704
      %737 = vst [vmem:[#allocation2 + $0x10] sm:$0xff] %v705
      %738 = vst [vmem:[#allocation2 + $0x18] sm:$0xff] %v706
      %739 = vst [vmem:[#allocation2 + $0x20] sm:$0xff] %v707
      %740 = vst [vmem:[#allocation2 + $0x28] sm:$0xff] %v708
      %741 = vst [vmem:[#allocation2 + $0x30] sm:$0xff] %v709
      %742 = vst [vmem:[#allocation2 + $0x38] sm:$0xff] %v710
      %743 = vst [vmem:[#allocation2 + $0x40] sm:$0xff] %v711
      %744 = vst [vmem:[#allocation2 + $0x48] sm:$0xff] %v712
      %745 = vst [vmem:[#allocation2 + $0x50] sm:$0xff] %v713
      %746 = vst [vmem:[#allocation2 + $0x58] sm:$0xff] %v714
      %747 = vst [vmem:[#allocation2 + $0x60] sm:$0xff] %v715
      %748 = vst [vmem:[#allocation2 + $0x68] sm:$0xff] %v716
      %749 = vst [vmem:[#allocation2 + $0x70] sm:$0xff] %v717
      %750 = vst [vmem:[#allocation2 + $0x78] sm:$0xff] %v718
      %751 = vst [vmem:[#allocation2 + $0x80] sm:$0xff] %v719
      %752 = vst [vmem:[#allocation2 + $0x88] sm:$0xff] %v720
      %753 = vst [vmem:[#allocation2 + $0x90] sm:$0xff] %v721
      %754 = vst [vmem:[#allocation2 + $0x98] sm:$0xff] %v722
      %755 = vst [vmem:[#allocation2 + $0xa0] sm:$0xff] %v723
      %756 = vst [vmem:[#allocation2 + $0xa8] sm:$0xff] %v724
      %757 = vst [vmem:[#allocation2 + $0xb0] sm:$0xff] %v725
      %758 = vst [vmem:[#allocation2 + $0xb8] sm:$0xff] %v726
      %759 = vst [vmem:[#allocation2 + $0xc0] sm:$0xff] %v727
      %760 = vst [vmem:[#allocation2 + $0xc8] sm:$0xff] %v728
      %761 = vst [vmem:[#allocation2 + $0xd0] sm:$0xff] %v729
      %762 = vst [vmem:[#allocation2 + $0xd8] sm:$0xff] %v730
      %763 = vst [vmem:[#allocation2 + $0xe0] sm:$0xff] %v731
      %764 = vst [vmem:[#allocation2 + $0xe8] sm:$0xff] %v732
      %765 = vst [vmem:[#allocation2 + $0xf0] sm:$0xff] %v733
      %766 = vst [vmem:[#allocation2 + $0xf8] sm:$0xff] %v734
      %v767 = vld [vmem:[%s315 + $0x1] sm:$0xff]
      %v768 = vld [vmem:[%s315 + $0x9] sm:$0xff]
      %v769 = vld [vmem:[%s315 + $0x19] sm:$0xff]
      %v770 = vld [vmem:[%s315 + $0x21] sm:$0xff]
      %v771 = vld [vmem:[%s315 + $0x31] sm:$0xff]
      %v772 = vld [vmem:[%s315 + $0x39] sm:$0xff]
      %v773 = vld [vmem:[%s315 + $0x49] sm:$0xff]
      %v774 = vld [vmem:[%s315 + $0x51] sm:$0xff]
      %v775 = vld [vmem:[%s315 + $0x61] sm:$0xff]
      %v776 = vld [vmem:[%s315 + $0x69] sm:$0xff]
      %v777 = vld [vmem:[%s315 + $0x79] sm:$0xff]
      %v778 = vld [vmem:[%s315 + $0x81] sm:$0xff]
      %v779 = vld [vmem:[%s315 + $0x91] sm:$0xff]
      %v780 = vld [vmem:[%s315 + $0x99] sm:$0xff]
      %v781 = vld [vmem:[%s315 + $0xa9] sm:$0xff]
      %v782 = vld [vmem:[%s315 + $0xb1] sm:$0xff]
      %v783 = vld [vmem:[%s315 + $0xc1] sm:$0xff]
      %v784 = vld [vmem:[%s315 + $0xc9] sm:$0xff]
      %v785 = vld [vmem:[%s315 + $0xd9] sm:$0xff]
      %v786 = vld [vmem:[%s315 + $0xe1] sm:$0xff]
      %v787 = vld [vmem:[%s315 + $0xf1] sm:$0xff]
      %v788 = vld [vmem:[%s315 + $0xf9] sm:$0xff]
      %v789 = vld [vmem:[%s315 + $0x109] sm:$0xff]
      %v790 = vld [vmem:[%s315 + $0x111] sm:$0xff]
      %v791 = vld [vmem:[%s315 + $0x121] sm:$0xff]
      %v792 = vld [vmem:[%s315 + $0x129] sm:$0xff]
      %v793 = vld [vmem:[%s315 + $0x139] sm:$0xff]
      %v794 = vld [vmem:[%s315 + $0x141] sm:$0xff]
      %v795 = vld [vmem:[%s315 + $0x151] sm:$0xff]
      %v796 = vld [vmem:[%s315 + $0x159] sm:$0xff]
      %v797 = vld [vmem:[%s315 + $0x169] sm:$0xff]
      %v798 = vld [vmem:[%s315 + $0x171] sm:$0xff]
      %v799 = vpack.c.bf16 %v767, %v767
      %v800 = vpack.c.bf16 %v768, %v768
      %v801 = vpack.c.bf16 %v769, %v769
      %v802 = vpack.c.bf16 %v770, %v770
      %v803 = vpack.c.bf16 %v771, %v771
      %v804 = vpack.c.bf16 %v772, %v772
      %v805 = vpack.c.bf16 %v773, %v773
      %v806 = vpack.c.bf16 %v774, %v774
      %v807 = vpack.c.bf16 %v775, %v775
      %v808 = vpack.c.bf16 %v776, %v776
      %v809 = vpack.c.bf16 %v777, %v777
      %v810 = vpack.c.bf16 %v778, %v778
      %v811 = vpack.c.bf16 %v779, %v779
      %v812 = vpack.c.bf16 %v780, %v780
      %v813 = vpack.c.bf16 %v781, %v781
      %v814 = vpack.c.bf16 %v782, %v782
      %v815 = vpack.c.bf16 %v783, %v783
      %v816 = vpack.c.bf16 %v784, %v784
      %v817 = vpack.c.bf16 %v785, %v785
      %v818 = vpack.c.bf16 %v786, %v786
      %v819 = vpack.c.bf16 %v787, %v787
      %v820 = vpack.c.bf16 %v788, %v788
      %v821 = vpack.c.bf16 %v789, %v789
      %v822 = vpack.c.bf16 %v790, %v790
      %v823 = vpack.c.bf16 %v791, %v791
      %v824 = vpack.c.bf16 %v792, %v792
      %v825 = vpack.c.bf16 %v793, %v793
      %v826 = vpack.c.bf16 %v794, %v794
      %v827 = vpack.c.bf16 %v795, %v795
      %v828 = vpack.c.bf16 %v796, %v796
      %v829 = vpack.c.bf16 %v797, %v797
      %v830 = vpack.c.bf16 %v798, %v798
      %v831 = vld [vmem:[#allocation2] sm:$0xff]
      %v832 = vld [vmem:[#allocation2 + $0x8] sm:$0xff]
      %v833 = vld [vmem:[#allocation2 + $0x10] sm:$0xff]
      %v834 = vld [vmem:[#allocation2 + $0x18] sm:$0xff]
      %v835 = vld [vmem:[#allocation2 + $0x20] sm:$0xff]
      %v836 = vld [vmem:[#allocation2 + $0x28] sm:$0xff]
      %v837 = vld [vmem:[#allocation2 + $0x30] sm:$0xff]
      %v838 = vld [vmem:[#allocation2 + $0x38] sm:$0xff]
      %v839 = vld [vmem:[#allocation2 + $0x40] sm:$0xff]
      %v840 = vld [vmem:[#allocation2 + $0x48] sm:$0xff]
      %v841 = vld [vmem:[#allocation2 + $0x50] sm:$0xff]
      %v842 = vld [vmem:[#allocation2 + $0x58] sm:$0xff]
      %v843 = vld [vmem:[#allocation2 + $0x60] sm:$0xff]
      %v844 = vld [vmem:[#allocation2 + $0x68] sm:$0xff]
      %v845 = vld [vmem:[#allocation2 + $0x70] sm:$0xff]
      %v846 = vld [vmem:[#allocation2 + $0x78] sm:$0xff]
      %v847 = vld [vmem:[#allocation2 + $0x80] sm:$0xff]
      %v848 = vld [vmem:[#allocation2 + $0x88] sm:$0xff]
      %v849 = vld [vmem:[#allocation2 + $0x90] sm:$0xff]
      %v850 = vld [vmem:[#allocation2 + $0x98] sm:$0xff]
      %v851 = vld [vmem:[#allocation2 + $0xa0] sm:$0xff]
      %v852 = vld [vmem:[#allocation2 + $0xa8] sm:$0xff]
      %v853 = vld [vmem:[#allocation2 + $0xb0] sm:$0xff]
      %v854 = vld [vmem:[#allocation2 + $0xb8] sm:$0xff]
      %v855 = vld [vmem:[#allocation2 + $0xc0] sm:$0xff]
      %v856 = vld [vmem:[#allocation2 + $0xc8] sm:$0xff]
      %v857 = vld [vmem:[#allocation2 + $0xd0] sm:$0xff]
      %v858 = vld [vmem:[#allocation2 + $0xd8] sm:$0xff]
      %v859 = vld [vmem:[#allocation2 + $0xe0] sm:$0xff]
      %v860 = vld [vmem:[#allocation2 + $0xe8] sm:$0xff]
      %v861 = vld [vmem:[#allocation2 + $0xf0] sm:$0xff]
      %v862 = vld [vmem:[#allocation2 + $0xf8] sm:$0xff]
      %s863 = scalar_lea.vmem %s2, 64
      %v864 = vld [vmem:[%s863] sm:$0xf]
      %v865 = vld [vmem:[%s863 + $0x4] sm:$0xf]
      %v866 = vld [vmem:[%s863 + $0x8] sm:$0xf]
      %v867 = vld [vmem:[%s863 + $0xc] sm:$0xf]
      %v868 = vld [vmem:[%s863 + $0x10] sm:$0xf]
      %v869 = vld [vmem:[%s863 + $0x14] sm:$0xf]
      %v870 = vld [vmem:[%s863 + $0x18] sm:$0xf]
      %v871 = vld [vmem:[%s863 + $0x1c] sm:$0xf]
      %v872 = vld [vmem:[%s863 + $0x20] sm:$0xf]
      %v873 = vld [vmem:[%s863 + $0x24] sm:$0xf]
      %v874 = vld [vmem:[%s863 + $0x28] sm:$0xf]
      %v875 = vld [vmem:[%s863 + $0x2c] sm:$0xf]
      %v876 = vld [vmem:[%s863 + $0x30] sm:$0xf]
      %v877 = vld [vmem:[%s863 + $0x34] sm:$0xf]
      %v878 = vld [vmem:[%s863 + $0x38] sm:$0xf]
      %v879 = vld [vmem:[%s863 + $0x3c] sm:$0xf]
      %v912 = vunpack.c.l.b16 %v799
      %v913 = vunpack.c.l.b16 %v800
      %v914 = vunpack.c.l.b16 %v801
      %v915 = vunpack.c.l.b16 %v802
      %v916 = vunpack.c.l.b16 %v803
      %v917 = vunpack.c.l.b16 %v804
      %v918 = vunpack.c.l.b16 %v805
      %v919 = vunpack.c.l.b16 %v806
      %v920 = vunpack.c.l.b16 %v807
      %v921 = vunpack.c.l.b16 %v808
      %v922 = vunpack.c.l.b16 %v809
      %v923 = vunpack.c.l.b16 %v810
      %v924 = vunpack.c.l.b16 %v811
      %v925 = vunpack.c.l.b16 %v812
      %v926 = vunpack.c.l.b16 %v813
      %v927 = vunpack.c.l.b16 %v814
      %v928 = vunpack.c.l.b16 %v815
      %v929 = vunpack.c.l.b16 %v816
      %v930 = vunpack.c.l.b16 %v817
      %v931 = vunpack.c.l.b16 %v818
      %v932 = vunpack.c.l.b16 %v819
      %v933 = vunpack.c.l.b16 %v820
      %v934 = vunpack.c.l.b16 %v821
      %v935 = vunpack.c.l.b16 %v822
      %v936 = vunpack.c.l.b16 %v823
      %v937 = vunpack.c.l.b16 %v824
      %v938 = vunpack.c.l.b16 %v825
      %v939 = vunpack.c.l.b16 %v826
      %v940 = vunpack.c.l.b16 %v827
      %v941 = vunpack.c.l.b16 %v828
      %v942 = vunpack.c.l.b16 %v829
      %v943 = vunpack.c.l.b16 %v830
      %v944 = vpack.c.b16 %v913, %v912
      %v945 = vpack.c.b16 %v915, %v914
      %v946 = vpack.c.b16 %v917, %v916
      %v947 = vpack.c.b16 %v919, %v918
      %v948 = vpack.c.b16 %v921, %v920
      %v949 = vpack.c.b16 %v923, %v922
      %v950 = vpack.c.b16 %v925, %v924
      %v951 = vpack.c.b16 %v927, %v926
      %v952 = vpack.c.b16 %v929, %v928
      %v953 = vpack.c.b16 %v931, %v930
      %v954 = vpack.c.b16 %v933, %v932
      %v955 = vpack.c.b16 %v935, %v934
      %v956 = vpack.c.b16 %v937, %v936
      %v957 = vpack.c.b16 %v939, %v938
      %v958 = vpack.c.b16 %v941, %v940
      %v959 = vpack.c.b16 %v943, %v942
      %v992 = vunpack.c.l.b16 %v864
      %v993 = vunpack.c.l.b16 %v865
      %v994 = vunpack.c.l.b16 %v866
      %v995 = vunpack.c.l.b16 %v867
      %v996 = vunpack.c.l.b16 %v868
      %v997 = vunpack.c.l.b16 %v869
      %v998 = vunpack.c.l.b16 %v870
      %v999 = vunpack.c.l.b16 %v871
      %v1000 = vunpack.c.l.b16 %v872
      %v1001 = vunpack.c.l.b16 %v873
      %v1002 = vunpack.c.l.b16 %v874
      %v1003 = vunpack.c.l.b16 %v875
      %v1004 = vunpack.c.l.b16 %v876
      %v1005 = vunpack.c.l.b16 %v877
      %v1006 = vunpack.c.l.b16 %v878
      %v1007 = vunpack.c.l.b16 %v879
      %v1008 = vpack.c.b16 %v993, %v992
      %v1009 = vpack.c.b16 %v995, %v994
      %v1010 = vpack.c.b16 %v997, %v996
      %v1011 = vpack.c.b16 %v999, %v998
      %v1012 = vpack.c.b16 %v1001, %v1000
      %v1013 = vpack.c.b16 %v1003, %v1002
      %v1014 = vpack.c.b16 %v1005, %v1004
      %v1015 = vpack.c.b16 %v1007, %v1006
      %1024 = vmatpush.bf16.msra.mxu0 %v1015
      %1025 = vmatpush.bf16.msra.mxu0 %v1014
      %1026 = vmatpush.bf16.msra.mxu0 %v1013
      %1027 = vmatpush.bf16.msra.mxu0 %v1012
      %1028 = vmatpush.bf16.msra.mxu0 %v1011
      %1029 = vmatpush.bf16.msra.mxu0 %v1010
      %1030 = vmatpush.bf16.msra.mxu0 %v1009
      %1031 = vmatpush.bf16.msra.mxu0 %v1008
      %1032 = vmatmul.bf16.gmra.mxu0 %v944
      %v1033 = vpop.f32.mrf.mxu0
      %v1034 = vadd.f32 0.0, %v1033
      %v1035 = vpop.f32.mrf.mxu0
      %v1036 = vadd.f32 0.0, %v1035
      %1037 = vmatmul.bf16.gmra.mxu0 %v945
      %v1038 = vpop.f32.mrf.mxu0
      %v1039 = vadd.f32 0.0, %v1038
      %v1040 = vpop.f32.mrf.mxu0
      %v1041 = vadd.f32 0.0, %v1040
      %1042 = vmatmul.bf16.gmra.mxu0 %v946
      %v1043 = vpop.f32.mrf.mxu0
      %v1044 = vadd.f32 0.0, %v1043
      %v1045 = vpop.f32.mrf.mxu0
      %v1046 = vadd.f32 0.0, %v1045
      %1047 = vmatmul.bf16.gmra.mxu0 %v947
      %v1048 = vpop.f32.mrf.mxu0
      %v1049 = vadd.f32 0.0, %v1048
      %v1050 = vpop.f32.mrf.mxu0
      %v1051 = vadd.f32 0.0, %v1050
      %1052 = vmatmul.bf16.gmra.mxu0 %v948
      %v1053 = vpop.f32.mrf.mxu0
      %v1054 = vadd.f32 0.0, %v1053
      %v1055 = vpop.f32.mrf.mxu0
      %v1056 = vadd.f32 0.0, %v1055
      %1057 = vmatmul.bf16.gmra.mxu0 %v949
      %v1058 = vpop.f32.mrf.mxu0
      %v1059 = vadd.f32 0.0, %v1058
      %v1060 = vpop.f32.mrf.mxu0
      %v1061 = vadd.f32 0.0, %v1060
      %1062 = vmatmul.bf16.gmra.mxu0 %v950
      %v1063 = vpop.f32.mrf.mxu0
      %v1064 = vadd.f32 0.0, %v1063
      %v1065 = vpop.f32.mrf.mxu0
      %v1066 = vadd.f32 0.0, %v1065
      %1067 = vmatmul.bf16.gmra.mxu0 %v951
      %v1068 = vpop.f32.mrf.mxu0
      %v1069 = vadd.f32 0.0, %v1068
      %v1070 = vpop.f32.mrf.mxu0
      %v1071 = vadd.f32 0.0, %v1070
      %1072 = vmatmul.bf16.gmra.mxu0 %v952
      %v1073 = vpop.f32.mrf.mxu0
      %v1074 = vadd.f32 0.0, %v1073
      %v1075 = vpop.f32.mrf.mxu0
      %v1076 = vadd.f32 0.0, %v1075
      %1077 = vmatmul.bf16.gmra.mxu0 %v953
      %v1078 = vpop.f32.mrf.mxu0
      %v1079 = vadd.f32 0.0, %v1078
      %v1080 = vpop.f32.mrf.mxu0
      %v1081 = vadd.f32 0.0, %v1080
      %1082 = vmatmul.bf16.gmra.mxu0 %v954
      %v1083 = vpop.f32.mrf.mxu0
      %v1084 = vadd.f32 0.0, %v1083
      %v1085 = vpop.f32.mrf.mxu0
      %v1086 = vadd.f32 0.0, %v1085
      %1087 = vmatmul.bf16.gmra.mxu0 %v955
      %v1088 = vpop.f32.mrf.mxu0
      %v1089 = vadd.f32 0.0, %v1088
      %v1090 = vpop.f32.mrf.mxu0
      %v1091 = vadd.f32 0.0, %v1090
      %1092 = vmatmul.bf16.gmra.mxu0 %v956
      %v1093 = vpop.f32.mrf.mxu0
      %v1094 = vadd.f32 0.0, %v1093
      %v1095 = vpop.f32.mrf.mxu0
      %v1096 = vadd.f32 0.0, %v1095
      %1097 = vmatmul.bf16.gmra.mxu0 %v957
      %v1098 = vpop.f32.mrf.mxu0
      %v1099 = vadd.f32 0.0, %v1098
      %v1100 = vpop.f32.mrf.mxu0
      %v1101 = vadd.f32 0.0, %v1100
      %1102 = vmatmul.bf16.gmra.mxu0 %v958
      %v1103 = vpop.f32.mrf.mxu0
      %v1104 = vadd.f32 0.0, %v1103
      %v1105 = vpop.f32.mrf.mxu0
      %v1106 = vadd.f32 0.0, %v1105
      %1107 = vmatmul.bf16.gmra.mxu0 %v959
      %v1108 = vpop.f32.mrf.mxu0
      %v1109 = vadd.f32 0.0, %v1108
      %v1110 = vpop.f32.mrf.mxu0
      %v1111 = vadd.f32 0.0, %v1110
      %1112 = vdwg.mxu0
      %v1113 = vadd.f32 %v831, %v1034
      %v1114 = vadd.f32 %v832, %v1036
      %v1115 = vadd.f32 %v833, %v1039
      %v1116 = vadd.f32 %v834, %v1041
      %v1117 = vadd.f32 %v835, %v1044
      %v1118 = vadd.f32 %v836, %v1046
      %v1119 = vadd.f32 %v837, %v1049
      %v1120 = vadd.f32 %v838, %v1051
      %v1121 = vadd.f32 %v839, %v1054
      %v1122 = vadd.f32 %v840, %v1056
      %v1123 = vadd.f32 %v841, %v1059
      %v1124 = vadd.f32 %v842, %v1061
      %v1125 = vadd.f32 %v843, %v1064
      %v1126 = vadd.f32 %v844, %v1066
      %v1127 = vadd.f32 %v845, %v1069
      %v1128 = vadd.f32 %v846, %v1071
      %v1129 = vadd.f32 %v847, %v1074
      %v1130 = vadd.f32 %v848, %v1076
      %v1131 = vadd.f32 %v849, %v1079
      %v1132 = vadd.f32 %v850, %v1081
      %v1133 = vadd.f32 %v851, %v1084
      %v1134 = vadd.f32 %v852, %v1086
      %v1135 = vadd.f32 %v853, %v1089
      %v1136 = vadd.f32 %v854, %v1091
      %v1137 = vadd.f32 %v855, %v1094
      %v1138 = vadd.f32 %v856, %v1096
      %v1139 = vadd.f32 %v857, %v1099
      %v1140 = vadd.f32 %v858, %v1101
      %v1141 = vadd.f32 %v859, %v1104
      %v1142 = vadd.f32 %v860, %v1106
      %v1143 = vadd.f32 %v861, %v1109
      %v1144 = vadd.f32 %v862, %v1111
      %1145 = vst [vmem:[#allocation2] sm:$0xff] %v1113
      %1146 = vst [vmem:[#allocation2 + $0x8] sm:$0xff] %v1114
      %1147 = vst [vmem:[#allocation2 + $0x10] sm:$0xff] %v1115
      %1148 = vst [vmem:[#allocation2 + $0x18] sm:$0xff] %v1116
      %1149 = vst [vmem:[#allocation2 + $0x20] sm:$0xff] %v1117
      %1150 = vst [vmem:[#allocation2 + $0x28] sm:$0xff] %v1118
      %1151 = vst [vmem:[#allocation2 + $0x30] sm:$0xff] %v1119
      %1152 = vst [vmem:[#allocation2 + $0x38] sm:$0xff] %v1120
      %1153 = vst [vmem:[#allocation2 + $0x40] sm:$0xff] %v1121
      %1154 = vst [vmem:[#allocation2 + $0x48] sm:$0xff] %v1122
      %1155 = vst [vmem:[#allocation2 + $0x50] sm:$0xff] %v1123
      %1156 = vst [vmem:[#allocation2 + $0x58] sm:$0xff] %v1124
      %1157 = vst [vmem:[#allocation2 + $0x60] sm:$0xff] %v1125
      %1158 = vst [vmem:[#allocation2 + $0x68] sm:$0xff] %v1126
      %1159 = vst [vmem:[#allocation2 + $0x70] sm:$0xff] %v1127
      %1160 = vst [vmem:[#allocation2 + $0x78] sm:$0xff] %v1128
      %1161 = vst [vmem:[#allocation2 + $0x80] sm:$0xff] %v1129
      %1162 = vst [vmem:[#allocation2 + $0x88] sm:$0xff] %v1130
      %1163 = vst [vmem:[#allocation2 + $0x90] sm:$0xff] %v1131
      %1164 = vst [vmem:[#allocation2 + $0x98] sm:$0xff] %v1132
      %1165 = vst [vmem:[#allocation2 + $0xa0] sm:$0xff] %v1133
      %1166 = vst [vmem:[#allocation2 + $0xa8] sm:$0xff] %v1134
      %1167 = vst [vmem:[#allocation2 + $0xb0] sm:$0xff] %v1135
      %1168 = vst [vmem:[#allocation2 + $0xb8] sm:$0xff] %v1136
      %1169 = vst [vmem:[#allocation2 + $0xc0] sm:$0xff] %v1137
      %1170 = vst [vmem:[#allocation2 + $0xc8] sm:$0xff] %v1138
      %1171 = vst [vmem:[#allocation2 + $0xd0] sm:$0xff] %v1139
      %1172 = vst [vmem:[#allocation2 + $0xd8] sm:$0xff] %v1140
      %1173 = vst [vmem:[#allocation2 + $0xe0] sm:$0xff] %v1141
      %1174 = vst [vmem:[#allocation2 + $0xe8] sm:$0xff] %v1142
      %1175 = vst [vmem:[#allocation2 + $0xf0] sm:$0xff] %v1143
      %1176 = vst [vmem:[#allocation2 + $0xf8] sm:$0xff] %v1144
      %v1177 = vld [vmem:[%s315 + $0x2] sm:$0xff]
      %v1178 = vld [vmem:[%s315 + $0xa] sm:$0xff]
      %v1179 = vld [vmem:[%s315 + $0x1a] sm:$0xff]
      %v1180 = vld [vmem:[%s315 + $0x22] sm:$0xff]
      %v1181 = vld [vmem:[%s315 + $0x32] sm:$0xff]
      %v1182 = vld [vmem:[%s315 + $0x3a] sm:$0xff]
      %v1183 = vld [vmem:[%s315 + $0x4a] sm:$0xff]
      %v1184 = vld [vmem:[%s315 + $0x52] sm:$0xff]
      %v1185 = vld [vmem:[%s315 + $0x62] sm:$0xff]
      %v1186 = vld [vmem:[%s315 + $0x6a] sm:$0xff]
      %v1187 = vld [vmem:[%s315 + $0x7a] sm:$0xff]
      %v1188 = vld [vmem:[%s315 + $0x82] sm:$0xff]
      %v1189 = vld [vmem:[%s315 + $0x92] sm:$0xff]
      %v1190 = vld [vmem:[%s315 + $0x9a] sm:$0xff]
      %v1191 = vld [vmem:[%s315 + $0xaa] sm:$0xff]
      %v1192 = vld [vmem:[%s315 + $0xb2] sm:$0xff]
      %v1193 = vld [vmem:[%s315 + $0xc2] sm:$0xff]
      %v1194 = vld [vmem:[%s315 + $0xca] sm:$0xff]
      %v1195 = vld [vmem:[%s315 + $0xda] sm:$0xff]
      %v1196 = vld [vmem:[%s315 + $0xe2] sm:$0xff]
      %v1197 = vld [vmem:[%s315 + $0xf2] sm:$0xff]
      %v1198 = vld [vmem:[%s315 + $0xfa] sm:$0xff]
      %v1199 = vld [vmem:[%s315 + $0x10a] sm:$0xff]
      %v1200 = vld [vmem:[%s315 + $0x112] sm:$0xff]
      %v1201 = vld [vmem:[%s315 + $0x122] sm:$0xff]
      %v1202 = vld [vmem:[%s315 + $0x12a] sm:$0xff]
      %v1203 = vld [vmem:[%s315 + $0x13a] sm:$0xff]
      %v1204 = vld [vmem:[%s315 + $0x142] sm:$0xff]
      %v1205 = vld [vmem:[%s315 + $0x152] sm:$0xff]
      %v1206 = vld [vmem:[%s315 + $0x15a] sm:$0xff]
      %v1207 = vld [vmem:[%s315 + $0x16a] sm:$0xff]
      %v1208 = vld [vmem:[%s315 + $0x172] sm:$0xff]
      %v1209 = vpack.c.bf16 %v1177, %v1177
      %v1210 = vpack.c.bf16 %v1178, %v1178
      %v1211 = vpack.c.bf16 %v1179, %v1179
      %v1212 = vpack.c.bf16 %v1180, %v1180
      %v1213 = vpack.c.bf16 %v1181, %v1181
      %v1214 = vpack.c.bf16 %v1182, %v1182
      %v1215 = vpack.c.bf16 %v1183, %v1183
      %v1216 = vpack.c.bf16 %v1184, %v1184
      %v1217 = vpack.c.bf16 %v1185, %v1185
      %v1218 = vpack.c.bf16 %v1186, %v1186
      %v1219 = vpack.c.bf16 %v1187, %v1187
      %v1220 = vpack.c.bf16 %v1188, %v1188
      %v1221 = vpack.c.bf16 %v1189, %v1189
      %v1222 = vpack.c.bf16 %v1190, %v1190
      %v1223 = vpack.c.bf16 %v1191, %v1191
      %v1224 = vpack.c.bf16 %v1192, %v1192
      %v1225 = vpack.c.bf16 %v1193, %v1193
      %v1226 = vpack.c.bf16 %v1194, %v1194
      %v1227 = vpack.c.bf16 %v1195, %v1195
      %v1228 = vpack.c.bf16 %v1196, %v1196
      %v1229 = vpack.c.bf16 %v1197, %v1197
      %v1230 = vpack.c.bf16 %v1198, %v1198
      %v1231 = vpack.c.bf16 %v1199, %v1199
      %v1232 = vpack.c.bf16 %v1200, %v1200
      %v1233 = vpack.c.bf16 %v1201, %v1201
      %v1234 = vpack.c.bf16 %v1202, %v1202
      %v1235 = vpack.c.bf16 %v1203, %v1203
      %v1236 = vpack.c.bf16 %v1204, %v1204
      %v1237 = vpack.c.bf16 %v1205, %v1205
      %v1238 = vpack.c.bf16 %v1206, %v1206
      %v1239 = vpack.c.bf16 %v1207, %v1207
      %v1240 = vpack.c.bf16 %v1208, %v1208
      %v1241 = vld [vmem:[#allocation2] sm:$0xff]
      %v1242 = vld [vmem:[#allocation2 + $0x8] sm:$0xff]
      %v1243 = vld [vmem:[#allocation2 + $0x10] sm:$0xff]
      %v1244 = vld [vmem:[#allocation2 + $0x18] sm:$0xff]
      %v1245 = vld [vmem:[#allocation2 + $0x20] sm:$0xff]
      %v1246 = vld [vmem:[#allocation2 + $0x28] sm:$0xff]
      %v1247 = vld [vmem:[#allocation2 + $0x30] sm:$0xff]
      %v1248 = vld [vmem:[#allocation2 + $0x38] sm:$0xff]
      %v1249 = vld [vmem:[#allocation2 + $0x40] sm:$0xff]
      %v1250 = vld [vmem:[#allocation2 + $0x48] sm:$0xff]
      %v1251 = vld [vmem:[#allocation2 + $0x50] sm:$0xff]
      %v1252 = vld [vmem:[#allocation2 + $0x58] sm:$0xff]
      %v1253 = vld [vmem:[#allocation2 + $0x60] sm:$0xff]
      %v1254 = vld [vmem:[#allocation2 + $0x68] sm:$0xff]
      %v1255 = vld [vmem:[#allocation2 + $0x70] sm:$0xff]
      %v1256 = vld [vmem:[#allocation2 + $0x78] sm:$0xff]
      %v1257 = vld [vmem:[#allocation2 + $0x80] sm:$0xff]
      %v1258 = vld [vmem:[#allocation2 + $0x88] sm:$0xff]
      %v1259 = vld [vmem:[#allocation2 + $0x90] sm:$0xff]
      %v1260 = vld [vmem:[#allocation2 + $0x98] sm:$0xff]
      %v1261 = vld [vmem:[#allocation2 + $0xa0] sm:$0xff]
      %v1262 = vld [vmem:[#allocation2 + $0xa8] sm:$0xff]
      %v1263 = vld [vmem:[#allocation2 + $0xb0] sm:$0xff]
      %v1264 = vld [vmem:[#allocation2 + $0xb8] sm:$0xff]
      %v1265 = vld [vmem:[#allocation2 + $0xc0] sm:$0xff]
      %v1266 = vld [vmem:[#allocation2 + $0xc8] sm:$0xff]
      %v1267 = vld [vmem:[#allocation2 + $0xd0] sm:$0xff]
      %v1268 = vld [vmem:[#allocation2 + $0xd8] sm:$0xff]
      %v1269 = vld [vmem:[#allocation2 + $0xe0] sm:$0xff]
      %v1270 = vld [vmem:[#allocation2 + $0xe8] sm:$0xff]
      %v1271 = vld [vmem:[#allocation2 + $0xf0] sm:$0xff]
      %v1272 = vld [vmem:[#allocation2 + $0xf8] sm:$0xff]
      %s1273 = scalar_lea.vmem %s2, 128
      %v1274 = vld [vmem:[%s1273] sm:$0xf]
      %v1275 = vld [vmem:[%s1273 + $0x4] sm:$0xf]
      %v1276 = vld [vmem:[%s1273 + $0x8] sm:$0xf]
      %v1277 = vld [vmem:[%s1273 + $0xc] sm:$0xf]
      %v1278 = vld [vmem:[%s1273 + $0x10] sm:$0xf]
      %v1279 = vld [vmem:[%s1273 + $0x14] sm:$0xf]
      %v1280 = vld [vmem:[%s1273 + $0x18] sm:$0xf]
      %v1281 = vld [vmem:[%s1273 + $0x1c] sm:$0xf]
      %v1282 = vld [vmem:[%s1273 + $0x20] sm:$0xf]
      %v1283 = vld [vmem:[%s1273 + $0x24] sm:$0xf]
      %v1284 = vld [vmem:[%s1273 + $0x28] sm:$0xf]
      %v1285 = vld [vmem:[%s1273 + $0x2c] sm:$0xf]
      %v1286 = vld [vmem:[%s1273 + $0x30] sm:$0xf]
      %v1287 = vld [vmem:[%s1273 + $0x34] sm:$0xf]
      %v1288 = vld [vmem:[%s1273 + $0x38] sm:$0xf]
      %v1289 = vld [vmem:[%s1273 + $0x3c] sm:$0xf]
      %v1322 = vunpack.c.l.b16 %v1209
      %v1323 = vunpack.c.l.b16 %v1210
      %v1324 = vunpack.c.l.b16 %v1211
      %v1325 = vunpack.c.l.b16 %v1212
      %v1326 = vunpack.c.l.b16 %v1213
      %v1327 = vunpack.c.l.b16 %v1214
      %v1328 = vunpack.c.l.b16 %v1215
      %v1329 = vunpack.c.l.b16 %v1216
      %v1330 = vunpack.c.l.b16 %v1217
      %v1331 = vunpack.c.l.b16 %v1218
      %v1332 = vunpack.c.l.b16 %v1219
      %v1333 = vunpack.c.l.b16 %v1220
      %v1334 = vunpack.c.l.b16 %v1221
      %v1335 = vunpack.c.l.b16 %v1222
      %v1336 = vunpack.c.l.b16 %v1223
      %v1337 = vunpack.c.l.b16 %v1224
      %v1338 = vunpack.c.l.b16 %v1225
      %v1339 = vunpack.c.l.b16 %v1226
      %v1340 = vunpack.c.l.b16 %v1227
      %v1341 = vunpack.c.l.b16 %v1228
      %v1342 = vunpack.c.l.b16 %v1229
      %v1343 = vunpack.c.l.b16 %v1230
      %v1344 = vunpack.c.l.b16 %v1231
      %v1345 = vunpack.c.l.b16 %v1232
      %v1346 = vunpack.c.l.b16 %v1233
      %v1347 = vunpack.c.l.b16 %v1234
      %v1348 = vunpack.c.l.b16 %v1235
      %v1349 = vunpack.c.l.b16 %v1236
      %v1350 = vunpack.c.l.b16 %v1237
      %v1351 = vunpack.c.l.b16 %v1238
      %v1352 = vunpack.c.l.b16 %v1239
      %v1353 = vunpack.c.l.b16 %v1240
      %v1354 = vpack.c.b16 %v1323, %v1322
      %v1355 = vpack.c.b16 %v1325, %v1324
      %v1356 = vpack.c.b16 %v1327, %v1326
      %v1357 = vpack.c.b16 %v1329, %v1328
      %v1358 = vpack.c.b16 %v1331, %v1330
      %v1359 = vpack.c.b16 %v1333, %v1332
      %v1360 = vpack.c.b16 %v1335, %v1334
      %v1361 = vpack.c.b16 %v1337, %v1336
      %v1362 = vpack.c.b16 %v1339, %v1338
      %v1363 = vpack.c.b16 %v1341, %v1340
      %v1364 = vpack.c.b16 %v1343, %v1342
      %v1365 = vpack.c.b16 %v1345, %v1344
      %v1366 = vpack.c.b16 %v1347, %v1346
      %v1367 = vpack.c.b16 %v1349, %v1348
      %v1368 = vpack.c.b16 %v1351, %v1350
      %v1369 = vpack.c.b16 %v1353, %v1352
      %v1402 = vunpack.c.l.b16 %v1274
      %v1403 = vunpack.c.l.b16 %v1275
      %v1404 = vunpack.c.l.b16 %v1276
      %v1405 = vunpack.c.l.b16 %v1277
      %v1406 = vunpack.c.l.b16 %v1278
      %v1407 = vunpack.c.l.b16 %v1279
      %v1408 = vunpack.c.l.b16 %v1280
      %v1409 = vunpack.c.l.b16 %v1281
      %v1410 = vunpack.c.l.b16 %v1282
      %v1411 = vunpack.c.l.b16 %v1283
      %v1412 = vunpack.c.l.b16 %v1284
      %v1413 = vunpack.c.l.b16 %v1285
      %v1414 = vunpack.c.l.b16 %v1286
      %v1415 = vunpack.c.l.b16 %v1287
      %v1416 = vunpack.c.l.b16 %v1288
      %v1417 = vunpack.c.l.b16 %v1289
      %v1418 = vpack.c.b16 %v1403, %v1402
      %v1419 = vpack.c.b16 %v1405, %v1404
      %v1420 = vpack.c.b16 %v1407, %v1406
      %v1421 = vpack.c.b16 %v1409, %v1408
      %v1422 = vpack.c.b16 %v1411, %v1410
      %v1423 = vpack.c.b16 %v1413, %v1412
      %v1424 = vpack.c.b16 %v1415, %v1414
      %v1425 = vpack.c.b16 %v1417, %v1416
      %1434 = vmatpush.bf16.msra.mxu0 %v1425
      %1435 = vmatpush.bf16.msra.mxu0 %v1424
      %1436 = vmatpush.bf16.msra.mxu0 %v1423
      %1437 = vmatpush.bf16.msra.mxu0 %v1422
      %1438 = vmatpush.bf16.msra.mxu0 %v1421
      %1439 = vmatpush.bf16.msra.mxu0 %v1420
      %1440 = vmatpush.bf16.msra.mxu0 %v1419
      %1441 = vmatpush.bf16.msra.mxu0 %v1418
      %1442 = vmatmul.bf16.gmra.mxu0 %v1354
      %v1443 = vpop.f32.mrf.mxu0
      %v1444 = vadd.f32 0.0, %v1443
      %v1445 = vpop.f32.mrf.mxu0
      %v1446 = vadd.f32 0.0, %v1445
      %1447 = vmatmul.bf16.gmra.mxu0 %v1355
      %v1448 = vpop.f32.mrf.mxu0
      %v1449 = vadd.f32 0.0, %v1448
      %v1450 = vpop.f32.mrf.mxu0
      %v1451 = vadd.f32 0.0, %v1450
      %1452 = vmatmul.bf16.gmra.mxu0 %v1356
      %v1453 = vpop.f32.mrf.mxu0
      %v1454 = vadd.f32 0.0, %v1453
      %v1455 = vpop.f32.mrf.mxu0
      %v1456 = vadd.f32 0.0, %v1455
      %1457 = vmatmul.bf16.gmra.mxu0 %v1357
      %v1458 = vpop.f32.mrf.mxu0
      %v1459 = vadd.f32 0.0, %v1458
      %v1460 = vpop.f32.mrf.mxu0
      %v1461 = vadd.f32 0.0, %v1460
      %1462 = vmatmul.bf16.gmra.mxu0 %v1358
      %v1463 = vpop.f32.mrf.mxu0
      %v1464 = vadd.f32 0.0, %v1463
      %v1465 = vpop.f32.mrf.mxu0
      %v1466 = vadd.f32 0.0, %v1465
      %1467 = vmatmul.bf16.gmra.mxu0 %v1359
      %v1468 = vpop.f32.mrf.mxu0
      %v1469 = vadd.f32 0.0, %v1468
      %v1470 = vpop.f32.mrf.mxu0
      %v1471 = vadd.f32 0.0, %v1470
      %1472 = vmatmul.bf16.gmra.mxu0 %v1360
      %v1473 = vpop.f32.mrf.mxu0
      %v1474 = vadd.f32 0.0, %v1473
      %v1475 = vpop.f32.mrf.mxu0
      %v1476 = vadd.f32 0.0, %v1475
      %1477 = vmatmul.bf16.gmra.mxu0 %v1361
      %v1478 = vpop.f32.mrf.mxu0
      %v1479 = vadd.f32 0.0, %v1478
      %v1480 = vpop.f32.mrf.mxu0
      %v1481 = vadd.f32 0.0, %v1480
      %1482 = vmatmul.bf16.gmra.mxu0 %v1362
      %v1483 = vpop.f32.mrf.mxu0
      %v1484 = vadd.f32 0.0, %v1483
      %v1485 = vpop.f32.mrf.mxu0
      %v1486 = vadd.f32 0.0, %v1485
      %1487 = vmatmul.bf16.gmra.mxu0 %v1363
      %v1488 = vpop.f32.mrf.mxu0
      %v1489 = vadd.f32 0.0, %v1488
      %v1490 = vpop.f32.mrf.mxu0
      %v1491 = vadd.f32 0.0, %v1490
      %1492 = vmatmul.bf16.gmra.mxu0 %v1364
      %v1493 = vpop.f32.mrf.mxu0
      %v1494 = vadd.f32 0.0, %v1493
      %v1495 = vpop.f32.mrf.mxu0
      %v1496 = vadd.f32 0.0, %v1495
      %1497 = vmatmul.bf16.gmra.mxu0 %v1365
      %v1498 = vpop.f32.mrf.mxu0
      %v1499 = vadd.f32 0.0, %v1498
      %v1500 = vpop.f32.mrf.mxu0
      %v1501 = vadd.f32 0.0, %v1500
      %1502 = vmatmul.bf16.gmra.mxu0 %v1366
      %v1503 = vpop.f32.mrf.mxu0
      %v1504 = vadd.f32 0.0, %v1503
      %v1505 = vpop.f32.mrf.mxu0
      %v1506 = vadd.f32 0.0, %v1505
      %1507 = vmatmul.bf16.gmra.mxu0 %v1367
      %v1508 = vpop.f32.mrf.mxu0
      %v1509 = vadd.f32 0.0, %v1508
      %v1510 = vpop.f32.mrf.mxu0
      %v1511 = vadd.f32 0.0, %v1510
      %1512 = vmatmul.bf16.gmra.mxu0 %v1368
      %v1513 = vpop.f32.mrf.mxu0
      %v1514 = vadd.f32 0.0, %v1513
      %v1515 = vpop.f32.mrf.mxu0
      %v1516 = vadd.f32 0.0, %v1515
      %1517 = vmatmul.bf16.gmra.mxu0 %v1369
      %v1518 = vpop.f32.mrf.mxu0
      %v1519 = vadd.f32 0.0, %v1518
      %v1520 = vpop.f32.mrf.mxu0
      %v1521 = vadd.f32 0.0, %v1520
      %1522 = vdwg.mxu0
      %v1523 = vadd.f32 %v1241, %v1444
      %v1524 = vadd.f32 %v1242, %v1446
      %v1525 = vadd.f32 %v1243, %v1449
      %v1526 = vadd.f32 %v1244, %v1451
      %v1527 = vadd.f32 %v1245, %v1454
      %v1528 = vadd.f32 %v1246, %v1456
      %v1529 = vadd.f32 %v1247, %v1459
      %v1530 = vadd.f32 %v1248, %v1461
      %v1531 = vadd.f32 %v1249, %v1464
      %v1532 = vadd.f32 %v1250, %v1466
      %v1533 = vadd.f32 %v1251, %v1469
      %v1534 = vadd.f32 %v1252, %v1471
      %v1535 = vadd.f32 %v1253, %v1474
      %v1536 = vadd.f32 %v1254, %v1476
      %v1537 = vadd.f32 %v1255, %v1479
      %v1538 = vadd.f32 %v1256, %v1481
      %v1539 = vadd.f32 %v1257, %v1484
      %v1540 = vadd.f32 %v1258, %v1486
      %v1541 = vadd.f32 %v1259, %v1489
      %v1542 = vadd.f32 %v1260, %v1491
      %v1543 = vadd.f32 %v1261, %v1494
      %v1544 = vadd.f32 %v1262, %v1496
      %v1545 = vadd.f32 %v1263, %v1499
      %v1546 = vadd.f32 %v1264, %v1501
      %v1547 = vadd.f32 %v1265, %v1504
      %v1548 = vadd.f32 %v1266, %v1506
      %v1549 = vadd.f32 %v1267, %v1509
      %v1550 = vadd.f32 %v1268, %v1511
      %v1551 = vadd.f32 %v1269, %v1514
      %v1552 = vadd.f32 %v1270, %v1516
      %v1553 = vadd.f32 %v1271, %v1519
      %v1554 = vadd.f32 %v1272, %v1521
      %1555 = vst [vmem:[#allocation2] sm:$0xff] %v1523
      %1556 = vst [vmem:[#allocation2 + $0x8] sm:$0xff] %v1524
      %1557 = vst [vmem:[#allocation2 + $0x10] sm:$0xff] %v1525
      %1558 = vst [vmem:[#allocation2 + $0x18] sm:$0xff] %v1526
      %1559 = vst [vmem:[#allocation2 + $0x20] sm:$0xff] %v1527
      %1560 = vst [vmem:[#allocation2 + $0x28] sm:$0xff] %v1528
      %1561 = vst [vmem:[#allocation2 + $0x30] sm:$0xff] %v1529
      %1562 = vst [vmem:[#allocation2 + $0x38] sm:$0xff] %v1530
      %1563 = vst [vmem:[#allocation2 + $0x40] sm:$0xff] %v1531
      %1564 = vst [vmem:[#allocation2 + $0x48] sm:$0xff] %v1532
      %1565 = vst [vmem:[#allocation2 + $0x50] sm:$0xff] %v1533
      %1566 = vst [vmem:[#allocation2 + $0x58] sm:$0xff] %v1534
      %1567 = vst [vmem:[#allocation2 + $0x60] sm:$0xff] %v1535
      %1568 = vst [vmem:[#allocation2 + $0x68] sm:$0xff] %v1536
      %1569 = vst [vmem:[#allocation2 + $0x70] sm:$0xff] %v1537
      %1570 = vst [vmem:[#allocation2 + $0x78] sm:$0xff] %v1538
      %1571 = vst [vmem:[#allocation2 + $0x80] sm:$0xff] %v1539
      %1572 = vst [vmem:[#allocation2 + $0x88] sm:$0xff] %v1540
      %1573 = vst [vmem:[#allocation2 + $0x90] sm:$0xff] %v1541
      %1574 = vst [vmem:[#allocation2 + $0x98] sm:$0xff] %v1542
      %1575 = vst [vmem:[#allocation2 + $0xa0] sm:$0xff] %v1543
      %1576 = vst [vmem:[#allocation2 + $0xa8] sm:$0xff] %v1544
      %1577 = vst [vmem:[#allocation2 + $0xb0] sm:$0xff] %v1545
      %1578 = vst [vmem:[#allocation2 + $0xb8] sm:$0xff] %v1546
      %1579 = vst [vmem:[#allocation2 + $0xc0] sm:$0xff] %v1547
      %1580 = vst [vmem:[#allocation2 + $0xc8] sm:$0xff] %v1548
      %1581 = vst [vmem:[#allocation2 + $0xd0] sm:$0xff] %v1549
      %1582 = vst [vmem:[#allocation2 + $0xd8] sm:$0xff] %v1550
      %1583 = vst [vmem:[#allocation2 + $0xe0] sm:$0xff] %v1551
      %1584 = vst [vmem:[#allocation2 + $0xe8] sm:$0xff] %v1552
      %1585 = vst [vmem:[#allocation2 + $0xf0] sm:$0xff] %v1553
      %1586 = vst [vmem:[#allocation2 + $0xf8] sm:$0xff] %v1554
      %s1587 = scalar_lea.vmem %s315, 24
      %v1588 = vld [vmem:[%s1587] sm:$0xff]
      %v1589 = vld [vmem:[%s1587 + $0x8] sm:$0xff]
      %v1590 = vld [vmem:[%s1587 + $0x18] sm:$0xff]
      %v1591 = vld [vmem:[%s1587 + $0x20] sm:$0xff]
      %v1592 = vld [vmem:[%s1587 + $0x30] sm:$0xff]
      %v1593 = vld [vmem:[%s1587 + $0x38] sm:$0xff]
      %v1594 = vld [vmem:[%s1587 + $0x48] sm:$0xff]
      %v1595 = vld [vmem:[%s1587 + $0x50] sm:$0xff]
      %v1596 = vld [vmem:[%s1587 + $0x60] sm:$0xff]
      %v1597 = vld [vmem:[%s1587 + $0x68] sm:$0xff]
      %v1598 = vld [vmem:[%s1587 + $0x78] sm:$0xff]
      %v1599 = vld [vmem:[%s1587 + $0x80] sm:$0xff]
      %v1600 = vld [vmem:[%s1587 + $0x90] sm:$0xff]
      %v1601 = vld [vmem:[%s1587 + $0x98] sm:$0xff]
      %v1602 = vld [vmem:[%s1587 + $0xa8] sm:$0xff]
      %v1603 = vld [vmem:[%s1587 + $0xb0] sm:$0xff]
      %v1604 = vld [vmem:[%s1587 + $0xc0] sm:$0xff]
      %v1605 = vld [vmem:[%s1587 + $0xc8] sm:$0xff]
      %v1606 = vld [vmem:[%s1587 + $0xd8] sm:$0xff]
      %v1607 = vld [vmem:[%s1587 + $0xe0] sm:$0xff]
      %v1608 = vld [vmem:[%s1587 + $0xf0] sm:$0xff]
      %v1609 = vld [vmem:[%s1587 + $0xf8] sm:$0xff]
      %v1610 = vld [vmem:[%s1587 + $0x108] sm:$0xff]
      %v1611 = vld [vmem:[%s1587 + $0x110] sm:$0xff]
      %v1612 = vld [vmem:[%s1587 + $0x120] sm:$0xff]
      %v1613 = vld [vmem:[%s1587 + $0x128] sm:$0xff]
      %v1614 = vld [vmem:[%s1587 + $0x138] sm:$0xff]
      %v1615 = vld [vmem:[%s1587 + $0x140] sm:$0xff]
      %v1616 = vld [vmem:[%s1587 + $0x150] sm:$0xff]
      %v1617 = vld [vmem:[%s1587 + $0x158] sm:$0xff]
      %v1618 = vld [vmem:[%s1587 + $0x168] sm:$0xff]
      %v1619 = vld [vmem:[%s1587 + $0x170] sm:$0xff]
      %v1620 = vpack.c.bf16 %v1588, %v1588
      %v1621 = vpack.c.bf16 %v1589, %v1589
      %v1622 = vpack.c.bf16 %v1590, %v1590
      %v1623 = vpack.c.bf16 %v1591, %v1591
      %v1624 = vpack.c.bf16 %v1592, %v1592
      %v1625 = vpack.c.bf16 %v1593, %v1593
      %v1626 = vpack.c.bf16 %v1594, %v1594
      %v1627 = vpack.c.bf16 %v1595, %v1595
      %v1628 = vpack.c.bf16 %v1596, %v1596
      %v1629 = vpack.c.bf16 %v1597, %v1597
      %v1630 = vpack.c.bf16 %v1598, %v1598
      %v1631 = vpack.c.bf16 %v1599, %v1599
      %v1632 = vpack.c.bf16 %v1600, %v1600
      %v1633 = vpack.c.bf16 %v1601, %v1601
      %v1634 = vpack.c.bf16 %v1602, %v1602
      %v1635 = vpack.c.bf16 %v1603, %v1603
      %v1636 = vpack.c.bf16 %v1604, %v1604
      %v1637 = vpack.c.bf16 %v1605, %v1605
      %v1638 = vpack.c.bf16 %v1606, %v1606
      %v1639 = vpack.c.bf16 %v1607, %v1607
      %v1640 = vpack.c.bf16 %v1608, %v1608
      %v1641 = vpack.c.bf16 %v1609, %v1609
      %v1642 = vpack.c.bf16 %v1610, %v1610
      %v1643 = vpack.c.bf16 %v1611, %v1611
      %v1644 = vpack.c.bf16 %v1612, %v1612
      %v1645 = vpack.c.bf16 %v1613, %v1613
      %v1646 = vpack.c.bf16 %v1614, %v1614
      %v1647 = vpack.c.bf16 %v1615, %v1615
      %v1648 = vpack.c.bf16 %v1616, %v1616
      %v1649 = vpack.c.bf16 %v1617, %v1617
      %v1650 = vpack.c.bf16 %v1618, %v1618
      %v1651 = vpack.c.bf16 %v1619, %v1619
      %v1652 = vld [vmem:[#allocation2] sm:$0xff]
      %v1653 = vld [vmem:[#allocation2 + $0x8] sm:$0xff]
      %v1654 = vld [vmem:[#allocation2 + $0x10] sm:$0xff]
      %v1655 = vld [vmem:[#allocation2 + $0x18] sm:$0xff]
      %v1656 = vld [vmem:[#allocation2 + $0x20] sm:$0xff]
      %v1657 = vld [vmem:[#allocation2 + $0x28] sm:$0xff]
      %v1658 = vld [vmem:[#allocation2 + $0x30] sm:$0xff]
      %v1659 = vld [vmem:[#allocation2 + $0x38] sm:$0xff]
      %v1660 = vld [vmem:[#allocation2 + $0x40] sm:$0xff]
      %v1661 = vld [vmem:[#allocation2 + $0x48] sm:$0xff]
      %v1662 = vld [vmem:[#allocation2 + $0x50] sm:$0xff]
      %v1663 = vld [vmem:[#allocation2 + $0x58] sm:$0xff]
      %v1664 = vld [vmem:[#allocation2 + $0x60] sm:$0xff]
      %v1665 = vld [vmem:[#allocation2 + $0x68] sm:$0xff]
      %v1666 = vld [vmem:[#allocation2 + $0x70] sm:$0xff]
      %v1667 = vld [vmem:[#allocation2 + $0x78] sm:$0xff]
      %v1668 = vld [vmem:[#allocation2 + $0x80] sm:$0xff]
      %v1669 = vld [vmem:[#allocation2 + $0x88] sm:$0xff]
      %v1670 = vld [vmem:[#allocation2 + $0x90] sm:$0xff]
      %v1671 = vld [vmem:[#allocation2 + $0x98] sm:$0xff]
      %v1672 = vld [vmem:[#allocation2 + $0xa0] sm:$0xff]
      %v1673 = vld [vmem:[#allocation2 + $0xa8] sm:$0xff]
      %v1674 = vld [vmem:[#allocation2 + $0xb0] sm:$0xff]
      %v1675 = vld [vmem:[#allocation2 + $0xb8] sm:$0xff]
      %v1676 = vld [vmem:[#allocation2 + $0xc0] sm:$0xff]
      %v1677 = vld [vmem:[#allocation2 + $0xc8] sm:$0xff]
      %v1678 = vld [vmem:[#allocation2 + $0xd0] sm:$0xff]
      %v1679 = vld [vmem:[#allocation2 + $0xd8] sm:$0xff]
      %v1680 = vld [vmem:[#allocation2 + $0xe0] sm:$0xff]
      %v1681 = vld [vmem:[#allocation2 + $0xe8] sm:$0xff]
      %v1682 = vld [vmem:[#allocation2 + $0xf0] sm:$0xff]
      %v1683 = vld [vmem:[#allocation2 + $0xf8] sm:$0xff]
      %s1684 = scalar_lea.vmem %s2, 192
      %v1685 = vld [vmem:[%s1684] sm:$0xf]
      %v1686 = vld [vmem:[%s1684 + $0x4] sm:$0xf]
      %v1687 = vld [vmem:[%s1684 + $0x8] sm:$0xf]
      %v1688 = vld [vmem:[%s1684 + $0xc] sm:$0xf]
      %v1689 = vld [vmem:[%s1684 + $0x10] sm:$0xf]
      %v1690 = vld [vmem:[%s1684 + $0x14] sm:$0xf]
      %v1691 = vld [vmem:[%s1684 + $0x18] sm:$0xf]
      %v1692 = vld [vmem:[%s1684 + $0x1c] sm:$0xf]
      %v1693 = vld [vmem:[%s1684 + $0x20] sm:$0xf]
      %v1694 = vld [vmem:[%s1684 + $0x24] sm:$0xf]
      %v1695 = vld [vmem:[%s1684 + $0x28] sm:$0xf]
      %v1696 = vld [vmem:[%s1684 + $0x2c] sm:$0xf]
      %v1697 = vld [vmem:[%s1684 + $0x30] sm:$0xf]
      %v1698 = vld [vmem:[%s1684 + $0x34] sm:$0xf]
      %v1699 = vld [vmem:[%s1684 + $0x38] sm:$0xf]
      %v1700 = vld [vmem:[%s1684 + $0x3c] sm:$0xf]
      %v1733 = vunpack.c.l.b16 %v1620
      %v1734 = vunpack.c.l.b16 %v1621
      %v1735 = vunpack.c.l.b16 %v1622
      %v1736 = vunpack.c.l.b16 %v1623
      %v1737 = vunpack.c.l.b16 %v1624
      %v1738 = vunpack.c.l.b16 %v1625
      %v1739 = vunpack.c.l.b16 %v1626
      %v1740 = vunpack.c.l.b16 %v1627
      %v1741 = vunpack.c.l.b16 %v1628
      %v1742 = vunpack.c.l.b16 %v1629
      %v1743 = vunpack.c.l.b16 %v1630
      %v1744 = vunpack.c.l.b16 %v1631
      %v1745 = vunpack.c.l.b16 %v1632
      %v1746 = vunpack.c.l.b16 %v1633
      %v1747 = vunpack.c.l.b16 %v1634
      %v1748 = vunpack.c.l.b16 %v1635
      %v1749 = vunpack.c.l.b16 %v1636
      %v1750 = vunpack.c.l.b16 %v1637
      %v1751 = vunpack.c.l.b16 %v1638
      %v1752 = vunpack.c.l.b16 %v1639
      %v1753 = vunpack.c.l.b16 %v1640
      %v1754 = vunpack.c.l.b16 %v1641
      %v1755 = vunpack.c.l.b16 %v1642
      %v1756 = vunpack.c.l.b16 %v1643
      %v1757 = vunpack.c.l.b16 %v1644
      %v1758 = vunpack.c.l.b16 %v1645
      %v1759 = vunpack.c.l.b16 %v1646
      %v1760 = vunpack.c.l.b16 %v1647
      %v1761 = vunpack.c.l.b16 %v1648
      %v1762 = vunpack.c.l.b16 %v1649
      %v1763 = vunpack.c.l.b16 %v1650
      %v1764 = vunpack.c.l.b16 %v1651
      %v1765 = vpack.c.b16 %v1734, %v1733
      %v1766 = vpack.c.b16 %v1736, %v1735
      %v1767 = vpack.c.b16 %v1738, %v1737
      %v1768 = vpack.c.b16 %v1740, %v1739
      %v1769 = vpack.c.b16 %v1742, %v1741
      %v1770 = vpack.c.b16 %v1744, %v1743
      %v1771 = vpack.c.b16 %v1746, %v1745
      %v1772 = vpack.c.b16 %v1748, %v1747
      %v1773 = vpack.c.b16 %v1750, %v1749
      %v1774 = vpack.c.b16 %v1752, %v1751
      %v1775 = vpack.c.b16 %v1754, %v1753
      %v1776 = vpack.c.b16 %v1756, %v1755
      %v1777 = vpack.c.b16 %v1758, %v1757
      %v1778 = vpack.c.b16 %v1760, %v1759
      %v1779 = vpack.c.b16 %v1762, %v1761
      %v1780 = vpack.c.b16 %v1764, %v1763
      %v1813 = vunpack.c.l.b16 %v1685
      %v1814 = vunpack.c.l.b16 %v1686
      %v1815 = vunpack.c.l.b16 %v1687
      %v1816 = vunpack.c.l.b16 %v1688
      %v1817 = vunpack.c.l.b16 %v1689
      %v1818 = vunpack.c.l.b16 %v1690
      %v1819 = vunpack.c.l.b16 %v1691
      %v1820 = vunpack.c.l.b16 %v1692
      %v1821 = vunpack.c.l.b16 %v1693
      %v1822 = vunpack.c.l.b16 %v1694
      %v1823 = vunpack.c.l.b16 %v1695
      %v1824 = vunpack.c.l.b16 %v1696
      %v1825 = vunpack.c.l.b16 %v1697
      %v1826 = vunpack.c.l.b16 %v1698
      %v1827 = vunpack.c.l.b16 %v1699
      %v1828 = vunpack.c.l.b16 %v1700
      %v1829 = vpack.c.b16 %v1814, %v1813
      %v1830 = vpack.c.b16 %v1816, %v1815
      %v1831 = vpack.c.b16 %v1818, %v1817
      %v1832 = vpack.c.b16 %v1820, %v1819
      %v1833 = vpack.c.b16 %v1822, %v1821
      %v1834 = vpack.c.b16 %v1824, %v1823
      %v1835 = vpack.c.b16 %v1826, %v1825
      %v1836 = vpack.c.b16 %v1828, %v1827
      %1845 = vmatpush.bf16.msra.mxu0 %v1836
      %1846 = vmatpush.bf16.msra.mxu0 %v1835
      %1847 = vmatpush.bf16.msra.mxu0 %v1834
      %1848 = vmatpush.bf16.msra.mxu0 %v1833
      %1849 = vmatpush.bf16.msra.mxu0 %v1832
      %1850 = vmatpush.bf16.msra.mxu0 %v1831
      %1851 = vmatpush.bf16.msra.mxu0 %v1830
      %1852 = vmatpush.bf16.msra.mxu0 %v1829
      %1853 = vmatmul.bf16.gmra.mxu0 %v1765
      %v1854 = vpop.f32.mrf.mxu0
      %v1855 = vadd.f32 0.0, %v1854
      %v1856 = vpop.f32.mrf.mxu0
      %v1857 = vadd.f32 0.0, %v1856
      %1858 = vmatmul.bf16.gmra.mxu0 %v1766
      %v1859 = vpop.f32.mrf.mxu0
      %v1860 = vadd.f32 0.0, %v1859
      %v1861 = vpop.f32.mrf.mxu0
      %v1862 = vadd.f32 0.0, %v1861
      %1863 = vmatmul.bf16.gmra.mxu0 %v1767
      %v1864 = vpop.f32.mrf.mxu0
      %v1865 = vadd.f32 0.0, %v1864
      %v1866 = vpop.f32.mrf.mxu0
      %v1867 = vadd.f32 0.0, %v1866
      %1868 = vmatmul.bf16.gmra.mxu0 %v1768
      %v1869 = vpop.f32.mrf.mxu0
      %v1870 = vadd.f32 0.0, %v1869
      %v1871 = vpop.f32.mrf.mxu0
      %v1872 = vadd.f32 0.0, %v1871
      %1873 = vmatmul.bf16.gmra.mxu0 %v1769
      %v1874 = vpop.f32.mrf.mxu0
      %v1875 = vadd.f32 0.0, %v1874
      %v1876 = vpop.f32.mrf.mxu0
      %v1877 = vadd.f32 0.0, %v1876
      %1878 = vmatmul.bf16.gmra.mxu0 %v1770
      %v1879 = vpop.f32.mrf.mxu0
      %v1880 = vadd.f32 0.0, %v1879
      %v1881 = vpop.f32.mrf.mxu0
      %v1882 = vadd.f32 0.0, %v1881
      %1883 = vmatmul.bf16.gmra.mxu0 %v1771
      %v1884 = vpop.f32.mrf.mxu0
      %v1885 = vadd.f32 0.0, %v1884
      %v1886 = vpop.f32.mrf.mxu0
      %v1887 = vadd.f32 0.0, %v1886
      %1888 = vmatmul.bf16.gmra.mxu0 %v1772
      %v1889 = vpop.f32.mrf.mxu0
      %v1890 = vadd.f32 0.0, %v1889
      %v1891 = vpop.f32.mrf.mxu0
      %v1892 = vadd.f32 0.0, %v1891
      %1893 = vmatmul.bf16.gmra.mxu0 %v1773
      %v1894 = vpop.f32.mrf.mxu0
      %v1895 = vadd.f32 0.0, %v1894
      %v1896 = vpop.f32.mrf.mxu0
      %v1897 = vadd.f32 0.0, %v1896
      %1898 = vmatmul.bf16.gmra.mxu0 %v1774
      %v1899 = vpop.f32.mrf.mxu0
      %v1900 = vadd.f32 0.0, %v1899
      %v1901 = vpop.f32.mrf.mxu0
      %v1902 = vadd.f32 0.0, %v1901
      %1903 = vmatmul.bf16.gmra.mxu0 %v1775
      %v1904 = vpop.f32.mrf.mxu0
      %v1905 = vadd.f32 0.0, %v1904
      %v1906 = vpop.f32.mrf.mxu0
      %v1907 = vadd.f32 0.0, %v1906
      %1908 = vmatmul.bf16.gmra.mxu0 %v1776
      %v1909 = vpop.f32.mrf.mxu0
      %v1910 = vadd.f32 0.0, %v1909
      %v1911 = vpop.f32.mrf.mxu0
      %v1912 = vadd.f32 0.0, %v1911
      %1913 = vmatmul.bf16.gmra.mxu0 %v1777
      %v1914 = vpop.f32.mrf.mxu0
      %v1915 = vadd.f32 0.0, %v1914
      %v1916 = vpop.f32.mrf.mxu0
      %v1917 = vadd.f32 0.0, %v1916
      %1918 = vmatmul.bf16.gmra.mxu0 %v1778
      %v1919 = vpop.f32.mrf.mxu0
      %v1920 = vadd.f32 0.0, %v1919
      %v1921 = vpop.f32.mrf.mxu0
      %v1922 = vadd.f32 0.0, %v1921
      %1923 = vmatmul.bf16.gmra.mxu0 %v1779
      %v1924 = vpop.f32.mrf.mxu0
      %v1925 = vadd.f32 0.0, %v1924
      %v1926 = vpop.f32.mrf.mxu0
      %v1927 = vadd.f32 0.0, %v1926
      %1928 = vmatmul.bf16.gmra.mxu0 %v1780
      %v1929 = vpop.f32.mrf.mxu0
      %v1930 = vadd.f32 0.0, %v1929
      %v1931 = vpop.f32.mrf.mxu0
      %v1932 = vadd.f32 0.0, %v1931
      %1933 = vdwg.mxu0
      %v1934 = vadd.f32 %v1652, %v1855
      %v1935 = vadd.f32 %v1653, %v1857
      %v1936 = vadd.f32 %v1654, %v1860
      %v1937 = vadd.f32 %v1655, %v1862
      %v1938 = vadd.f32 %v1656, %v1865
      %v1939 = vadd.f32 %v1657, %v1867
      %v1940 = vadd.f32 %v1658, %v1870
      %v1941 = vadd.f32 %v1659, %v1872
      %v1942 = vadd.f32 %v1660, %v1875
      %v1943 = vadd.f32 %v1661, %v1877
      %v1944 = vadd.f32 %v1662, %v1880
      %v1945 = vadd.f32 %v1663, %v1882
      %v1946 = vadd.f32 %v1664, %v1885
      %v1947 = vadd.f32 %v1665, %v1887
      %v1948 = vadd.f32 %v1666, %v1890
      %v1949 = vadd.f32 %v1667, %v1892
      %v1950 = vadd.f32 %v1668, %v1895
      %v1951 = vadd.f32 %v1669, %v1897
      %v1952 = vadd.f32 %v1670, %v1900
      %v1953 = vadd.f32 %v1671, %v1902
      %v1954 = vadd.f32 %v1672, %v1905
      %v1955 = vadd.f32 %v1673, %v1907
      %v1956 = vadd.f32 %v1674, %v1910
      %v1957 = vadd.f32 %v1675, %v1912
      %v1958 = vadd.f32 %v1676, %v1915
      %v1959 = vadd.f32 %v1677, %v1917
      %v1960 = vadd.f32 %v1678, %v1920
      %v1961 = vadd.f32 %v1679, %v1922
      %v1962 = vadd.f32 %v1680, %v1925
      %v1963 = vadd.f32 %v1681, %v1927
      %v1964 = vadd.f32 %v1682, %v1930
      %v1965 = vadd.f32 %v1683, %v1932
      %1966 = vst [vmem:[#allocation2] sm:$0xff] %v1934
      %1967 = vst [vmem:[#allocation2 + $0x8] sm:$0xff] %v1935
      %1968 = vst [vmem:[#allocation2 + $0x10] sm:$0xff] %v1936
      %1969 = vst [vmem:[#allocation2 + $0x18] sm:$0xff] %v1937
      %1970 = vst [vmem:[#allocation2 + $0x20] sm:$0xff] %v1938
      %1971 = vst [vmem:[#allocation2 + $0x28] sm:$0xff] %v1939
      %1972 = vst [vmem:[#allocation2 + $0x30] sm:$0xff] %v1940
      %1973 = vst [vmem:[#allocation2 + $0x38] sm:$0xff] %v1941
      %1974 = vst [vmem:[#allocation2 + $0x40] sm:$0xff] %v1942
      %1975 = vst [vmem:[#allocation2 + $0x48] sm:$0xff] %v1943
      %1976 = vst [vmem:[#allocation2 + $0x50] sm:$0xff] %v1944
      %1977 = vst [vmem:[#allocation2 + $0x58] sm:$0xff] %v1945
      %1978 = vst [vmem:[#allocation2 + $0x60] sm:$0xff] %v1946
      %1979 = vst [vmem:[#allocation2 + $0x68] sm:$0xff] %v1947
      %1980 = vst [vmem:[#allocation2 + $0x70] sm:$0xff] %v1948
      %1981 = vst [vmem:[#allocation2 + $0x78] sm:$0xff] %v1949
      %1982 = vst [vmem:[#allocation2 + $0x80] sm:$0xff] %v1950
      %1983 = vst [vmem:[#allocation2 + $0x88] sm:$0xff] %v1951
      %1984 = vst [vmem:[#allocation2 + $0x90] sm:$0xff] %v1952
      %1985 = vst [vmem:[#allocation2 + $0x98] sm:$0xff] %v1953
      %1986 = vst [vmem:[#allocation2 + $0xa0] sm:$0xff] %v1954
      %1987 = vst [vmem:[#allocation2 + $0xa8] sm:$0xff] %v1955
      %1988 = vst [vmem:[#allocation2 + $0xb0] sm:$0xff] %v1956
      %1989 = vst [vmem:[#allocation2 + $0xb8] sm:$0xff] %v1957
      %1990 = vst [vmem:[#allocation2 + $0xc0] sm:$0xff] %v1958
      %1991 = vst [vmem:[#allocation2 + $0xc8] sm:$0xff] %v1959
      %1992 = vst [vmem:[#allocation2 + $0xd0] sm:$0xff] %v1960
      %1993 = vst [vmem:[#allocation2 + $0xd8] sm:$0xff] %v1961
      %1994 = vst [vmem:[#allocation2 + $0xe0] sm:$0xff] %v1962
      %1995 = vst [vmem:[#allocation2 + $0xe8] sm:$0xff] %v1963
      %1996 = vst [vmem:[#allocation2 + $0xf0] sm:$0xff] %v1964
      %1997 = vst [vmem:[#allocation2 + $0xf8] sm:$0xff] %v1965
      %v1998 = vld [vmem:[%s1587 + $0x1] sm:$0xff]
      %v1999 = vld [vmem:[%s1587 + $0x9] sm:$0xff]
      %v2000 = vld [vmem:[%s1587 + $0x19] sm:$0xff]
      %v2001 = vld [vmem:[%s1587 + $0x21] sm:$0xff]
      %v2002 = vld [vmem:[%s1587 + $0x31] sm:$0xff]
      %v2003 = vld [vmem:[%s1587 + $0x39] sm:$0xff]
      %v2004 = vld [vmem:[%s1587 + $0x49] sm:$0xff]
      %v2005 = vld [vmem:[%s1587 + $0x51] sm:$0xff]
      %v2006 = vld [vmem:[%s1587 + $0x61] sm:$0xff]
      %v2007 = vld [vmem:[%s1587 + $0x69] sm:$0xff]
      %v2008 = vld [vmem:[%s1587 + $0x79] sm:$0xff]
      %v2009 = vld [vmem:[%s1587 + $0x81] sm:$0xff]
      %v2010 = vld [vmem:[%s1587 + $0x91] sm:$0xff]
      %v2011 = vld [vmem:[%s1587 + $0x99] sm:$0xff]
      %v2012 = vld [vmem:[%s1587 + $0xa9] sm:$0xff]
      %v2013 = vld [vmem:[%s1587 + $0xb1] sm:$0xff]
      %v2014 = vld [vmem:[%s1587 + $0xc1] sm:$0xff]
      %v2015 = vld [vmem:[%s1587 + $0xc9] sm:$0xff]
      %v2016 = vld [vmem:[%s1587 + $0xd9] sm:$0xff]
      %v2017 = vld [vmem:[%s1587 + $0xe1] sm:$0xff]
      %v2018 = vld [vmem:[%s1587 + $0xf1] sm:$0xff]
      %v2019 = vld [vmem:[%s1587 + $0xf9] sm:$0xff]
      %v2020 = vld [vmem:[%s1587 + $0x109] sm:$0xff]
      %v2021 = vld [vmem:[%s1587 + $0x111] sm:$0xff]
      %v2022 = vld [vmem:[%s1587 + $0x121] sm:$0xff]
      %v2023 = vld [vmem:[%s1587 + $0x129] sm:$0xff]
      %v2024 = vld [vmem:[%s1587 + $0x139] sm:$0xff]
      %v2025 = vld [vmem:[%s1587 + $0x141] sm:$0xff]
      %v2026 = vld [vmem:[%s1587 + $0x151] sm:$0xff]
      %v2027 = vld [vmem:[%s1587 + $0x159] sm:$0xff]
      %v2028 = vld [vmem:[%s1587 + $0x169] sm:$0xff]
      %v2029 = vld [vmem:[%s1587 + $0x171] sm:$0xff]
      %v2030 = vpack.c.bf16 %v1998, %v1998
      %v2031 = vpack.c.bf16 %v1999, %v1999
      %v2032 = vpack.c.bf16 %v2000, %v2000
      %v2033 = vpack.c.bf16 %v2001, %v2001
      %v2034 = vpack.c.bf16 %v2002, %v2002
      %v2035 = vpack.c.bf16 %v2003, %v2003
      %v2036 = vpack.c.bf16 %v2004, %v2004
      %v2037 = vpack.c.bf16 %v2005, %v2005
      %v2038 = vpack.c.bf16 %v2006, %v2006
      %v2039 = vpack.c.bf16 %v2007, %v2007
      %v2040 = vpack.c.bf16 %v2008, %v2008
      %v2041 = vpack.c.bf16 %v2009, %v2009
      %v2042 = vpack.c.bf16 %v2010, %v2010
      %v2043 = vpack.c.bf16 %v2011, %v2011
      %v2044 = vpack.c.bf16 %v2012, %v2012
      %v2045 = vpack.c.bf16 %v2013, %v2013
      %v2046 = vpack.c.bf16 %v2014, %v2014
      %v2047 = vpack.c.bf16 %v2015, %v2015
      %v2048 = vpack.c.bf16 %v2016, %v2016
      %v2049 = vpack.c.bf16 %v2017, %v2017
      %v2050 = vpack.c.bf16 %v2018, %v2018
      %v2051 = vpack.c.bf16 %v2019, %v2019
      %v2052 = vpack.c.bf16 %v2020, %v2020
      %v2053 = vpack.c.bf16 %v2021, %v2021
      %v2054 = vpack.c.bf16 %v2022, %v2022
      %v2055 = vpack.c.bf16 %v2023, %v2023
      %v2056 = vpack.c.bf16 %v2024, %v2024
      %v2057 = vpack.c.bf16 %v2025, %v2025
      %v2058 = vpack.c.bf16 %v2026, %v2026
      %v2059 = vpack.c.bf16 %v2027, %v2027
      %v2060 = vpack.c.bf16 %v2028, %v2028
      %v2061 = vpack.c.bf16 %v2029, %v2029
      %v2062 = vld [vmem:[#allocation2] sm:$0xff]
      %v2063 = vld [vmem:[#allocation2 + $0x8] sm:$0xff]
      %v2064 = vld [vmem:[#allocation2 + $0x10] sm:$0xff]
      %v2065 = vld [vmem:[#allocation2 + $0x18] sm:$0xff]
      %v2066 = vld [vmem:[#allocation2 + $0x20] sm:$0xff]
      %v2067 = vld [vmem:[#allocation2 + $0x28] sm:$0xff]
      %v2068 = vld [vmem:[#allocation2 + $0x30] sm:$0xff]
      %v2069 = vld [vmem:[#allocation2 + $0x38] sm:$0xff]
      %v2070 = vld [vmem:[#allocation2 + $0x40] sm:$0xff]
      %v2071 = vld [vmem:[#allocation2 + $0x48] sm:$0xff]
      %v2072 = vld [vmem:[#allocation2 + $0x50] sm:$0xff]
      %v2073 = vld [vmem:[#allocation2 + $0x58] sm:$0xff]
      %v2074 = vld [vmem:[#allocation2 + $0x60] sm:$0xff]
      %v2075 = vld [vmem:[#allocation2 + $0x68] sm:$0xff]
      %v2076 = vld [vmem:[#allocation2 + $0x70] sm:$0xff]
      %v2077 = vld [vmem:[#allocation2 + $0x78] sm:$0xff]
      %v2078 = vld [vmem:[#allocation2 + $0x80] sm:$0xff]
      %v2079 = vld [vmem:[#allocation2 + $0x88] sm:$0xff]
      %v2080 = vld [vmem:[#allocation2 + $0x90] sm:$0xff]
      %v2081 = vld [vmem:[#allocation2 + $0x98] sm:$0xff]
      %v2082 = vld [vmem:[#allocation2 + $0xa0] sm:$0xff]
      %v2083 = vld [vmem:[#allocation2 + $0xa8] sm:$0xff]
      %v2084 = vld [vmem:[#allocation2 + $0xb0] sm:$0xff]
      %v2085 = vld [vmem:[#allocation2 + $0xb8] sm:$0xff]
      %v2086 = vld [vmem:[#allocation2 + $0xc0] sm:$0xff]
      %v2087 = vld [vmem:[#allocation2 + $0xc8] sm:$0xff]
      %v2088 = vld [vmem:[#allocation2 + $0xd0] sm:$0xff]
      %v2089 = vld [vmem:[#allocation2 + $0xd8] sm:$0xff]
      %v2090 = vld [vmem:[#allocation2 + $0xe0] sm:$0xff]
      %v2091 = vld [vmem:[#allocation2 + $0xe8] sm:$0xff]
      %v2092 = vld [vmem:[#allocation2 + $0xf0] sm:$0xff]
      %v2093 = vld [vmem:[#allocation2 + $0xf8] sm:$0xff]
      %s2094 = scalar_lea.vmem %s2, 256
      %v2095 = vld [vmem:[%s2094] sm:$0xf]
      %v2096 = vld [vmem:[%s2094 + $0x4] sm:$0xf]
      %v2097 = vld [vmem:[%s2094 + $0x8] sm:$0xf]
      %v2098 = vld [vmem:[%s2094 + $0xc] sm:$0xf]
      %v2099 = vld [vmem:[%s2094 + $0x10] sm:$0xf]
      %v2100 = vld [vmem:[%s2094 + $0x14] sm:$0xf]
      %v2101 = vld [vmem:[%s2094 + $0x18] sm:$0xf]
      %v2102 = vld [vmem:[%s2094 + $0x1c] sm:$0xf]
      %v2103 = vld [vmem:[%s2094 + $0x20] sm:$0xf]
      %v2104 = vld [vmem:[%s2094 + $0x24] sm:$0xf]
      %v2105 = vld [vmem:[%s2094 + $0x28] sm:$0xf]
      %v2106 = vld [vmem:[%s2094 + $0x2c] sm:$0xf]
      %v2107 = vld [vmem:[%s2094 + $0x30] sm:$0xf]
      %v2108 = vld [vmem:[%s2094 + $0x34] sm:$0xf]
      %v2109 = vld [vmem:[%s2094 + $0x38] sm:$0xf]
      %v2110 = vld [vmem:[%s2094 + $0x3c] sm:$0xf]
      %v2143 = vunpack.c.l.b16 %v2030
      %v2144 = vunpack.c.l.b16 %v2031
      %v2145 = vunpack.c.l.b16 %v2032
      %v2146 = vunpack.c.l.b16 %v2033
      %v2147 = vunpack.c.l.b16 %v2034
      %v2148 = vunpack.c.l.b16 %v2035
      %v2149 = vunpack.c.l.b16 %v2036
      %v2150 = vunpack.c.l.b16 %v2037
      %v2151 = vunpack.c.l.b16 %v2038
      %v2152 = vunpack.c.l.b16 %v2039
      %v2153 = vunpack.c.l.b16 %v2040
      %v2154 = vunpack.c.l.b16 %v2041
      %v2155 = vunpack.c.l.b16 %v2042
      %v2156 = vunpack.c.l.b16 %v2043
      %v2157 = vunpack.c.l.b16 %v2044
      %v2158 = vunpack.c.l.b16 %v2045
      %v2159 = vunpack.c.l.b16 %v2046
      %v2160 = vunpack.c.l.b16 %v2047
      %v2161 = vunpack.c.l.b16 %v2048
      %v2162 = vunpack.c.l.b16 %v2049
      %v2163 = vunpack.c.l.b16 %v2050
      %v2164 = vunpack.c.l.b16 %v2051
      %v2165 = vunpack.c.l.b16 %v2052
      %v2166 = vunpack.c.l.b16 %v2053
      %v2167 = vunpack.c.l.b16 %v2054
      %v2168 = vunpack.c.l.b16 %v2055
      %v2169 = vunpack.c.l.b16 %v2056
      %v2170 = vunpack.c.l.b16 %v2057
      %v2171 = vunpack.c.l.b16 %v2058
      %v2172 = vunpack.c.l.b16 %v2059
      %v2173 = vunpack.c.l.b16 %v2060
      %v2174 = vunpack.c.l.b16 %v2061
      %v2175 = vpack.c.b16 %v2144, %v2143
      %v2176 = vpack.c.b16 %v2146, %v2145
      %v2177 = vpack.c.b16 %v2148, %v2147
      %v2178 = vpack.c.b16 %v2150, %v2149
      %v2179 = vpack.c.b16 %v2152, %v2151
      %v2180 = vpack.c.b16 %v2154, %v2153
      %v2181 = vpack.c.b16 %v2156, %v2155
      %v2182 = vpack.c.b16 %v2158, %v2157
      %v2183 = vpack.c.b16 %v2160, %v2159
      %v2184 = vpack.c.b16 %v2162, %v2161
      %v2185 = vpack.c.b16 %v2164, %v2163
      %v2186 = vpack.c.b16 %v2166, %v2165
      %v2187 = vpack.c.b16 %v2168, %v2167
      %v2188 = vpack.c.b16 %v2170, %v2169
      %v2189 = vpack.c.b16 %v2172, %v2171
      %v2190 = vpack.c.b16 %v2174, %v2173
      %v2223 = vunpack.c.l.b16 %v2095
      %v2224 = vunpack.c.l.b16 %v2096
      %v2225 = vunpack.c.l.b16 %v2097
      %v2226 = vunpack.c.l.b16 %v2098
      %v2227 = vunpack.c.l.b16 %v2099
      %v2228 = vunpack.c.l.b16 %v2100
      %v2229 = vunpack.c.l.b16 %v2101
      %v2230 = vunpack.c.l.b16 %v2102
      %v2231 = vunpack.c.l.b16 %v2103
      %v2232 = vunpack.c.l.b16 %v2104
      %v2233 = vunpack.c.l.b16 %v2105
      %v2234 = vunpack.c.l.b16 %v2106
      %v2235 = vunpack.c.l.b16 %v2107
      %v2236 = vunpack.c.l.b16 %v2108
      %v2237 = vunpack.c.l.b16 %v2109
      %v2238 = vunpack.c.l.b16 %v2110
      %v2239 = vpack.c.b16 %v2224, %v2223
      %v2240 = vpack.c.b16 %v2226, %v2225
      %v2241 = vpack.c.b16 %v2228, %v2227
      %v2242 = vpack.c.b16 %v2230, %v2229
      %v2243 = vpack.c.b16 %v2232, %v2231
      %v2244 = vpack.c.b16 %v2234, %v2233
      %v2245 = vpack.c.b16 %v2236, %v2235
      %v2246 = vpack.c.b16 %v2238, %v2237
      %2255 = vmatpush.bf16.msra.mxu0 %v2246
      %2256 = vmatpush.bf16.msra.mxu0 %v2245
      %2257 = vmatpush.bf16.msra.mxu0 %v2244
      %2258 = vmatpush.bf16.msra.mxu0 %v2243
      %2259 = vmatpush.bf16.msra.mxu0 %v2242
      %2260 = vmatpush.bf16.msra.mxu0 %v2241
      %2261 = vmatpush.bf16.msra.mxu0 %v2240
      %2262 = vmatpush.bf16.msra.mxu0 %v2239
      %2263 = vmatmul.bf16.gmra.mxu0 %v2175
      %v2264 = vpop.f32.mrf.mxu0
      %v2265 = vadd.f32 0.0, %v2264
      %v2266 = vpop.f32.mrf.mxu0
      %v2267 = vadd.f32 0.0, %v2266
      %2268 = vmatmul.bf16.gmra.mxu0 %v2176
      %v2269 = vpop.f32.mrf.mxu0
      %v2270 = vadd.f32 0.0, %v2269
      %v2271 = vpop.f32.mrf.mxu0
      %v2272 = vadd.f32 0.0, %v2271
      %2273 = vmatmul.bf16.gmra.mxu0 %v2177
      %v2274 = vpop.f32.mrf.mxu0
      %v2275 = vadd.f32 0.0, %v2274
      %v2276 = vpop.f32.mrf.mxu0
      %v2277 = vadd.f32 0.0, %v2276
      %2278 = vmatmul.bf16.gmra.mxu0 %v2178
      %v2279 = vpop.f32.mrf.mxu0
      %v2280 = vadd.f32 0.0, %v2279
      %v2281 = vpop.f32.mrf.mxu0
      %v2282 = vadd.f32 0.0, %v2281
      %2283 = vmatmul.bf16.gmra.mxu0 %v2179
      %v2284 = vpop.f32.mrf.mxu0
      %v2285 = vadd.f32 0.0, %v2284
      %v2286 = vpop.f32.mrf.mxu0
      %v2287 = vadd.f32 0.0, %v2286
      %2288 = vmatmul.bf16.gmra.mxu0 %v2180
      %v2289 = vpop.f32.mrf.mxu0
      %v2290 = vadd.f32 0.0, %v2289
      %v2291 = vpop.f32.mrf.mxu0
      %v2292 = vadd.f32 0.0, %v2291
      %2293 = vmatmul.bf16.gmra.mxu0 %v2181
      %v2294 = vpop.f32.mrf.mxu0
      %v2295 = vadd.f32 0.0, %v2294
      %v2296 = vpop.f32.mrf.mxu0
      %v2297 = vadd.f32 0.0, %v2296
      %2298 = vmatmul.bf16.gmra.mxu0 %v2182
      %v2299 = vpop.f32.mrf.mxu0
      %v2300 = vadd.f32 0.0, %v2299
      %v2301 = vpop.f32.mrf.mxu0
      %v2302 = vadd.f32 0.0, %v2301
      %2303 = vmatmul.bf16.gmra.mxu0 %v2183
      %v2304 = vpop.f32.mrf.mxu0
      %v2305 = vadd.f32 0.0, %v2304
      %v2306 = vpop.f32.mrf.mxu0
      %v2307 = vadd.f32 0.0, %v2306
      %2308 = vmatmul.bf16.gmra.mxu0 %v2184
      %v2309 = vpop.f32.mrf.mxu0
      %v2310 = vadd.f32 0.0, %v2309
      %v2311 = vpop.f32.mrf.mxu0
      %v2312 = vadd.f32 0.0, %v2311
      %2313 = vmatmul.bf16.gmra.mxu0 %v2185
      %v2314 = vpop.f32.mrf.mxu0
      %v2315 = vadd.f32 0.0, %v2314
      %v2316 = vpop.f32.mrf.mxu0
      %v2317 = vadd.f32 0.0, %v2316
      %2318 = vmatmul.bf16.gmra.mxu0 %v2186
      %v2319 = vpop.f32.mrf.mxu0
      %v2320 = vadd.f32 0.0, %v2319
      %v2321 = vpop.f32.mrf.mxu0
      %v2322 = vadd.f32 0.0, %v2321
      %2323 = vmatmul.bf16.gmra.mxu0 %v2187
      %v2324 = vpop.f32.mrf.mxu0
      %v2325 = vadd.f32 0.0, %v2324
      %v2326 = vpop.f32.mrf.mxu0
      %v2327 = vadd.f32 0.0, %v2326
      %2328 = vmatmul.bf16.gmra.mxu0 %v2188
      %v2329 = vpop.f32.mrf.mxu0
      %v2330 = vadd.f32 0.0, %v2329
      %v2331 = vpop.f32.mrf.mxu0
      %v2332 = vadd.f32 0.0, %v2331
      %2333 = vmatmul.bf16.gmra.mxu0 %v2189
      %v2334 = vpop.f32.mrf.mxu0
      %v2335 = vadd.f32 0.0, %v2334
      %v2336 = vpop.f32.mrf.mxu0
      %v2337 = vadd.f32 0.0, %v2336
      %2338 = vmatmul.bf16.gmra.mxu0 %v2190
      %v2339 = vpop.f32.mrf.mxu0
      %v2340 = vadd.f32 0.0, %v2339
      %v2341 = vpop.f32.mrf.mxu0
      %v2342 = vadd.f32 0.0, %v2341
      %2343 = vdwg.mxu0
      %v2344 = vadd.f32 %v2062, %v2265
      %v2345 = vadd.f32 %v2063, %v2267
      %v2346 = vadd.f32 %v2064, %v2270
      %v2347 = vadd.f32 %v2065, %v2272
      %v2348 = vadd.f32 %v2066, %v2275
      %v2349 = vadd.f32 %v2067, %v2277
      %v2350 = vadd.f32 %v2068, %v2280
      %v2351 = vadd.f32 %v2069, %v2282
      %v2352 = vadd.f32 %v2070, %v2285
      %v2353 = vadd.f32 %v2071, %v2287
      %v2354 = vadd.f32 %v2072, %v2290
      %v2355 = vadd.f32 %v2073, %v2292
      %v2356 = vadd.f32 %v2074, %v2295
      %v2357 = vadd.f32 %v2075, %v2297
      %v2358 = vadd.f32 %v2076, %v2300
      %v2359 = vadd.f32 %v2077, %v2302
      %v2360 = vadd.f32 %v2078, %v2305
      %v2361 = vadd.f32 %v2079, %v2307
      %v2362 = vadd.f32 %v2080, %v2310
      %v2363 = vadd.f32 %v2081, %v2312
      %v2364 = vadd.f32 %v2082, %v2315
      %v2365 = vadd.f32 %v2083, %v2317
      %v2366 = vadd.f32 %v2084, %v2320
      %v2367 = vadd.f32 %v2085, %v2322
      %v2368 = vadd.f32 %v2086, %v2325
      %v2369 = vadd.f32 %v2087, %v2327
      %v2370 = vadd.f32 %v2088, %v2330
      %v2371 = vadd.f32 %v2089, %v2332
      %v2372 = vadd.f32 %v2090, %v2335
      %v2373 = vadd.f32 %v2091, %v2337
      %v2374 = vadd.f32 %v2092, %v2340
      %v2375 = vadd.f32 %v2093, %v2342
      %2376 = vst [vmem:[#allocation2] sm:$0xff] %v2344
      %2377 = vst [vmem:[#allocation2 + $0x8] sm:$0xff] %v2345
      %2378 = vst [vmem:[#allocation2 + $0x10] sm:$0xff] %v2346
      %2379 = vst [vmem:[#allocation2 + $0x18] sm:$0xff] %v2347
      %2380 = vst [vmem:[#allocation2 + $0x20] sm:$0xff] %v2348
      %2381 = vst [vmem:[#allocation2 + $0x28] sm:$0xff] %v2349
      %2382 = vst [vmem:[#allocation2 + $0x30] sm:$0xff] %v2350
      %2383 = vst [vmem:[#allocation2 + $0x38] sm:$0xff] %v2351
      %2384 = vst [vmem:[#allocation2 + $0x40] sm:$0xff] %v2352
      %2385 = vst [vmem:[#allocation2 + $0x48] sm:$0xff] %v2353
      %2386 = vst [vmem:[#allocation2 + $0x50] sm:$0xff] %v2354
      %2387 = vst [vmem:[#allocation2 + $0x58] sm:$0xff] %v2355
      %2388 = vst [vmem:[#allocation2 + $0x60] sm:$0xff] %v2356
      %2389 = vst [vmem:[#allocation2 + $0x68] sm:$0xff] %v2357
      %2390 = vst [vmem:[#allocation2 + $0x70] sm:$0xff] %v2358
      %2391 = vst [vmem:[#allocation2 + $0x78] sm:$0xff] %v2359
      %2392 = vst [vmem:[#allocation2 + $0x80] sm:$0xff] %v2360
      %2393 = vst [vmem:[#allocation2 + $0x88] sm:$0xff] %v2361
      %2394 = vst [vmem:[#allocation2 + $0x90] sm:$0xff] %v2362
      %2395 = vst [vmem:[#allocation2 + $0x98] sm:$0xff] %v2363
      %2396 = vst [vmem:[#allocation2 + $0xa0] sm:$0xff] %v2364
      %2397 = vst [vmem:[#allocation2 + $0xa8] sm:$0xff] %v2365
      %2398 = vst [vmem:[#allocation2 + $0xb0] sm:$0xff] %v2366
      %2399 = vst [vmem:[#allocation2 + $0xb8] sm:$0xff] %v2367
      %2400 = vst [vmem:[#allocation2 + $0xc0] sm:$0xff] %v2368
      %2401 = vst [vmem:[#allocation2 + $0xc8] sm:$0xff] %v2369
      %2402 = vst [vmem:[#allocation2 + $0xd0] sm:$0xff] %v2370
      %2403 = vst [vmem:[#allocation2 + $0xd8] sm:$0xff] %v2371
      %2404 = vst [vmem:[#allocation2 + $0xe0] sm:$0xff] %v2372
      %2405 = vst [vmem:[#allocation2 + $0xe8] sm:$0xff] %v2373
      %2406 = vst [vmem:[#allocation2 + $0xf0] sm:$0xff] %v2374
      %2407 = vst [vmem:[#allocation2 + $0xf8] sm:$0xff] %v2375
      %v2408 = vld [vmem:[%s1587 + $0x2] sm:$0xff]
      %v2409 = vld [vmem:[%s1587 + $0xa] sm:$0xff]
      %v2410 = vld [vmem:[%s1587 + $0x1a] sm:$0xff]
      %v2411 = vld [vmem:[%s1587 + $0x22] sm:$0xff]
      %v2412 = vld [vmem:[%s1587 + $0x32] sm:$0xff]
      %v2413 = vld [vmem:[%s1587 + $0x3a] sm:$0xff]
      %v2414 = vld [vmem:[%s1587 + $0x4a] sm:$0xff]
      %v2415 = vld [vmem:[%s1587 + $0x52] sm:$0xff]
      %v2416 = vld [vmem:[%s1587 + $0x62] sm:$0xff]
      %v2417 = vld [vmem:[%s1587 + $0x6a] sm:$0xff]
      %v2418 = vld [vmem:[%s1587 + $0x7a] sm:$0xff]
      %v2419 = vld [vmem:[%s1587 + $0x82] sm:$0xff]
      %v2420 = vld [vmem:[%s1587 + $0x92] sm:$0xff]
      %v2421 = vld [vmem:[%s1587 + $0x9a] sm:$0xff]
      %v2422 = vld [vmem:[%s1587 + $0xaa] sm:$0xff]
      %v2423 = vld [vmem:[%s1587 + $0xb2] sm:$0xff]
      %v2424 = vld [vmem:[%s1587 + $0xc2] sm:$0xff]
      %v2425 = vld [vmem:[%s1587 + $0xca] sm:$0xff]
      %v2426 = vld [vmem:[%s1587 + $0xda] sm:$0xff]
      %v2427 = vld [vmem:[%s1587 + $0xe2] sm:$0xff]
      %v2428 = vld [vmem:[%s1587 + $0xf2] sm:$0xff]
      %v2429 = vld [vmem:[%s1587 + $0xfa] sm:$0xff]
      %v2430 = vld [vmem:[%s1587 + $0x10a] sm:$0xff]
      %v2431 = vld [vmem:[%s1587 + $0x112] sm:$0xff]
      %v2432 = vld [vmem:[%s1587 + $0x122] sm:$0xff]
      %v2433 = vld [vmem:[%s1587 + $0x12a] sm:$0xff]
      %v2434 = vld [vmem:[%s1587 + $0x13a] sm:$0xff]
      %v2435 = vld [vmem:[%s1587 + $0x142] sm:$0xff]
      %v2436 = vld [vmem:[%s1587 + $0x152] sm:$0xff]
      %v2437 = vld [vmem:[%s1587 + $0x15a] sm:$0xff]
      %v2438 = vld [vmem:[%s1587 + $0x16a] sm:$0xff]
      %v2439 = vld [vmem:[%s1587 + $0x172] sm:$0xff]
      %v2440 = vpack.c.bf16 %v2408, %v2408
      %v2441 = vpack.c.bf16 %v2409, %v2409
      %v2442 = vpack.c.bf16 %v2410, %v2410
      %v2443 = vpack.c.bf16 %v2411, %v2411
      %v2444 = vpack.c.bf16 %v2412, %v2412
      %v2445 = vpack.c.bf16 %v2413, %v2413
      %v2446 = vpack.c.bf16 %v2414, %v2414
      %v2447 = vpack.c.bf16 %v2415, %v2415
      %v2448 = vpack.c.bf16 %v2416, %v2416
      %v2449 = vpack.c.bf16 %v2417, %v2417
      %v2450 = vpack.c.bf16 %v2418, %v2418
      %v2451 = vpack.c.bf16 %v2419, %v2419
      %v2452 = vpack.c.bf16 %v2420, %v2420
      %v2453 = vpack.c.bf16 %v2421, %v2421
      %v2454 = vpack.c.bf16 %v2422, %v2422
      %v2455 = vpack.c.bf16 %v2423, %v2423
      %v2456 = vpack.c.bf16 %v2424, %v2424
      %v2457 = vpack.c.bf16 %v2425, %v2425
      %v2458 = vpack.c.bf16 %v2426, %v2426
      %v2459 = vpack.c.bf16 %v2427, %v2427
      %v2460 = vpack.c.bf16 %v2428, %v2428
      %v2461 = vpack.c.bf16 %v2429, %v2429
      %v2462 = vpack.c.bf16 %v2430, %v2430
      %v2463 = vpack.c.bf16 %v2431, %v2431
      %v2464 = vpack.c.bf16 %v2432, %v2432
      %v2465 = vpack.c.bf16 %v2433, %v2433
      %v2466 = vpack.c.bf16 %v2434, %v2434
      %v2467 = vpack.c.bf16 %v2435, %v2435
      %v2468 = vpack.c.bf16 %v2436, %v2436
      %v2469 = vpack.c.bf16 %v2437, %v2437
      %v2470 = vpack.c.bf16 %v2438, %v2438
      %v2471 = vpack.c.bf16 %v2439, %v2439
      %v2472 = vld [vmem:[#allocation2] sm:$0xff]
      %v2473 = vld [vmem:[#allocation2 + $0x8] sm:$0xff]
      %v2474 = vld [vmem:[#allocation2 + $0x10] sm:$0xff]
      %v2475 = vld [vmem:[#allocation2 + $0x18] sm:$0xff]
      %v2476 = vld [vmem:[#allocation2 + $0x20] sm:$0xff]
      %v2477 = vld [vmem:[#allocation2 + $0x28] sm:$0xff]
      %v2478 = vld [vmem:[#allocation2 + $0x30] sm:$0xff]
      %v2479 = vld [vmem:[#allocation2 + $0x38] sm:$0xff]
      %v2480 = vld [vmem:[#allocation2 + $0x40] sm:$0xff]
      %v2481 = vld [vmem:[#allocation2 + $0x48] sm:$0xff]
      %v2482 = vld [vmem:[#allocation2 + $0x50] sm:$0xff]
      %v2483 = vld [vmem:[#allocation2 + $0x58] sm:$0xff]
      %v2484 = vld [vmem:[#allocation2 + $0x60] sm:$0xff]
      %v2485 = vld [vmem:[#allocation2 + $0x68] sm:$0xff]
      %v2486 = vld [vmem:[#allocation2 + $0x70] sm:$0xff]
      %v2487 = vld [vmem:[#allocation2 + $0x78] sm:$0xff]
      %v2488 = vld [vmem:[#allocation2 + $0x80] sm:$0xff]
      %v2489 = vld [vmem:[#allocation2 + $0x88] sm:$0xff]
      %v2490 = vld [vmem:[#allocation2 + $0x90] sm:$0xff]
      %v2491 = vld [vmem:[#allocation2 + $0x98] sm:$0xff]
      %v2492 = vld [vmem:[#allocation2 + $0xa0] sm:$0xff]
      %v2493 = vld [vmem:[#allocation2 + $0xa8] sm:$0xff]
      %v2494 = vld [vmem:[#allocation2 + $0xb0] sm:$0xff]
      %v2495 = vld [vmem:[#allocation2 + $0xb8] sm:$0xff]
      %v2496 = vld [vmem:[#allocation2 + $0xc0] sm:$0xff]
      %v2497 = vld [vmem:[#allocation2 + $0xc8] sm:$0xff]
      %v2498 = vld [vmem:[#allocation2 + $0xd0] sm:$0xff]
      %v2499 = vld [vmem:[#allocation2 + $0xd8] sm:$0xff]
      %v2500 = vld [vmem:[#allocation2 + $0xe0] sm:$0xff]
      %v2501 = vld [vmem:[#allocation2 + $0xe8] sm:$0xff]
      %v2502 = vld [vmem:[#allocation2 + $0xf0] sm:$0xff]
      %v2503 = vld [vmem:[#allocation2 + $0xf8] sm:$0xff]
      %s2504 = scalar_lea.vmem %s2, 320
      %v2505 = vld [vmem:[%s2504] sm:$0xf]
      %v2506 = vld [vmem:[%s2504 + $0x4] sm:$0xf]
      %v2507 = vld [vmem:[%s2504 + $0x8] sm:$0xf]
      %v2508 = vld [vmem:[%s2504 + $0xc] sm:$0xf]
      %v2509 = vld [vmem:[%s2504 + $0x10] sm:$0xf]
      %v2510 = vld [vmem:[%s2504 + $0x14] sm:$0xf]
      %v2511 = vld [vmem:[%s2504 + $0x18] sm:$0xf]
      %v2512 = vld [vmem:[%s2504 + $0x1c] sm:$0xf]
      %v2513 = vld [vmem:[%s2504 + $0x20] sm:$0xf]
      %v2514 = vld [vmem:[%s2504 + $0x24] sm:$0xf]
      %v2515 = vld [vmem:[%s2504 + $0x28] sm:$0xf]
      %v2516 = vld [vmem:[%s2504 + $0x2c] sm:$0xf]
      %v2517 = vld [vmem:[%s2504 + $0x30] sm:$0xf]
      %v2518 = vld [vmem:[%s2504 + $0x34] sm:$0xf]
      %v2519 = vld [vmem:[%s2504 + $0x38] sm:$0xf]
      %v2520 = vld [vmem:[%s2504 + $0x3c] sm:$0xf]
      %v2553 = vunpack.c.l.b16 %v2440
      %v2554 = vunpack.c.l.b16 %v2441
      %v2555 = vunpack.c.l.b16 %v2442
      %v2556 = vunpack.c.l.b16 %v2443
      %v2557 = vunpack.c.l.b16 %v2444
      %v2558 = vunpack.c.l.b16 %v2445
      %v2559 = vunpack.c.l.b16 %v2446
      %v2560 = vunpack.c.l.b16 %v2447
      %v2561 = vunpack.c.l.b16 %v2448
      %v2562 = vunpack.c.l.b16 %v2449
      %v2563 = vunpack.c.l.b16 %v2450
      %v2564 = vunpack.c.l.b16 %v2451
      %v2565 = vunpack.c.l.b16 %v2452
      %v2566 = vunpack.c.l.b16 %v2453
      %v2567 = vunpack.c.l.b16 %v2454
      %v2568 = vunpack.c.l.b16 %v2455
      %v2569 = vunpack.c.l.b16 %v2456
      %v2570 = vunpack.c.l.b16 %v2457
      %v2571 = vunpack.c.l.b16 %v2458
      %v2572 = vunpack.c.l.b16 %v2459
      %v2573 = vunpack.c.l.b16 %v2460
      %v2574 = vunpack.c.l.b16 %v2461
      %v2575 = vunpack.c.l.b16 %v2462
      %v2576 = vunpack.c.l.b16 %v2463
      %v2577 = vunpack.c.l.b16 %v2464
      %v2578 = vunpack.c.l.b16 %v2465
      %v2579 = vunpack.c.l.b16 %v2466
      %v2580 = vunpack.c.l.b16 %v2467
      %v2581 = vunpack.c.l.b16 %v2468
      %v2582 = vunpack.c.l.b16 %v2469
      %v2583 = vunpack.c.l.b16 %v2470
      %v2584 = vunpack.c.l.b16 %v2471
      %v2585 = vpack.c.b16 %v2554, %v2553
      %v2586 = vpack.c.b16 %v2556, %v2555
      %v2587 = vpack.c.b16 %v2558, %v2557
      %v2588 = vpack.c.b16 %v2560, %v2559
      %v2589 = vpack.c.b16 %v2562, %v2561
      %v2590 = vpack.c.b16 %v2564, %v2563
      %v2591 = vpack.c.b16 %v2566, %v2565
      %v2592 = vpack.c.b16 %v2568, %v2567
      %v2593 = vpack.c.b16 %v2570, %v2569
      %v2594 = vpack.c.b16 %v2572, %v2571
      %v2595 = vpack.c.b16 %v2574, %v2573
      %v2596 = vpack.c.b16 %v2576, %v2575
      %v2597 = vpack.c.b16 %v2578, %v2577
      %v2598 = vpack.c.b16 %v2580, %v2579
      %v2599 = vpack.c.b16 %v2582, %v2581
      %v2600 = vpack.c.b16 %v2584, %v2583
      %v2633 = vunpack.c.l.b16 %v2505
      %v2634 = vunpack.c.l.b16 %v2506
      %v2635 = vunpack.c.l.b16 %v2507
      %v2636 = vunpack.c.l.b16 %v2508
      %v2637 = vunpack.c.l.b16 %v2509
      %v2638 = vunpack.c.l.b16 %v2510
      %v2639 = vunpack.c.l.b16 %v2511
      %v2640 = vunpack.c.l.b16 %v2512
      %v2641 = vunpack.c.l.b16 %v2513
      %v2642 = vunpack.c.l.b16 %v2514
      %v2643 = vunpack.c.l.b16 %v2515
      %v2644 = vunpack.c.l.b16 %v2516
      %v2645 = vunpack.c.l.b16 %v2517
      %v2646 = vunpack.c.l.b16 %v2518
      %v2647 = vunpack.c.l.b16 %v2519
      %v2648 = vunpack.c.l.b16 %v2520
      %v2649 = vpack.c.b16 %v2634, %v2633
      %v2650 = vpack.c.b16 %v2636, %v2635
      %v2651 = vpack.c.b16 %v2638, %v2637
      %v2652 = vpack.c.b16 %v2640, %v2639
      %v2653 = vpack.c.b16 %v2642, %v2641
      %v2654 = vpack.c.b16 %v2644, %v2643
      %v2655 = vpack.c.b16 %v2646, %v2645
      %v2656 = vpack.c.b16 %v2648, %v2647
      %2665 = vmatpush.bf16.msra.mxu0 %v2656
      %2666 = vmatpush.bf16.msra.mxu0 %v2655
      %2667 = vmatpush.bf16.msra.mxu0 %v2654
      %2668 = vmatpush.bf16.msra.mxu0 %v2653
      %2669 = vmatpush.bf16.msra.mxu0 %v2652
      %2670 = vmatpush.bf16.msra.mxu0 %v2651
      %2671 = vmatpush.bf16.msra.mxu0 %v2650
      %2672 = vmatpush.bf16.msra.mxu0 %v2649
      %2673 = vmatmul.bf16.gmra.mxu0 %v2585
      %v2674 = vpop.f32.mrf.mxu0
      %v2675 = vadd.f32 0.0, %v2674
      %v2676 = vpop.f32.mrf.mxu0
      %v2677 = vadd.f32 0.0, %v2676
      %2678 = vmatmul.bf16.gmra.mxu0 %v2586
      %v2679 = vpop.f32.mrf.mxu0
      %v2680 = vadd.f32 0.0, %v2679
      %v2681 = vpop.f32.mrf.mxu0
      %v2682 = vadd.f32 0.0, %v2681
      %2683 = vmatmul.bf16.gmra.mxu0 %v2587
      %v2684 = vpop.f32.mrf.mxu0
      %v2685 = vadd.f32 0.0, %v2684
      %v2686 = vpop.f32.mrf.mxu0
      %v2687 = vadd.f32 0.0, %v2686
      %2688 = vmatmul.bf16.gmra.mxu0 %v2588
      %v2689 = vpop.f32.mrf.mxu0
      %v2690 = vadd.f32 0.0, %v2689
      %v2691 = vpop.f32.mrf.mxu0
      %v2692 = vadd.f32 0.0, %v2691
      %2693 = vmatmul.bf16.gmra.mxu0 %v2589
      %v2694 = vpop.f32.mrf.mxu0
      %v2695 = vadd.f32 0.0, %v2694
      %v2696 = vpop.f32.mrf.mxu0
      %v2697 = vadd.f32 0.0, %v2696
      %2698 = vmatmul.bf16.gmra.mxu0 %v2590
      %v2699 = vpop.f32.mrf.mxu0
      %v2700 = vadd.f32 0.0, %v2699
      %v2701 = vpop.f32.mrf.mxu0
      %v2702 = vadd.f32 0.0, %v2701
      %2703 = vmatmul.bf16.gmra.mxu0 %v2591
      %v2704 = vpop.f32.mrf.mxu0
      %v2705 = vadd.f32 0.0, %v2704
      %v2706 = vpop.f32.mrf.mxu0
      %v2707 = vadd.f32 0.0, %v2706
      %2708 = vmatmul.bf16.gmra.mxu0 %v2592
      %v2709 = vpop.f32.mrf.mxu0
      %v2710 = vadd.f32 0.0, %v2709
      %v2711 = vpop.f32.mrf.mxu0
      %v2712 = vadd.f32 0.0, %v2711
      %2713 = vmatmul.bf16.gmra.mxu0 %v2593
      %v2714 = vpop.f32.mrf.mxu0
      %v2715 = vadd.f32 0.0, %v2714
      %v2716 = vpop.f32.mrf.mxu0
      %v2717 = vadd.f32 0.0, %v2716
      %2718 = vmatmul.bf16.gmra.mxu0 %v2594
      %v2719 = vpop.f32.mrf.mxu0
      %v2720 = vadd.f32 0.0, %v2719
      %v2721 = vpop.f32.mrf.mxu0
      %v2722 = vadd.f32 0.0, %v2721
      %2723 = vmatmul.bf16.gmra.mxu0 %v2595
      %v2724 = vpop.f32.mrf.mxu0
      %v2725 = vadd.f32 0.0, %v2724
      %v2726 = vpop.f32.mrf.mxu0
      %v2727 = vadd.f32 0.0, %v2726
      %2728 = vmatmul.bf16.gmra.mxu0 %v2596
      %v2729 = vpop.f32.mrf.mxu0
      %v2730 = vadd.f32 0.0, %v2729
      %v2731 = vpop.f32.mrf.mxu0
      %v2732 = vadd.f32 0.0, %v2731
      %2733 = vmatmul.bf16.gmra.mxu0 %v2597
      %v2734 = vpop.f32.mrf.mxu0
      %v2735 = vadd.f32 0.0, %v2734
      %v2736 = vpop.f32.mrf.mxu0
      %v2737 = vadd.f32 0.0, %v2736
      %2738 = vmatmul.bf16.gmra.mxu0 %v2598
      %v2739 = vpop.f32.mrf.mxu0
      %v2740 = vadd.f32 0.0, %v2739
      %v2741 = vpop.f32.mrf.mxu0
      %v2742 = vadd.f32 0.0, %v2741
      %2743 = vmatmul.bf16.gmra.mxu0 %v2599
      %v2744 = vpop.f32.mrf.mxu0
      %v2745 = vadd.f32 0.0, %v2744
      %v2746 = vpop.f32.mrf.mxu0
      %v2747 = vadd.f32 0.0, %v2746
      %2748 = vmatmul.bf16.gmra.mxu0 %v2600
      %v2749 = vpop.f32.mrf.mxu0
      %v2750 = vadd.f32 0.0, %v2749
      %v2751 = vpop.f32.mrf.mxu0
      %v2752 = vadd.f32 0.0, %v2751
      %2753 = vdwg.mxu0
      %v2754 = vadd.f32 %v2472, %v2675
      %v2755 = vadd.f32 %v2473, %v2677
      %v2756 = vadd.f32 %v2474, %v2680
      %v2757 = vadd.f32 %v2475, %v2682
      %v2758 = vadd.f32 %v2476, %v2685
      %v2759 = vadd.f32 %v2477, %v2687
      %v2760 = vadd.f32 %v2478, %v2690
      %v2761 = vadd.f32 %v2479, %v2692
      %v2762 = vadd.f32 %v2480, %v2695
      %v2763 = vadd.f32 %v2481, %v2697
      %v2764 = vadd.f32 %v2482, %v2700
      %v2765 = vadd.f32 %v2483, %v2702
      %v2766 = vadd.f32 %v2484, %v2705
      %v2767 = vadd.f32 %v2485, %v2707
      %v2768 = vadd.f32 %v2486, %v2710
      %v2769 = vadd.f32 %v2487, %v2712
      %v2770 = vadd.f32 %v2488, %v2715
      %v2771 = vadd.f32 %v2489, %v2717
      %v2772 = vadd.f32 %v2490, %v2720
      %v2773 = vadd.f32 %v2491, %v2722
      %v2774 = vadd.f32 %v2492, %v2725
      %v2775 = vadd.f32 %v2493, %v2727
      %v2776 = vadd.f32 %v2494, %v2730
      %v2777 = vadd.f32 %v2495, %v2732
      %v2778 = vadd.f32 %v2496, %v2735
      %v2779 = vadd.f32 %v2497, %v2737
      %v2780 = vadd.f32 %v2498, %v2740
      %v2781 = vadd.f32 %v2499, %v2742
      %v2782 = vadd.f32 %v2500, %v2745
      %v2783 = vadd.f32 %v2501, %v2747
      %v2784 = vadd.f32 %v2502, %v2750
      %v2785 = vadd.f32 %v2503, %v2752
      %2786 = vst [vmem:[#allocation2] sm:$0xff] %v2754
      %2787 = vst [vmem:[#allocation2 + $0x8] sm:$0xff] %v2755
      %2788 = vst [vmem:[#allocation2 + $0x10] sm:$0xff] %v2756
      %2789 = vst [vmem:[#allocation2 + $0x18] sm:$0xff] %v2757
      %2790 = vst [vmem:[#allocation2 + $0x20] sm:$0xff] %v2758
      %2791 = vst [vmem:[#allocation2 + $0x28] sm:$0xff] %v2759
      %2792 = vst [vmem:[#allocation2 + $0x30] sm:$0xff] %v2760
      %2793 = vst [vmem:[#allocation2 + $0x38] sm:$0xff] %v2761
      %2794 = vst [vmem:[#allocation2 + $0x40] sm:$0xff] %v2762
      %2795 = vst [vmem:[#allocation2 + $0x48] sm:$0xff] %v2763
      %2796 = vst [vmem:[#allocation2 + $0x50] sm:$0xff] %v2764
      %2797 = vst [vmem:[#allocation2 + $0x58] sm:$0xff] %v2765
      %2798 = vst [vmem:[#allocation2 + $0x60] sm:$0xff] %v2766
      %2799 = vst [vmem:[#allocation2 + $0x68] sm:$0xff] %v2767
      %2800 = vst [vmem:[#allocation2 + $0x70] sm:$0xff] %v2768
      %2801 = vst [vmem:[#allocation2 + $0x78] sm:$0xff] %v2769
      %2802 = vst [vmem:[#allocation2 + $0x80] sm:$0xff] %v2770
      %2803 = vst [vmem:[#allocation2 + $0x88] sm:$0xff] %v2771
      %2804 = vst [vmem:[#allocation2 + $0x90] sm:$0xff] %v2772
      %2805 = vst [vmem:[#allocation2 + $0x98] sm:$0xff] %v2773
      %2806 = vst [vmem:[#allocation2 + $0xa0] sm:$0xff] %v2774
      %2807 = vst [vmem:[#allocation2 + $0xa8] sm:$0xff] %v2775
      %2808 = vst [vmem:[#allocation2 + $0xb0] sm:$0xff] %v2776
      %2809 = vst [vmem:[#allocation2 + $0xb8] sm:$0xff] %v2777
      %2810 = vst [vmem:[#allocation2 + $0xc0] sm:$0xff] %v2778
      %2811 = vst [vmem:[#allocation2 + $0xc8] sm:$0xff] %v2779
      %2812 = vst [vmem:[#allocation2 + $0xd0] sm:$0xff] %v2780
      %2813 = vst [vmem:[#allocation2 + $0xd8] sm:$0xff] %v2781
      %2814 = vst [vmem:[#allocation2 + $0xe0] sm:$0xff] %v2782
      %2815 = vst [vmem:[#allocation2 + $0xe8] sm:$0xff] %v2783
      %2816 = vst [vmem:[#allocation2 + $0xf0] sm:$0xff] %v2784
      %2817 = vst [vmem:[#allocation2 + $0xf8] sm:$0xff] %v2785
      %s2818 = scalar_lea.vmem %s315, 48
      %v2819 = vld [vmem:[%s2818] sm:$0xff]
      %v2820 = vld [vmem:[%s2818 + $0x8] sm:$0xff]
      %v2821 = vld [vmem:[%s2818 + $0x18] sm:$0xff]
      %v2822 = vld [vmem:[%s2818 + $0x20] sm:$0xff]
      %v2823 = vld [vmem:[%s2818 + $0x30] sm:$0xff]
      %v2824 = vld [vmem:[%s2818 + $0x38] sm:$0xff]
      %v2825 = vld [vmem:[%s2818 + $0x48] sm:$0xff]
      %v2826 = vld [vmem:[%s2818 + $0x50] sm:$0xff]
      %v2827 = vld [vmem:[%s2818 + $0x60] sm:$0xff]
      %v2828 = vld [vmem:[%s2818 + $0x68] sm:$0xff]
      %v2829 = vld [vmem:[%s2818 + $0x78] sm:$0xff]
      %v2830 = vld [vmem:[%s2818 + $0x80] sm:$0xff]
      %v2831 = vld [vmem:[%s2818 + $0x90] sm:$0xff]
      %v2832 = vld [vmem:[%s2818 + $0x98] sm:$0xff]
      %v2833 = vld [vmem:[%s2818 + $0xa8] sm:$0xff]
      %v2834 = vld [vmem:[%s2818 + $0xb0] sm:$0xff]
      %v2835 = vld [vmem:[%s2818 + $0xc0] sm:$0xff]
      %v2836 = vld [vmem:[%s2818 + $0xc8] sm:$0xff]
      %v2837 = vld [vmem:[%s2818 + $0xd8] sm:$0xff]
      %v2838 = vld [vmem:[%s2818 + $0xe0] sm:$0xff]
      %v2839 = vld [vmem:[%s2818 + $0xf0] sm:$0xff]
      %v2840 = vld [vmem:[%s2818 + $0xf8] sm:$0xff]
      %v2841 = vld [vmem:[%s2818 + $0x108] sm:$0xff]
      %v2842 = vld [vmem:[%s2818 + $0x110] sm:$0xff]
      %v2843 = vld [vmem:[%s2818 + $0x120] sm:$0xff]
      %v2844 = vld [vmem:[%s2818 + $0x128] sm:$0xff]
      %v2845 = vld [vmem:[%s2818 + $0x138] sm:$0xff]
      %v2846 = vld [vmem:[%s2818 + $0x140] sm:$0xff]
      %v2847 = vld [vmem:[%s2818 + $0x150] sm:$0xff]
      %v2848 = vld [vmem:[%s2818 + $0x158] sm:$0xff]
      %v2849 = vld [vmem:[%s2818 + $0x168] sm:$0xff]
      %v2850 = vld [vmem:[%s2818 + $0x170] sm:$0xff]
      %v2851 = vpack.c.bf16 %v2819, %v2819
      %v2852 = vpack.c.bf16 %v2820, %v2820
      %v2853 = vpack.c.bf16 %v2821, %v2821
      %v2854 = vpack.c.bf16 %v2822, %v2822
      %v2855 = vpack.c.bf16 %v2823, %v2823
      %v2856 = vpack.c.bf16 %v2824, %v2824
      %v2857 = vpack.c.bf16 %v2825, %v2825
      %v2858 = vpack.c.bf16 %v2826, %v2826
      %v2859 = vpack.c.bf16 %v2827, %v2827
      %v2860 = vpack.c.bf16 %v2828, %v2828
      %v2861 = vpack.c.bf16 %v2829, %v2829
      %v2862 = vpack.c.bf16 %v2830, %v2830
      %v2863 = vpack.c.bf16 %v2831, %v2831
      %v2864 = vpack.c.bf16 %v2832, %v2832
      %v2865 = vpack.c.bf16 %v2833, %v2833
      %v2866 = vpack.c.bf16 %v2834, %v2834
      %v2867 = vpack.c.bf16 %v2835, %v2835
      %v2868 = vpack.c.bf16 %v2836, %v2836
      %v2869 = vpack.c.bf16 %v2837, %v2837
      %v2870 = vpack.c.bf16 %v2838, %v2838
      %v2871 = vpack.c.bf16 %v2839, %v2839
      %v2872 = vpack.c.bf16 %v2840, %v2840
      %v2873 = vpack.c.bf16 %v2841, %v2841
      %v2874 = vpack.c.bf16 %v2842, %v2842
      %v2875 = vpack.c.bf16 %v2843, %v2843
      %v2876 = vpack.c.bf16 %v2844, %v2844
      %v2877 = vpack.c.bf16 %v2845, %v2845
      %v2878 = vpack.c.bf16 %v2846, %v2846
      %v2879 = vpack.c.bf16 %v2847, %v2847
      %v2880 = vpack.c.bf16 %v2848, %v2848
      %v2881 = vpack.c.bf16 %v2849, %v2849
      %v2882 = vpack.c.bf16 %v2850, %v2850
      %v2883 = vld [vmem:[#allocation2] sm:$0xff]
      %v2884 = vld [vmem:[#allocation2 + $0x8] sm:$0xff]
      %v2885 = vld [vmem:[#allocation2 + $0x10] sm:$0xff]
      %v2886 = vld [vmem:[#allocation2 + $0x18] sm:$0xff]
      %v2887 = vld [vmem:[#allocation2 + $0x20] sm:$0xff]
      %v2888 = vld [vmem:[#allocation2 + $0x28] sm:$0xff]
      %v2889 = vld [vmem:[#allocation2 + $0x30] sm:$0xff]
      %v2890 = vld [vmem:[#allocation2 + $0x38] sm:$0xff]
      %v2891 = vld [vmem:[#allocation2 + $0x40] sm:$0xff]
      %v2892 = vld [vmem:[#allocation2 + $0x48] sm:$0xff]
      %v2893 = vld [vmem:[#allocation2 + $0x50] sm:$0xff]
      %v2894 = vld [vmem:[#allocation2 + $0x58] sm:$0xff]
      %v2895 = vld [vmem:[#allocation2 + $0x60] sm:$0xff]
      %v2896 = vld [vmem:[#allocation2 + $0x68] sm:$0xff]
      %v2897 = vld [vmem:[#allocation2 + $0x70] sm:$0xff]
      %v2898 = vld [vmem:[#allocation2 + $0x78] sm:$0xff]
      %v2899 = vld [vmem:[#allocation2 + $0x80] sm:$0xff]
      %v2900 = vld [vmem:[#allocation2 + $0x88] sm:$0xff]
      %v2901 = vld [vmem:[#allocation2 + $0x90] sm:$0xff]
      %v2902 = vld [vmem:[#allocation2 + $0x98] sm:$0xff]
      %v2903 = vld [vmem:[#allocation2 + $0xa0] sm:$0xff]
      %v2904 = vld [vmem:[#allocation2 + $0xa8] sm:$0xff]
      %v2905 = vld [vmem:[#allocation2 + $0xb0] sm:$0xff]
      %v2906 = vld [vmem:[#allocation2 + $0xb8] sm:$0xff]
      %v2907 = vld [vmem:[#allocation2 + $0xc0] sm:$0xff]
      %v2908 = vld [vmem:[#allocation2 + $0xc8] sm:$0xff]
      %v2909 = vld [vmem:[#allocation2 + $0xd0] sm:$0xff]
      %v2910 = vld [vmem:[#allocation2 + $0xd8] sm:$0xff]
      %v2911 = vld [vmem:[#allocation2 + $0xe0] sm:$0xff]
      %v2912 = vld [vmem:[#allocation2 + $0xe8] sm:$0xff]
      %v2913 = vld [vmem:[#allocation2 + $0xf0] sm:$0xff]
      %v2914 = vld [vmem:[#allocation2 + $0xf8] sm:$0xff]
      %s2915 = scalar_lea.vmem %s2, 384
      %v2916 = vld [vmem:[%s2915] sm:$0xf]
      %v2917 = vld [vmem:[%s2915 + $0x4] sm:$0xf]
      %v2918 = vld [vmem:[%s2915 + $0x8] sm:$0xf]
      %v2919 = vld [vmem:[%s2915 + $0xc] sm:$0xf]
      %v2920 = vld [vmem:[%s2915 + $0x10] sm:$0xf]
      %v2921 = vld [vmem:[%s2915 + $0x14] sm:$0xf]
      %v2922 = vld [vmem:[%s2915 + $0x18] sm:$0xf]
      %v2923 = vld [vmem:[%s2915 + $0x1c] sm:$0xf]
      %v2924 = vld [vmem:[%s2915 + $0x20] sm:$0xf]
      %v2925 = vld [vmem:[%s2915 + $0x24] sm:$0xf]
      %v2926 = vld [vmem:[%s2915 + $0x28] sm:$0xf]
      %v2927 = vld [vmem:[%s2915 + $0x2c] sm:$0xf]
      %v2928 = vld [vmem:[%s2915 + $0x30] sm:$0xf]
      %v2929 = vld [vmem:[%s2915 + $0x34] sm:$0xf]
      %v2930 = vld [vmem:[%s2915 + $0x38] sm:$0xf]
      %v2931 = vld [vmem:[%s2915 + $0x3c] sm:$0xf]
      %v2964 = vunpack.c.l.b16 %v2851
      %v2965 = vunpack.c.l.b16 %v2852
      %v2966 = vunpack.c.l.b16 %v2853
      %v2967 = vunpack.c.l.b16 %v2854
      %v2968 = vunpack.c.l.b16 %v2855
      %v2969 = vunpack.c.l.b16 %v2856
      %v2970 = vunpack.c.l.b16 %v2857
      %v2971 = vunpack.c.l.b16 %v2858
      %v2972 = vunpack.c.l.b16 %v2859
      %v2973 = vunpack.c.l.b16 %v2860
      %v2974 = vunpack.c.l.b16 %v2861
      %v2975 = vunpack.c.l.b16 %v2862
      %v2976 = vunpack.c.l.b16 %v2863
      %v2977 = vunpack.c.l.b16 %v2864
      %v2978 = vunpack.c.l.b16 %v2865
      %v2979 = vunpack.c.l.b16 %v2866
      %v2980 = vunpack.c.l.b16 %v2867
      %v2981 = vunpack.c.l.b16 %v2868
      %v2982 = vunpack.c.l.b16 %v2869
      %v2983 = vunpack.c.l.b16 %v2870
      %v2984 = vunpack.c.l.b16 %v2871
      %v2985 = vunpack.c.l.b16 %v2872
      %v2986 = vunpack.c.l.b16 %v2873
      %v2987 = vunpack.c.l.b16 %v2874
      %v2988 = vunpack.c.l.b16 %v2875
      %v2989 = vunpack.c.l.b16 %v2876
      %v2990 = vunpack.c.l.b16 %v2877
      %v2991 = vunpack.c.l.b16 %v2878
      %v2992 = vunpack.c.l.b16 %v2879
      %v2993 = vunpack.c.l.b16 %v2880
      %v2994 = vunpack.c.l.b16 %v2881
      %v2995 = vunpack.c.l.b16 %v2882
      %v2996 = vpack.c.b16 %v2965, %v2964
      %v2997 = vpack.c.b16 %v2967, %v2966
      %v2998 = vpack.c.b16 %v2969, %v2968
      %v2999 = vpack.c.b16 %v2971, %v2970
      %v3000 = vpack.c.b16 %v2973, %v2972
      %v3001 = vpack.c.b16 %v2975, %v2974
      %v3002 = vpack.c.b16 %v2977, %v2976
      %v3003 = vpack.c.b16 %v2979, %v2978
      %v3004 = vpack.c.b16 %v2981, %v2980
      %v3005 = vpack.c.b16 %v2983, %v2982
      %v3006 = vpack.c.b16 %v2985, %v2984
      %v3007 = vpack.c.b16 %v2987, %v2986
      %v3008 = vpack.c.b16 %v2989, %v2988
      %v3009 = vpack.c.b16 %v2991, %v2990
      %v3010 = vpack.c.b16 %v2993, %v2992
      %v3011 = vpack.c.b16 %v2995, %v2994
      %v3044 = vunpack.c.l.b16 %v2916
      %v3045 = vunpack.c.l.b16 %v2917
      %v3046 = vunpack.c.l.b16 %v2918
      %v3047 = vunpack.c.l.b16 %v2919
      %v3048 = vunpack.c.l.b16 %v2920
      %v3049 = vunpack.c.l.b16 %v2921
      %v3050 = vunpack.c.l.b16 %v2922
      %v3051 = vunpack.c.l.b16 %v2923
      %v3052 = vunpack.c.l.b16 %v2924
      %v3053 = vunpack.c.l.b16 %v2925
      %v3054 = vunpack.c.l.b16 %v2926
      %v3055 = vunpack.c.l.b16 %v2927
      %v3056 = vunpack.c.l.b16 %v2928
      %v3057 = vunpack.c.l.b16 %v2929
      %v3058 = vunpack.c.l.b16 %v2930
      %v3059 = vunpack.c.l.b16 %v2931
      %v3060 = vpack.c.b16 %v3045, %v3044
      %v3061 = vpack.c.b16 %v3047, %v3046
      %v3062 = vpack.c.b16 %v3049, %v3048
      %v3063 = vpack.c.b16 %v3051, %v3050
      %v3064 = vpack.c.b16 %v3053, %v3052
      %v3065 = vpack.c.b16 %v3055, %v3054
      %v3066 = vpack.c.b16 %v3057, %v3056
      %v3067 = vpack.c.b16 %v3059, %v3058
      %3076 = vmatpush.bf16.msra.mxu0 %v3067
      %3077 = vmatpush.bf16.msra.mxu0 %v3066
      %3078 = vmatpush.bf16.msra.mxu0 %v3065
      %3079 = vmatpush.bf16.msra.mxu0 %v3064
      %3080 = vmatpush.bf16.msra.mxu0 %v3063
      %3081 = vmatpush.bf16.msra.mxu0 %v3062
      %3082 = vmatpush.bf16.msra.mxu0 %v3061
      %3083 = vmatpush.bf16.msra.mxu0 %v3060
      %3084 = vmatmul.bf16.gmra.mxu0 %v2996
      %v3085 = vpop.f32.mrf.mxu0
      %v3086 = vadd.f32 0.0, %v3085
      %v3087 = vpop.f32.mrf.mxu0
      %v3088 = vadd.f32 0.0, %v3087
      %3089 = vmatmul.bf16.gmra.mxu0 %v2997
      %v3090 = vpop.f32.mrf.mxu0
      %v3091 = vadd.f32 0.0, %v3090
      %v3092 = vpop.f32.mrf.mxu0
      %v3093 = vadd.f32 0.0, %v3092
      %3094 = vmatmul.bf16.gmra.mxu0 %v2998
      %v3095 = vpop.f32.mrf.mxu0
      %v3096 = vadd.f32 0.0, %v3095
      %v3097 = vpop.f32.mrf.mxu0
      %v3098 = vadd.f32 0.0, %v3097
      %3099 = vmatmul.bf16.gmra.mxu0 %v2999
      %v3100 = vpop.f32.mrf.mxu0
      %v3101 = vadd.f32 0.0, %v3100
      %v3102 = vpop.f32.mrf.mxu0
      %v3103 = vadd.f32 0.0, %v3102
      %3104 = vmatmul.bf16.gmra.mxu0 %v3000
      %v3105 = vpop.f32.mrf.mxu0
      %v3106 = vadd.f32 0.0, %v3105
      %v3107 = vpop.f32.mrf.mxu0
      %v3108 = vadd.f32 0.0, %v3107
      %3109 = vmatmul.bf16.gmra.mxu0 %v3001
      %v3110 = vpop.f32.mrf.mxu0
      %v3111 = vadd.f32 0.0, %v3110
      %v3112 = vpop.f32.mrf.mxu0
      %v3113 = vadd.f32 0.0, %v3112
      %3114 = vmatmul.bf16.gmra.mxu0 %v3002
      %v3115 = vpop.f32.mrf.mxu0
      %v3116 = vadd.f32 0.0, %v3115
      %v3117 = vpop.f32.mrf.mxu0
      %v3118 = vadd.f32 0.0, %v3117
      %3119 = vmatmul.bf16.gmra.mxu0 %v3003
      %v3120 = vpop.f32.mrf.mxu0
      %v3121 = vadd.f32 0.0, %v3120
      %v3122 = vpop.f32.mrf.mxu0
      %v3123 = vadd.f32 0.0, %v3122
      %3124 = vmatmul.bf16.gmra.mxu0 %v3004
      %v3125 = vpop.f32.mrf.mxu0
      %v3126 = vadd.f32 0.0, %v3125
      %v3127 = vpop.f32.mrf.mxu0
      %v3128 = vadd.f32 0.0, %v3127
      %3129 = vmatmul.bf16.gmra.mxu0 %v3005
      %v3130 = vpop.f32.mrf.mxu0
      %v3131 = vadd.f32 0.0, %v3130
      %v3132 = vpop.f32.mrf.mxu0
      %v3133 = vadd.f32 0.0, %v3132
      %3134 = vmatmul.bf16.gmra.mxu0 %v3006
      %v3135 = vpop.f32.mrf.mxu0
      %v3136 = vadd.f32 0.0, %v3135
      %v3137 = vpop.f32.mrf.mxu0
      %v3138 = vadd.f32 0.0, %v3137
      %3139 = vmatmul.bf16.gmra.mxu0 %v3007
      %v3140 = vpop.f32.mrf.mxu0
      %v3141 = vadd.f32 0.0, %v3140
      %v3142 = vpop.f32.mrf.mxu0
      %v3143 = vadd.f32 0.0, %v3142
      %3144 = vmatmul.bf16.gmra.mxu0 %v3008
      %v3145 = vpop.f32.mrf.mxu0
      %v3146 = vadd.f32 0.0, %v3145
      %v3147 = vpop.f32.mrf.mxu0
      %v3148 = vadd.f32 0.0, %v3147
      %3149 = vmatmul.bf16.gmra.mxu0 %v3009
      %v3150 = vpop.f32.mrf.mxu0
      %v3151 = vadd.f32 0.0, %v3150
      %v3152 = vpop.f32.mrf.mxu0
      %v3153 = vadd.f32 0.0, %v3152
      %3154 = vmatmul.bf16.gmra.mxu0 %v3010
      %v3155 = vpop.f32.mrf.mxu0
      %v3156 = vadd.f32 0.0, %v3155
      %v3157 = vpop.f32.mrf.mxu0
      %v3158 = vadd.f32 0.0, %v3157
      %3159 = vmatmul.bf16.gmra.mxu0 %v3011
      %v3160 = vpop.f32.mrf.mxu0
      %v3161 = vadd.f32 0.0, %v3160
      %v3162 = vpop.f32.mrf.mxu0
      %v3163 = vadd.f32 0.0, %v3162
      %3164 = vdwg.mxu0
      %v3165 = vadd.f32 %v2883, %v3086
      %v3166 = vadd.f32 %v2884, %v3088
      %v3167 = vadd.f32 %v2885, %v3091
      %v3168 = vadd.f32 %v2886, %v3093
      %v3169 = vadd.f32 %v2887, %v3096
      %v3170 = vadd.f32 %v2888, %v3098
      %v3171 = vadd.f32 %v2889, %v3101
      %v3172 = vadd.f32 %v2890, %v3103
      %v3173 = vadd.f32 %v2891, %v3106
      %v3174 = vadd.f32 %v2892, %v3108
      %v3175 = vadd.f32 %v2893, %v3111
      %v3176 = vadd.f32 %v2894, %v3113
      %v3177 = vadd.f32 %v2895, %v3116
      %v3178 = vadd.f32 %v2896, %v3118
      %v3179 = vadd.f32 %v2897, %v3121
      %v3180 = vadd.f32 %v2898, %v3123
      %v3181 = vadd.f32 %v2899, %v3126
      %v3182 = vadd.f32 %v2900, %v3128
      %v3183 = vadd.f32 %v2901, %v3131
      %v3184 = vadd.f32 %v2902, %v3133
      %v3185 = vadd.f32 %v2903, %v3136
      %v3186 = vadd.f32 %v2904, %v3138
      %v3187 = vadd.f32 %v2905, %v3141
      %v3188 = vadd.f32 %v2906, %v3143
      %v3189 = vadd.f32 %v2907, %v3146
      %v3190 = vadd.f32 %v2908, %v3148
      %v3191 = vadd.f32 %v2909, %v3151
      %v3192 = vadd.f32 %v2910, %v3153
      %v3193 = vadd.f32 %v2911, %v3156
      %v3194 = vadd.f32 %v2912, %v3158
      %v3195 = vadd.f32 %v2913, %v3161
      %v3196 = vadd.f32 %v2914, %v3163
      %3197 = vst [vmem:[#allocation2] sm:$0xff] %v3165
      %3198 = vst [vmem:[#allocation2 + $0x8] sm:$0xff] %v3166
      %3199 = vst [vmem:[#allocation2 + $0x10] sm:$0xff] %v3167
      %3200 = vst [vmem:[#allocation2 + $0x18] sm:$0xff] %v3168
      %3201 = vst [vmem:[#allocation2 + $0x20] sm:$0xff] %v3169
      %3202 = vst [vmem:[#allocation2 + $0x28] sm:$0xff] %v3170
      %3203 = vst [vmem:[#allocation2 + $0x30] sm:$0xff] %v3171
      %3204 = vst [vmem:[#allocation2 + $0x38] sm:$0xff] %v3172
      %3205 = vst [vmem:[#allocation2 + $0x40] sm:$0xff] %v3173
      %3206 = vst [vmem:[#allocation2 + $0x48] sm:$0xff] %v3174
      %3207 = vst [vmem:[#allocation2 + $0x50] sm:$0xff] %v3175
      %3208 = vst [vmem:[#allocation2 + $0x58] sm:$0xff] %v3176
      %3209 = vst [vmem:[#allocation2 + $0x60] sm:$0xff] %v3177
      %3210 = vst [vmem:[#allocation2 + $0x68] sm:$0xff] %v3178
      %3211 = vst [vmem:[#allocation2 + $0x70] sm:$0xff] %v3179
      %3212 = vst [vmem:[#allocation2 + $0x78] sm:$0xff] %v3180
      %3213 = vst [vmem:[#allocation2 + $0x80] sm:$0xff] %v3181
      %3214 = vst [vmem:[#allocation2 + $0x88] sm:$0xff] %v3182
      %3215 = vst [vmem:[#allocation2 + $0x90] sm:$0xff] %v3183
      %3216 = vst [vmem:[#allocation2 + $0x98] sm:$0xff] %v3184
      %3217 = vst [vmem:[#allocation2 + $0xa0] sm:$0xff] %v3185
      %3218 = vst [vmem:[#allocation2 + $0xa8] sm:$0xff] %v3186
      %3219 = vst [vmem:[#allocation2 + $0xb0] sm:$0xff] %v3187
      %3220 = vst [vmem:[#allocation2 + $0xb8] sm:$0xff] %v3188
      %3221 = vst [vmem:[#allocation2 + $0xc0] sm:$0xff] %v3189
      %3222 = vst [vmem:[#allocation2 + $0xc8] sm:$0xff] %v3190
      %3223 = vst [vmem:[#allocation2 + $0xd0] sm:$0xff] %v3191
      %3224 = vst [vmem:[#allocation2 + $0xd8] sm:$0xff] %v3192
      %3225 = vst [vmem:[#allocation2 + $0xe0] sm:$0xff] %v3193
      %3226 = vst [vmem:[#allocation2 + $0xe8] sm:$0xff] %v3194
      %3227 = vst [vmem:[#allocation2 + $0xf0] sm:$0xff] %v3195
      %3228 = vst [vmem:[#allocation2 + $0xf8] sm:$0xff] %v3196
      %v3229 = vld [vmem:[%s2818 + $0x1] sm:$0xff]
      %v3230 = vld [vmem:[%s2818 + $0x9] sm:$0xff]
      %v3231 = vld [vmem:[%s2818 + $0x19] sm:$0xff]
      %v3232 = vld [vmem:[%s2818 + $0x21] sm:$0xff]
      %v3233 = vld [vmem:[%s2818 + $0x31] sm:$0xff]
      %v3234 = vld [vmem:[%s2818 + $0x39] sm:$0xff]
      %v3235 = vld [vmem:[%s2818 + $0x49] sm:$0xff]
      %v3236 = vld [vmem:[%s2818 + $0x51] sm:$0xff]
      %v3237 = vld [vmem:[%s2818 + $0x61] sm:$0xff]
      %v3238 = vld [vmem:[%s2818 + $0x69] sm:$0xff]
      %v3239 = vld [vmem:[%s2818 + $0x79] sm:$0xff]
      %v3240 = vld [vmem:[%s2818 + $0x81] sm:$0xff]
      %v3241 = vld [vmem:[%s2818 + $0x91] sm:$0xff]
      %v3242 = vld [vmem:[%s2818 + $0x99] sm:$0xff]
      %v3243 = vld [vmem:[%s2818 + $0xa9] sm:$0xff]
      %v3244 = vld [vmem:[%s2818 + $0xb1] sm:$0xff]
      %v3245 = vld [vmem:[%s2818 + $0xc1] sm:$0xff]
      %v3246 = vld [vmem:[%s2818 + $0xc9] sm:$0xff]
      %v3247 = vld [vmem:[%s2818 + $0xd9] sm:$0xff]
      %v3248 = vld [vmem:[%s2818 + $0xe1] sm:$0xff]
      %v3249 = vld [vmem:[%s2818 + $0xf1] sm:$0xff]
      %v3250 = vld [vmem:[%s2818 + $0xf9] sm:$0xff]
      %v3251 = vld [vmem:[%s2818 + $0x109] sm:$0xff]
      %v3252 = vld [vmem:[%s2818 + $0x111] sm:$0xff]
      %v3253 = vld [vmem:[%s2818 + $0x121] sm:$0xff]
      %v3254 = vld [vmem:[%s2818 + $0x129] sm:$0xff]
      %v3255 = vld [vmem:[%s2818 + $0x139] sm:$0xff]
      %v3256 = vld [vmem:[%s2818 + $0x141] sm:$0xff]
      %v3257 = vld [vmem:[%s2818 + $0x151] sm:$0xff]
      %v3258 = vld [vmem:[%s2818 + $0x159] sm:$0xff]
      %v3259 = vld [vmem:[%s2818 + $0x169] sm:$0xff]
      %v3260 = vld [vmem:[%s2818 + $0x171] sm:$0xff]
      %v3261 = vpack.c.bf16 %v3229, %v3229
      %v3262 = vpack.c.bf16 %v3230, %v3230
      %v3263 = vpack.c.bf16 %v3231, %v3231
      %v3264 = vpack.c.bf16 %v3232, %v3232
      %v3265 = vpack.c.bf16 %v3233, %v3233
      %v3266 = vpack.c.bf16 %v3234, %v3234
      %v3267 = vpack.c.bf16 %v3235, %v3235
      %v3268 = vpack.c.bf16 %v3236, %v3236
      %v3269 = vpack.c.bf16 %v3237, %v3237
      %v3270 = vpack.c.bf16 %v3238, %v3238
      %v3271 = vpack.c.bf16 %v3239, %v3239
      %v3272 = vpack.c.bf16 %v3240, %v3240
      %v3273 = vpack.c.bf16 %v3241, %v3241
      %v3274 = vpack.c.bf16 %v3242, %v3242
      %v3275 = vpack.c.bf16 %v3243, %v3243
      %v3276 = vpack.c.bf16 %v3244, %v3244
      %v3277 = vpack.c.bf16 %v3245, %v3245
      %v3278 = vpack.c.bf16 %v3246, %v3246
      %v3279 = vpack.c.bf16 %v3247, %v3247
      %v3280 = vpack.c.bf16 %v3248, %v3248
      %v3281 = vpack.c.bf16 %v3249, %v3249
      %v3282 = vpack.c.bf16 %v3250, %v3250
      %v3283 = vpack.c.bf16 %v3251, %v3251
      %v3284 = vpack.c.bf16 %v3252, %v3252
      %v3285 = vpack.c.bf16 %v3253, %v3253
      %v3286 = vpack.c.bf16 %v3254, %v3254
      %v3287 = vpack.c.bf16 %v3255, %v3255
      %v3288 = vpack.c.bf16 %v3256, %v3256
      %v3289 = vpack.c.bf16 %v3257, %v3257
      %v3290 = vpack.c.bf16 %v3258, %v3258
      %v3291 = vpack.c.bf16 %v3259, %v3259
      %v3292 = vpack.c.bf16 %v3260, %v3260
      %v3293 = vld [vmem:[#allocation2] sm:$0xff]
      %v3294 = vld [vmem:[#allocation2 + $0x8] sm:$0xff]
      %v3295 = vld [vmem:[#allocation2 + $0x10] sm:$0xff]
      %v3296 = vld [vmem:[#allocation2 + $0x18] sm:$0xff]
      %v3297 = vld [vmem:[#allocation2 + $0x20] sm:$0xff]
      %v3298 = vld [vmem:[#allocation2 + $0x28] sm:$0xff]
      %v3299 = vld [vmem:[#allocation2 + $0x30] sm:$0xff]
      %v3300 = vld [vmem:[#allocation2 + $0x38] sm:$0xff]
      %v3301 = vld [vmem:[#allocation2 + $0x40] sm:$0xff]
      %v3302 = vld [vmem:[#allocation2 + $0x48] sm:$0xff]
      %v3303 = vld [vmem:[#allocation2 + $0x50] sm:$0xff]
      %v3304 = vld [vmem:[#allocation2 + $0x58] sm:$0xff]
      %v3305 = vld [vmem:[#allocation2 + $0x60] sm:$0xff]
      %v3306 = vld [vmem:[#allocation2 + $0x68] sm:$0xff]
      %v3307 = vld [vmem:[#allocation2 + $0x70] sm:$0xff]
      %v3308 = vld [vmem:[#allocation2 + $0x78] sm:$0xff]
      %v3309 = vld [vmem:[#allocation2 + $0x80] sm:$0xff]
      %v3310 = vld [vmem:[#allocation2 + $0x88] sm:$0xff]
      %v3311 = vld [vmem:[#allocation2 + $0x90] sm:$0xff]
      %v3312 = vld [vmem:[#allocation2 + $0x98] sm:$0xff]
      %v3313 = vld [vmem:[#allocation2 + $0xa0] sm:$0xff]
      %v3314 = vld [vmem:[#allocation2 + $0xa8] sm:$0xff]
      %v3315 = vld [vmem:[#allocation2 + $0xb0] sm:$0xff]
      %v3316 = vld [vmem:[#allocation2 + $0xb8] sm:$0xff]
      %v3317 = vld [vmem:[#allocation2 + $0xc0] sm:$0xff]
      %v3318 = vld [vmem:[#allocation2 + $0xc8] sm:$0xff]
      %v3319 = vld [vmem:[#allocation2 + $0xd0] sm:$0xff]
      %v3320 = vld [vmem:[#allocation2 + $0xd8] sm:$0xff]
      %v3321 = vld [vmem:[#allocation2 + $0xe0] sm:$0xff]
      %v3322 = vld [vmem:[#allocation2 + $0xe8] sm:$0xff]
      %v3323 = vld [vmem:[#allocation2 + $0xf0] sm:$0xff]
      %v3324 = vld [vmem:[#allocation2 + $0xf8] sm:$0xff]
      %s3325 = scalar_lea.vmem %s2, 448
      %v3326 = vld [vmem:[%s3325] sm:$0xf]
      %v3327 = vld [vmem:[%s3325 + $0x4] sm:$0xf]
      %v3328 = vld [vmem:[%s3325 + $0x8] sm:$0xf]
      %v3329 = vld [vmem:[%s3325 + $0xc] sm:$0xf]
      %v3330 = vld [vmem:[%s3325 + $0x10] sm:$0xf]
      %v3331 = vld [vmem:[%s3325 + $0x14] sm:$0xf]
      %v3332 = vld [vmem:[%s3325 + $0x18] sm:$0xf]
      %v3333 = vld [vmem:[%s3325 + $0x1c] sm:$0xf]
      %v3334 = vld [vmem:[%s3325 + $0x20] sm:$0xf]
      %v3335 = vld [vmem:[%s3325 + $0x24] sm:$0xf]
      %v3336 = vld [vmem:[%s3325 + $0x28] sm:$0xf]
      %v3337 = vld [vmem:[%s3325 + $0x2c] sm:$0xf]
      %v3338 = vld [vmem:[%s3325 + $0x30] sm:$0xf]
      %v3339 = vld [vmem:[%s3325 + $0x34] sm:$0xf]
      %v3340 = vld [vmem:[%s3325 + $0x38] sm:$0xf]
      %v3341 = vld [vmem:[%s3325 + $0x3c] sm:$0xf]
      %v3374 = vunpack.c.l.b16 %v3261
      %v3375 = vunpack.c.l.b16 %v3262
      %v3376 = vunpack.c.l.b16 %v3263
      %v3377 = vunpack.c.l.b16 %v3264
      %v3378 = vunpack.c.l.b16 %v3265
      %v3379 = vunpack.c.l.b16 %v3266
      %v3380 = vunpack.c.l.b16 %v3267
      %v3381 = vunpack.c.l.b16 %v3268
      %v3382 = vunpack.c.l.b16 %v3269
      %v3383 = vunpack.c.l.b16 %v3270
      %v3384 = vunpack.c.l.b16 %v3271
      %v3385 = vunpack.c.l.b16 %v3272
      %v3386 = vunpack.c.l.b16 %v3273
      %v3387 = vunpack.c.l.b16 %v3274
      %v3388 = vunpack.c.l.b16 %v3275
      %v3389 = vunpack.c.l.b16 %v3276
      %v3390 = vunpack.c.l.b16 %v3277
      %v3391 = vunpack.c.l.b16 %v3278
      %v3392 = vunpack.c.l.b16 %v3279
      %v3393 = vunpack.c.l.b16 %v3280
      %v3394 = vunpack.c.l.b16 %v3281
      %v3395 = vunpack.c.l.b16 %v3282
      %v3396 = vunpack.c.l.b16 %v3283
      %v3397 = vunpack.c.l.b16 %v3284
      %v3398 = vunpack.c.l.b16 %v3285
      %v3399 = vunpack.c.l.b16 %v3286
      %v3400 = vunpack.c.l.b16 %v3287
      %v3401 = vunpack.c.l.b16 %v3288
      %v3402 = vunpack.c.l.b16 %v3289
      %v3403 = vunpack.c.l.b16 %v3290
      %v3404 = vunpack.c.l.b16 %v3291
      %v3405 = vunpack.c.l.b16 %v3292
      %v3406 = vpack.c.b16 %v3375, %v3374
      %v3407 = vpack.c.b16 %v3377, %v3376
      %v3408 = vpack.c.b16 %v3379, %v3378
      %v3409 = vpack.c.b16 %v3381, %v3380
      %v3410 = vpack.c.b16 %v3383, %v3382
      %v3411 = vpack.c.b16 %v3385, %v3384
      %v3412 = vpack.c.b16 %v3387, %v3386
      %v3413 = vpack.c.b16 %v3389, %v3388
      %v3414 = vpack.c.b16 %v3391, %v3390
      %v3415 = vpack.c.b16 %v3393, %v3392
      %v3416 = vpack.c.b16 %v3395, %v3394
      %v3417 = vpack.c.b16 %v3397, %v3396
      %v3418 = vpack.c.b16 %v3399, %v3398
      %v3419 = vpack.c.b16 %v3401, %v3400
      %v3420 = vpack.c.b16 %v3403, %v3402
      %v3421 = vpack.c.b16 %v3405, %v3404
      %v3454 = vunpack.c.l.b16 %v3326
      %v3455 = vunpack.c.l.b16 %v3327
      %v3456 = vunpack.c.l.b16 %v3328
      %v3457 = vunpack.c.l.b16 %v3329
      %v3458 = vunpack.c.l.b16 %v3330
      %v3459 = vunpack.c.l.b16 %v3331
      %v3460 = vunpack.c.l.b16 %v3332
      %v3461 = vunpack.c.l.b16 %v3333
      %v3462 = vunpack.c.l.b16 %v3334
      %v3463 = vunpack.c.l.b16 %v3335
      %v3464 = vunpack.c.l.b16 %v3336
      %v3465 = vunpack.c.l.b16 %v3337
      %v3466 = vunpack.c.l.b16 %v3338
      %v3467 = vunpack.c.l.b16 %v3339
      %v3468 = vunpack.c.l.b16 %v3340
      %v3469 = vunpack.c.l.b16 %v3341
      %v3470 = vpack.c.b16 %v3455, %v3454
      %v3471 = vpack.c.b16 %v3457, %v3456
      %v3472 = vpack.c.b16 %v3459, %v3458
      %v3473 = vpack.c.b16 %v3461, %v3460
      %v3474 = vpack.c.b16 %v3463, %v3462
      %v3475 = vpack.c.b16 %v3465, %v3464
      %v3476 = vpack.c.b16 %v3467, %v3466
      %v3477 = vpack.c.b16 %v3469, %v3468
      %3486 = vmatpush.bf16.msra.mxu0 %v3477
      %3487 = vmatpush.bf16.msra.mxu0 %v3476
      %3488 = vmatpush.bf16.msra.mxu0 %v3475
      %3489 = vmatpush.bf16.msra.mxu0 %v3474
      %3490 = vmatpush.bf16.msra.mxu0 %v3473
      %3491 = vmatpush.bf16.msra.mxu0 %v3472
      %3492 = vmatpush.bf16.msra.mxu0 %v3471
      %3493 = vmatpush.bf16.msra.mxu0 %v3470
      %3494 = vmatmul.bf16.gmra.mxu0 %v3406
      %v3495 = vpop.f32.mrf.mxu0
      %v3496 = vadd.f32 0.0, %v3495
      %v3497 = vpop.f32.mrf.mxu0
      %v3498 = vadd.f32 0.0, %v3497
      %3499 = vmatmul.bf16.gmra.mxu0 %v3407
      %v3500 = vpop.f32.mrf.mxu0
      %v3501 = vadd.f32 0.0, %v3500
      %v3502 = vpop.f32.mrf.mxu0
      %v3503 = vadd.f32 0.0, %v3502
      %3504 = vmatmul.bf16.gmra.mxu0 %v3408
      %v3505 = vpop.f32.mrf.mxu0
      %v3506 = vadd.f32 0.0, %v3505
      %v3507 = vpop.f32.mrf.mxu0
      %v3508 = vadd.f32 0.0, %v3507
      %3509 = vmatmul.bf16.gmra.mxu0 %v3409
      %v3510 = vpop.f32.mrf.mxu0
      %v3511 = vadd.f32 0.0, %v3510
      %v3512 = vpop.f32.mrf.mxu0
      %v3513 = vadd.f32 0.0, %v3512
      %3514 = vmatmul.bf16.gmra.mxu0 %v3410
      %v3515 = vpop.f32.mrf.mxu0
      %v3516 = vadd.f32 0.0, %v3515
      %v3517 = vpop.f32.mrf.mxu0
      %v3518 = vadd.f32 0.0, %v3517
      %3519 = vmatmul.bf16.gmra.mxu0 %v3411
      %v3520 = vpop.f32.mrf.mxu0
      %v3521 = vadd.f32 0.0, %v3520
      %v3522 = vpop.f32.mrf.mxu0
      %v3523 = vadd.f32 0.0, %v3522
      %3524 = vmatmul.bf16.gmra.mxu0 %v3412
      %v3525 = vpop.f32.mrf.mxu0
      %v3526 = vadd.f32 0.0, %v3525
      %v3527 = vpop.f32.mrf.mxu0
      %v3528 = vadd.f32 0.0, %v3527
      %3529 = vmatmul.bf16.gmra.mxu0 %v3413
      %v3530 = vpop.f32.mrf.mxu0
      %v3531 = vadd.f32 0.0, %v3530
      %v3532 = vpop.f32.mrf.mxu0
      %v3533 = vadd.f32 0.0, %v3532
      %3534 = vmatmul.bf16.gmra.mxu0 %v3414
      %v3535 = vpop.f32.mrf.mxu0
      %v3536 = vadd.f32 0.0, %v3535
      %v3537 = vpop.f32.mrf.mxu0
      %v3538 = vadd.f32 0.0, %v3537
      %3539 = vmatmul.bf16.gmra.mxu0 %v3415
      %v3540 = vpop.f32.mrf.mxu0
      %v3541 = vadd.f32 0.0, %v3540
      %v3542 = vpop.f32.mrf.mxu0
      %v3543 = vadd.f32 0.0, %v3542
      %3544 = vmatmul.bf16.gmra.mxu0 %v3416
      %v3545 = vpop.f32.mrf.mxu0
      %v3546 = vadd.f32 0.0, %v3545
      %v3547 = vpop.f32.mrf.mxu0
      %v3548 = vadd.f32 0.0, %v3547
      %3549 = vmatmul.bf16.gmra.mxu0 %v3417
      %v3550 = vpop.f32.mrf.mxu0
      %v3551 = vadd.f32 0.0, %v3550
      %v3552 = vpop.f32.mrf.mxu0
      %v3553 = vadd.f32 0.0, %v3552
      %3554 = vmatmul.bf16.gmra.mxu0 %v3418
      %v3555 = vpop.f32.mrf.mxu0
      %v3556 = vadd.f32 0.0, %v3555
      %v3557 = vpop.f32.mrf.mxu0
      %v3558 = vadd.f32 0.0, %v3557
      %3559 = vmatmul.bf16.gmra.mxu0 %v3419
      %v3560 = vpop.f32.mrf.mxu0
      %v3561 = vadd.f32 0.0, %v3560
      %v3562 = vpop.f32.mrf.mxu0
      %v3563 = vadd.f32 0.0, %v3562
      %3564 = vmatmul.bf16.gmra.mxu0 %v3420
      %v3565 = vpop.f32.mrf.mxu0
      %v3566 = vadd.f32 0.0, %v3565
      %v3567 = vpop.f32.mrf.mxu0
      %v3568 = vadd.f32 0.0, %v3567
      %3569 = vmatmul.bf16.gmra.mxu0 %v3421
      %v3570 = vpop.f32.mrf.mxu0
      %v3571 = vadd.f32 0.0, %v3570
      %v3572 = vpop.f32.mrf.mxu0
      %v3573 = vadd.f32 0.0, %v3572
      %3574 = vdwg.mxu0
      %v3575 = vadd.f32 %v3293, %v3496
      %v3576 = vadd.f32 %v3294, %v3498
      %v3577 = vadd.f32 %v3295, %v3501
      %v3578 = vadd.f32 %v3296, %v3503
      %v3579 = vadd.f32 %v3297, %v3506
      %v3580 = vadd.f32 %v3298, %v3508
      %v3581 = vadd.f32 %v3299, %v3511
      %v3582 = vadd.f32 %v3300, %v3513
      %v3583 = vadd.f32 %v3301, %v3516
      %v3584 = vadd.f32 %v3302, %v3518
      %v3585 = vadd.f32 %v3303, %v3521
      %v3586 = vadd.f32 %v3304, %v3523
      %v3587 = vadd.f32 %v3305, %v3526
      %v3588 = vadd.f32 %v3306, %v3528
      %v3589 = vadd.f32 %v3307, %v3531
      %v3590 = vadd.f32 %v3308, %v3533
      %v3591 = vadd.f32 %v3309, %v3536
      %v3592 = vadd.f32 %v3310, %v3538
      %v3593 = vadd.f32 %v3311, %v3541
      %v3594 = vadd.f32 %v3312, %v3543
      %v3595 = vadd.f32 %v3313, %v3546
      %v3596 = vadd.f32 %v3314, %v3548
      %v3597 = vadd.f32 %v3315, %v3551
      %v3598 = vadd.f32 %v3316, %v3553
      %v3599 = vadd.f32 %v3317, %v3556
      %v3600 = vadd.f32 %v3318, %v3558
      %v3601 = vadd.f32 %v3319, %v3561
      %v3602 = vadd.f32 %v3320, %v3563
      %v3603 = vadd.f32 %v3321, %v3566
      %v3604 = vadd.f32 %v3322, %v3568
      %v3605 = vadd.f32 %v3323, %v3571
      %v3606 = vadd.f32 %v3324, %v3573
      %3607 = vst [vmem:[#allocation2] sm:$0xff] %v3575
      %3608 = vst [vmem:[#allocation2 + $0x8] sm:$0xff] %v3576
      %3609 = vst [vmem:[#allocation2 + $0x10] sm:$0xff] %v3577
      %3610 = vst [vmem:[#allocation2 + $0x18] sm:$0xff] %v3578
      %3611 = vst [vmem:[#allocation2 + $0x20] sm:$0xff] %v3579
      %3612 = vst [vmem:[#allocation2 + $0x28] sm:$0xff] %v3580
      %3613 = vst [vmem:[#allocation2 + $0x30] sm:$0xff] %v3581
      %3614 = vst [vmem:[#allocation2 + $0x38] sm:$0xff] %v3582
      %3615 = vst [vmem:[#allocation2 + $0x40] sm:$0xff] %v3583
      %3616 = vst [vmem:[#allocation2 + $0x48] sm:$0xff] %v3584
      %3617 = vst [vmem:[#allocation2 + $0x50] sm:$0xff] %v3585
      %3618 = vst [vmem:[#allocation2 + $0x58] sm:$0xff] %v3586
      %3619 = vst [vmem:[#allocation2 + $0x60] sm:$0xff] %v3587
      %3620 = vst [vmem:[#allocation2 + $0x68] sm:$0xff] %v3588
      %3621 = vst [vmem:[#allocation2 + $0x70] sm:$0xff] %v3589
      %3622 = vst [vmem:[#allocation2 + $0x78] sm:$0xff] %v3590
      %3623 = vst [vmem:[#allocation2 + $0x80] sm:$0xff] %v3591
      %3624 = vst [vmem:[#allocation2 + $0x88] sm:$0xff] %v3592
      %3625 = vst [vmem:[#allocation2 + $0x90] sm:$0xff] %v3593
      %3626 = vst [vmem:[#allocation2 + $0x98] sm:$0xff] %v3594
      %3627 = vst [vmem:[#allocation2 + $0xa0] sm:$0xff] %v3595
      %3628 = vst [vmem:[#allocation2 + $0xa8] sm:$0xff] %v3596
      %3629 = vst [vmem:[#allocation2 + $0xb0] sm:$0xff] %v3597
      %3630 = vst [vmem:[#allocation2 + $0xb8] sm:$0xff] %v3598
      %3631 = vst [vmem:[#allocation2 + $0xc0] sm:$0xff] %v3599
      %3632 = vst [vmem:[#allocation2 + $0xc8] sm:$0xff] %v3600
      %3633 = vst [vmem:[#allocation2 + $0xd0] sm:$0xff] %v3601
      %3634 = vst [vmem:[#allocation2 + $0xd8] sm:$0xff] %v3602
      %3635 = vst [vmem:[#allocation2 + $0xe0] sm:$0xff] %v3603
      %3636 = vst [vmem:[#allocation2 + $0xe8] sm:$0xff] %v3604
      %3637 = vst [vmem:[#allocation2 + $0xf0] sm:$0xff] %v3605
      %3638 = vst [vmem:[#allocation2 + $0xf8] sm:$0xff] %v3606
      %v3639 = vld [vmem:[%s2818 + $0x2] sm:$0xff]
      %v3640 = vld [vmem:[%s2818 + $0xa] sm:$0xff]
      %v3641 = vld [vmem:[%s2818 + $0x1a] sm:$0xff]
      %v3642 = vld [vmem:[%s2818 + $0x22] sm:$0xff]
      %v3643 = vld [vmem:[%s2818 + $0x32] sm:$0xff]
      %v3644 = vld [vmem:[%s2818 + $0x3a] sm:$0xff]
      %v3645 = vld [vmem:[%s2818 + $0x4a] sm:$0xff]
      %v3646 = vld [vmem:[%s2818 + $0x52] sm:$0xff]
      %v3647 = vld [vmem:[%s2818 + $0x62] sm:$0xff]
      %v3648 = vld [vmem:[%s2818 + $0x6a] sm:$0xff]
      %v3649 = vld [vmem:[%s2818 + $0x7a] sm:$0xff]
      %v3650 = vld [vmem:[%s2818 + $0x82] sm:$0xff]
      %v3651 = vld [vmem:[%s2818 + $0x92] sm:$0xff]
      %v3652 = vld [vmem:[%s2818 + $0x9a] sm:$0xff]
      %v3653 = vld [vmem:[%s2818 + $0xaa] sm:$0xff]
      %v3654 = vld [vmem:[%s2818 + $0xb2] sm:$0xff]
      %v3655 = vld [vmem:[%s2818 + $0xc2] sm:$0xff]
      %v3656 = vld [vmem:[%s2818 + $0xca] sm:$0xff]
      %v3657 = vld [vmem:[%s2818 + $0xda] sm:$0xff]
      %v3658 = vld [vmem:[%s2818 + $0xe2] sm:$0xff]
      %v3659 = vld [vmem:[%s2818 + $0xf2] sm:$0xff]
      %v3660 = vld [vmem:[%s2818 + $0xfa] sm:$0xff]
      %v3661 = vld [vmem:[%s2818 + $0x10a] sm:$0xff]
      %v3662 = vld [vmem:[%s2818 + $0x112] sm:$0xff]
      %v3663 = vld [vmem:[%s2818 + $0x122] sm:$0xff]
      %v3664 = vld [vmem:[%s2818 + $0x12a] sm:$0xff]
      %v3665 = vld [vmem:[%s2818 + $0x13a] sm:$0xff]
      %v3666 = vld [vmem:[%s2818 + $0x142] sm:$0xff]
      %v3667 = vld [vmem:[%s2818 + $0x152] sm:$0xff]
      %v3668 = vld [vmem:[%s2818 + $0x15a] sm:$0xff]
      %v3669 = vld [vmem:[%s2818 + $0x16a] sm:$0xff]
      %v3670 = vld [vmem:[%s2818 + $0x172] sm:$0xff]
      %v3671 = vpack.c.bf16 %v3639, %v3639
      %v3672 = vpack.c.bf16 %v3640, %v3640
      %v3673 = vpack.c.bf16 %v3641, %v3641
      %v3674 = vpack.c.bf16 %v3642, %v3642
      %v3675 = vpack.c.bf16 %v3643, %v3643
      %v3676 = vpack.c.bf16 %v3644, %v3644
      %v3677 = vpack.c.bf16 %v3645, %v3645
      %v3678 = vpack.c.bf16 %v3646, %v3646
      %v3679 = vpack.c.bf16 %v3647, %v3647
      %v3680 = vpack.c.bf16 %v3648, %v3648
      %v3681 = vpack.c.bf16 %v3649, %v3649
      %v3682 = vpack.c.bf16 %v3650, %v3650
      %v3683 = vpack.c.bf16 %v3651, %v3651
      %v3684 = vpack.c.bf16 %v3652, %v3652
      %v3685 = vpack.c.bf16 %v3653, %v3653
      %v3686 = vpack.c.bf16 %v3654, %v3654
      %v3687 = vpack.c.bf16 %v3655, %v3655
      %v3688 = vpack.c.bf16 %v3656, %v3656
      %v3689 = vpack.c.bf16 %v3657, %v3657
      %v3690 = vpack.c.bf16 %v3658, %v3658
      %v3691 = vpack.c.bf16 %v3659, %v3659
      %v3692 = vpack.c.bf16 %v3660, %v3660
      %v3693 = vpack.c.bf16 %v3661, %v3661
      %v3694 = vpack.c.bf16 %v3662, %v3662
      %v3695 = vpack.c.bf16 %v3663, %v3663
      %v3696 = vpack.c.bf16 %v3664, %v3664
      %v3697 = vpack.c.bf16 %v3665, %v3665
      %v3698 = vpack.c.bf16 %v3666, %v3666
      %v3699 = vpack.c.bf16 %v3667, %v3667
      %v3700 = vpack.c.bf16 %v3668, %v3668
      %v3701 = vpack.c.bf16 %v3669, %v3669
      %v3702 = vpack.c.bf16 %v3670, %v3670
      %v3703 = vld [vmem:[#allocation2] sm:$0xff]
      %v3704 = vld [vmem:[#allocation2 + $0x8] sm:$0xff]
      %v3705 = vld [vmem:[#allocation2 + $0x10] sm:$0xff]
      %v3706 = vld [vmem:[#allocation2 + $0x18] sm:$0xff]
      %v3707 = vld [vmem:[#allocation2 + $0x20] sm:$0xff]
      %v3708 = vld [vmem:[#allocation2 + $0x28] sm:$0xff]
      %v3709 = vld [vmem:[#allocation2 + $0x30] sm:$0xff]
      %v3710 = vld [vmem:[#allocation2 + $0x38] sm:$0xff]
      %v3711 = vld [vmem:[#allocation2 + $0x40] sm:$0xff]
      %v3712 = vld [vmem:[#allocation2 + $0x48] sm:$0xff]
      %v3713 = vld [vmem:[#allocation2 + $0x50] sm:$0xff]
      %v3714 = vld [vmem:[#allocation2 + $0x58] sm:$0xff]
      %v3715 = vld [vmem:[#allocation2 + $0x60] sm:$0xff]
      %v3716 = vld [vmem:[#allocation2 + $0x68] sm:$0xff]
      %v3717 = vld [vmem:[#allocation2 + $0x70] sm:$0xff]
      %v3718 = vld [vmem:[#allocation2 + $0x78] sm:$0xff]
      %v3719 = vld [vmem:[#allocation2 + $0x80] sm:$0xff]
      %v3720 = vld [vmem:[#allocation2 + $0x88] sm:$0xff]
      %v3721 = vld [vmem:[#allocation2 + $0x90] sm:$0xff]
      %v3722 = vld [vmem:[#allocation2 + $0x98] sm:$0xff]
      %v3723 = vld [vmem:[#allocation2 + $0xa0] sm:$0xff]
      %v3724 = vld [vmem:[#allocation2 + $0xa8] sm:$0xff]
      %v3725 = vld [vmem:[#allocation2 + $0xb0] sm:$0xff]
      %v3726 = vld [vmem:[#allocation2 + $0xb8] sm:$0xff]
      %v3727 = vld [vmem:[#allocation2 + $0xc0] sm:$0xff]
      %v3728 = vld [vmem:[#allocation2 + $0xc8] sm:$0xff]
      %v3729 = vld [vmem:[#allocation2 + $0xd0] sm:$0xff]
      %v3730 = vld [vmem:[#allocation2 + $0xd8] sm:$0xff]
      %v3731 = vld [vmem:[#allocation2 + $0xe0] sm:$0xff]
      %v3732 = vld [vmem:[#allocation2 + $0xe8] sm:$0xff]
      %v3733 = vld [vmem:[#allocation2 + $0xf0] sm:$0xff]
      %v3734 = vld [vmem:[#allocation2 + $0xf8] sm:$0xff]
      %s3735 = scalar_lea.vmem %s2, 512
      %v3736 = vld [vmem:[%s3735] sm:$0xf]
      %v3737 = vld [vmem:[%s3735 + $0x4] sm:$0xf]
      %v3738 = vld [vmem:[%s3735 + $0x8] sm:$0xf]
      %v3739 = vld [vmem:[%s3735 + $0xc] sm:$0xf]
      %v3740 = vld [vmem:[%s3735 + $0x10] sm:$0xf]
      %v3741 = vld [vmem:[%s3735 + $0x14] sm:$0xf]
      %v3742 = vld [vmem:[%s3735 + $0x18] sm:$0xf]
      %v3743 = vld [vmem:[%s3735 + $0x1c] sm:$0xf]
      %v3744 = vld [vmem:[%s3735 + $0x20] sm:$0xf]
      %v3745 = vld [vmem:[%s3735 + $0x24] sm:$0xf]
      %v3746 = vld [vmem:[%s3735 + $0x28] sm:$0xf]
      %v3747 = vld [vmem:[%s3735 + $0x2c] sm:$0xf]
      %v3748 = vld [vmem:[%s3735 + $0x30] sm:$0xf]
      %v3749 = vld [vmem:[%s3735 + $0x34] sm:$0xf]
      %v3750 = vld [vmem:[%s3735 + $0x38] sm:$0xf]
      %v3751 = vld [vmem:[%s3735 + $0x3c] sm:$0xf]
      %v3784 = vunpack.c.l.b16 %v3671
      %v3785 = vunpack.c.l.b16 %v3672
      %v3786 = vunpack.c.l.b16 %v3673
      %v3787 = vunpack.c.l.b16 %v3674
      %v3788 = vunpack.c.l.b16 %v3675
      %v3789 = vunpack.c.l.b16 %v3676
      %v3790 = vunpack.c.l.b16 %v3677
      %v3791 = vunpack.c.l.b16 %v3678
      %v3792 = vunpack.c.l.b16 %v3679
      %v3793 = vunpack.c.l.b16 %v3680
      %v3794 = vunpack.c.l.b16 %v3681
      %v3795 = vunpack.c.l.b16 %v3682
      %v3796 = vunpack.c.l.b16 %v3683
      %v3797 = vunpack.c.l.b16 %v3684
      %v3798 = vunpack.c.l.b16 %v3685
      %v3799 = vunpack.c.l.b16 %v3686
      %v3800 = vunpack.c.l.b16 %v3687
      %v3801 = vunpack.c.l.b16 %v3688
      %v3802 = vunpack.c.l.b16 %v3689
      %v3803 = vunpack.c.l.b16 %v3690
      %v3804 = vunpack.c.l.b16 %v3691
      %v3805 = vunpack.c.l.b16 %v3692
      %v3806 = vunpack.c.l.b16 %v3693
      %v3807 = vunpack.c.l.b16 %v3694
      %v3808 = vunpack.c.l.b16 %v3695
      %v3809 = vunpack.c.l.b16 %v3696
      %v3810 = vunpack.c.l.b16 %v3697
      %v3811 = vunpack.c.l.b16 %v3698
      %v3812 = vunpack.c.l.b16 %v3699
      %v3813 = vunpack.c.l.b16 %v3700
      %v3814 = vunpack.c.l.b16 %v3701
      %v3815 = vunpack.c.l.b16 %v3702
      %v3816 = vpack.c.b16 %v3785, %v3784
      %v3817 = vpack.c.b16 %v3787, %v3786
      %v3818 = vpack.c.b16 %v3789, %v3788
      %v3819 = vpack.c.b16 %v3791, %v3790
      %v3820 = vpack.c.b16 %v3793, %v3792
      %v3821 = vpack.c.b16 %v3795, %v3794
      %v3822 = vpack.c.b16 %v3797, %v3796
      %v3823 = vpack.c.b16 %v3799, %v3798
      %v3824 = vpack.c.b16 %v3801, %v3800
      %v3825 = vpack.c.b16 %v3803, %v3802
      %v3826 = vpack.c.b16 %v3805, %v3804
      %v3827 = vpack.c.b16 %v3807, %v3806
      %v3828 = vpack.c.b16 %v3809, %v3808
      %v3829 = vpack.c.b16 %v3811, %v3810
      %v3830 = vpack.c.b16 %v3813, %v3812
      %v3831 = vpack.c.b16 %v3815, %v3814
      %v3864 = vunpack.c.l.b16 %v3736
      %v3865 = vunpack.c.l.b16 %v3737
      %v3866 = vunpack.c.l.b16 %v3738
      %v3867 = vunpack.c.l.b16 %v3739
      %v3868 = vunpack.c.l.b16 %v3740
      %v3869 = vunpack.c.l.b16 %v3741
      %v3870 = vunpack.c.l.b16 %v3742
      %v3871 = vunpack.c.l.b16 %v3743
      %v3872 = vunpack.c.l.b16 %v3744
      %v3873 = vunpack.c.l.b16 %v3745
      %v3874 = vunpack.c.l.b16 %v3746
      %v3875 = vunpack.c.l.b16 %v3747
      %v3876 = vunpack.c.l.b16 %v3748
      %v3877 = vunpack.c.l.b16 %v3749
      %v3878 = vunpack.c.l.b16 %v3750
      %v3879 = vunpack.c.l.b16 %v3751
      %v3880 = vpack.c.b16 %v3865, %v3864
      %v3881 = vpack.c.b16 %v3867, %v3866
      %v3882 = vpack.c.b16 %v3869, %v3868
      %v3883 = vpack.c.b16 %v3871, %v3870
      %v3884 = vpack.c.b16 %v3873, %v3872
      %v3885 = vpack.c.b16 %v3875, %v3874
      %v3886 = vpack.c.b16 %v3877, %v3876
      %v3887 = vpack.c.b16 %v3879, %v3878
      %3896 = vmatpush.bf16.msra.mxu0 %v3887
      %3897 = vmatpush.bf16.msra.mxu0 %v3886
      %3898 = vmatpush.bf16.msra.mxu0 %v3885
      %3899 = vmatpush.bf16.msra.mxu0 %v3884
      %3900 = vmatpush.bf16.msra.mxu0 %v3883
      %3901 = vmatpush.bf16.msra.mxu0 %v3882
      %3902 = vmatpush.bf16.msra.mxu0 %v3881
      %3903 = vmatpush.bf16.msra.mxu0 %v3880
      %3904 = vmatmul.bf16.gmra.mxu0 %v3816
      %v3905 = vpop.f32.mrf.mxu0
      %v3906 = vadd.f32 0.0, %v3905
      %v3907 = vpop.f32.mrf.mxu0
      %v3908 = vadd.f32 0.0, %v3907
      %3909 = vmatmul.bf16.gmra.mxu0 %v3817
      %v3910 = vpop.f32.mrf.mxu0
      %v3911 = vadd.f32 0.0, %v3910
      %v3912 = vpop.f32.mrf.mxu0
      %v3913 = vadd.f32 0.0, %v3912
      %3914 = vmatmul.bf16.gmra.mxu0 %v3818
      %v3915 = vpop.f32.mrf.mxu0
      %v3916 = vadd.f32 0.0, %v3915
      %v3917 = vpop.f32.mrf.mxu0
      %v3918 = vadd.f32 0.0, %v3917
      %3919 = vmatmul.bf16.gmra.mxu0 %v3819
      %v3920 = vpop.f32.mrf.mxu0
      %v3921 = vadd.f32 0.0, %v3920
      %v3922 = vpop.f32.mrf.mxu0
      %v3923 = vadd.f32 0.0, %v3922
      %3924 = vmatmul.bf16.gmra.mxu0 %v3820
      %v3925 = vpop.f32.mrf.mxu0
      %v3926 = vadd.f32 0.0, %v3925
      %v3927 = vpop.f32.mrf.mxu0
      %v3928 = vadd.f32 0.0, %v3927
      %3929 = vmatmul.bf16.gmra.mxu0 %v3821
      %v3930 = vpop.f32.mrf.mxu0
      %v3931 = vadd.f32 0.0, %v3930
      %v3932 = vpop.f32.mrf.mxu0
      %v3933 = vadd.f32 0.0, %v3932
      %3934 = vmatmul.bf16.gmra.mxu0 %v3822
      %v3935 = vpop.f32.mrf.mxu0
      %v3936 = vadd.f32 0.0, %v3935
      %v3937 = vpop.f32.mrf.mxu0
      %v3938 = vadd.f32 0.0, %v3937
      %3939 = vmatmul.bf16.gmra.mxu0 %v3823
      %v3940 = vpop.f32.mrf.mxu0
      %v3941 = vadd.f32 0.0, %v3940
      %v3942 = vpop.f32.mrf.mxu0
      %v3943 = vadd.f32 0.0, %v3942
      %3944 = vmatmul.bf16.gmra.mxu0 %v3824
      %v3945 = vpop.f32.mrf.mxu0
      %v3946 = vadd.f32 0.0, %v3945
      %v3947 = vpop.f32.mrf.mxu0
      %v3948 = vadd.f32 0.0, %v3947
      %3949 = vmatmul.bf16.gmra.mxu0 %v3825
      %v3950 = vpop.f32.mrf.mxu0
      %v3951 = vadd.f32 0.0, %v3950
      %v3952 = vpop.f32.mrf.mxu0
      %v3953 = vadd.f32 0.0, %v3952
      %3954 = vmatmul.bf16.gmra.mxu0 %v3826
      %v3955 = vpop.f32.mrf.mxu0
      %v3956 = vadd.f32 0.0, %v3955
      %v3957 = vpop.f32.mrf.mxu0
      %v3958 = vadd.f32 0.0, %v3957
      %3959 = vmatmul.bf16.gmra.mxu0 %v3827
      %v3960 = vpop.f32.mrf.mxu0
      %v3961 = vadd.f32 0.0, %v3960
      %v3962 = vpop.f32.mrf.mxu0
      %v3963 = vadd.f32 0.0, %v3962
      %3964 = vmatmul.bf16.gmra.mxu0 %v3828
      %v3965 = vpop.f32.mrf.mxu0
      %v3966 = vadd.f32 0.0, %v3965
      %v3967 = vpop.f32.mrf.mxu0
      %v3968 = vadd.f32 0.0, %v3967
      %3969 = vmatmul.bf16.gmra.mxu0 %v3829
      %v3970 = vpop.f32.mrf.mxu0
      %v3971 = vadd.f32 0.0, %v3970
      %v3972 = vpop.f32.mrf.mxu0
      %v3973 = vadd.f32 0.0, %v3972
      %3974 = vmatmul.bf16.gmra.mxu0 %v3830
      %v3975 = vpop.f32.mrf.mxu0
      %v3976 = vadd.f32 0.0, %v3975
      %v3977 = vpop.f32.mrf.mxu0
      %v3978 = vadd.f32 0.0, %v3977
      %3979 = vmatmul.bf16.gmra.mxu0 %v3831
      %v3980 = vpop.f32.mrf.mxu0
      %v3981 = vadd.f32 0.0, %v3980
      %v3982 = vpop.f32.mrf.mxu0
      %v3983 = vadd.f32 0.0, %v3982
      %3984 = vdwg.mxu0
      %v3985 = vadd.f32 %v3703, %v3906
      %v3986 = vadd.f32 %v3704, %v3908
      %v3987 = vadd.f32 %v3705, %v3911
      %v3988 = vadd.f32 %v3706, %v3913
      %v3989 = vadd.f32 %v3707, %v3916
      %v3990 = vadd.f32 %v3708, %v3918
      %v3991 = vadd.f32 %v3709, %v3921
      %v3992 = vadd.f32 %v3710, %v3923
      %v3993 = vadd.f32 %v3711, %v3926
      %v3994 = vadd.f32 %v3712, %v3928
      %v3995 = vadd.f32 %v3713, %v3931
      %v3996 = vadd.f32 %v3714, %v3933
      %v3997 = vadd.f32 %v3715, %v3936
      %v3998 = vadd.f32 %v3716, %v3938
      %v3999 = vadd.f32 %v3717, %v3941
      %v4000 = vadd.f32 %v3718, %v3943
      %v4001 = vadd.f32 %v3719, %v3946
      %v4002 = vadd.f32 %v3720, %v3948
      %v4003 = vadd.f32 %v3721, %v3951
      %v4004 = vadd.f32 %v3722, %v3953
      %v4005 = vadd.f32 %v3723, %v3956
      %v4006 = vadd.f32 %v3724, %v3958
      %v4007 = vadd.f32 %v3725, %v3961
      %v4008 = vadd.f32 %v3726, %v3963
      %v4009 = vadd.f32 %v3727, %v3966
      %v4010 = vadd.f32 %v3728, %v3968
      %v4011 = vadd.f32 %v3729, %v3971
      %v4012 = vadd.f32 %v3730, %v3973
      %v4013 = vadd.f32 %v3731, %v3976
      %v4014 = vadd.f32 %v3732, %v3978
      %v4015 = vadd.f32 %v3733, %v3981
      %v4016 = vadd.f32 %v3734, %v3983
      %4017 = vst [vmem:[#allocation2] sm:$0xff] %v3985
      %4018 = vst [vmem:[#allocation2 + $0x8] sm:$0xff] %v3986
      %4019 = vst [vmem:[#allocation2 + $0x10] sm:$0xff] %v3987
      %4020 = vst [vmem:[#allocation2 + $0x18] sm:$0xff] %v3988
      %4021 = vst [vmem:[#allocation2 + $0x20] sm:$0xff] %v3989
      %4022 = vst [vmem:[#allocation2 + $0x28] sm:$0xff] %v3990
      %4023 = vst [vmem:[#allocation2 + $0x30] sm:$0xff] %v3991
      %4024 = vst [vmem:[#allocation2 + $0x38] sm:$0xff] %v3992
      %4025 = vst [vmem:[#allocation2 + $0x40] sm:$0xff] %v3993
      %4026 = vst [vmem:[#allocation2 + $0x48] sm:$0xff] %v3994
      %4027 = vst [vmem:[#allocation2 + $0x50] sm:$0xff] %v3995
      %4028 = vst [vmem:[#allocation2 + $0x58] sm:$0xff] %v3996
      %4029 = vst [vmem:[#allocation2 + $0x60] sm:$0xff] %v3997
      %4030 = vst [vmem:[#allocation2 + $0x68] sm:$0xff] %v3998
      %4031 = vst [vmem:[#allocation2 + $0x70] sm:$0xff] %v3999
      %4032 = vst [vmem:[#allocation2 + $0x78] sm:$0xff] %v4000
      %4033 = vst [vmem:[#allocation2 + $0x80] sm:$0xff] %v4001
      %4034 = vst [vmem:[#allocation2 + $0x88] sm:$0xff] %v4002
      %4035 = vst [vmem:[#allocation2 + $0x90] sm:$0xff] %v4003
      %4036 = vst [vmem:[#allocation2 + $0x98] sm:$0xff] %v4004
      %4037 = vst [vmem:[#allocation2 + $0xa0] sm:$0xff] %v4005
      %4038 = vst [vmem:[#allocation2 + $0xa8] sm:$0xff] %v4006
      %4039 = vst [vmem:[#allocation2 + $0xb0] sm:$0xff] %v4007
      %4040 = vst [vmem:[#allocation2 + $0xb8] sm:$0xff] %v4008
      %4041 = vst [vmem:[#allocation2 + $0xc0] sm:$0xff] %v4009
      %4042 = vst [vmem:[#allocation2 + $0xc8] sm:$0xff] %v4010
      %4043 = vst [vmem:[#allocation2 + $0xd0] sm:$0xff] %v4011
      %4044 = vst [vmem:[#allocation2 + $0xd8] sm:$0xff] %v4012
      %4045 = vst [vmem:[#allocation2 + $0xe0] sm:$0xff] %v4013
      %4046 = vst [vmem:[#allocation2 + $0xe8] sm:$0xff] %v4014
      %4047 = vst [vmem:[#allocation2 + $0xf0] sm:$0xff] %v4015
      %4048 = vst [vmem:[#allocation2 + $0xf8] sm:$0xff] %v4016
      %v4049 = vld [vmem:[#allocation2] sm:$0xff]
      %v4050 = vld [vmem:[#allocation2 + $0x8] sm:$0xff]
      %v4051 = vld [vmem:[#allocation2 + $0x10] sm:$0xff]
      %v4052 = vld [vmem:[#allocation2 + $0x18] sm:$0xff]
      %v4053 = vld [vmem:[#allocation2 + $0x20] sm:$0xff]
      %v4054 = vld [vmem:[#allocation2 + $0x28] sm:$0xff]
      %v4055 = vld [vmem:[#allocation2 + $0x30] sm:$0xff]
      %v4056 = vld [vmem:[#allocation2 + $0x38] sm:$0xff]
      %v4057 = vld [vmem:[#allocation2 + $0x40] sm:$0xff]
      %v4058 = vld [vmem:[#allocation2 + $0x48] sm:$0xff]
      %v4059 = vld [vmem:[#allocation2 + $0x50] sm:$0xff]
      %v4060 = vld [vmem:[#allocation2 + $0x58] sm:$0xff]
      %v4061 = vld [vmem:[#allocation2 + $0x60] sm:$0xff]
      %v4062 = vld [vmem:[#allocation2 + $0x68] sm:$0xff]
      %v4063 = vld [vmem:[#allocation2 + $0x70] sm:$0xff]
      %v4064 = vld [vmem:[#allocation2 + $0x78] sm:$0xff]
      %v4065 = vld [vmem:[#allocation2 + $0x80] sm:$0xff]
      %v4066 = vld [vmem:[#allocation2 + $0x88] sm:$0xff]
      %v4067 = vld [vmem:[#allocation2 + $0x90] sm:$0xff]
      %v4068 = vld [vmem:[#allocation2 + $0x98] sm:$0xff]
      %v4069 = vld [vmem:[#allocation2 + $0xa0] sm:$0xff]
      %v4070 = vld [vmem:[#allocation2 + $0xa8] sm:$0xff]
      %v4071 = vld [vmem:[#allocation2 + $0xb0] sm:$0xff]
      %v4072 = vld [vmem:[#allocation2 + $0xb8] sm:$0xff]
      %v4073 = vld [vmem:[#allocation2 + $0xc0] sm:$0xff]
      %v4074 = vld [vmem:[#allocation2 + $0xc8] sm:$0xff]
      %v4075 = vld [vmem:[#allocation2 + $0xd0] sm:$0xff]
      %v4076 = vld [vmem:[#allocation2 + $0xd8] sm:$0xff]
      %v4077 = vld [vmem:[#allocation2 + $0xe0] sm:$0xff]
      %v4078 = vld [vmem:[#allocation2 + $0xe8] sm:$0xff]
      %v4079 = vld [vmem:[#allocation2 + $0xf0] sm:$0xff]
      %v4080 = vld [vmem:[#allocation2 + $0xf8] sm:$0xff]
      %v4081 = vpack.c.bf16 %v4050, %v4049
      %v4082 = vpack.c.bf16 %v4052, %v4051
      %v4083 = vpack.c.bf16 %v4054, %v4053
      %v4084 = vpack.c.bf16 %v4056, %v4055
      %v4085 = vpack.c.bf16 %v4058, %v4057
      %v4086 = vpack.c.bf16 %v4060, %v4059
      %v4087 = vpack.c.bf16 %v4062, %v4061
      %v4088 = vpack.c.bf16 %v4064, %v4063
      %v4089 = vpack.c.bf16 %v4066, %v4065
      %v4090 = vpack.c.bf16 %v4068, %v4067
      %v4091 = vpack.c.bf16 %v4070, %v4069
      %v4092 = vpack.c.bf16 %v4072, %v4071
      %v4093 = vpack.c.bf16 %v4074, %v4073
      %v4094 = vpack.c.bf16 %v4076, %v4075
      %v4095 = vpack.c.bf16 %v4078, %v4077
      %v4096 = vpack.c.bf16 %v4080, %v4079
      %v4097 = vld [vmem:[%s3] sm:$0xf]
      %v4098 = vld [vmem:[%s3 + $0x4] sm:$0xf]
      %v4099 = vld [vmem:[%s3 + $0x8] sm:$0xf]
      %v4100 = vld [vmem:[%s3 + $0xc] sm:$0xf]
      %v4101 = vld [vmem:[%s3 + $0x10] sm:$0xf]
      %v4102 = vld [vmem:[%s3 + $0x14] sm:$0xf]
      %v4103 = vld [vmem:[%s3 + $0x18] sm:$0xf]
      %v4104 = vld [vmem:[%s3 + $0x1c] sm:$0xf]
      %v4105 = vld [vmem:[%s3 + $0x20] sm:$0xf]
      %v4106 = vld [vmem:[%s3 + $0x24] sm:$0xf]
      %v4107 = vld [vmem:[%s3 + $0x28] sm:$0xf]
      %v4108 = vld [vmem:[%s3 + $0x2c] sm:$0xf]
      %v4109 = vld [vmem:[%s3 + $0x30] sm:$0xf]
      %v4110 = vld [vmem:[%s3 + $0x34] sm:$0xf]
      %v4111 = vld [vmem:[%s3 + $0x38] sm:$0xf]
      %v4112 = vld [vmem:[%s3 + $0x3c] sm:$0xf]
      %v4113 = vld [vmem:[%s4] sm:$0x1]
      %v4115 = vperm.slane %v4113, 0
      %v4133 = vunpack.c.l.b16 %v4097
      %v4134 = vunpack.c.l.b16 %v4098
      %v4135 = vunpack.c.l.b16 %v4099
      %v4136 = vunpack.c.l.b16 %v4100
      %v4137 = vunpack.c.l.b16 %v4101
      %v4138 = vunpack.c.l.b16 %v4102
      %v4139 = vunpack.c.l.b16 %v4103
      %v4140 = vunpack.c.l.b16 %v4104
      %v4141 = vunpack.c.l.b16 %v4105
      %v4142 = vunpack.c.l.b16 %v4106
      %v4143 = vunpack.c.l.b16 %v4107
      %v4144 = vunpack.c.l.b16 %v4108
      %v4145 = vunpack.c.l.b16 %v4109
      %v4146 = vunpack.c.l.b16 %v4110
      %v4147 = vunpack.c.l.b16 %v4111
      %v4148 = vunpack.c.l.b16 %v4112
      %v4149 = vpack.c.b16 %v4134, %v4133
      %v4150 = vpack.c.b16 %v4136, %v4135
      %v4151 = vpack.c.b16 %v4138, %v4137
      %v4152 = vpack.c.b16 %v4140, %v4139
      %v4153 = vpack.c.b16 %v4142, %v4141
      %v4154 = vpack.c.b16 %v4144, %v4143
      %v4155 = vpack.c.b16 %v4146, %v4145
      %v4156 = vpack.c.b16 %v4148, %v4147
      %4165 = vmatpush.bf16.msra.mxu0 %v4156
      %4166 = vmatpush.bf16.msra.mxu0 %v4155
      %4167 = vmatpush.bf16.msra.mxu0 %v4154
      %4168 = vmatpush.bf16.msra.mxu0 %v4153
      %4169 = vmatpush.bf16.msra.mxu0 %v4152
      %4170 = vmatpush.bf16.msra.mxu0 %v4151
      %4171 = vmatpush.bf16.msra.mxu0 %v4150
      %4172 = vmatpush.bf16.msra.mxu0 %v4149
      %4173 = vmatmul.bf16.gmra.mxu0 %v4081
      %v4174 = vpop.f32.mrf.mxu0
      %v4175 = vadd.f32 %v4115, %v4174
      %v4176 = vpop.f32.mrf.mxu0
      %v4177 = vadd.f32 %v4115, %v4176
      %4178 = vmatmul.bf16.gmra.mxu0 %v4082
      %v4179 = vpop.f32.mrf.mxu0
      %v4180 = vadd.f32 %v4115, %v4179
      %v4181 = vpop.f32.mrf.mxu0
      %v4182 = vadd.f32 %v4115, %v4181
      %4183 = vmatmul.bf16.gmra.mxu0 %v4083
      %v4184 = vpop.f32.mrf.mxu0
      %v4185 = vadd.f32 %v4115, %v4184
      %v4186 = vpop.f32.mrf.mxu0
      %v4187 = vadd.f32 %v4115, %v4186
      %4188 = vmatmul.bf16.gmra.mxu0 %v4084
      %v4189 = vpop.f32.mrf.mxu0
      %v4190 = vadd.f32 %v4115, %v4189
      %v4191 = vpop.f32.mrf.mxu0
      %v4192 = vadd.f32 %v4115, %v4191
      %4193 = vmatmul.bf16.gmra.mxu0 %v4085
      %v4194 = vpop.f32.mrf.mxu0
      %v4195 = vadd.f32 %v4115, %v4194
      %v4196 = vpop.f32.mrf.mxu0
      %v4197 = vadd.f32 %v4115, %v4196
      %4198 = vmatmul.bf16.gmra.mxu0 %v4086
      %v4199 = vpop.f32.mrf.mxu0
      %v4200 = vadd.f32 %v4115, %v4199
      %v4201 = vpop.f32.mrf.mxu0
      %v4202 = vadd.f32 %v4115, %v4201
      %4203 = vmatmul.bf16.gmra.mxu0 %v4087
      %v4204 = vpop.f32.mrf.mxu0
      %v4205 = vadd.f32 %v4115, %v4204
      %v4206 = vpop.f32.mrf.mxu0
      %v4207 = vadd.f32 %v4115, %v4206
      %4208 = vmatmul.bf16.gmra.mxu0 %v4088
      %v4209 = vpop.f32.mrf.mxu0
      %v4210 = vadd.f32 %v4115, %v4209
      %v4211 = vpop.f32.mrf.mxu0
      %v4212 = vadd.f32 %v4115, %v4211
      %4213 = vmatmul.bf16.gmra.mxu0 %v4089
      %v4214 = vpop.f32.mrf.mxu0
      %v4215 = vadd.f32 %v4115, %v4214
      %v4216 = vpop.f32.mrf.mxu0
      %v4217 = vadd.f32 %v4115, %v4216
      %4218 = vmatmul.bf16.gmra.mxu0 %v4090
      %v4219 = vpop.f32.mrf.mxu0
      %v4220 = vadd.f32 %v4115, %v4219
      %v4221 = vpop.f32.mrf.mxu0
      %v4222 = vadd.f32 %v4115, %v4221
      %4223 = vmatmul.bf16.gmra.mxu0 %v4091
      %v4224 = vpop.f32.mrf.mxu0
      %v4225 = vadd.f32 %v4115, %v4224
      %v4226 = vpop.f32.mrf.mxu0
      %v4227 = vadd.f32 %v4115, %v4226
      %4228 = vmatmul.bf16.gmra.mxu0 %v4092
      %v4229 = vpop.f32.mrf.mxu0
      %v4230 = vadd.f32 %v4115, %v4229
      %v4231 = vpop.f32.mrf.mxu0
      %v4232 = vadd.f32 %v4115, %v4231
      %4233 = vmatmul.bf16.gmra.mxu0 %v4093
      %v4234 = vpop.f32.mrf.mxu0
      %v4235 = vadd.f32 %v4115, %v4234
      %v4236 = vpop.f32.mrf.mxu0
      %v4237 = vadd.f32 %v4115, %v4236
      %4238 = vmatmul.bf16.gmra.mxu0 %v4094
      %v4239 = vpop.f32.mrf.mxu0
      %v4240 = vadd.f32 %v4115, %v4239
      %v4241 = vpop.f32.mrf.mxu0
      %v4242 = vadd.f32 %v4115, %v4241
      %4243 = vmatmul.bf16.gmra.mxu0 %v4095
      %v4244 = vpop.f32.mrf.mxu0
      %v4245 = vadd.f32 %v4115, %v4244
      %v4246 = vpop.f32.mrf.mxu0
      %v4247 = vadd.f32 %v4115, %v4246
      %4248 = vmatmul.bf16.gmra.mxu0 %v4096
      %v4249 = vpop.f32.mrf.mxu0
      %v4250 = vadd.f32 %v4115, %v4249
      %v4251 = vpop.f32.mrf.mxu0
      %v4252 = vadd.f32 %v4115, %v4251
      %4253 = vdwg.mxu0
      %v4254 = vmax.f32 %v4175, 0.0
      %v4255 = vmax.f32 %v4177, 0.0
      %v4256 = vmax.f32 %v4180, 0.0
      %v4257 = vmax.f32 %v4182, 0.0
      %v4258 = vmax.f32 %v4185, 0.0
      %v4259 = vmax.f32 %v4187, 0.0
      %v4260 = vmax.f32 %v4190, 0.0
      %v4261 = vmax.f32 %v4192, 0.0
      %v4262 = vmax.f32 %v4195, 0.0
      %v4263 = vmax.f32 %v4197, 0.0
      %v4264 = vmax.f32 %v4200, 0.0
      %v4265 = vmax.f32 %v4202, 0.0
      %v4266 = vmax.f32 %v4205, 0.0
      %v4267 = vmax.f32 %v4207, 0.0
      %v4268 = vmax.f32 %v4210, 0.0
      %v4269 = vmax.f32 %v4212, 0.0
      %v4270 = vmax.f32 %v4215, 0.0
      %v4271 = vmax.f32 %v4217, 0.0
      %v4272 = vmax.f32 %v4220, 0.0
      %v4273 = vmax.f32 %v4222, 0.0
      %v4274 = vmax.f32 %v4225, 0.0
      %v4275 = vmax.f32 %v4227, 0.0
      %v4276 = vmax.f32 %v4230, 0.0
      %v4277 = vmax.f32 %v4232, 0.0
      %v4278 = vmax.f32 %v4235, 0.0
      %v4279 = vmax.f32 %v4237, 0.0
      %v4280 = vmax.f32 %v4240, 0.0
      %v4281 = vmax.f32 %v4242, 0.0
      %v4282 = vmax.f32 %v4245, 0.0
      %v4283 = vmax.f32 %v4247, 0.0
      %v4284 = vmax.f32 %v4250, 0.0
      %v4285 = vmax.f32 %v4252, 0.0
      %4286 = vst [vmem:[#allocation3] sm:$0xff] 0.0
      %4287 = vst [vmem:[#allocation3 + $0x8] sm:$0xff] 0.0
      %4288 = vst [vmem:[#allocation3 + $0x10] sm:$0x3] 0.0
      %4289 = vst [vmem:[#allocation3 + $0x18] sm:$0xff] 0.0
      %4290 = vst [vmem:[#allocation3 + $0x20] sm:$0xff] 0.0
      %4291 = vst [vmem:[#allocation3 + $0x28] sm:$0x3] 0.0
      %4292 = vst [vmem:[#allocation3 + $0x30] sm:$0xff] 0.0
      %4293 = vst [vmem:[#allocation3 + $0x38] sm:$0xff] 0.0
      %4294 = vst [vmem:[#allocation3 + $0x40] sm:$0x3] 0.0
      %4295 = vst [vmem:[#allocation3 + $0x48] sm:$0xff] 0.0
      %4296 = vst [vmem:[#allocation3 + $0x50] sm:$0xff] 0.0
      %4297 = vst [vmem:[#allocation3 + $0x58] sm:$0x3] 0.0
      %4298 = vst [vmem:[#allocation3 + $0x60] sm:$0xff] 0.0
      %4299 = vst [vmem:[#allocation3 + $0x68] sm:$0xff] 0.0
      %4300 = vst [vmem:[#allocation3 + $0x70] sm:$0x3] 0.0
      %4301 = vst [vmem:[#allocation3 + $0x78] sm:$0xff] 0.0
      %4302 = vst [vmem:[#allocation3 + $0x80] sm:$0xff] 0.0
      %4303 = vst [vmem:[#allocation3 + $0x88] sm:$0x3] 0.0
      %4304 = vst [vmem:[#allocation3 + $0x90] sm:$0xff] 0.0
      %4305 = vst [vmem:[#allocation3 + $0x98] sm:$0xff] 0.0
      %4306 = vst [vmem:[#allocation3 + $0xa0] sm:$0x3] 0.0
      %4307 = vst [vmem:[#allocation3 + $0xa8] sm:$0xff] 0.0
      %4308 = vst [vmem:[#allocation3 + $0xb0] sm:$0xff] 0.0
      %4309 = vst [vmem:[#allocation3 + $0xb8] sm:$0x3] 0.0
      %4310 = vst [vmem:[#allocation3 + $0xc0] sm:$0xff] 0.0
      %4311 = vst [vmem:[#allocation3 + $0xc8] sm:$0xff] 0.0
      %4312 = vst [vmem:[#allocation3 + $0xd0] sm:$0x3] 0.0
      %4313 = vst [vmem:[#allocation3 + $0xd8] sm:$0xff] 0.0
      %4314 = vst [vmem:[#allocation3 + $0xe0] sm:$0xff] 0.0
      %4315 = vst [vmem:[#allocation3 + $0xe8] sm:$0x3] 0.0
      %4316 = vst [vmem:[#allocation3 + $0xf0] sm:$0xff] 0.0
      %4317 = vst [vmem:[#allocation3 + $0xf8] sm:$0xff] 0.0
      %4318 = vst [vmem:[#allocation3 + $0x100] sm:$0x3] 0.0
      %4319 = vst [vmem:[#allocation3 + $0x108] sm:$0xff] 0.0
      %4320 = vst [vmem:[#allocation3 + $0x110] sm:$0xff] 0.0
      %4321 = vst [vmem:[#allocation3 + $0x118] sm:$0x3] 0.0
      %4322 = vst [vmem:[#allocation3 + $0x120] sm:$0xff] 0.0
      %4323 = vst [vmem:[#allocation3 + $0x128] sm:$0xff] 0.0
      %4324 = vst [vmem:[#allocation3 + $0x130] sm:$0x3] 0.0
      %4325 = vst [vmem:[#allocation3 + $0x138] sm:$0xff] 0.0
      %4326 = vst [vmem:[#allocation3 + $0x140] sm:$0xff] 0.0
      %4327 = vst [vmem:[#allocation3 + $0x148] sm:$0x3] 0.0
      %4328 = vst [vmem:[#allocation3 + $0x150] sm:$0xff] 0.0
      %4329 = vst [vmem:[#allocation3 + $0x158] sm:$0xff] 0.0
      %4330 = vst [vmem:[#allocation3 + $0x160] sm:$0x3] 0.0
      %4331 = vst [vmem:[#allocation3 + $0x168] sm:$0xff] 0.0
      %4332 = vst [vmem:[#allocation3 + $0x170] sm:$0xff] 0.0
      %4333 = vst [vmem:[#allocation3 + $0x178] sm:$0x3] 0.0
      %4334 = vst [vmem:[#allocation3 + $0x180] sm:$0xff] 0.0
      %4335 = vst [vmem:[#allocation3 + $0x188] sm:$0xff] 0.0
      %4336 = vst [vmem:[#allocation3 + $0x190] sm:$0x3] 0.0
      %4337 = vst [vmem:[#allocation3 + $0x198] sm:$0xff] 0.0
      %4338 = vst [vmem:[#allocation3 + $0x1a0] sm:$0xff] 0.0
      %4339 = vst [vmem:[#allocation3 + $0x1a8] sm:$0x3] 0.0
      %s4340 = scalar_lea.vmem [#allocation3], 24
      %4341 = vst [vmem:[%s4340 + $0x1] sm:$0xff] %v4254
      %4342 = vst [vmem:[%s4340 + $0x9] sm:$0xff] %v4255
      %4343 = vst [vmem:[%s4340 + $0x19] sm:$0xff] %v4256
      %4344 = vst [vmem:[%s4340 + $0x21] sm:$0xff] %v4257
      %4345 = vst [vmem:[%s4340 + $0x31] sm:$0xff] %v4258
      %4346 = vst [vmem:[%s4340 + $0x39] sm:$0xff] %v4259
      %4347 = vst [vmem:[%s4340 + $0x49] sm:$0xff] %v4260
      %4348 = vst [vmem:[%s4340 + $0x51] sm:$0xff] %v4261
      %4349 = vst [vmem:[%s4340 + $0x61] sm:$0xff] %v4262
      %4350 = vst [vmem:[%s4340 + $0x69] sm:$0xff] %v4263
      %4351 = vst [vmem:[%s4340 + $0x79] sm:$0xff] %v4264
      %4352 = vst [vmem:[%s4340 + $0x81] sm:$0xff] %v4265
      %4353 = vst [vmem:[%s4340 + $0x91] sm:$0xff] %v4266
      %4354 = vst [vmem:[%s4340 + $0x99] sm:$0xff] %v4267
      %4355 = vst [vmem:[%s4340 + $0xa9] sm:$0xff] %v4268
      %4356 = vst [vmem:[%s4340 + $0xb1] sm:$0xff] %v4269
      %4357 = vst [vmem:[%s4340 + $0xc1] sm:$0xff] %v4270
      %4358 = vst [vmem:[%s4340 + $0xc9] sm:$0xff] %v4271
      %4359 = vst [vmem:[%s4340 + $0xd9] sm:$0xff] %v4272
      %4360 = vst [vmem:[%s4340 + $0xe1] sm:$0xff] %v4273
      %4361 = vst [vmem:[%s4340 + $0xf1] sm:$0xff] %v4274
      %4362 = vst [vmem:[%s4340 + $0xf9] sm:$0xff] %v4275
      %4363 = vst [vmem:[%s4340 + $0x109] sm:$0xff] %v4276
      %4364 = vst [vmem:[%s4340 + $0x111] sm:$0xff] %v4277
      %4365 = vst [vmem:[%s4340 + $0x121] sm:$0xff] %v4278
      %4366 = vst [vmem:[%s4340 + $0x129] sm:$0xff] %v4279
      %4367 = vst [vmem:[%s4340 + $0x139] sm:$0xff] %v4280
      %4368 = vst [vmem:[%s4340 + $0x141] sm:$0xff] %v4281
      %4369 = vst [vmem:[%s4340 + $0x151] sm:$0xff] %v4282
      %4370 = vst [vmem:[%s4340 + $0x159] sm:$0xff] %v4283
      %4371 = vst [vmem:[%s4340 + $0x169] sm:$0xff] %v4284
      %4372 = vst [vmem:[%s4340 + $0x171] sm:$0xff] %v4285
      %4373 = vst [vmem:[#allocation2] sm:$0xff] 0.0
      %4374 = vst [vmem:[#allocation2 + $0x8] sm:$0xff] 0.0
      %4375 = vst [vmem:[#allocation2 + $0x10] sm:$0xff] 0.0
      %4376 = vst [vmem:[#allocation2 + $0x18] sm:$0xff] 0.0
      %4377 = vst [vmem:[#allocation2 + $0x20] sm:$0xff] 0.0
      %4378 = vst [vmem:[#allocation2 + $0x28] sm:$0xff] 0.0
      %4379 = vst [vmem:[#allocation2 + $0x30] sm:$0xff] 0.0
      %4380 = vst [vmem:[#allocation2 + $0x38] sm:$0xff] 0.0
      %4381 = vst [vmem:[#allocation2 + $0x40] sm:$0xff] 0.0
      %4382 = vst [vmem:[#allocation2 + $0x48] sm:$0xff] 0.0
      %4383 = vst [vmem:[#allocation2 + $0x50] sm:$0xff] 0.0
      %4384 = vst [vmem:[#allocation2 + $0x58] sm:$0xff] 0.0
      %4385 = vst [vmem:[#allocation2 + $0x60] sm:$0xff] 0.0
      %4386 = vst [vmem:[#allocation2 + $0x68] sm:$0xff] 0.0
      %4387 = vst [vmem:[#allocation2 + $0x70] sm:$0xff] 0.0
      %4388 = vst [vmem:[#allocation2 + $0x78] sm:$0xff] 0.0
      %4389 = vst [vmem:[#allocation2 + $0x80] sm:$0xff] 0.0
      %4390 = vst [vmem:[#allocation2 + $0x88] sm:$0xff] 0.0
      %4391 = vst [vmem:[#allocation2 + $0x90] sm:$0xff] 0.0
      %4392 = vst [vmem:[#allocation2 + $0x98] sm:$0xff] 0.0
      %4393 = vst [vmem:[#allocation2 + $0xa0] sm:$0xff] 0.0
      %4394 = vst [vmem:[#allocation2 + $0xa8] sm:$0xff] 0.0
      %4395 = vst [vmem:[#allocation2 + $0xb0] sm:$0xff] 0.0
      %4396 = vst [vmem:[#allocation2 + $0xb8] sm:$0xff] 0.0
      %4397 = vst [vmem:[#allocation2 + $0xc0] sm:$0xff] 0.0
      %4398 = vst [vmem:[#allocation2 + $0xc8] sm:$0xff] 0.0
      %4399 = vst [vmem:[#allocation2 + $0xd0] sm:$0xff] 0.0
      %4400 = vst [vmem:[#allocation2 + $0xd8] sm:$0xff] 0.0
      %4401 = vst [vmem:[#allocation2 + $0xe0] sm:$0xff] 0.0
      %4402 = vst [vmem:[#allocation2 + $0xe8] sm:$0xff] 0.0
      %4403 = vst [vmem:[#allocation2 + $0xf0] sm:$0xff] 0.0
      %4404 = vst [vmem:[#allocation2 + $0xf8] sm:$0xff] 0.0
      %v4405 = vld [vmem:[#allocation3] sm:$0xff]
      %v4406 = vld [vmem:[#allocation3 + $0x8] sm:$0xff]
      %v4407 = vld [vmem:[#allocation3 + $0x18] sm:$0xff]
      %v4408 = vld [vmem:[#allocation3 + $0x20] sm:$0xff]
      %v4409 = vld [vmem:[#allocation3 + $0x30] sm:$0xff]
      %v4410 = vld [vmem:[#allocation3 + $0x38] sm:$0xff]
      %v4411 = vld [vmem:[#allocation3 + $0x48] sm:$0xff]
      %v4412 = vld [vmem:[#allocation3 + $0x50] sm:$0xff]
      %v4413 = vld [vmem:[#allocation3 + $0x60] sm:$0xff]
      %v4414 = vld [vmem:[#allocation3 + $0x68] sm:$0xff]
      %v4415 = vld [vmem:[#allocation3 + $0x78] sm:$0xff]
      %v4416 = vld [vmem:[#allocation3 + $0x80] sm:$0xff]
      %v4417 = vld [vmem:[#allocation3 + $0x90] sm:$0xff]
      %v4418 = vld [vmem:[#allocation3 + $0x98] sm:$0xff]
      %v4419 = vld [vmem:[#allocation3 + $0xa8] sm:$0xff]
      %v4420 = vld [vmem:[#allocation3 + $0xb0] sm:$0xff]
      %v4421 = vld [vmem:[#allocation3 + $0xc0] sm:$0xff]
      %v4422 = vld [vmem:[#allocation3 + $0xc8] sm:$0xff]
      %v4423 = vld [vmem:[#allocation3 + $0xd8] sm:$0xff]
      %v4424 = vld [vmem:[#allocation3 + $0xe0] sm:$0xff]
      %v4425 = vld [vmem:[#allocation3 + $0xf0] sm:$0xff]
      %v4426 = vld [vmem:[#allocation3 + $0xf8] sm:$0xff]
      %v4427 = vld [vmem:[#allocation3 + $0x108] sm:$0xff]
      %v4428 = vld [vmem:[#allocation3 + $0x110] sm:$0xff]
      %v4429 = vld [vmem:[#allocation3 + $0x120] sm:$0xff]
      %v4430 = vld [vmem:[#allocation3 + $0x128] sm:$0xff]
      %v4431 = vld [vmem:[#allocation3 + $0x138] sm:$0xff]
      %v4432 = vld [vmem:[#allocation3 + $0x140] sm:$0xff]
      %v4433 = vld [vmem:[#allocation3 + $0x150] sm:$0xff]
      %v4434 = vld [vmem:[#allocation3 + $0x158] sm:$0xff]
      %v4435 = vld [vmem:[#allocation3 + $0x168] sm:$0xff]
      %v4436 = vld [vmem:[#allocation3 + $0x170] sm:$0xff]
      %v4437 = vpack.c.bf16 %v4405, %v4405
      %v4438 = vpack.c.bf16 %v4406, %v4406
      %v4439 = vpack.c.bf16 %v4407, %v4407
      %v4440 = vpack.c.bf16 %v4408, %v4408
      %v4441 = vpack.c.bf16 %v4409, %v4409
      %v4442 = vpack.c.bf16 %v4410, %v4410
      %v4443 = vpack.c.bf16 %v4411, %v4411
      %v4444 = vpack.c.bf16 %v4412, %v4412
      %v4445 = vpack.c.bf16 %v4413, %v4413
      %v4446 = vpack.c.bf16 %v4414, %v4414
      %v4447 = vpack.c.bf16 %v4415, %v4415
      %v4448 = vpack.c.bf16 %v4416, %v4416
      %v4449 = vpack.c.bf16 %v4417, %v4417
      %v4450 = vpack.c.bf16 %v4418, %v4418
      %v4451 = vpack.c.bf16 %v4419, %v4419
      %v4452 = vpack.c.bf16 %v4420, %v4420
      %v4453 = vpack.c.bf16 %v4421, %v4421
      %v4454 = vpack.c.bf16 %v4422, %v4422
      %v4455 = vpack.c.bf16 %v4423, %v4423
      %v4456 = vpack.c.bf16 %v4424, %v4424
      %v4457 = vpack.c.bf16 %v4425, %v4425
      %v4458 = vpack.c.bf16 %v4426, %v4426
      %v4459 = vpack.c.bf16 %v4427, %v4427
      %v4460 = vpack.c.bf16 %v4428, %v4428
      %v4461 = vpack.c.bf16 %v4429, %v4429
      %v4462 = vpack.c.bf16 %v4430, %v4430
      %v4463 = vpack.c.bf16 %v4431, %v4431
      %v4464 = vpack.c.bf16 %v4432, %v4432
      %v4465 = vpack.c.bf16 %v4433, %v4433
      %v4466 = vpack.c.bf16 %v4434, %v4434
      %v4467 = vpack.c.bf16 %v4435, %v4435
      %v4468 = vpack.c.bf16 %v4436, %v4436
      %v4469 = vld [vmem:[#allocation2] sm:$0xff]
      %v4470 = vld [vmem:[#allocation2 + $0x8] sm:$0xff]
      %v4471 = vld [vmem:[#allocation2 + $0x10] sm:$0xff]
      %v4472 = vld [vmem:[#allocation2 + $0x18] sm:$0xff]
      %v4473 = vld [vmem:[#allocation2 + $0x20] sm:$0xff]
      %v4474 = vld [vmem:[#allocation2 + $0x28] sm:$0xff]
      %v4475 = vld [vmem:[#allocation2 + $0x30] sm:$0xff]
      %v4476 = vld [vmem:[#allocation2 + $0x38] sm:$0xff]
      %v4477 = vld [vmem:[#allocation2 + $0x40] sm:$0xff]
      %v4478 = vld [vmem:[#allocation2 + $0x48] sm:$0xff]
      %v4479 = vld [vmem:[#allocation2 + $0x50] sm:$0xff]
      %v4480 = vld [vmem:[#allocation2 + $0x58] sm:$0xff]
      %v4481 = vld [vmem:[#allocation2 + $0x60] sm:$0xff]
      %v4482 = vld [vmem:[#allocation2 + $0x68] sm:$0xff]
      %v4483 = vld [vmem:[#allocation2 + $0x70] sm:$0xff]
      %v4484 = vld [vmem:[#allocation2 + $0x78] sm:$0xff]
      %v4485 = vld [vmem:[#allocation2 + $0x80] sm:$0xff]
      %v4486 = vld [vmem:[#allocation2 + $0x88] sm:$0xff]
      %v4487 = vld [vmem:[#allocation2 + $0x90] sm:$0xff]
      %v4488 = vld [vmem:[#allocation2 + $0x98] sm:$0xff]
      %v4489 = vld [vmem:[#allocation2 + $0xa0] sm:$0xff]
      %v4490 = vld [vmem:[#allocation2 + $0xa8] sm:$0xff]
      %v4491 = vld [vmem:[#allocation2 + $0xb0] sm:$0xff]
      %v4492 = vld [vmem:[#allocation2 + $0xb8] sm:$0xff]
      %v4493 = vld [vmem:[#allocation2 + $0xc0] sm:$0xff]
      %v4494 = vld [vmem:[#allocation2 + $0xc8] sm:$0xff]
      %v4495 = vld [vmem:[#allocation2 + $0xd0] sm:$0xff]
      %v4496 = vld [vmem:[#allocation2 + $0xd8] sm:$0xff]
      %v4497 = vld [vmem:[#allocation2 + $0xe0] sm:$0xff]
      %v4498 = vld [vmem:[#allocation2 + $0xe8] sm:$0xff]
      %v4499 = vld [vmem:[#allocation2 + $0xf0] sm:$0xff]
      %v4500 = vld [vmem:[#allocation2 + $0xf8] sm:$0xff]
      %v4501 = vld [vmem:[%s5] sm:$0xf]
      %v4502 = vld [vmem:[%s5 + $0x4] sm:$0xf]
      %v4503 = vld [vmem:[%s5 + $0x8] sm:$0xf]
      %v4504 = vld [vmem:[%s5 + $0xc] sm:$0xf]
      %v4505 = vld [vmem:[%s5 + $0x10] sm:$0xf]
      %v4506 = vld [vmem:[%s5 + $0x14] sm:$0xf]
      %v4507 = vld [vmem:[%s5 + $0x18] sm:$0xf]
      %v4508 = vld [vmem:[%s5 + $0x1c] sm:$0xf]
      %v4509 = vld [vmem:[%s5 + $0x20] sm:$0xf]
      %v4510 = vld [vmem:[%s5 + $0x24] sm:$0xf]
      %v4511 = vld [vmem:[%s5 + $0x28] sm:$0xf]
      %v4512 = vld [vmem:[%s5 + $0x2c] sm:$0xf]
      %v4513 = vld [vmem:[%s5 + $0x30] sm:$0xf]
      %v4514 = vld [vmem:[%s5 + $0x34] sm:$0xf]
      %v4515 = vld [vmem:[%s5 + $0x38] sm:$0xf]
      %v4516 = vld [vmem:[%s5 + $0x3c] sm:$0xf]
      %v4549 = vunpack.c.l.b16 %v4437
      %v4550 = vunpack.c.l.b16 %v4438
      %v4551 = vunpack.c.l.b16 %v4439
      %v4552 = vunpack.c.l.b16 %v4440
      %v4553 = vunpack.c.l.b16 %v4441
      %v4554 = vunpack.c.l.b16 %v4442
      %v4555 = vunpack.c.l.b16 %v4443
      %v4556 = vunpack.c.l.b16 %v4444
      %v4557 = vunpack.c.l.b16 %v4445
      %v4558 = vunpack.c.l.b16 %v4446
      %v4559 = vunpack.c.l.b16 %v4447
      %v4560 = vunpack.c.l.b16 %v4448
      %v4561 = vunpack.c.l.b16 %v4449
      %v4562 = vunpack.c.l.b16 %v4450
      %v4563 = vunpack.c.l.b16 %v4451
      %v4564 = vunpack.c.l.b16 %v4452
      %v4565 = vunpack.c.l.b16 %v4453
      %v4566 = vunpack.c.l.b16 %v4454
      %v4567 = vunpack.c.l.b16 %v4455
      %v4568 = vunpack.c.l.b16 %v4456
      %v4569 = vunpack.c.l.b16 %v4457
      %v4570 = vunpack.c.l.b16 %v4458
      %v4571 = vunpack.c.l.b16 %v4459
      %v4572 = vunpack.c.l.b16 %v4460
      %v4573 = vunpack.c.l.b16 %v4461
      %v4574 = vunpack.c.l.b16 %v4462
      %v4575 = vunpack.c.l.b16 %v4463
      %v4576 = vunpack.c.l.b16 %v4464
      %v4577 = vunpack.c.l.b16 %v4465
      %v4578 = vunpack.c.l.b16 %v4466
      %v4579 = vunpack.c.l.b16 %v4467
      %v4580 = vunpack.c.l.b16 %v4468
      %v4581 = vpack.c.b16 %v4550, %v4549
      %v4582 = vpack.c.b16 %v4552, %v4551
      %v4583 = vpack.c.b16 %v4554, %v4553
      %v4584 = vpack.c.b16 %v4556, %v4555
      %v4585 = vpack.c.b16 %v4558, %v4557
      %v4586 = vpack.c.b16 %v4560, %v4559
      %v4587 = vpack.c.b16 %v4562, %v4561
      %v4588 = vpack.c.b16 %v4564, %v4563
      %v4589 = vpack.c.b16 %v4566, %v4565
      %v4590 = vpack.c.b16 %v4568, %v4567
      %v4591 = vpack.c.b16 %v4570, %v4569
      %v4592 = vpack.c.b16 %v4572, %v4571
      %v4593 = vpack.c.b16 %v4574, %v4573
      %v4594 = vpack.c.b16 %v4576, %v4575
      %v4595 = vpack.c.b16 %v4578, %v4577
      %v4596 = vpack.c.b16 %v4580, %v4579
      %v4629 = vunpack.c.l.b16 %v4501
      %v4630 = vunpack.c.l.b16 %v4502
      %v4631 = vunpack.c.l.b16 %v4503
      %v4632 = vunpack.c.l.b16 %v4504
      %v4633 = vunpack.c.l.b16 %v4505
      %v4634 = vunpack.c.l.b16 %v4506
      %v4635 = vunpack.c.l.b16 %v4507
      %v4636 = vunpack.c.l.b16 %v4508
      %v4637 = vunpack.c.l.b16 %v4509
      %v4638 = vunpack.c.l.b16 %v4510
      %v4639 = vunpack.c.l.b16 %v4511
      %v4640 = vunpack.c.l.b16 %v4512
      %v4641 = vunpack.c.l.b16 %v4513
      %v4642 = vunpack.c.l.b16 %v4514
      %v4643 = vunpack.c.l.b16 %v4515
      %v4644 = vunpack.c.l.b16 %v4516
      %v4645 = vpack.c.b16 %v4630, %v4629
      %v4646 = vpack.c.b16 %v4632, %v4631
      %v4647 = vpack.c.b16 %v4634, %v4633
      %v4648 = vpack.c.b16 %v4636, %v4635
      %v4649 = vpack.c.b16 %v4638, %v4637
      %v4650 = vpack.c.b16 %v4640, %v4639
      %v4651 = vpack.c.b16 %v4642, %v4641
      %v4652 = vpack.c.b16 %v4644, %v4643
      %4661 = vmatpush.bf16.msra.mxu0 %v4652
      %4662 = vmatpush.bf16.msra.mxu0 %v4651
      %4663 = vmatpush.bf16.msra.mxu0 %v4650
      %4664 = vmatpush.bf16.msra.mxu0 %v4649
      %4665 = vmatpush.bf16.msra.mxu0 %v4648
      %4666 = vmatpush.bf16.msra.mxu0 %v4647
      %4667 = vmatpush.bf16.msra.mxu0 %v4646
      %4668 = vmatpush.bf16.msra.mxu0 %v4645
      %4669 = vmatmul.bf16.gmra.mxu0 %v4581
      %v4670 = vpop.f32.mrf.mxu0
      %v4671 = vadd.f32 0.0, %v4670
      %v4672 = vpop.f32.mrf.mxu0
      %v4673 = vadd.f32 0.0, %v4672
      %4674 = vmatmul.bf16.gmra.mxu0 %v4582
      %v4675 = vpop.f32.mrf.mxu0
      %v4676 = vadd.f32 0.0, %v4675
      %v4677 = vpop.f32.mrf.mxu0
      %v4678 = vadd.f32 0.0, %v4677
      %4679 = vmatmul.bf16.gmra.mxu0 %v4583
      %v4680 = vpop.f32.mrf.mxu0
      %v4681 = vadd.f32 0.0, %v4680
      %v4682 = vpop.f32.mrf.mxu0
      %v4683 = vadd.f32 0.0, %v4682
      %4684 = vmatmul.bf16.gmra.mxu0 %v4584
      %v4685 = vpop.f32.mrf.mxu0
      %v4686 = vadd.f32 0.0, %v4685
      %v4687 = vpop.f32.mrf.mxu0
      %v4688 = vadd.f32 0.0, %v4687
      %4689 = vmatmul.bf16.gmra.mxu0 %v4585
      %v4690 = vpop.f32.mrf.mxu0
      %v4691 = vadd.f32 0.0, %v4690
      %v4692 = vpop.f32.mrf.mxu0
      %v4693 = vadd.f32 0.0, %v4692
      %4694 = vmatmul.bf16.gmra.mxu0 %v4586
      %v4695 = vpop.f32.mrf.mxu0
      %v4696 = vadd.f32 0.0, %v4695
      %v4697 = vpop.f32.mrf.mxu0
      %v4698 = vadd.f32 0.0, %v4697
      %4699 = vmatmul.bf16.gmra.mxu0 %v4587
      %v4700 = vpop.f32.mrf.mxu0
      %v4701 = vadd.f32 0.0, %v4700
      %v4702 = vpop.f32.mrf.mxu0
      %v4703 = vadd.f32 0.0, %v4702
      %4704 = vmatmul.bf16.gmra.mxu0 %v4588
      %v4705 = vpop.f32.mrf.mxu0
      %v4706 = vadd.f32 0.0, %v4705
      %v4707 = vpop.f32.mrf.mxu0
      %v4708 = vadd.f32 0.0, %v4707
      %4709 = vmatmul.bf16.gmra.mxu0 %v4589
      %v4710 = vpop.f32.mrf.mxu0
      %v4711 = vadd.f32 0.0, %v4710
      %v4712 = vpop.f32.mrf.mxu0
      %v4713 = vadd.f32 0.0, %v4712
      %4714 = vmatmul.bf16.gmra.mxu0 %v4590
      %v4715 = vpop.f32.mrf.mxu0
      %v4716 = vadd.f32 0.0, %v4715
      %v4717 = vpop.f32.mrf.mxu0
      %v4718 = vadd.f32 0.0, %v4717
      %4719 = vmatmul.bf16.gmra.mxu0 %v4591
      %v4720 = vpop.f32.mrf.mxu0
      %v4721 = vadd.f32 0.0, %v4720
      %v4722 = vpop.f32.mrf.mxu0
      %v4723 = vadd.f32 0.0, %v4722
      %4724 = vmatmul.bf16.gmra.mxu0 %v4592
      %v4725 = vpop.f32.mrf.mxu0
      %v4726 = vadd.f32 0.0, %v4725
      %v4727 = vpop.f32.mrf.mxu0
      %v4728 = vadd.f32 0.0, %v4727
      %4729 = vmatmul.bf16.gmra.mxu0 %v4593
      %v4730 = vpop.f32.mrf.mxu0
      %v4731 = vadd.f32 0.0, %v4730
      %v4732 = vpop.f32.mrf.mxu0
      %v4733 = vadd.f32 0.0, %v4732
      %4734 = vmatmul.bf16.gmra.mxu0 %v4594
      %v4735 = vpop.f32.mrf.mxu0
      %v4736 = vadd.f32 0.0, %v4735
      %v4737 = vpop.f32.mrf.mxu0
      %v4738 = vadd.f32 0.0, %v4737
      %4739 = vmatmul.bf16.gmra.mxu0 %v4595
      %v4740 = vpop.f32.mrf.mxu0
      %v4741 = vadd.f32 0.0, %v4740
      %v4742 = vpop.f32.mrf.mxu0
      %v4743 = vadd.f32 0.0, %v4742
      %4744 = vmatmul.bf16.gmra.mxu0 %v4596
      %v4745 = vpop.f32.mrf.mxu0
      %v4746 = vadd.f32 0.0, %v4745
      %v4747 = vpop.f32.mrf.mxu0
      %v4748 = vadd.f32 0.0, %v4747
      %4749 = vdwg.mxu0
      %v4750 = vadd.f32 %v4469, %v4671
      %v4751 = vadd.f32 %v4470, %v4673
      %v4752 = vadd.f32 %v4471, %v4676
      %v4753 = vadd.f32 %v4472, %v4678
      %v4754 = vadd.f32 %v4473, %v4681
      %v4755 = vadd.f32 %v4474, %v4683
      %v4756 = vadd.f32 %v4475, %v4686
      %v4757 = vadd.f32 %v4476, %v4688
      %v4758 = vadd.f32 %v4477, %v4691
      %v4759 = vadd.f32 %v4478, %v4693
      %v4760 = vadd.f32 %v4479, %v4696
      %v4761 = vadd.f32 %v4480, %v4698
      %v4762 = vadd.f32 %v4481, %v4701
      %v4763 = vadd.f32 %v4482, %v4703
      %v4764 = vadd.f32 %v4483, %v4706
      %v4765 = vadd.f32 %v4484, %v4708
      %v4766 = vadd.f32 %v4485, %v4711
      %v4767 = vadd.f32 %v4486, %v4713
      %v4768 = vadd.f32 %v4487, %v4716
      %v4769 = vadd.f32 %v4488, %v4718
      %v4770 = vadd.f32 %v4489, %v4721
      %v4771 = vadd.f32 %v4490, %v4723
      %v4772 = vadd.f32 %v4491, %v4726
      %v4773 = vadd.f32 %v4492, %v4728
      %v4774 = vadd.f32 %v4493, %v4731
      %v4775 = vadd.f32 %v4494, %v4733
      %v4776 = vadd.f32 %v4495, %v4736
      %v4777 = vadd.f32 %v4496, %v4738
      %v4778 = vadd.f32 %v4497, %v4741
      %v4779 = vadd.f32 %v4498, %v4743
      %v4780 = vadd.f32 %v4499, %v4746
      %v4781 = vadd.f32 %v4500, %v4748
      %4782 = vst [vmem:[#allocation2] sm:$0xff] %v4750
      %4783 = vst [vmem:[#allocation2 + $0x8] sm:$0xff] %v4751
      %4784 = vst [vmem:[#allocation2 + $0x10] sm:$0xff] %v4752
      %4785 = vst [vmem:[#allocation2 + $0x18] sm:$0xff] %v4753
      %4786 = vst [vmem:[#allocation2 + $0x20] sm:$0xff] %v4754
      %4787 = vst [vmem:[#allocation2 + $0x28] sm:$0xff] %v4755
      %4788 = vst [vmem:[#allocation2 + $0x30] sm:$0xff] %v4756
      %4789 = vst [vmem:[#allocation2 + $0x38] sm:$0xff] %v4757
      %4790 = vst [vmem:[#allocation2 + $0x40] sm:$0xff] %v4758
      %4791 = vst [vmem:[#allocation2 + $0x48] sm:$0xff] %v4759
      %4792 = vst [vmem:[#allocation2 + $0x50] sm:$0xff] %v4760
      %4793 = vst [vmem:[#allocation2 + $0x58] sm:$0xff] %v4761
      %4794 = vst [vmem:[#allocation2 + $0x60] sm:$0xff] %v4762
      %4795 = vst [vmem:[#allocation2 + $0x68] sm:$0xff] %v4763
      %4796 = vst [vmem:[#allocation2 + $0x70] sm:$0xff] %v4764
      %4797 = vst [vmem:[#allocation2 + $0x78] sm:$0xff] %v4765
      %4798 = vst [vmem:[#allocation2 + $0x80] sm:$0xff] %v4766
      %4799 = vst [vmem:[#allocation2 + $0x88] sm:$0xff] %v4767
      %4800 = vst [vmem:[#allocation2 + $0x90] sm:$0xff] %v4768
      %4801 = vst [vmem:[#allocation2 + $0x98] sm:$0xff] %v4769
      %4802 = vst [vmem:[#allocation2 + $0xa0] sm:$0xff] %v4770
      %4803 = vst [vmem:[#allocation2 + $0xa8] sm:$0xff] %v4771
      %4804 = vst [vmem:[#allocation2 + $0xb0] sm:$0xff] %v4772
      %4805 = vst [vmem:[#allocation2 + $0xb8] sm:$0xff] %v4773
      %4806 = vst [vmem:[#allocation2 + $0xc0] sm:$0xff] %v4774
      %4807 = vst [vmem:[#allocation2 + $0xc8] sm:$0xff] %v4775
      %4808 = vst [vmem:[#allocation2 + $0xd0] sm:$0xff] %v4776
      %4809 = vst [vmem:[#allocation2 + $0xd8] sm:$0xff] %v4777
      %4810 = vst [vmem:[#allocation2 + $0xe0] sm:$0xff] %v4778
      %4811 = vst [vmem:[#allocation2 + $0xe8] sm:$0xff] %v4779
      %4812 = vst [vmem:[#allocation2 + $0xf0] sm:$0xff] %v4780
      %4813 = vst [vmem:[#allocation2 + $0xf8] sm:$0xff] %v4781
      %v4814 = vld [vmem:[#allocation3 + $0x1] sm:$0xff]
      %v4815 = vld [vmem:[#allocation3 + $0x9] sm:$0xff]
      %v4816 = vld [vmem:[#allocation3 + $0x19] sm:$0xff]
      %v4817 = vld [vmem:[#allocation3 + $0x21] sm:$0xff]
      %v4818 = vld [vmem:[#allocation3 + $0x31] sm:$0xff]
      %v4819 = vld [vmem:[#allocation3 + $0x39] sm:$0xff]
      %v4820 = vld [vmem:[#allocation3 + $0x49] sm:$0xff]
      %v4821 = vld [vmem:[#allocation3 + $0x51] sm:$0xff]
      %v4822 = vld [vmem:[#allocation3 + $0x61] sm:$0xff]
      %v4823 = vld [vmem:[#allocation3 + $0x69] sm:$0xff]
      %v4824 = vld [vmem:[#allocation3 + $0x79] sm:$0xff]
      %v4825 = vld [vmem:[#allocation3 + $0x81] sm:$0xff]
      %v4826 = vld [vmem:[#allocation3 + $0x91] sm:$0xff]
      %v4827 = vld [vmem:[#allocation3 + $0x99] sm:$0xff]
      %v4828 = vld [vmem:[#allocation3 + $0xa9] sm:$0xff]
      %v4829 = vld [vmem:[#allocation3 + $0xb1] sm:$0xff]
      %v4830 = vld [vmem:[#allocation3 + $0xc1] sm:$0xff]
      %v4831 = vld [vmem:[#allocation3 + $0xc9] sm:$0xff]
      %v4832 = vld [vmem:[#allocation3 + $0xd9] sm:$0xff]
      %v4833 = vld [vmem:[#allocation3 + $0xe1] sm:$0xff]
      %v4834 = vld [vmem:[#allocation3 + $0xf1] sm:$0xff]
      %v4835 = vld [vmem:[#allocation3 + $0xf9] sm:$0xff]
      %v4836 = vld [vmem:[#allocation3 + $0x109] sm:$0xff]
      %v4837 = vld [vmem:[#allocation3 + $0x111] sm:$0xff]
      %v4838 = vld [vmem:[#allocation3 + $0x121] sm:$0xff]
      %v4839 = vld [vmem:[#allocation3 + $0x129] sm:$0xff]
      %v4840 = vld [vmem:[#allocation3 + $0x139] sm:$0xff]
      %v4841 = vld [vmem:[#allocation3 + $0x141] sm:$0xff]
      %v4842 = vld [vmem:[#allocation3 + $0x151] sm:$0xff]
      %v4843 = vld [vmem:[#allocation3 + $0x159] sm:$0xff]
      %v4844 = vld [vmem:[#allocation3 + $0x169] sm:$0xff]
      %v4845 = vld [vmem:[#allocation3 + $0x171] sm:$0xff]
      %v4846 = vpack.c.bf16 %v4814, %v4814
      %v4847 = vpack.c.bf16 %v4815, %v4815
      %v4848 = vpack.c.bf16 %v4816, %v4816
      %v4849 = vpack.c.bf16 %v4817, %v4817
      %v4850 = vpack.c.bf16 %v4818, %v4818
      %v4851 = vpack.c.bf16 %v4819, %v4819
      %v4852 = vpack.c.bf16 %v4820, %v4820
      %v4853 = vpack.c.bf16 %v4821, %v4821
      %v4854 = vpack.c.bf16 %v4822, %v4822
      %v4855 = vpack.c.bf16 %v4823, %v4823
      %v4856 = vpack.c.bf16 %v4824, %v4824
      %v4857 = vpack.c.bf16 %v4825, %v4825
      %v4858 = vpack.c.bf16 %v4826, %v4826
      %v4859 = vpack.c.bf16 %v4827, %v4827
      %v4860 = vpack.c.bf16 %v4828, %v4828
      %v4861 = vpack.c.bf16 %v4829, %v4829
      %v4862 = vpack.c.bf16 %v4830, %v4830
      %v4863 = vpack.c.bf16 %v4831, %v4831
      %v4864 = vpack.c.bf16 %v4832, %v4832
      %v4865 = vpack.c.bf16 %v4833, %v4833
      %v4866 = vpack.c.bf16 %v4834, %v4834
      %v4867 = vpack.c.bf16 %v4835, %v4835
      %v4868 = vpack.c.bf16 %v4836, %v4836
      %v4869 = vpack.c.bf16 %v4837, %v4837
      %v4870 = vpack.c.bf16 %v4838, %v4838
      %v4871 = vpack.c.bf16 %v4839, %v4839
      %v4872 = vpack.c.bf16 %v4840, %v4840
      %v4873 = vpack.c.bf16 %v4841, %v4841
      %v4874 = vpack.c.bf16 %v4842, %v4842
      %v4875 = vpack.c.bf16 %v4843, %v4843
      %v4876 = vpack.c.bf16 %v4844, %v4844
      %v4877 = vpack.c.bf16 %v4845, %v4845
      %v4878 = vld [vmem:[#allocation2] sm:$0xff]
      %v4879 = vld [vmem:[#allocation2 + $0x8] sm:$0xff]
      %v4880 = vld [vmem:[#allocation2 + $0x10] sm:$0xff]
      %v4881 = vld [vmem:[#allocation2 + $0x18] sm:$0xff]
      %v4882 = vld [vmem:[#allocation2 + $0x20] sm:$0xff]
      %v4883 = vld [vmem:[#allocation2 + $0x28] sm:$0xff]
      %v4884 = vld [vmem:[#allocation2 + $0x30] sm:$0xff]
      %v4885 = vld [vmem:[#allocation2 + $0x38] sm:$0xff]
      %v4886 = vld [vmem:[#allocation2 + $0x40] sm:$0xff]
      %v4887 = vld [vmem:[#allocation2 + $0x48] sm:$0xff]
      %v4888 = vld [vmem:[#allocation2 + $0x50] sm:$0xff]
      %v4889 = vld [vmem:[#allocation2 + $0x58] sm:$0xff]
      %v4890 = vld [vmem:[#allocation2 + $0x60] sm:$0xff]
      %v4891 = vld [vmem:[#allocation2 + $0x68] sm:$0xff]
      %v4892 = vld [vmem:[#allocation2 + $0x70] sm:$0xff]
      %v4893 = vld [vmem:[#allocation2 + $0x78] sm:$0xff]
      %v4894 = vld [vmem:[#allocation2 + $0x80] sm:$0xff]
      %v4895 = vld [vmem:[#allocation2 + $0x88] sm:$0xff]
      %v4896 = vld [vmem:[#allocation2 + $0x90] sm:$0xff]
      %v4897 = vld [vmem:[#allocation2 + $0x98] sm:$0xff]
      %v4898 = vld [vmem:[#allocation2 + $0xa0] sm:$0xff]
      %v4899 = vld [vmem:[#allocation2 + $0xa8] sm:$0xff]
      %v4900 = vld [vmem:[#allocation2 + $0xb0] sm:$0xff]
      %v4901 = vld [vmem:[#allocation2 + $0xb8] sm:$0xff]
      %v4902 = vld [vmem:[#allocation2 + $0xc0] sm:$0xff]
      %v4903 = vld [vmem:[#allocation2 + $0xc8] sm:$0xff]
      %v4904 = vld [vmem:[#allocation2 + $0xd0] sm:$0xff]
      %v4905 = vld [vmem:[#allocation2 + $0xd8] sm:$0xff]
      %v4906 = vld [vmem:[#allocation2 + $0xe0] sm:$0xff]
      %v4907 = vld [vmem:[#allocation2 + $0xe8] sm:$0xff]
      %v4908 = vld [vmem:[#allocation2 + $0xf0] sm:$0xff]
      %v4909 = vld [vmem:[#allocation2 + $0xf8] sm:$0xff]
      %s4910 = scalar_lea.vmem %s5, 64
      %v4911 = vld [vmem:[%s4910] sm:$0xf]
      %v4912 = vld [vmem:[%s4910 + $0x4] sm:$0xf]
      %v4913 = vld [vmem:[%s4910 + $0x8] sm:$0xf]
      %v4914 = vld [vmem:[%s4910 + $0xc] sm:$0xf]
      %v4915 = vld [vmem:[%s4910 + $0x10] sm:$0xf]
      %v4916 = vld [vmem:[%s4910 + $0x14] sm:$0xf]
      %v4917 = vld [vmem:[%s4910 + $0x18] sm:$0xf]
      %v4918 = vld [vmem:[%s4910 + $0x1c] sm:$0xf]
      %v4919 = vld [vmem:[%s4910 + $0x20] sm:$0xf]
      %v4920 = vld [vmem:[%s4910 + $0x24] sm:$0xf]
      %v4921 = vld [vmem:[%s4910 + $0x28] sm:$0xf]
      %v4922 = vld [vmem:[%s4910 + $0x2c] sm:$0xf]
      %v4923 = vld [vmem:[%s4910 + $0x30] sm:$0xf]
      %v4924 = vld [vmem:[%s4910 + $0x34] sm:$0xf]
      %v4925 = vld [vmem:[%s4910 + $0x38] sm:$0xf]
      %v4926 = vld [vmem:[%s4910 + $0x3c] sm:$0xf]
      %v4959 = vunpack.c.l.b16 %v4846
      %v4960 = vunpack.c.l.b16 %v4847
      %v4961 = vunpack.c.l.b16 %v4848
      %v4962 = vunpack.c.l.b16 %v4849
      %v4963 = vunpack.c.l.b16 %v4850
      %v4964 = vunpack.c.l.b16 %v4851
      %v4965 = vunpack.c.l.b16 %v4852
      %v4966 = vunpack.c.l.b16 %v4853
      %v4967 = vunpack.c.l.b16 %v4854
      %v4968 = vunpack.c.l.b16 %v4855
      %v4969 = vunpack.c.l.b16 %v4856
      %v4970 = vunpack.c.l.b16 %v4857
      %v4971 = vunpack.c.l.b16 %v4858
      %v4972 = vunpack.c.l.b16 %v4859
      %v4973 = vunpack.c.l.b16 %v4860
      %v4974 = vunpack.c.l.b16 %v4861
      %v4975 = vunpack.c.l.b16 %v4862
      %v4976 = vunpack.c.l.b16 %v4863
      %v4977 = vunpack.c.l.b16 %v4864
      %v4978 = vunpack.c.l.b16 %v4865
      %v4979 = vunpack.c.l.b16 %v4866
      %v4980 = vunpack.c.l.b16 %v4867
      %v4981 = vunpack.c.l.b16 %v4868
      %v4982 = vunpack.c.l.b16 %v4869
      %v4983 = vunpack.c.l.b16 %v4870
      %v4984 = vunpack.c.l.b16 %v4871
      %v4985 = vunpack.c.l.b16 %v4872
      %v4986 = vunpack.c.l.b16 %v4873
      %v4987 = vunpack.c.l.b16 %v4874
      %v4988 = vunpack.c.l.b16 %v4875
      %v4989 = vunpack.c.l.b16 %v4876
      %v4990 = vunpack.c.l.b16 %v4877
      %v4991 = vpack.c.b16 %v4960, %v4959
      %v4992 = vpack.c.b16 %v4962, %v4961
      %v4993 = vpack.c.b16 %v4964, %v4963
      %v4994 = vpack.c.b16 %v4966, %v4965
      %v4995 = vpack.c.b16 %v4968, %v4967
      %v4996 = vpack.c.b16 %v4970, %v4969
      %v4997 = vpack.c.b16 %v4972, %v4971
      %v4998 = vpack.c.b16 %v4974, %v4973
      %v4999 = vpack.c.b16 %v4976, %v4975
      %v5000 = vpack.c.b16 %v4978, %v4977
      %v5001 = vpack.c.b16 %v4980, %v4979
      %v5002 = vpack.c.b16 %v4982, %v4981
      %v5003 = vpack.c.b16 %v4984, %v4983
      %v5004 = vpack.c.b16 %v4986, %v4985
      %v5005 = vpack.c.b16 %v4988, %v4987
      %v5006 = vpack.c.b16 %v4990, %v4989
      %v5039 = vunpack.c.l.b16 %v4911
      %v5040 = vunpack.c.l.b16 %v4912
      %v5041 = vunpack.c.l.b16 %v4913
      %v5042 = vunpack.c.l.b16 %v4914
      %v5043 = vunpack.c.l.b16 %v4915
      %v5044 = vunpack.c.l.b16 %v4916
      %v5045 = vunpack.c.l.b16 %v4917
      %v5046 = vunpack.c.l.b16 %v4918
      %v5047 = vunpack.c.l.b16 %v4919
      %v5048 = vunpack.c.l.b16 %v4920
      %v5049 = vunpack.c.l.b16 %v4921
      %v5050 = vunpack.c.l.b16 %v4922
      %v5051 = vunpack.c.l.b16 %v4923
      %v5052 = vunpack.c.l.b16 %v4924
      %v5053 = vunpack.c.l.b16 %v4925
      %v5054 = vunpack.c.l.b16 %v4926
      %v5055 = vpack.c.b16 %v5040, %v5039
      %v5056 = vpack.c.b16 %v5042, %v5041
      %v5057 = vpack.c.b16 %v5044, %v5043
      %v5058 = vpack.c.b16 %v5046, %v5045
      %v5059 = vpack.c.b16 %v5048, %v5047
      %v5060 = vpack.c.b16 %v5050, %v5049
      %v5061 = vpack.c.b16 %v5052, %v5051
      %v5062 = vpack.c.b16 %v5054, %v5053
      %5071 = vmatpush.bf16.msra.mxu0 %v5062
      %5072 = vmatpush.bf16.msra.mxu0 %v5061
      %5073 = vmatpush.bf16.msra.mxu0 %v5060
      %5074 = vmatpush.bf16.msra.mxu0 %v5059
      %5075 = vmatpush.bf16.msra.mxu0 %v5058
      %5076 = vmatpush.bf16.msra.mxu0 %v5057
      %5077 = vmatpush.bf16.msra.mxu0 %v5056
      %5078 = vmatpush.bf16.msra.mxu0 %v5055
      %5079 = vmatmul.bf16.gmra.mxu0 %v4991
      %v5080 = vpop.f32.mrf.mxu0
      %v5081 = vadd.f32 0.0, %v5080
      %v5082 = vpop.f32.mrf.mxu0
      %v5083 = vadd.f32 0.0, %v5082
      %5084 = vmatmul.bf16.gmra.mxu0 %v4992
      %v5085 = vpop.f32.mrf.mxu0
      %v5086 = vadd.f32 0.0, %v5085
      %v5087 = vpop.f32.mrf.mxu0
      %v5088 = vadd.f32 0.0, %v5087
      %5089 = vmatmul.bf16.gmra.mxu0 %v4993
      %v5090 = vpop.f32.mrf.mxu0
      %v5091 = vadd.f32 0.0, %v5090
      %v5092 = vpop.f32.mrf.mxu0
      %v5093 = vadd.f32 0.0, %v5092
      %5094 = vmatmul.bf16.gmra.mxu0 %v4994
      %v5095 = vpop.f32.mrf.mxu0
      %v5096 = vadd.f32 0.0, %v5095
      %v5097 = vpop.f32.mrf.mxu0
      %v5098 = vadd.f32 0.0, %v5097
      %5099 = vmatmul.bf16.gmra.mxu0 %v4995
      %v5100 = vpop.f32.mrf.mxu0
      %v5101 = vadd.f32 0.0, %v5100
      %v5102 = vpop.f32.mrf.mxu0
      %v5103 = vadd.f32 0.0, %v5102
      %5104 = vmatmul.bf16.gmra.mxu0 %v4996
      %v5105 = vpop.f32.mrf.mxu0
      %v5106 = vadd.f32 0.0, %v5105
      %v5107 = vpop.f32.mrf.mxu0
      %v5108 = vadd.f32 0.0, %v5107
      %5109 = vmatmul.bf16.gmra.mxu0 %v4997
      %v5110 = vpop.f32.mrf.mxu0
      %v5111 = vadd.f32 0.0, %v5110
      %v5112 = vpop.f32.mrf.mxu0
      %v5113 = vadd.f32 0.0, %v5112
      %5114 = vmatmul.bf16.gmra.mxu0 %v4998
      %v5115 = vpop.f32.mrf.mxu0
      %v5116 = vadd.f32 0.0, %v5115
      %v5117 = vpop.f32.mrf.mxu0
      %v5118 = vadd.f32 0.0, %v5117
      %5119 = vmatmul.bf16.gmra.mxu0 %v4999
      %v5120 = vpop.f32.mrf.mxu0
      %v5121 = vadd.f32 0.0, %v5120
      %v5122 = vpop.f32.mrf.mxu0
      %v5123 = vadd.f32 0.0, %v5122
      %5124 = vmatmul.bf16.gmra.mxu0 %v5000
      %v5125 = vpop.f32.mrf.mxu0
      %v5126 = vadd.f32 0.0, %v5125
      %v5127 = vpop.f32.mrf.mxu0
      %v5128 = vadd.f32 0.0, %v5127
      %5129 = vmatmul.bf16.gmra.mxu0 %v5001
      %v5130 = vpop.f32.mrf.mxu0
      %v5131 = vadd.f32 0.0, %v5130
      %v5132 = vpop.f32.mrf.mxu0
      %v5133 = vadd.f32 0.0, %v5132
      %5134 = vmatmul.bf16.gmra.mxu0 %v5002
      %v5135 = vpop.f32.mrf.mxu0
      %v5136 = vadd.f32 0.0, %v5135
      %v5137 = vpop.f32.mrf.mxu0
      %v5138 = vadd.f32 0.0, %v5137
      %5139 = vmatmul.bf16.gmra.mxu0 %v5003
      %v5140 = vpop.f32.mrf.mxu0
      %v5141 = vadd.f32 0.0, %v5140
      %v5142 = vpop.f32.mrf.mxu0
      %v5143 = vadd.f32 0.0, %v5142
      %5144 = vmatmul.bf16.gmra.mxu0 %v5004
      %v5145 = vpop.f32.mrf.mxu0
      %v5146 = vadd.f32 0.0, %v5145
      %v5147 = vpop.f32.mrf.mxu0
      %v5148 = vadd.f32 0.0, %v5147
      %5149 = vmatmul.bf16.gmra.mxu0 %v5005
      %v5150 = vpop.f32.mrf.mxu0
      %v5151 = vadd.f32 0.0, %v5150
      %v5152 = vpop.f32.mrf.mxu0
      %v5153 = vadd.f32 0.0, %v5152
      %5154 = vmatmul.bf16.gmra.mxu0 %v5006
      %v5155 = vpop.f32.mrf.mxu0
      %v5156 = vadd.f32 0.0, %v5155
      %v5157 = vpop.f32.mrf.mxu0
      %v5158 = vadd.f32 0.0, %v5157
      %5159 = vdwg.mxu0
      %v5160 = vadd.f32 %v4878, %v5081
      %v5161 = vadd.f32 %v4879, %v5083
      %v5162 = vadd.f32 %v4880, %v5086
      %v5163 = vadd.f32 %v4881, %v5088
      %v5164 = vadd.f32 %v4882, %v5091
      %v5165 = vadd.f32 %v4883, %v5093
      %v5166 = vadd.f32 %v4884, %v5096
      %v5167 = vadd.f32 %v4885, %v5098
      %v5168 = vadd.f32 %v4886, %v5101
      %v5169 = vadd.f32 %v4887, %v5103
      %v5170 = vadd.f32 %v4888, %v5106
      %v5171 = vadd.f32 %v4889, %v5108
      %v5172 = vadd.f32 %v4890, %v5111
      %v5173 = vadd.f32 %v4891, %v5113
      %v5174 = vadd.f32 %v4892, %v5116
      %v5175 = vadd.f32 %v4893, %v5118
      %v5176 = vadd.f32 %v4894, %v5121
      %v5177 = vadd.f32 %v4895, %v5123
      %v5178 = vadd.f32 %v4896, %v5126
      %v5179 = vadd.f32 %v4897, %v5128
      %v5180 = vadd.f32 %v4898, %v5131
      %v5181 = vadd.f32 %v4899, %v5133
      %v5182 = vadd.f32 %v4900, %v5136
      %v5183 = vadd.f32 %v4901, %v5138
      %v5184 = vadd.f32 %v4902, %v5141
      %v5185 = vadd.f32 %v4903, %v5143
      %v5186 = vadd.f32 %v4904, %v5146
      %v5187 = vadd.f32 %v4905, %v5148
      %v5188 = vadd.f32 %v4906, %v5151
      %v5189 = vadd.f32 %v4907, %v5153
      %v5190 = vadd.f32 %v4908, %v5156
      %v5191 = vadd.f32 %v4909, %v5158
      %5192 = vst [vmem:[#allocation2] sm:$0xff] %v5160
      %5193 = vst [vmem:[#allocation2 + $0x8] sm:$0xff] %v5161
      %5194 = vst [vmem:[#allocation2 + $0x10] sm:$0xff] %v5162
      %5195 = vst [vmem:[#allocation2 + $0x18] sm:$0xff] %v5163
      %5196 = vst [vmem:[#allocation2 + $0x20] sm:$0xff] %v5164
      %5197 = vst [vmem:[#allocation2 + $0x28] sm:$0xff] %v5165
      %5198 = vst [vmem:[#allocation2 + $0x30] sm:$0xff] %v5166
      %5199 = vst [vmem:[#allocation2 + $0x38] sm:$0xff] %v5167
      %5200 = vst [vmem:[#allocation2 + $0x40] sm:$0xff] %v5168
      %5201 = vst [vmem:[#allocation2 + $0x48] sm:$0xff] %v5169
      %5202 = vst [vmem:[#allocation2 + $0x50] sm:$0xff] %v5170
      %5203 = vst [vmem:[#allocation2 + $0x58] sm:$0xff] %v5171
      %5204 = vst [vmem:[#allocation2 + $0x60] sm:$0xff] %v5172
      %5205 = vst [vmem:[#allocation2 + $0x68] sm:$0xff] %v5173
      %5206 = vst [vmem:[#allocation2 + $0x70] sm:$0xff] %v5174
      %5207 = vst [vmem:[#allocation2 + $0x78] sm:$0xff] %v5175
      %5208 = vst [vmem:[#allocation2 + $0x80] sm:$0xff] %v5176
      %5209 = vst [vmem:[#allocation2 + $0x88] sm:$0xff] %v5177
      %5210 = vst [vmem:[#allocation2 + $0x90] sm:$0xff] %v5178
      %5211 = vst [vmem:[#allocation2 + $0x98] sm:$0xff] %v5179
      %5212 = vst [vmem:[#allocation2 + $0xa0] sm:$0xff] %v5180
      %5213 = vst [vmem:[#allocation2 + $0xa8] sm:$0xff] %v5181
      %5214 = vst [vmem:[#allocation2 + $0xb0] sm:$0xff] %v5182
      %5215 = vst [vmem:[#allocation2 + $0xb8] sm:$0xff] %v5183
      %5216 = vst [vmem:[#allocation2 + $0xc0] sm:$0xff] %v5184
      %5217 = vst [vmem:[#allocation2 + $0xc8] sm:$0xff] %v5185
      %5218 = vst [vmem:[#allocation2 + $0xd0] sm:$0xff] %v5186
      %5219 = vst [vmem:[#allocation2 + $0xd8] sm:$0xff] %v5187
      %5220 = vst [vmem:[#allocation2 + $0xe0] sm:$0xff] %v5188
      %5221 = vst [vmem:[#allocation2 + $0xe8] sm:$0xff] %v5189
      %5222 = vst [vmem:[#allocation2 + $0xf0] sm:$0xff] %v5190
      %5223 = vst [vmem:[#allocation2 + $0xf8] sm:$0xff] %v5191
      %v5224 = vld [vmem:[#allocation3 + $0x2] sm:$0xff]
      %v5225 = vld [vmem:[#allocation3 + $0xa] sm:$0xff]
      %v5226 = vld [vmem:[#allocation3 + $0x1a] sm:$0xff]
      %v5227 = vld [vmem:[#allocation3 + $0x22] sm:$0xff]
      %v5228 = vld [vmem:[#allocation3 + $0x32] sm:$0xff]
      %v5229 = vld [vmem:[#allocation3 + $0x3a] sm:$0xff]
      %v5230 = vld [vmem:[#allocation3 + $0x4a] sm:$0xff]
      %v5231 = vld [vmem:[#allocation3 + $0x52] sm:$0xff]
      %v5232 = vld [vmem:[#allocation3 + $0x62] sm:$0xff]
      %v5233 = vld [vmem:[#allocation3 + $0x6a] sm:$0xff]
      %v5234 = vld [vmem:[#allocation3 + $0x7a] sm:$0xff]
      %v5235 = vld [vmem:[#allocation3 + $0x82] sm:$0xff]
      %v5236 = vld [vmem:[#allocation3 + $0x92] sm:$0xff]
      %v5237 = vld [vmem:[#allocation3 + $0x9a] sm:$0xff]
      %v5238 = vld [vmem:[#allocation3 + $0xaa] sm:$0xff]
      %v5239 = vld [vmem:[#allocation3 + $0xb2] sm:$0xff]
      %v5240 = vld [vmem:[#allocation3 + $0xc2] sm:$0xff]
      %v5241 = vld [vmem:[#allocation3 + $0xca] sm:$0xff]
      %v5242 = vld [vmem:[#allocation3 + $0xda] sm:$0xff]
      %v5243 = vld [vmem:[#allocation3 + $0xe2] sm:$0xff]
      %v5244 = vld [vmem:[#allocation3 + $0xf2] sm:$0xff]
      %v5245 = vld [vmem:[#allocation3 + $0xfa] sm:$0xff]
      %v5246 = vld [vmem:[#allocation3 + $0x10a] sm:$0xff]
      %v5247 = vld [vmem:[#allocation3 + $0x112] sm:$0xff]
      %v5248 = vld [vmem:[#allocation3 + $0x122] sm:$0xff]
      %v5249 = vld [vmem:[#allocation3 + $0x12a] sm:$0xff]
      %v5250 = vld [vmem:[#allocation3 + $0x13a] sm:$0xff]
      %v5251 = vld [vmem:[#allocation3 + $0x142] sm:$0xff]
      %v5252 = vld [vmem:[#allocation3 + $0x152] sm:$0xff]
      %v5253 = vld [vmem:[#allocation3 + $0x15a] sm:$0xff]
      %v5254 = vld [vmem:[#allocation3 + $0x16a] sm:$0xff]
      %v5255 = vld [vmem:[#allocation3 + $0x172] sm:$0xff]
      %v5256 = vpack.c.bf16 %v5224, %v5224
      %v5257 = vpack.c.bf16 %v5225, %v5225
      %v5258 = vpack.c.bf16 %v5226, %v5226
      %v5259 = vpack.c.bf16 %v5227, %v5227
      %v5260 = vpack.c.bf16 %v5228, %v5228
      %v5261 = vpack.c.bf16 %v5229, %v5229
      %v5262 = vpack.c.bf16 %v5230, %v5230
      %v5263 = vpack.c.bf16 %v5231, %v5231
      %v5264 = vpack.c.bf16 %v5232, %v5232
      %v5265 = vpack.c.bf16 %v5233, %v5233
      %v5266 = vpack.c.bf16 %v5234, %v5234
      %v5267 = vpack.c.bf16 %v5235, %v5235
      %v5268 = vpack.c.bf16 %v5236, %v5236
      %v5269 = vpack.c.bf16 %v5237, %v5237
      %v5270 = vpack.c.bf16 %v5238, %v5238
      %v5271 = vpack.c.bf16 %v5239, %v5239
      %v5272 = vpack.c.bf16 %v5240, %v5240
      %v5273 = vpack.c.bf16 %v5241, %v5241
      %v5274 = vpack.c.bf16 %v5242, %v5242
      %v5275 = vpack.c.bf16 %v5243, %v5243
      %v5276 = vpack.c.bf16 %v5244, %v5244
      %v5277 = vpack.c.bf16 %v5245, %v5245
      %v5278 = vpack.c.bf16 %v5246, %v5246
      %v5279 = vpack.c.bf16 %v5247, %v5247
      %v5280 = vpack.c.bf16 %v5248, %v5248
      %v5281 = vpack.c.bf16 %v5249, %v5249
      %v5282 = vpack.c.bf16 %v5250, %v5250
      %v5283 = vpack.c.bf16 %v5251, %v5251
      %v5284 = vpack.c.bf16 %v5252, %v5252
      %v5285 = vpack.c.bf16 %v5253, %v5253
      %v5286 = vpack.c.bf16 %v5254, %v5254
      %v5287 = vpack.c.bf16 %v5255, %v5255
      %v5288 = vld [vmem:[#allocation2] sm:$0xff]
      %v5289 = vld [vmem:[#allocation2 + $0x8] sm:$0xff]
      %v5290 = vld [vmem:[#allocation2 + $0x10] sm:$0xff]
      %v5291 = vld [vmem:[#allocation2 + $0x18] sm:$0xff]
      %v5292 = vld [vmem:[#allocation2 + $0x20] sm:$0xff]
      %v5293 = vld [vmem:[#allocation2 + $0x28] sm:$0xff]
      %v5294 = vld [vmem:[#allocation2 + $0x30] sm:$0xff]
      %v5295 = vld [vmem:[#allocation2 + $0x38] sm:$0xff]
      %v5296 = vld [vmem:[#allocation2 + $0x40] sm:$0xff]
      %v5297 = vld [vmem:[#allocation2 + $0x48] sm:$0xff]
      %v5298 = vld [vmem:[#allocation2 + $0x50] sm:$0xff]
      %v5299 = vld [vmem:[#allocation2 + $0x58] sm:$0xff]
      %v5300 = vld [vmem:[#allocation2 + $0x60] sm:$0xff]
      %v5301 = vld [vmem:[#allocation2 + $0x68] sm:$0xff]
      %v5302 = vld [vmem:[#allocation2 + $0x70] sm:$0xff]
      %v5303 = vld [vmem:[#allocation2 + $0x78] sm:$0xff]
      %v5304 = vld [vmem:[#allocation2 + $0x80] sm:$0xff]
      %v5305 = vld [vmem:[#allocation2 + $0x88] sm:$0xff]
      %v5306 = vld [vmem:[#allocation2 + $0x90] sm:$0xff]
      %v5307 = vld [vmem:[#allocation2 + $0x98] sm:$0xff]
      %v5308 = vld [vmem:[#allocation2 + $0xa0] sm:$0xff]
      %v5309 = vld [vmem:[#allocation2 + $0xa8] sm:$0xff]
      %v5310 = vld [vmem:[#allocation2 + $0xb0] sm:$0xff]
      %v5311 = vld [vmem:[#allocation2 + $0xb8] sm:$0xff]
      %v5312 = vld [vmem:[#allocation2 + $0xc0] sm:$0xff]
      %v5313 = vld [vmem:[#allocation2 + $0xc8] sm:$0xff]
      %v5314 = vld [vmem:[#allocation2 + $0xd0] sm:$0xff]
      %v5315 = vld [vmem:[#allocation2 + $0xd8] sm:$0xff]
      %v5316 = vld [vmem:[#allocation2 + $0xe0] sm:$0xff]
      %v5317 = vld [vmem:[#allocation2 + $0xe8] sm:$0xff]
      %v5318 = vld [vmem:[#allocation2 + $0xf0] sm:$0xff]
      %v5319 = vld [vmem:[#allocation2 + $0xf8] sm:$0xff]
      %s5320 = scalar_lea.vmem %s5, 128
      %v5321 = vld [vmem:[%s5320] sm:$0xf]
      %v5322 = vld [vmem:[%s5320 + $0x4] sm:$0xf]
      %v5323 = vld [vmem:[%s5320 + $0x8] sm:$0xf]
      %v5324 = vld [vmem:[%s5320 + $0xc] sm:$0xf]
      %v5325 = vld [vmem:[%s5320 + $0x10] sm:$0xf]
      %v5326 = vld [vmem:[%s5320 + $0x14] sm:$0xf]
      %v5327 = vld [vmem:[%s5320 + $0x18] sm:$0xf]
      %v5328 = vld [vmem:[%s5320 + $0x1c] sm:$0xf]
      %v5329 = vld [vmem:[%s5320 + $0x20] sm:$0xf]
      %v5330 = vld [vmem:[%s5320 + $0x24] sm:$0xf]
      %v5331 = vld [vmem:[%s5320 + $0x28] sm:$0xf]
      %v5332 = vld [vmem:[%s5320 + $0x2c] sm:$0xf]
      %v5333 = vld [vmem:[%s5320 + $0x30] sm:$0xf]
      %v5334 = vld [vmem:[%s5320 + $0x34] sm:$0xf]
      %v5335 = vld [vmem:[%s5320 + $0x38] sm:$0xf]
      %v5336 = vld [vmem:[%s5320 + $0x3c] sm:$0xf]
      %v5369 = vunpack.c.l.b16 %v5256
      %v5370 = vunpack.c.l.b16 %v5257
      %v5371 = vunpack.c.l.b16 %v5258
      %v5372 = vunpack.c.l.b16 %v5259
      %v5373 = vunpack.c.l.b16 %v5260
      %v5374 = vunpack.c.l.b16 %v5261
      %v5375 = vunpack.c.l.b16 %v5262
      %v5376 = vunpack.c.l.b16 %v5263
      %v5377 = vunpack.c.l.b16 %v5264
      %v5378 = vunpack.c.l.b16 %v5265
      %v5379 = vunpack.c.l.b16 %v5266
      %v5380 = vunpack.c.l.b16 %v5267
      %v5381 = vunpack.c.l.b16 %v5268
      %v5382 = vunpack.c.l.b16 %v5269
      %v5383 = vunpack.c.l.b16 %v5270
      %v5384 = vunpack.c.l.b16 %v5271
      %v5385 = vunpack.c.l.b16 %v5272
      %v5386 = vunpack.c.l.b16 %v5273
      %v5387 = vunpack.c.l.b16 %v5274
      %v5388 = vunpack.c.l.b16 %v5275
      %v5389 = vunpack.c.l.b16 %v5276
      %v5390 = vunpack.c.l.b16 %v5277
      %v5391 = vunpack.c.l.b16 %v5278
      %v5392 = vunpack.c.l.b16 %v5279
      %v5393 = vunpack.c.l.b16 %v5280
      %v5394 = vunpack.c.l.b16 %v5281
      %v5395 = vunpack.c.l.b16 %v5282
      %v5396 = vunpack.c.l.b16 %v5283
      %v5397 = vunpack.c.l.b16 %v5284
      %v5398 = vunpack.c.l.b16 %v5285
      %v5399 = vunpack.c.l.b16 %v5286
      %v5400 = vunpack.c.l.b16 %v5287
      %v5401 = vpack.c.b16 %v5370, %v5369
      %v5402 = vpack.c.b16 %v5372, %v5371
      %v5403 = vpack.c.b16 %v5374, %v5373
      %v5404 = vpack.c.b16 %v5376, %v5375
      %v5405 = vpack.c.b16 %v5378, %v5377
      %v5406 = vpack.c.b16 %v5380, %v5379
      %v5407 = vpack.c.b16 %v5382, %v5381
      %v5408 = vpack.c.b16 %v5384, %v5383
      %v5409 = vpack.c.b16 %v5386, %v5385
      %v5410 = vpack.c.b16 %v5388, %v5387
      %v5411 = vpack.c.b16 %v5390, %v5389
      %v5412 = vpack.c.b16 %v5392, %v5391
      %v5413 = vpack.c.b16 %v5394, %v5393
      %v5414 = vpack.c.b16 %v5396, %v5395
      %v5415 = vpack.c.b16 %v5398, %v5397
      %v5416 = vpack.c.b16 %v5400, %v5399
      %v5449 = vunpack.c.l.b16 %v5321
      %v5450 = vunpack.c.l.b16 %v5322
      %v5451 = vunpack.c.l.b16 %v5323
      %v5452 = vunpack.c.l.b16 %v5324
      %v5453 = vunpack.c.l.b16 %v5325
      %v5454 = vunpack.c.l.b16 %v5326
      %v5455 = vunpack.c.l.b16 %v5327
      %v5456 = vunpack.c.l.b16 %v5328
      %v5457 = vunpack.c.l.b16 %v5329
      %v5458 = vunpack.c.l.b16 %v5330
      %v5459 = vunpack.c.l.b16 %v5331
      %v5460 = vunpack.c.l.b16 %v5332
      %v5461 = vunpack.c.l.b16 %v5333
      %v5462 = vunpack.c.l.b16 %v5334
      %v5463 = vunpack.c.l.b16 %v5335
      %v5464 = vunpack.c.l.b16 %v5336
      %v5465 = vpack.c.b16 %v5450, %v5449
      %v5466 = vpack.c.b16 %v5452, %v5451
      %v5467 = vpack.c.b16 %v5454, %v5453
      %v5468 = vpack.c.b16 %v5456, %v5455
      %v5469 = vpack.c.b16 %v5458, %v5457
      %v5470 = vpack.c.b16 %v5460, %v5459
      %v5471 = vpack.c.b16 %v5462, %v5461
      %v5472 = vpack.c.b16 %v5464, %v5463
      %5481 = vmatpush.bf16.msra.mxu0 %v5472
      %5482 = vmatpush.bf16.msra.mxu0 %v5471
      %5483 = vmatpush.bf16.msra.mxu0 %v5470
      %5484 = vmatpush.bf16.msra.mxu0 %v5469
      %5485 = vmatpush.bf16.msra.mxu0 %v5468
      %5486 = vmatpush.bf16.msra.mxu0 %v5467
      %5487 = vmatpush.bf16.msra.mxu0 %v5466
      %5488 = vmatpush.bf16.msra.mxu0 %v5465
      %5489 = vmatmul.bf16.gmra.mxu0 %v5401
      %v5490 = vpop.f32.mrf.mxu0
      %v5491 = vadd.f32 0.0, %v5490
      %v5492 = vpop.f32.mrf.mxu0
      %v5493 = vadd.f32 0.0, %v5492
      %5494 = vmatmul.bf16.gmra.mxu0 %v5402
      %v5495 = vpop.f32.mrf.mxu0
      %v5496 = vadd.f32 0.0, %v5495
      %v5497 = vpop.f32.mrf.mxu0
      %v5498 = vadd.f32 0.0, %v5497
      %5499 = vmatmul.bf16.gmra.mxu0 %v5403
      %v5500 = vpop.f32.mrf.mxu0
      %v5501 = vadd.f32 0.0, %v5500
      %v5502 = vpop.f32.mrf.mxu0
      %v5503 = vadd.f32 0.0, %v5502
      %5504 = vmatmul.bf16.gmra.mxu0 %v5404
      %v5505 = vpop.f32.mrf.mxu0
      %v5506 = vadd.f32 0.0, %v5505
      %v5507 = vpop.f32.mrf.mxu0
      %v5508 = vadd.f32 0.0, %v5507
      %5509 = vmatmul.bf16.gmra.mxu0 %v5405
      %v5510 = vpop.f32.mrf.mxu0
      %v5511 = vadd.f32 0.0, %v5510
      %v5512 = vpop.f32.mrf.mxu0
      %v5513 = vadd.f32 0.0, %v5512
      %5514 = vmatmul.bf16.gmra.mxu0 %v5406
      %v5515 = vpop.f32.mrf.mxu0
      %v5516 = vadd.f32 0.0, %v5515
      %v5517 = vpop.f32.mrf.mxu0
      %v5518 = vadd.f32 0.0, %v5517
      %5519 = vmatmul.bf16.gmra.mxu0 %v5407
      %v5520 = vpop.f32.mrf.mxu0
      %v5521 = vadd.f32 0.0, %v5520
      %v5522 = vpop.f32.mrf.mxu0
      %v5523 = vadd.f32 0.0, %v5522
      %5524 = vmatmul.bf16.gmra.mxu0 %v5408
      %v5525 = vpop.f32.mrf.mxu0
      %v5526 = vadd.f32 0.0, %v5525
      %v5527 = vpop.f32.mrf.mxu0
      %v5528 = vadd.f32 0.0, %v5527
      %5529 = vmatmul.bf16.gmra.mxu0 %v5409
      %v5530 = vpop.f32.mrf.mxu0
      %v5531 = vadd.f32 0.0, %v5530
      %v5532 = vpop.f32.mrf.mxu0
      %v5533 = vadd.f32 0.0, %v5532
      %5534 = vmatmul.bf16.gmra.mxu0 %v5410
      %v5535 = vpop.f32.mrf.mxu0
      %v5536 = vadd.f32 0.0, %v5535
      %v5537 = vpop.f32.mrf.mxu0
      %v5538 = vadd.f32 0.0, %v5537
      %5539 = vmatmul.bf16.gmra.mxu0 %v5411
      %v5540 = vpop.f32.mrf.mxu0
      %v5541 = vadd.f32 0.0, %v5540
      %v5542 = vpop.f32.mrf.mxu0
      %v5543 = vadd.f32 0.0, %v5542
      %5544 = vmatmul.bf16.gmra.mxu0 %v5412
      %v5545 = vpop.f32.mrf.mxu0
      %v5546 = vadd.f32 0.0, %v5545
      %v5547 = vpop.f32.mrf.mxu0
      %v5548 = vadd.f32 0.0, %v5547
      %5549 = vmatmul.bf16.gmra.mxu0 %v5413
      %v5550 = vpop.f32.mrf.mxu0
      %v5551 = vadd.f32 0.0, %v5550
      %v5552 = vpop.f32.mrf.mxu0
      %v5553 = vadd.f32 0.0, %v5552
      %5554 = vmatmul.bf16.gmra.mxu0 %v5414
      %v5555 = vpop.f32.mrf.mxu0
      %v5556 = vadd.f32 0.0, %v5555
      %v5557 = vpop.f32.mrf.mxu0
      %v5558 = vadd.f32 0.0, %v5557
      %5559 = vmatmul.bf16.gmra.mxu0 %v5415
      %v5560 = vpop.f32.mrf.mxu0
      %v5561 = vadd.f32 0.0, %v5560
      %v5562 = vpop.f32.mrf.mxu0
      %v5563 = vadd.f32 0.0, %v5562
      %5564 = vmatmul.bf16.gmra.mxu0 %v5416
      %v5565 = vpop.f32.mrf.mxu0
      %v5566 = vadd.f32 0.0, %v5565
      %v5567 = vpop.f32.mrf.mxu0
      %v5568 = vadd.f32 0.0, %v5567
      %5569 = vdwg.mxu0
      %v5570 = vadd.f32 %v5288, %v5491
      %v5571 = vadd.f32 %v5289, %v5493
      %v5572 = vadd.f32 %v5290, %v5496
      %v5573 = vadd.f32 %v5291, %v5498
      %v5574 = vadd.f32 %v5292, %v5501
      %v5575 = vadd.f32 %v5293, %v5503
      %v5576 = vadd.f32 %v5294, %v5506
      %v5577 = vadd.f32 %v5295, %v5508
      %v5578 = vadd.f32 %v5296, %v5511
      %v5579 = vadd.f32 %v5297, %v5513
      %v5580 = vadd.f32 %v5298, %v5516
      %v5581 = vadd.f32 %v5299, %v5518
      %v5582 = vadd.f32 %v5300, %v5521
      %v5583 = vadd.f32 %v5301, %v5523
      %v5584 = vadd.f32 %v5302, %v5526
      %v5585 = vadd.f32 %v5303, %v5528
      %v5586 = vadd.f32 %v5304, %v5531
      %v5587 = vadd.f32 %v5305, %v5533
      %v5588 = vadd.f32 %v5306, %v5536
      %v5589 = vadd.f32 %v5307, %v5538
      %v5590 = vadd.f32 %v5308, %v5541
      %v5591 = vadd.f32 %v5309, %v5543
      %v5592 = vadd.f32 %v5310, %v5546
      %v5593 = vadd.f32 %v5311, %v5548
      %v5594 = vadd.f32 %v5312, %v5551
      %v5595 = vadd.f32 %v5313, %v5553
      %v5596 = vadd.f32 %v5314, %v5556
      %v5597 = vadd.f32 %v5315, %v5558
      %v5598 = vadd.f32 %v5316, %v5561
      %v5599 = vadd.f32 %v5317, %v5563
      %v5600 = vadd.f32 %v5318, %v5566
      %v5601 = vadd.f32 %v5319, %v5568
      %5602 = vst [vmem:[#allocation2] sm:$0xff] %v5570
      %5603 = vst [vmem:[#allocation2 + $0x8] sm:$0xff] %v5571
      %5604 = vst [vmem:[#allocation2 + $0x10] sm:$0xff] %v5572
      %5605 = vst [vmem:[#allocation2 + $0x18] sm:$0xff] %v5573
      %5606 = vst [vmem:[#allocation2 + $0x20] sm:$0xff] %v5574
      %5607 = vst [vmem:[#allocation2 + $0x28] sm:$0xff] %v5575
      %5608 = vst [vmem:[#allocation2 + $0x30] sm:$0xff] %v5576
      %5609 = vst [vmem:[#allocation2 + $0x38] sm:$0xff] %v5577
      %5610 = vst [vmem:[#allocation2 + $0x40] sm:$0xff] %v5578
      %5611 = vst [vmem:[#allocation2 + $0x48] sm:$0xff] %v5579
      %5612 = vst [vmem:[#allocation2 + $0x50] sm:$0xff] %v5580
      %5613 = vst [vmem:[#allocation2 + $0x58] sm:$0xff] %v5581
      %5614 = vst [vmem:[#allocation2 + $0x60] sm:$0xff] %v5582
      %5615 = vst [vmem:[#allocation2 + $0x68] sm:$0xff] %v5583
      %5616 = vst [vmem:[#allocation2 + $0x70] sm:$0xff] %v5584
      %5617 = vst [vmem:[#allocation2 + $0x78] sm:$0xff] %v5585
      %5618 = vst [vmem:[#allocation2 + $0x80] sm:$0xff] %v5586
      %5619 = vst [vmem:[#allocation2 + $0x88] sm:$0xff] %v5587
      %5620 = vst [vmem:[#allocation2 + $0x90] sm:$0xff] %v5588
      %5621 = vst [vmem:[#allocation2 + $0x98] sm:$0xff] %v5589
      %5622 = vst [vmem:[#allocation2 + $0xa0] sm:$0xff] %v5590
      %5623 = vst [vmem:[#allocation2 + $0xa8] sm:$0xff] %v5591
      %5624 = vst [vmem:[#allocation2 + $0xb0] sm:$0xff] %v5592
      %5625 = vst [vmem:[#allocation2 + $0xb8] sm:$0xff] %v5593
      %5626 = vst [vmem:[#allocation2 + $0xc0] sm:$0xff] %v5594
      %5627 = vst [vmem:[#allocation2 + $0xc8] sm:$0xff] %v5595
      %5628 = vst [vmem:[#allocation2 + $0xd0] sm:$0xff] %v5596
      %5629 = vst [vmem:[#allocation2 + $0xd8] sm:$0xff] %v5597
      %5630 = vst [vmem:[#allocation2 + $0xe0] sm:$0xff] %v5598
      %5631 = vst [vmem:[#allocation2 + $0xe8] sm:$0xff] %v5599
      %5632 = vst [vmem:[#allocation2 + $0xf0] sm:$0xff] %v5600
      %5633 = vst [vmem:[#allocation2 + $0xf8] sm:$0xff] %v5601
      %v5634 = vld [vmem:[%s4340] sm:$0xff]
      %v5635 = vld [vmem:[%s4340 + $0x8] sm:$0xff]
      %v5636 = vld [vmem:[%s4340 + $0x18] sm:$0xff]
      %v5637 = vld [vmem:[%s4340 + $0x20] sm:$0xff]
      %v5638 = vld [vmem:[%s4340 + $0x30] sm:$0xff]
      %v5639 = vld [vmem:[%s4340 + $0x38] sm:$0xff]
      %v5640 = vld [vmem:[%s4340 + $0x48] sm:$0xff]
      %v5641 = vld [vmem:[%s4340 + $0x50] sm:$0xff]
      %v5642 = vld [vmem:[%s4340 + $0x60] sm:$0xff]
      %v5643 = vld [vmem:[%s4340 + $0x68] sm:$0xff]
      %v5644 = vld [vmem:[%s4340 + $0x78] sm:$0xff]
      %v5645 = vld [vmem:[%s4340 + $0x80] sm:$0xff]
      %v5646 = vld [vmem:[%s4340 + $0x90] sm:$0xff]
      %v5647 = vld [vmem:[%s4340 + $0x98] sm:$0xff]
      %v5648 = vld [vmem:[%s4340 + $0xa8] sm:$0xff]
      %v5649 = vld [vmem:[%s4340 + $0xb0] sm:$0xff]
      %v5650 = vld [vmem:[%s4340 + $0xc0] sm:$0xff]
      %v5651 = vld [vmem:[%s4340 + $0xc8] sm:$0xff]
      %v5652 = vld [vmem:[%s4340 + $0xd8] sm:$0xff]
      %v5653 = vld [vmem:[%s4340 + $0xe0] sm:$0xff]
      %v5654 = vld [vmem:[%s4340 + $0xf0] sm:$0xff]
      %v5655 = vld [vmem:[%s4340 + $0xf8] sm:$0xff]
      %v5656 = vld [vmem:[%s4340 + $0x108] sm:$0xff]
      %v5657 = vld [vmem:[%s4340 + $0x110] sm:$0xff]
      %v5658 = vld [vmem:[%s4340 + $0x120] sm:$0xff]
      %v5659 = vld [vmem:[%s4340 + $0x128] sm:$0xff]
      %v5660 = vld [vmem:[%s4340 + $0x138] sm:$0xff]
      %v5661 = vld [vmem:[%s4340 + $0x140] sm:$0xff]
      %v5662 = vld [vmem:[%s4340 + $0x150] sm:$0xff]
      %v5663 = vld [vmem:[%s4340 + $0x158] sm:$0xff]
      %v5664 = vld [vmem:[%s4340 + $0x168] sm:$0xff]
      %v5665 = vld [vmem:[%s4340 + $0x170] sm:$0xff]
      %v5666 = vpack.c.bf16 %v5634, %v5634
      %v5667 = vpack.c.bf16 %v5635, %v5635
      %v5668 = vpack.c.bf16 %v5636, %v5636
      %v5669 = vpack.c.bf16 %v5637, %v5637
      %v5670 = vpack.c.bf16 %v5638, %v5638
      %v5671 = vpack.c.bf16 %v5639, %v5639
      %v5672 = vpack.c.bf16 %v5640, %v5640
      %v5673 = vpack.c.bf16 %v5641, %v5641
      %v5674 = vpack.c.bf16 %v5642, %v5642
      %v5675 = vpack.c.bf16 %v5643, %v5643
      %v5676 = vpack.c.bf16 %v5644, %v5644
      %v5677 = vpack.c.bf16 %v5645, %v5645
      %v5678 = vpack.c.bf16 %v5646, %v5646
      %v5679 = vpack.c.bf16 %v5647, %v5647
      %v5680 = vpack.c.bf16 %v5648, %v5648
      %v5681 = vpack.c.bf16 %v5649, %v5649
      %v5682 = vpack.c.bf16 %v5650, %v5650
      %v5683 = vpack.c.bf16 %v5651, %v5651
      %v5684 = vpack.c.bf16 %v5652, %v5652
      %v5685 = vpack.c.bf16 %v5653, %v5653
      %v5686 = vpack.c.bf16 %v5654, %v5654
      %v5687 = vpack.c.bf16 %v5655, %v5655
      %v5688 = vpack.c.bf16 %v5656, %v5656
      %v5689 = vpack.c.bf16 %v5657, %v5657
      %v5690 = vpack.c.bf16 %v5658, %v5658
      %v5691 = vpack.c.bf16 %v5659, %v5659
      %v5692 = vpack.c.bf16 %v5660, %v5660
      %v5693 = vpack.c.bf16 %v5661, %v5661
      %v5694 = vpack.c.bf16 %v5662, %v5662
      %v5695 = vpack.c.bf16 %v5663, %v5663
      %v5696 = vpack.c.bf16 %v5664, %v5664
      %v5697 = vpack.c.bf16 %v5665, %v5665
      %v5698 = vld [vmem:[#allocation2] sm:$0xff]
      %v5699 = vld [vmem:[#allocation2 + $0x8] sm:$0xff]
      %v5700 = vld [vmem:[#allocation2 + $0x10] sm:$0xff]
      %v5701 = vld [vmem:[#allocation2 + $0x18] sm:$0xff]
      %v5702 = vld [vmem:[#allocation2 + $0x20] sm:$0xff]
      %v5703 = vld [vmem:[#allocation2 + $0x28] sm:$0xff]
      %v5704 = vld [vmem:[#allocation2 + $0x30] sm:$0xff]
      %v5705 = vld [vmem:[#allocation2 + $0x38] sm:$0xff]
      %v5706 = vld [vmem:[#allocation2 + $0x40] sm:$0xff]
      %v5707 = vld [vmem:[#allocation2 + $0x48] sm:$0xff]
      %v5708 = vld [vmem:[#allocation2 + $0x50] sm:$0xff]
      %v5709 = vld [vmem:[#allocation2 + $0x58] sm:$0xff]
      %v5710 = vld [vmem:[#allocation2 + $0x60] sm:$0xff]
      %v5711 = vld [vmem:[#allocation2 + $0x68] sm:$0xff]
      %v5712 = vld [vmem:[#allocation2 + $0x70] sm:$0xff]
      %v5713 = vld [vmem:[#allocation2 + $0x78] sm:$0xff]
      %v5714 = vld [vmem:[#allocation2 + $0x80] sm:$0xff]
      %v5715 = vld [vmem:[#allocation2 + $0x88] sm:$0xff]
      %v5716 = vld [vmem:[#allocation2 + $0x90] sm:$0xff]
      %v5717 = vld [vmem:[#allocation2 + $0x98] sm:$0xff]
      %v5718 = vld [vmem:[#allocation2 + $0xa0] sm:$0xff]
      %v5719 = vld [vmem:[#allocation2 + $0xa8] sm:$0xff]
      %v5720 = vld [vmem:[#allocation2 + $0xb0] sm:$0xff]
      %v5721 = vld [vmem:[#allocation2 + $0xb8] sm:$0xff]
      %v5722 = vld [vmem:[#allocation2 + $0xc0] sm:$0xff]
      %v5723 = vld [vmem:[#allocation2 + $0xc8] sm:$0xff]
      %v5724 = vld [vmem:[#allocation2 + $0xd0] sm:$0xff]
      %v5725 = vld [vmem:[#allocation2 + $0xd8] sm:$0xff]
      %v5726 = vld [vmem:[#allocation2 + $0xe0] sm:$0xff]
      %v5727 = vld [vmem:[#allocation2 + $0xe8] sm:$0xff]
      %v5728 = vld [vmem:[#allocation2 + $0xf0] sm:$0xff]
      %v5729 = vld [vmem:[#allocation2 + $0xf8] sm:$0xff]
      %s5730 = scalar_lea.vmem %s5, 192
      %v5731 = vld [vmem:[%s5730] sm:$0xf]
      %v5732 = vld [vmem:[%s5730 + $0x4] sm:$0xf]
      %v5733 = vld [vmem:[%s5730 + $0x8] sm:$0xf]
      %v5734 = vld [vmem:[%s5730 + $0xc] sm:$0xf]
      %v5735 = vld [vmem:[%s5730 + $0x10] sm:$0xf]
      %v5736 = vld [vmem:[%s5730 + $0x14] sm:$0xf]
      %v5737 = vld [vmem:[%s5730 + $0x18] sm:$0xf]
      %v5738 = vld [vmem:[%s5730 + $0x1c] sm:$0xf]
      %v5739 = vld [vmem:[%s5730 + $0x20] sm:$0xf]
      %v5740 = vld [vmem:[%s5730 + $0x24] sm:$0xf]
      %v5741 = vld [vmem:[%s5730 + $0x28] sm:$0xf]
      %v5742 = vld [vmem:[%s5730 + $0x2c] sm:$0xf]
      %v5743 = vld [vmem:[%s5730 + $0x30] sm:$0xf]
      %v5744 = vld [vmem:[%s5730 + $0x34] sm:$0xf]
      %v5745 = vld [vmem:[%s5730 + $0x38] sm:$0xf]
      %v5746 = vld [vmem:[%s5730 + $0x3c] sm:$0xf]
      %v5779 = vunpack.c.l.b16 %v5666
      %v5780 = vunpack.c.l.b16 %v5667
      %v5781 = vunpack.c.l.b16 %v5668
      %v5782 = vunpack.c.l.b16 %v5669
      %v5783 = vunpack.c.l.b16 %v5670
      %v5784 = vunpack.c.l.b16 %v5671
      %v5785 = vunpack.c.l.b16 %v5672
      %v5786 = vunpack.c.l.b16 %v5673
      %v5787 = vunpack.c.l.b16 %v5674
      %v5788 = vunpack.c.l.b16 %v5675
      %v5789 = vunpack.c.l.b16 %v5676
      %v5790 = vunpack.c.l.b16 %v5677
      %v5791 = vunpack.c.l.b16 %v5678
      %v5792 = vunpack.c.l.b16 %v5679
      %v5793 = vunpack.c.l.b16 %v5680
      %v5794 = vunpack.c.l.b16 %v5681
      %v5795 = vunpack.c.l.b16 %v5682
      %v5796 = vunpack.c.l.b16 %v5683
      %v5797 = vunpack.c.l.b16 %v5684
      %v5798 = vunpack.c.l.b16 %v5685
      %v5799 = vunpack.c.l.b16 %v5686
      %v5800 = vunpack.c.l.b16 %v5687
      %v5801 = vunpack.c.l.b16 %v5688
      %v5802 = vunpack.c.l.b16 %v5689
      %v5803 = vunpack.c.l.b16 %v5690
      %v5804 = vunpack.c.l.b16 %v5691
      %v5805 = vunpack.c.l.b16 %v5692
      %v5806 = vunpack.c.l.b16 %v5693
      %v5807 = vunpack.c.l.b16 %v5694
      %v5808 = vunpack.c.l.b16 %v5695
      %v5809 = vunpack.c.l.b16 %v5696
      %v5810 = vunpack.c.l.b16 %v5697
      %v5811 = vpack.c.b16 %v5780, %v5779
      %v5812 = vpack.c.b16 %v5782, %v5781
      %v5813 = vpack.c.b16 %v5784, %v5783
      %v5814 = vpack.c.b16 %v5786, %v5785
      %v5815 = vpack.c.b16 %v5788, %v5787
      %v5816 = vpack.c.b16 %v5790, %v5789
      %v5817 = vpack.c.b16 %v5792, %v5791
      %v5818 = vpack.c.b16 %v5794, %v5793
      %v5819 = vpack.c.b16 %v5796, %v5795
      %v5820 = vpack.c.b16 %v5798, %v5797
      %v5821 = vpack.c.b16 %v5800, %v5799
      %v5822 = vpack.c.b16 %v5802, %v5801
      %v5823 = vpack.c.b16 %v5804, %v5803
      %v5824 = vpack.c.b16 %v5806, %v5805
      %v5825 = vpack.c.b16 %v5808, %v5807
      %v5826 = vpack.c.b16 %v5810, %v5809
      %v5859 = vunpack.c.l.b16 %v5731
      %v5860 = vunpack.c.l.b16 %v5732
      %v5861 = vunpack.c.l.b16 %v5733
      %v5862 = vunpack.c.l.b16 %v5734
      %v5863 = vunpack.c.l.b16 %v5735
      %v5864 = vunpack.c.l.b16 %v5736
      %v5865 = vunpack.c.l.b16 %v5737
      %v5866 = vunpack.c.l.b16 %v5738
      %v5867 = vunpack.c.l.b16 %v5739
      %v5868 = vunpack.c.l.b16 %v5740
      %v5869 = vunpack.c.l.b16 %v5741
      %v5870 = vunpack.c.l.b16 %v5742
      %v5871 = vunpack.c.l.b16 %v5743
      %v5872 = vunpack.c.l.b16 %v5744
      %v5873 = vunpack.c.l.b16 %v5745
      %v5874 = vunpack.c.l.b16 %v5746
      %v5875 = vpack.c.b16 %v5860, %v5859
      %v5876 = vpack.c.b16 %v5862, %v5861
      %v5877 = vpack.c.b16 %v5864, %v5863
      %v5878 = vpack.c.b16 %v5866, %v5865
      %v5879 = vpack.c.b16 %v5868, %v5867
      %v5880 = vpack.c.b16 %v5870, %v5869
      %v5881 = vpack.c.b16 %v5872, %v5871
      %v5882 = vpack.c.b16 %v5874, %v5873
      %5891 = vmatpush.bf16.msra.mxu0 %v5882
      %5892 = vmatpush.bf16.msra.mxu0 %v5881
      %5893 = vmatpush.bf16.msra.mxu0 %v5880
      %5894 = vmatpush.bf16.msra.mxu0 %v5879
      %5895 = vmatpush.bf16.msra.mxu0 %v5878
      %5896 = vmatpush.bf16.msra.mxu0 %v5877
      %5897 = vmatpush.bf16.msra.mxu0 %v5876
      %5898 = vmatpush.bf16.msra.mxu0 %v5875
      %5899 = vmatmul.bf16.gmra.mxu0 %v5811
      %v5900 = vpop.f32.mrf.mxu0
      %v5901 = vadd.f32 0.0, %v5900
      %v5902 = vpop.f32.mrf.mxu0
      %v5903 = vadd.f32 0.0, %v5902
      %5904 = vmatmul.bf16.gmra.mxu0 %v5812
      %v5905 = vpop.f32.mrf.mxu0
      %v5906 = vadd.f32 0.0, %v5905
      %v5907 = vpop.f32.mrf.mxu0
      %v5908 = vadd.f32 0.0, %v5907
      %5909 = vmatmul.bf16.gmra.mxu0 %v5813
      %v5910 = vpop.f32.mrf.mxu0
      %v5911 = vadd.f32 0.0, %v5910
      %v5912 = vpop.f32.mrf.mxu0
      %v5913 = vadd.f32 0.0, %v5912
      %5914 = vmatmul.bf16.gmra.mxu0 %v5814
      %v5915 = vpop.f32.mrf.mxu0
      %v5916 = vadd.f32 0.0, %v5915
      %v5917 = vpop.f32.mrf.mxu0
      %v5918 = vadd.f32 0.0, %v5917
      %5919 = vmatmul.bf16.gmra.mxu0 %v5815
      %v5920 = vpop.f32.mrf.mxu0
      %v5921 = vadd.f32 0.0, %v5920
      %v5922 = vpop.f32.mrf.mxu0
      %v5923 = vadd.f32 0.0, %v5922
      %5924 = vmatmul.bf16.gmra.mxu0 %v5816
      %v5925 = vpop.f32.mrf.mxu0
      %v5926 = vadd.f32 0.0, %v5925
      %v5927 = vpop.f32.mrf.mxu0
      %v5928 = vadd.f32 0.0, %v5927
      %5929 = vmatmul.bf16.gmra.mxu0 %v5817
      %v5930 = vpop.f32.mrf.mxu0
      %v5931 = vadd.f32 0.0, %v5930
      %v5932 = vpop.f32.mrf.mxu0
      %v5933 = vadd.f32 0.0, %v5932
      %5934 = vmatmul.bf16.gmra.mxu0 %v5818
      %v5935 = vpop.f32.mrf.mxu0
      %v5936 = vadd.f32 0.0, %v5935
      %v5937 = vpop.f32.mrf.mxu0
      %v5938 = vadd.f32 0.0, %v5937
      %5939 = vmatmul.bf16.gmra.mxu0 %v5819
      %v5940 = vpop.f32.mrf.mxu0
      %v5941 = vadd.f32 0.0, %v5940
      %v5942 = vpop.f32.mrf.mxu0
      %v5943 = vadd.f32 0.0, %v5942
      %5944 = vmatmul.bf16.gmra.mxu0 %v5820
      %v5945 = vpop.f32.mrf.mxu0
      %v5946 = vadd.f32 0.0, %v5945
      %v5947 = vpop.f32.mrf.mxu0
      %v5948 = vadd.f32 0.0, %v5947
      %5949 = vmatmul.bf16.gmra.mxu0 %v5821
      %v5950 = vpop.f32.mrf.mxu0
      %v5951 = vadd.f32 0.0, %v5950
      %v5952 = vpop.f32.mrf.mxu0
      %v5953 = vadd.f32 0.0, %v5952
      %5954 = vmatmul.bf16.gmra.mxu0 %v5822
      %v5955 = vpop.f32.mrf.mxu0
      %v5956 = vadd.f32 0.0, %v5955
      %v5957 = vpop.f32.mrf.mxu0
      %v5958 = vadd.f32 0.0, %v5957
      %5959 = vmatmul.bf16.gmra.mxu0 %v5823
      %v5960 = vpop.f32.mrf.mxu0
      %v5961 = vadd.f32 0.0, %v5960
      %v5962 = vpop.f32.mrf.mxu0
      %v5963 = vadd.f32 0.0, %v5962
      %5964 = vmatmul.bf16.gmra.mxu0 %v5824
      %v5965 = vpop.f32.mrf.mxu0
      %v5966 = vadd.f32 0.0, %v5965
      %v5967 = vpop.f32.mrf.mxu0
      %v5968 = vadd.f32 0.0, %v5967
      %5969 = vmatmul.bf16.gmra.mxu0 %v5825
      %v5970 = vpop.f32.mrf.mxu0
      %v5971 = vadd.f32 0.0, %v5970
      %v5972 = vpop.f32.mrf.mxu0
      %v5973 = vadd.f32 0.0, %v5972
      %5974 = vmatmul.bf16.gmra.mxu0 %v5826
      %v5975 = vpop.f32.mrf.mxu0
      %v5976 = vadd.f32 0.0, %v5975
      %v5977 = vpop.f32.mrf.mxu0
      %v5978 = vadd.f32 0.0, %v5977
      %5979 = vdwg.mxu0
      %v5980 = vadd.f32 %v5698, %v5901
      %v5981 = vadd.f32 %v5699, %v5903
      %v5982 = vadd.f32 %v5700, %v5906
      %v5983 = vadd.f32 %v5701, %v5908
      %v5984 = vadd.f32 %v5702, %v5911
      %v5985 = vadd.f32 %v5703, %v5913
      %v5986 = vadd.f32 %v5704, %v5916
      %v5987 = vadd.f32 %v5705, %v5918
      %v5988 = vadd.f32 %v5706, %v5921
      %v5989 = vadd.f32 %v5707, %v5923
      %v5990 = vadd.f32 %v5708, %v5926
      %v5991 = vadd.f32 %v5709, %v5928
      %v5992 = vadd.f32 %v5710, %v5931
      %v5993 = vadd.f32 %v5711, %v5933
      %v5994 = vadd.f32 %v5712, %v5936
      %v5995 = vadd.f32 %v5713, %v5938
      %v5996 = vadd.f32 %v5714, %v5941
      %v5997 = vadd.f32 %v5715, %v5943
      %v5998 = vadd.f32 %v5716, %v5946
      %v5999 = vadd.f32 %v5717, %v5948
      %v6000 = vadd.f32 %v5718, %v5951
      %v6001 = vadd.f32 %v5719, %v5953
      %v6002 = vadd.f32 %v5720, %v5956
      %v6003 = vadd.f32 %v5721, %v5958
      %v6004 = vadd.f32 %v5722, %v5961
      %v6005 = vadd.f32 %v5723, %v5963
      %v6006 = vadd.f32 %v5724, %v5966
      %v6007 = vadd.f32 %v5725, %v5968
      %v6008 = vadd.f32 %v5726, %v5971
      %v6009 = vadd.f32 %v5727, %v5973
      %v6010 = vadd.f32 %v5728, %v5976
      %v6011 = vadd.f32 %v5729, %v5978
      %6012 = vst [vmem:[#allocation2] sm:$0xff] %v5980
      %6013 = vst [vmem:[#allocation2 + $0x8] sm:$0xff] %v5981
      %6014 = vst [vmem:[#allocation2 + $0x10] sm:$0xff] %v5982
      %6015 = vst [vmem:[#allocation2 + $0x18] sm:$0xff] %v5983
      %6016 = vst [vmem:[#allocation2 + $0x20] sm:$0xff] %v5984
      %6017 = vst [vmem:[#allocation2 + $0x28] sm:$0xff] %v5985
      %6018 = vst [vmem:[#allocation2 + $0x30] sm:$0xff] %v5986
      %6019 = vst [vmem:[#allocation2 + $0x38] sm:$0xff] %v5987
      %6020 = vst [vmem:[#allocation2 + $0x40] sm:$0xff] %v5988
      %6021 = vst [vmem:[#allocation2 + $0x48] sm:$0xff] %v5989
      %6022 = vst [vmem:[#allocation2 + $0x50] sm:$0xff] %v5990
      %6023 = vst [vmem:[#allocation2 + $0x58] sm:$0xff] %v5991
      %6024 = vst [vmem:[#allocation2 + $0x60] sm:$0xff] %v5992
      %6025 = vst [vmem:[#allocation2 + $0x68] sm:$0xff] %v5993
      %6026 = vst [vmem:[#allocation2 + $0x70] sm:$0xff] %v5994
      %6027 = vst [vmem:[#allocation2 + $0x78] sm:$0xff] %v5995
      %6028 = vst [vmem:[#allocation2 + $0x80] sm:$0xff] %v5996
      %6029 = vst [vmem:[#allocation2 + $0x88] sm:$0xff] %v5997
      %6030 = vst [vmem:[#allocation2 + $0x90] sm:$0xff] %v5998
      %6031 = vst [vmem:[#allocation2 + $0x98] sm:$0xff] %v5999
      %6032 = vst [vmem:[#allocation2 + $0xa0] sm:$0xff] %v6000
      %6033 = vst [vmem:[#allocation2 + $0xa8] sm:$0xff] %v6001
      %6034 = vst [vmem:[#allocation2 + $0xb0] sm:$0xff] %v6002
      %6035 = vst [vmem:[#allocation2 + $0xb8] sm:$0xff] %v6003
      %6036 = vst [vmem:[#allocation2 + $0xc0] sm:$0xff] %v6004
      %6037 = vst [vmem:[#allocation2 + $0xc8] sm:$0xff] %v6005
      %6038 = vst [vmem:[#allocation2 + $0xd0] sm:$0xff] %v6006
      %6039 = vst [vmem:[#allocation2 + $0xd8] sm:$0xff] %v6007
      %6040 = vst [vmem:[#allocation2 + $0xe0] sm:$0xff] %v6008
      %6041 = vst [vmem:[#allocation2 + $0xe8] sm:$0xff] %v6009
      %6042 = vst [vmem:[#allocation2 + $0xf0] sm:$0xff] %v6010
      %6043 = vst [vmem:[#allocation2 + $0xf8] sm:$0xff] %v6011
      %v6044 = vld [vmem:[%s4340 + $0x1] sm:$0xff]
      %v6045 = vld [vmem:[%s4340 + $0x9] sm:$0xff]
      %v6046 = vld [vmem:[%s4340 + $0x19] sm:$0xff]
      %v6047 = vld [vmem:[%s4340 + $0x21] sm:$0xff]
      %v6048 = vld [vmem:[%s4340 + $0x31] sm:$0xff]
      %v6049 = vld [vmem:[%s4340 + $0x39] sm:$0xff]
      %v6050 = vld [vmem:[%s4340 + $0x49] sm:$0xff]
      %v6051 = vld [vmem:[%s4340 + $0x51] sm:$0xff]
      %v6052 = vld [vmem:[%s4340 + $0x61] sm:$0xff]
      %v6053 = vld [vmem:[%s4340 + $0x69] sm:$0xff]
      %v6054 = vld [vmem:[%s4340 + $0x79] sm:$0xff]
      %v6055 = vld [vmem:[%s4340 + $0x81] sm:$0xff]
      %v6056 = vld [vmem:[%s4340 + $0x91] sm:$0xff]
      %v6057 = vld [vmem:[%s4340 + $0x99] sm:$0xff]
      %v6058 = vld [vmem:[%s4340 + $0xa9] sm:$0xff]
      %v6059 = vld [vmem:[%s4340 + $0xb1] sm:$0xff]
      %v6060 = vld [vmem:[%s4340 + $0xc1] sm:$0xff]
      %v6061 = vld [vmem:[%s4340 + $0xc9] sm:$0xff]
      %v6062 = vld [vmem:[%s4340 + $0xd9] sm:$0xff]
      %v6063 = vld [vmem:[%s4340 + $0xe1] sm:$0xff]
      %v6064 = vld [vmem:[%s4340 + $0xf1] sm:$0xff]
      %v6065 = vld [vmem:[%s4340 + $0xf9] sm:$0xff]
      %v6066 = vld [vmem:[%s4340 + $0x109] sm:$0xff]
      %v6067 = vld [vmem:[%s4340 + $0x111] sm:$0xff]
      %v6068 = vld [vmem:[%s4340 + $0x121] sm:$0xff]
      %v6069 = vld [vmem:[%s4340 + $0x129] sm:$0xff]
      %v6070 = vld [vmem:[%s4340 + $0x139] sm:$0xff]
      %v6071 = vld [vmem:[%s4340 + $0x141] sm:$0xff]
      %v6072 = vld [vmem:[%s4340 + $0x151] sm:$0xff]
      %v6073 = vld [vmem:[%s4340 + $0x159] sm:$0xff]
      %v6074 = vld [vmem:[%s4340 + $0x169] sm:$0xff]
      %v6075 = vld [vmem:[%s4340 + $0x171] sm:$0xff]
      %v6076 = vpack.c.bf16 %v6044, %v6044
      %v6077 = vpack.c.bf16 %v6045, %v6045
      %v6078 = vpack.c.bf16 %v6046, %v6046
      %v6079 = vpack.c.bf16 %v6047, %v6047
      %v6080 = vpack.c.bf16 %v6048, %v6048
      %v6081 = vpack.c.bf16 %v6049, %v6049
      %v6082 = vpack.c.bf16 %v6050, %v6050
      %v6083 = vpack.c.bf16 %v6051, %v6051
      %v6084 = vpack.c.bf16 %v6052, %v6052
      %v6085 = vpack.c.bf16 %v6053, %v6053
      %v6086 = vpack.c.bf16 %v6054, %v6054
      %v6087 = vpack.c.bf16 %v6055, %v6055
      %v6088 = vpack.c.bf16 %v6056, %v6056
      %v6089 = vpack.c.bf16 %v6057, %v6057
      %v6090 = vpack.c.bf16 %v6058, %v6058
      %v6091 = vpack.c.bf16 %v6059, %v6059
      %v6092 = vpack.c.bf16 %v6060, %v6060
      %v6093 = vpack.c.bf16 %v6061, %v6061
      %v6094 = vpack.c.bf16 %v6062, %v6062
      %v6095 = vpack.c.bf16 %v6063, %v6063
      %v6096 = vpack.c.bf16 %v6064, %v6064
      %v6097 = vpack.c.bf16 %v6065, %v6065
      %v6098 = vpack.c.bf16 %v6066, %v6066
      %v6099 = vpack.c.bf16 %v6067, %v6067
      %v6100 = vpack.c.bf16 %v6068, %v6068
      %v6101 = vpack.c.bf16 %v6069, %v6069
      %v6102 = vpack.c.bf16 %v6070, %v6070
      %v6103 = vpack.c.bf16 %v6071, %v6071
      %v6104 = vpack.c.bf16 %v6072, %v6072
      %v6105 = vpack.c.bf16 %v6073, %v6073
      %v6106 = vpack.c.bf16 %v6074, %v6074
      %v6107 = vpack.c.bf16 %v6075, %v6075
      %v6108 = vld [vmem:[#allocation2] sm:$0xff]
      %v6109 = vld [vmem:[#allocation2 + $0x8] sm:$0xff]
      %v6110 = vld [vmem:[#allocation2 + $0x10] sm:$0xff]
      %v6111 = vld [vmem:[#allocation2 + $0x18] sm:$0xff]
      %v6112 = vld [vmem:[#allocation2 + $0x20] sm:$0xff]
      %v6113 = vld [vmem:[#allocation2 + $0x28] sm:$0xff]
      %v6114 = vld [vmem:[#allocation2 + $0x30] sm:$0xff]
      %v6115 = vld [vmem:[#allocation2 + $0x38] sm:$0xff]
      %v6116 = vld [vmem:[#allocation2 + $0x40] sm:$0xff]
      %v6117 = vld [vmem:[#allocation2 + $0x48] sm:$0xff]
      %v6118 = vld [vmem:[#allocation2 + $0x50] sm:$0xff]
      %v6119 = vld [vmem:[#allocation2 + $0x58] sm:$0xff]
      %v6120 = vld [vmem:[#allocation2 + $0x60] sm:$0xff]
      %v6121 = vld [vmem:[#allocation2 + $0x68] sm:$0xff]
      %v6122 = vld [vmem:[#allocation2 + $0x70] sm:$0xff]
      %v6123 = vld [vmem:[#allocation2 + $0x78] sm:$0xff]
      %v6124 = vld [vmem:[#allocation2 + $0x80] sm:$0xff]
      %v6125 = vld [vmem:[#allocation2 + $0x88] sm:$0xff]
      %v6126 = vld [vmem:[#allocation2 + $0x90] sm:$0xff]
      %v6127 = vld [vmem:[#allocation2 + $0x98] sm:$0xff]
      %v6128 = vld [vmem:[#allocation2 + $0xa0] sm:$0xff]
      %v6129 = vld [vmem:[#allocation2 + $0xa8] sm:$0xff]
      %v6130 = vld [vmem:[#allocation2 + $0xb0] sm:$0xff]
      %v6131 = vld [vmem:[#allocation2 + $0xb8] sm:$0xff]
      %v6132 = vld [vmem:[#allocation2 + $0xc0] sm:$0xff]
      %v6133 = vld [vmem:[#allocation2 + $0xc8] sm:$0xff]
      %v6134 = vld [vmem:[#allocation2 + $0xd0] sm:$0xff]
      %v6135 = vld [vmem:[#allocation2 + $0xd8] sm:$0xff]
      %v6136 = vld [vmem:[#allocation2 + $0xe0] sm:$0xff]
      %v6137 = vld [vmem:[#allocation2 + $0xe8] sm:$0xff]
      %v6138 = vld [vmem:[#allocation2 + $0xf0] sm:$0xff]
      %v6139 = vld [vmem:[#allocation2 + $0xf8] sm:$0xff]
      %s6140 = scalar_lea.vmem %s5, 256
      %v6141 = vld [vmem:[%s6140] sm:$0xf]
      %v6142 = vld [vmem:[%s6140 + $0x4] sm:$0xf]
      %v6143 = vld [vmem:[%s6140 + $0x8] sm:$0xf]
      %v6144 = vld [vmem:[%s6140 + $0xc] sm:$0xf]
      %v6145 = vld [vmem:[%s6140 + $0x10] sm:$0xf]
      %v6146 = vld [vmem:[%s6140 + $0x14] sm:$0xf]
      %v6147 = vld [vmem:[%s6140 + $0x18] sm:$0xf]
      %v6148 = vld [vmem:[%s6140 + $0x1c] sm:$0xf]
      %v6149 = vld [vmem:[%s6140 + $0x20] sm:$0xf]
      %v6150 = vld [vmem:[%s6140 + $0x24] sm:$0xf]
      %v6151 = vld [vmem:[%s6140 + $0x28] sm:$0xf]
      %v6152 = vld [vmem:[%s6140 + $0x2c] sm:$0xf]
      %v6153 = vld [vmem:[%s6140 + $0x30] sm:$0xf]
      %v6154 = vld [vmem:[%s6140 + $0x34] sm:$0xf]
      %v6155 = vld [vmem:[%s6140 + $0x38] sm:$0xf]
      %v6156 = vld [vmem:[%s6140 + $0x3c] sm:$0xf]
      %v6189 = vunpack.c.l.b16 %v6076
      %v6190 = vunpack.c.l.b16 %v6077
      %v6191 = vunpack.c.l.b16 %v6078
      %v6192 = vunpack.c.l.b16 %v6079
      %v6193 = vunpack.c.l.b16 %v6080
      %v6194 = vunpack.c.l.b16 %v6081
      %v6195 = vunpack.c.l.b16 %v6082
      %v6196 = vunpack.c.l.b16 %v6083
      %v6197 = vunpack.c.l.b16 %v6084
      %v6198 = vunpack.c.l.b16 %v6085
      %v6199 = vunpack.c.l.b16 %v6086
      %v6200 = vunpack.c.l.b16 %v6087
      %v6201 = vunpack.c.l.b16 %v6088
      %v6202 = vunpack.c.l.b16 %v6089
      %v6203 = vunpack.c.l.b16 %v6090
      %v6204 = vunpack.c.l.b16 %v6091
      %v6205 = vunpack.c.l.b16 %v6092
      %v6206 = vunpack.c.l.b16 %v6093
      %v6207 = vunpack.c.l.b16 %v6094
      %v6208 = vunpack.c.l.b16 %v6095
      %v6209 = vunpack.c.l.b16 %v6096
      %v6210 = vunpack.c.l.b16 %v6097
      %v6211 = vunpack.c.l.b16 %v6098
      %v6212 = vunpack.c.l.b16 %v6099
      %v6213 = vunpack.c.l.b16 %v6100
      %v6214 = vunpack.c.l.b16 %v6101
      %v6215 = vunpack.c.l.b16 %v6102
      %v6216 = vunpack.c.l.b16 %v6103
      %v6217 = vunpack.c.l.b16 %v6104
      %v6218 = vunpack.c.l.b16 %v6105
      %v6219 = vunpack.c.l.b16 %v6106
      %v6220 = vunpack.c.l.b16 %v6107
      %v6221 = vpack.c.b16 %v6190, %v6189
      %v6222 = vpack.c.b16 %v6192, %v6191
      %v6223 = vpack.c.b16 %v6194, %v6193
      %v6224 = vpack.c.b16 %v6196, %v6195
      %v6225 = vpack.c.b16 %v6198, %v6197
      %v6226 = vpack.c.b16 %v6200, %v6199
      %v6227 = vpack.c.b16 %v6202, %v6201
      %v6228 = vpack.c.b16 %v6204, %v6203
      %v6229 = vpack.c.b16 %v6206, %v6205
      %v6230 = vpack.c.b16 %v6208, %v6207
      %v6231 = vpack.c.b16 %v6210, %v6209
      %v6232 = vpack.c.b16 %v6212, %v6211
      %v6233 = vpack.c.b16 %v6214, %v6213
      %v6234 = vpack.c.b16 %v6216, %v6215
      %v6235 = vpack.c.b16 %v6218, %v6217
      %v6236 = vpack.c.b16 %v6220, %v6219
      %v6269 = vunpack.c.l.b16 %v6141
      %v6270 = vunpack.c.l.b16 %v6142
      %v6271 = vunpack.c.l.b16 %v6143
      %v6272 = vunpack.c.l.b16 %v6144
      %v6273 = vunpack.c.l.b16 %v6145
      %v6274 = vunpack.c.l.b16 %v6146
      %v6275 = vunpack.c.l.b16 %v6147
      %v6276 = vunpack.c.l.b16 %v6148
      %v6277 = vunpack.c.l.b16 %v6149
      %v6278 = vunpack.c.l.b16 %v6150
      %v6279 = vunpack.c.l.b16 %v6151
      %v6280 = vunpack.c.l.b16 %v6152
      %v6281 = vunpack.c.l.b16 %v6153
      %v6282 = vunpack.c.l.b16 %v6154
      %v6283 = vunpack.c.l.b16 %v6155
      %v6284 = vunpack.c.l.b16 %v6156
      %v6285 = vpack.c.b16 %v6270, %v6269
      %v6286 = vpack.c.b16 %v6272, %v6271
      %v6287 = vpack.c.b16 %v6274, %v6273
      %v6288 = vpack.c.b16 %v6276, %v6275
      %v6289 = vpack.c.b16 %v6278, %v6277
      %v6290 = vpack.c.b16 %v6280, %v6279
      %v6291 = vpack.c.b16 %v6282, %v6281
      %v6292 = vpack.c.b16 %v6284, %v6283
      %6301 = vmatpush.bf16.msra.mxu0 %v6292
      %6302 = vmatpush.bf16.msra.mxu0 %v6291
      %6303 = vmatpush.bf16.msra.mxu0 %v6290
      %6304 = vmatpush.bf16.msra.mxu0 %v6289
      %6305 = vmatpush.bf16.msra.mxu0 %v6288
      %6306 = vmatpush.bf16.msra.mxu0 %v6287
      %6307 = vmatpush.bf16.msra.mxu0 %v6286
      %6308 = vmatpush.bf16.msra.mxu0 %v6285
      %6309 = vmatmul.bf16.gmra.mxu0 %v6221
      %v6310 = vpop.f32.mrf.mxu0
      %v6311 = vadd.f32 0.0, %v6310
      %v6312 = vpop.f32.mrf.mxu0
      %v6313 = vadd.f32 0.0, %v6312
      %6314 = vmatmul.bf16.gmra.mxu0 %v6222
      %v6315 = vpop.f32.mrf.mxu0
      %v6316 = vadd.f32 0.0, %v6315
      %v6317 = vpop.f32.mrf.mxu0
      %v6318 = vadd.f32 0.0, %v6317
      %6319 = vmatmul.bf16.gmra.mxu0 %v6223
      %v6320 = vpop.f32.mrf.mxu0
      %v6321 = vadd.f32 0.0, %v6320
      %v6322 = vpop.f32.mrf.mxu0
      %v6323 = vadd.f32 0.0, %v6322
      %6324 = vmatmul.bf16.gmra.mxu0 %v6224
      %v6325 = vpop.f32.mrf.mxu0
      %v6326 = vadd.f32 0.0, %v6325
      %v6327 = vpop.f32.mrf.mxu0
      %v6328 = vadd.f32 0.0, %v6327
      %6329 = vmatmul.bf16.gmra.mxu0 %v6225
      %v6330 = vpop.f32.mrf.mxu0
      %v6331 = vadd.f32 0.0, %v6330
      %v6332 = vpop.f32.mrf.mxu0
      %v6333 = vadd.f32 0.0, %v6332
      %6334 = vmatmul.bf16.gmra.mxu0 %v6226
      %v6335 = vpop.f32.mrf.mxu0
      %v6336 = vadd.f32 0.0, %v6335
      %v6337 = vpop.f32.mrf.mxu0
      %v6338 = vadd.f32 0.0, %v6337
      %6339 = vmatmul.bf16.gmra.mxu0 %v6227
      %v6340 = vpop.f32.mrf.mxu0
      %v6341 = vadd.f32 0.0, %v6340
      %v6342 = vpop.f32.mrf.mxu0
      %v6343 = vadd.f32 0.0, %v6342
      %6344 = vmatmul.bf16.gmra.mxu0 %v6228
      %v6345 = vpop.f32.mrf.mxu0
      %v6346 = vadd.f32 0.0, %v6345
      %v6347 = vpop.f32.mrf.mxu0
      %v6348 = vadd.f32 0.0, %v6347
      %6349 = vmatmul.bf16.gmra.mxu0 %v6229
      %v6350 = vpop.f32.mrf.mxu0
      %v6351 = vadd.f32 0.0, %v6350
      %v6352 = vpop.f32.mrf.mxu0
      %v6353 = vadd.f32 0.0, %v6352
      %6354 = vmatmul.bf16.gmra.mxu0 %v6230
      %v6355 = vpop.f32.mrf.mxu0
      %v6356 = vadd.f32 0.0, %v6355
      %v6357 = vpop.f32.mrf.mxu0
      %v6358 = vadd.f32 0.0, %v6357
      %6359 = vmatmul.bf16.gmra.mxu0 %v6231
      %v6360 = vpop.f32.mrf.mxu0
      %v6361 = vadd.f32 0.0, %v6360
      %v6362 = vpop.f32.mrf.mxu0
      %v6363 = vadd.f32 0.0, %v6362
      %6364 = vmatmul.bf16.gmra.mxu0 %v6232
      %v6365 = vpop.f32.mrf.mxu0
      %v6366 = vadd.f32 0.0, %v6365
      %v6367 = vpop.f32.mrf.mxu0
      %v6368 = vadd.f32 0.0, %v6367
      %6369 = vmatmul.bf16.gmra.mxu0 %v6233
      %v6370 = vpop.f32.mrf.mxu0
      %v6371 = vadd.f32 0.0, %v6370
      %v6372 = vpop.f32.mrf.mxu0
      %v6373 = vadd.f32 0.0, %v6372
      %6374 = vmatmul.bf16.gmra.mxu0 %v6234
      %v6375 = vpop.f32.mrf.mxu0
      %v6376 = vadd.f32 0.0, %v6375
      %v6377 = vpop.f32.mrf.mxu0
      %v6378 = vadd.f32 0.0, %v6377
      %6379 = vmatmul.bf16.gmra.mxu0 %v6235
      %v6380 = vpop.f32.mrf.mxu0
      %v6381 = vadd.f32 0.0, %v6380
      %v6382 = vpop.f32.mrf.mxu0
      %v6383 = vadd.f32 0.0, %v6382
      %6384 = vmatmul.bf16.gmra.mxu0 %v6236
      %v6385 = vpop.f32.mrf.mxu0
      %v6386 = vadd.f32 0.0, %v6385
      %v6387 = vpop.f32.mrf.mxu0
      %v6388 = vadd.f32 0.0, %v6387
      %6389 = vdwg.mxu0
      %v6390 = vadd.f32 %v6108, %v6311
      %v6391 = vadd.f32 %v6109, %v6313
      %v6392 = vadd.f32 %v6110, %v6316
      %v6393 = vadd.f32 %v6111, %v6318
      %v6394 = vadd.f32 %v6112, %v6321
      %v6395 = vadd.f32 %v6113, %v6323
      %v6396 = vadd.f32 %v6114, %v6326
      %v6397 = vadd.f32 %v6115, %v6328
      %v6398 = vadd.f32 %v6116, %v6331
      %v6399 = vadd.f32 %v6117, %v6333
      %v6400 = vadd.f32 %v6118, %v6336
      %v6401 = vadd.f32 %v6119, %v6338
      %v6402 = vadd.f32 %v6120, %v6341
      %v6403 = vadd.f32 %v6121, %v6343
      %v6404 = vadd.f32 %v6122, %v6346
      %v6405 = vadd.f32 %v6123, %v6348
      %v6406 = vadd.f32 %v6124, %v6351
      %v6407 = vadd.f32 %v6125, %v6353
      %v6408 = vadd.f32 %v6126, %v6356
      %v6409 = vadd.f32 %v6127, %v6358
      %v6410 = vadd.f32 %v6128, %v6361
      %v6411 = vadd.f32 %v6129, %v6363
      %v6412 = vadd.f32 %v6130, %v6366
      %v6413 = vadd.f32 %v6131, %v6368
      %v6414 = vadd.f32 %v6132, %v6371
      %v6415 = vadd.f32 %v6133, %v6373
      %v6416 = vadd.f32 %v6134, %v6376
      %v6417 = vadd.f32 %v6135, %v6378
      %v6418 = vadd.f32 %v6136, %v6381
      %v6419 = vadd.f32 %v6137, %v6383
      %v6420 = vadd.f32 %v6138, %v6386
      %v6421 = vadd.f32 %v6139, %v6388
      %6422 = vst [vmem:[#allocation2] sm:$0xff] %v6390
      %6423 = vst [vmem:[#allocation2 + $0x8] sm:$0xff] %v6391
      %6424 = vst [vmem:[#allocation2 + $0x10] sm:$0xff] %v6392
      %6425 = vst [vmem:[#allocation2 + $0x18] sm:$0xff] %v6393
      %6426 = vst [vmem:[#allocation2 + $0x20] sm:$0xff] %v6394
      %6427 = vst [vmem:[#allocation2 + $0x28] sm:$0xff] %v6395
      %6428 = vst [vmem:[#allocation2 + $0x30] sm:$0xff] %v6396
      %6429 = vst [vmem:[#allocation2 + $0x38] sm:$0xff] %v6397
      %6430 = vst [vmem:[#allocation2 + $0x40] sm:$0xff] %v6398
      %6431 = vst [vmem:[#allocation2 + $0x48] sm:$0xff] %v6399
      %6432 = vst [vmem:[#allocation2 + $0x50] sm:$0xff] %v6400
      %6433 = vst [vmem:[#allocation2 + $0x58] sm:$0xff] %v6401
      %6434 = vst [vmem:[#allocation2 + $0x60] sm:$0xff] %v6402
      %6435 = vst [vmem:[#allocation2 + $0x68] sm:$0xff] %v6403
      %6436 = vst [vmem:[#allocation2 + $0x70] sm:$0xff] %v6404
      %6437 = vst [vmem:[#allocation2 + $0x78] sm:$0xff] %v6405
      %6438 = vst [vmem:[#allocation2 + $0x80] sm:$0xff] %v6406
      %6439 = vst [vmem:[#allocation2 + $0x88] sm:$0xff] %v6407
      %6440 = vst [vmem:[#allocation2 + $0x90] sm:$0xff] %v6408
      %6441 = vst [vmem:[#allocation2 + $0x98] sm:$0xff] %v6409
      %6442 = vst [vmem:[#allocation2 + $0xa0] sm:$0xff] %v6410
      %6443 = vst [vmem:[#allocation2 + $0xa8] sm:$0xff] %v6411
      %6444 = vst [vmem:[#allocation2 + $0xb0] sm:$0xff] %v6412
      %6445 = vst [vmem:[#allocation2 + $0xb8] sm:$0xff] %v6413
      %6446 = vst [vmem:[#allocation2 + $0xc0] sm:$0xff] %v6414
      %6447 = vst [vmem:[#allocation2 + $0xc8] sm:$0xff] %v6415
      %6448 = vst [vmem:[#allocation2 + $0xd0] sm:$0xff] %v6416
      %6449 = vst [vmem:[#allocation2 + $0xd8] sm:$0xff] %v6417
      %6450 = vst [vmem:[#allocation2 + $0xe0] sm:$0xff] %v6418
      %6451 = vst [vmem:[#allocation2 + $0xe8] sm:$0xff] %v6419
      %6452 = vst [vmem:[#allocation2 + $0xf0] sm:$0xff] %v6420
      %6453 = vst [vmem:[#allocation2 + $0xf8] sm:$0xff] %v6421
      %v6454 = vld [vmem:[%s4340 + $0x2] sm:$0xff]
      %v6455 = vld [vmem:[%s4340 + $0xa] sm:$0xff]
      %v6456 = vld [vmem:[%s4340 + $0x1a] sm:$0xff]
      %v6457 = vld [vmem:[%s4340 + $0x22] sm:$0xff]
      %v6458 = vld [vmem:[%s4340 + $0x32] sm:$0xff]
      %v6459 = vld [vmem:[%s4340 + $0x3a] sm:$0xff]
      %v6460 = vld [vmem:[%s4340 + $0x4a] sm:$0xff]
      %v6461 = vld [vmem:[%s4340 + $0x52] sm:$0xff]
      %v6462 = vld [vmem:[%s4340 + $0x62] sm:$0xff]
      %v6463 = vld [vmem:[%s4340 + $0x6a] sm:$0xff]
      %v6464 = vld [vmem:[%s4340 + $0x7a] sm:$0xff]
      %v6465 = vld [vmem:[%s4340 + $0x82] sm:$0xff]
      %v6466 = vld [vmem:[%s4340 + $0x92] sm:$0xff]
      %v6467 = vld [vmem:[%s4340 + $0x9a] sm:$0xff]
      %v6468 = vld [vmem:[%s4340 + $0xaa] sm:$0xff]
      %v6469 = vld [vmem:[%s4340 + $0xb2] sm:$0xff]
      %v6470 = vld [vmem:[%s4340 + $0xc2] sm:$0xff]
      %v6471 = vld [vmem:[%s4340 + $0xca] sm:$0xff]
      %v6472 = vld [vmem:[%s4340 + $0xda] sm:$0xff]
      %v6473 = vld [vmem:[%s4340 + $0xe2] sm:$0xff]
      %v6474 = vld [vmem:[%s4340 + $0xf2] sm:$0xff]
      %v6475 = vld [vmem:[%s4340 + $0xfa] sm:$0xff]
      %v6476 = vld [vmem:[%s4340 + $0x10a] sm:$0xff]
      %v6477 = vld [vmem:[%s4340 + $0x112] sm:$0xff]
      %v6478 = vld [vmem:[%s4340 + $0x122] sm:$0xff]
      %v6479 = vld [vmem:[%s4340 + $0x12a] sm:$0xff]
      %v6480 = vld [vmem:[%s4340 + $0x13a] sm:$0xff]
      %v6481 = vld [vmem:[%s4340 + $0x142] sm:$0xff]
      %v6482 = vld [vmem:[%s4340 + $0x152] sm:$0xff]
      %v6483 = vld [vmem:[%s4340 + $0x15a] sm:$0xff]
      %v6484 = vld [vmem:[%s4340 + $0x16a] sm:$0xff]
      %v6485 = vld [vmem:[%s4340 + $0x172] sm:$0xff]
      %v6486 = vpack.c.bf16 %v6454, %v6454
      %v6487 = vpack.c.bf16 %v6455, %v6455
      %v6488 = vpack.c.bf16 %v6456, %v6456
      %v6489 = vpack.c.bf16 %v6457, %v6457
      %v6490 = vpack.c.bf16 %v6458, %v6458
      %v6491 = vpack.c.bf16 %v6459, %v6459
      %v6492 = vpack.c.bf16 %v6460, %v6460
      %v6493 = vpack.c.bf16 %v6461, %v6461
      %v6494 = vpack.c.bf16 %v6462, %v6462
      %v6495 = vpack.c.bf16 %v6463, %v6463
      %v6496 = vpack.c.bf16 %v6464, %v6464
      %v6497 = vpack.c.bf16 %v6465, %v6465
      %v6498 = vpack.c.bf16 %v6466, %v6466
      %v6499 = vpack.c.bf16 %v6467, %v6467
      %v6500 = vpack.c.bf16 %v6468, %v6468
      %v6501 = vpack.c.bf16 %v6469, %v6469
      %v6502 = vpack.c.bf16 %v6470, %v6470
      %v6503 = vpack.c.bf16 %v6471, %v6471
      %v6504 = vpack.c.bf16 %v6472, %v6472
      %v6505 = vpack.c.bf16 %v6473, %v6473
      %v6506 = vpack.c.bf16 %v6474, %v6474
      %v6507 = vpack.c.bf16 %v6475, %v6475
      %v6508 = vpack.c.bf16 %v6476, %v6476
      %v6509 = vpack.c.bf16 %v6477, %v6477
      %v6510 = vpack.c.bf16 %v6478, %v6478
      %v6511 = vpack.c.bf16 %v6479, %v6479
      %v6512 = vpack.c.bf16 %v6480, %v6480
      %v6513 = vpack.c.bf16 %v6481, %v6481
      %v6514 = vpack.c.bf16 %v6482, %v6482
      %v6515 = vpack.c.bf16 %v6483, %v6483
      %v6516 = vpack.c.bf16 %v6484, %v6484
      %v6517 = vpack.c.bf16 %v6485, %v6485
      %v6518 = vld [vmem:[#allocation2] sm:$0xff]
      %v6519 = vld [vmem:[#allocation2 + $0x8] sm:$0xff]
      %v6520 = vld [vmem:[#allocation2 + $0x10] sm:$0xff]
      %v6521 = vld [vmem:[#allocation2 + $0x18] sm:$0xff]
      %v6522 = vld [vmem:[#allocation2 + $0x20] sm:$0xff]
      %v6523 = vld [vmem:[#allocation2 + $0x28] sm:$0xff]
      %v6524 = vld [vmem:[#allocation2 + $0x30] sm:$0xff]
      %v6525 = vld [vmem:[#allocation2 + $0x38] sm:$0xff]
      %v6526 = vld [vmem:[#allocation2 + $0x40] sm:$0xff]
      %v6527 = vld [vmem:[#allocation2 + $0x48] sm:$0xff]
      %v6528 = vld [vmem:[#allocation2 + $0x50] sm:$0xff]
      %v6529 = vld [vmem:[#allocation2 + $0x58] sm:$0xff]
      %v6530 = vld [vmem:[#allocation2 + $0x60] sm:$0xff]
      %v6531 = vld [vmem:[#allocation2 + $0x68] sm:$0xff]
      %v6532 = vld [vmem:[#allocation2 + $0x70] sm:$0xff]
      %v6533 = vld [vmem:[#allocation2 + $0x78] sm:$0xff]
      %v6534 = vld [vmem:[#allocation2 + $0x80] sm:$0xff]
      %v6535 = vld [vmem:[#allocation2 + $0x88] sm:$0xff]
      %v6536 = vld [vmem:[#allocation2 + $0x90] sm:$0xff]
      %v6537 = vld [vmem:[#allocation2 + $0x98] sm:$0xff]
      %v6538 = vld [vmem:[#allocation2 + $0xa0] sm:$0xff]
      %v6539 = vld [vmem:[#allocation2 + $0xa8] sm:$0xff]
      %v6540 = vld [vmem:[#allocation2 + $0xb0] sm:$0xff]
      %v6541 = vld [vmem:[#allocation2 + $0xb8] sm:$0xff]
      %v6542 = vld [vmem:[#allocation2 + $0xc0] sm:$0xff]
      %v6543 = vld [vmem:[#allocation2 + $0xc8] sm:$0xff]
      %v6544 = vld [vmem:[#allocation2 + $0xd0] sm:$0xff]
      %v6545 = vld [vmem:[#allocation2 + $0xd8] sm:$0xff]
      %v6546 = vld [vmem:[#allocation2 + $0xe0] sm:$0xff]
      %v6547 = vld [vmem:[#allocation2 + $0xe8] sm:$0xff]
      %v6548 = vld [vmem:[#allocation2 + $0xf0] sm:$0xff]
      %v6549 = vld [vmem:[#allocation2 + $0xf8] sm:$0xff]
      %s6550 = scalar_lea.vmem %s5, 320
      %v6551 = vld [vmem:[%s6550] sm:$0xf]
      %v6552 = vld [vmem:[%s6550 + $0x4] sm:$0xf]
      %v6553 = vld [vmem:[%s6550 + $0x8] sm:$0xf]
      %v6554 = vld [vmem:[%s6550 + $0xc] sm:$0xf]
      %v6555 = vld [vmem:[%s6550 + $0x10] sm:$0xf]
      %v6556 = vld [vmem:[%s6550 + $0x14] sm:$0xf]
      %v6557 = vld [vmem:[%s6550 + $0x18] sm:$0xf]
      %v6558 = vld [vmem:[%s6550 + $0x1c] sm:$0xf]
      %v6559 = vld [vmem:[%s6550 + $0x20] sm:$0xf]
      %v6560 = vld [vmem:[%s6550 + $0x24] sm:$0xf]
      %v6561 = vld [vmem:[%s6550 + $0x28] sm:$0xf]
      %v6562 = vld [vmem:[%s6550 + $0x2c] sm:$0xf]
      %v6563 = vld [vmem:[%s6550 + $0x30] sm:$0xf]
      %v6564 = vld [vmem:[%s6550 + $0x34] sm:$0xf]
      %v6565 = vld [vmem:[%s6550 + $0x38] sm:$0xf]
      %v6566 = vld [vmem:[%s6550 + $0x3c] sm:$0xf]
      %v6599 = vunpack.c.l.b16 %v6486
      %v6600 = vunpack.c.l.b16 %v6487
      %v6601 = vunpack.c.l.b16 %v6488
      %v6602 = vunpack.c.l.b16 %v6489
      %v6603 = vunpack.c.l.b16 %v6490
      %v6604 = vunpack.c.l.b16 %v6491
      %v6605 = vunpack.c.l.b16 %v6492
      %v6606 = vunpack.c.l.b16 %v6493
      %v6607 = vunpack.c.l.b16 %v6494
      %v6608 = vunpack.c.l.b16 %v6495
      %v6609 = vunpack.c.l.b16 %v6496
      %v6610 = vunpack.c.l.b16 %v6497
      %v6611 = vunpack.c.l.b16 %v6498
      %v6612 = vunpack.c.l.b16 %v6499
      %v6613 = vunpack.c.l.b16 %v6500
      %v6614 = vunpack.c.l.b16 %v6501
      %v6615 = vunpack.c.l.b16 %v6502
      %v6616 = vunpack.c.l.b16 %v6503
      %v6617 = vunpack.c.l.b16 %v6504
      %v6618 = vunpack.c.l.b16 %v6505
      %v6619 = vunpack.c.l.b16 %v6506
      %v6620 = vunpack.c.l.b16 %v6507
      %v6621 = vunpack.c.l.b16 %v6508
      %v6622 = vunpack.c.l.b16 %v6509
      %v6623 = vunpack.c.l.b16 %v6510
      %v6624 = vunpack.c.l.b16 %v6511
      %v6625 = vunpack.c.l.b16 %v6512
      %v6626 = vunpack.c.l.b16 %v6513
      %v6627 = vunpack.c.l.b16 %v6514
      %v6628 = vunpack.c.l.b16 %v6515
      %v6629 = vunpack.c.l.b16 %v6516
      %v6630 = vunpack.c.l.b16 %v6517
      %v6631 = vpack.c.b16 %v6600, %v6599
      %v6632 = vpack.c.b16 %v6602, %v6601
      %v6633 = vpack.c.b16 %v6604, %v6603
      %v6634 = vpack.c.b16 %v6606, %v6605
      %v6635 = vpack.c.b16 %v6608, %v6607
      %v6636 = vpack.c.b16 %v6610, %v6609
      %v6637 = vpack.c.b16 %v6612, %v6611
      %v6638 = vpack.c.b16 %v6614, %v6613
      %v6639 = vpack.c.b16 %v6616, %v6615
      %v6640 = vpack.c.b16 %v6618, %v6617
      %v6641 = vpack.c.b16 %v6620, %v6619
      %v6642 = vpack.c.b16 %v6622, %v6621
      %v6643 = vpack.c.b16 %v6624, %v6623
      %v6644 = vpack.c.b16 %v6626, %v6625
      %v6645 = vpack.c.b16 %v6628, %v6627
      %v6646 = vpack.c.b16 %v6630, %v6629
      %v6679 = vunpack.c.l.b16 %v6551
      %v6680 = vunpack.c.l.b16 %v6552
      %v6681 = vunpack.c.l.b16 %v6553
      %v6682 = vunpack.c.l.b16 %v6554
      %v6683 = vunpack.c.l.b16 %v6555
      %v6684 = vunpack.c.l.b16 %v6556
      %v6685 = vunpack.c.l.b16 %v6557
      %v6686 = vunpack.c.l.b16 %v6558
      %v6687 = vunpack.c.l.b16 %v6559
      %v6688 = vunpack.c.l.b16 %v6560
      %v6689 = vunpack.c.l.b16 %v6561
      %v6690 = vunpack.c.l.b16 %v6562
      %v6691 = vunpack.c.l.b16 %v6563
      %v6692 = vunpack.c.l.b16 %v6564
      %v6693 = vunpack.c.l.b16 %v6565
      %v6694 = vunpack.c.l.b16 %v6566
      %v6695 = vpack.c.b16 %v6680, %v6679
      %v6696 = vpack.c.b16 %v6682, %v6681
      %v6697 = vpack.c.b16 %v6684, %v6683
      %v6698 = vpack.c.b16 %v6686, %v6685
      %v6699 = vpack.c.b16 %v6688, %v6687
      %v6700 = vpack.c.b16 %v6690, %v6689
      %v6701 = vpack.c.b16 %v6692, %v6691
      %v6702 = vpack.c.b16 %v6694, %v6693
      %6711 = vmatpush.bf16.msra.mxu0 %v6702
      %6712 = vmatpush.bf16.msra.mxu0 %v6701
      %6713 = vmatpush.bf16.msra.mxu0 %v6700
      %6714 = vmatpush.bf16.msra.mxu0 %v6699
      %6715 = vmatpush.bf16.msra.mxu0 %v6698
      %6716 = vmatpush.bf16.msra.mxu0 %v6697
      %6717 = vmatpush.bf16.msra.mxu0 %v6696
      %6718 = vmatpush.bf16.msra.mxu0 %v6695
      %6719 = vmatmul.bf16.gmra.mxu0 %v6631
      %v6720 = vpop.f32.mrf.mxu0
      %v6721 = vadd.f32 0.0, %v6720
      %v6722 = vpop.f32.mrf.mxu0
      %v6723 = vadd.f32 0.0, %v6722
      %6724 = vmatmul.bf16.gmra.mxu0 %v6632
      %v6725 = vpop.f32.mrf.mxu0
      %v6726 = vadd.f32 0.0, %v6725
      %v6727 = vpop.f32.mrf.mxu0
      %v6728 = vadd.f32 0.0, %v6727
      %6729 = vmatmul.bf16.gmra.mxu0 %v6633
      %v6730 = vpop.f32.mrf.mxu0
      %v6731 = vadd.f32 0.0, %v6730
      %v6732 = vpop.f32.mrf.mxu0
      %v6733 = vadd.f32 0.0, %v6732
      %6734 = vmatmul.bf16.gmra.mxu0 %v6634
      %v6735 = vpop.f32.mrf.mxu0
      %v6736 = vadd.f32 0.0, %v6735
      %v6737 = vpop.f32.mrf.mxu0
      %v6738 = vadd.f32 0.0, %v6737
      %6739 = vmatmul.bf16.gmra.mxu0 %v6635
      %v6740 = vpop.f32.mrf.mxu0
      %v6741 = vadd.f32 0.0, %v6740
      %v6742 = vpop.f32.mrf.mxu0
      %v6743 = vadd.f32 0.0, %v6742
      %6744 = vmatmul.bf16.gmra.mxu0 %v6636
      %v6745 = vpop.f32.mrf.mxu0
      %v6746 = vadd.f32 0.0, %v6745
      %v6747 = vpop.f32.mrf.mxu0
      %v6748 = vadd.f32 0.0, %v6747
      %6749 = vmatmul.bf16.gmra.mxu0 %v6637
      %v6750 = vpop.f32.mrf.mxu0
      %v6751 = vadd.f32 0.0, %v6750
      %v6752 = vpop.f32.mrf.mxu0
      %v6753 = vadd.f32 0.0, %v6752
      %6754 = vmatmul.bf16.gmra.mxu0 %v6638
      %v6755 = vpop.f32.mrf.mxu0
      %v6756 = vadd.f32 0.0, %v6755
      %v6757 = vpop.f32.mrf.mxu0
      %v6758 = vadd.f32 0.0, %v6757
      %6759 = vmatmul.bf16.gmra.mxu0 %v6639
      %v6760 = vpop.f32.mrf.mxu0
      %v6761 = vadd.f32 0.0, %v6760
      %v6762 = vpop.f32.mrf.mxu0
      %v6763 = vadd.f32 0.0, %v6762
      %6764 = vmatmul.bf16.gmra.mxu0 %v6640
      %v6765 = vpop.f32.mrf.mxu0
      %v6766 = vadd.f32 0.0, %v6765
      %v6767 = vpop.f32.mrf.mxu0
      %v6768 = vadd.f32 0.0, %v6767
      %6769 = vmatmul.bf16.gmra.mxu0 %v6641
      %v6770 = vpop.f32.mrf.mxu0
      %v6771 = vadd.f32 0.0, %v6770
      %v6772 = vpop.f32.mrf.mxu0
      %v6773 = vadd.f32 0.0, %v6772
      %6774 = vmatmul.bf16.gmra.mxu0 %v6642
      %v6775 = vpop.f32.mrf.mxu0
      %v6776 = vadd.f32 0.0, %v6775
      %v6777 = vpop.f32.mrf.mxu0
      %v6778 = vadd.f32 0.0, %v6777
      %6779 = vmatmul.bf16.gmra.mxu0 %v6643
      %v6780 = vpop.f32.mrf.mxu0
      %v6781 = vadd.f32 0.0, %v6780
      %v6782 = vpop.f32.mrf.mxu0
      %v6783 = vadd.f32 0.0, %v6782
      %6784 = vmatmul.bf16.gmra.mxu0 %v6644
      %v6785 = vpop.f32.mrf.mxu0
      %v6786 = vadd.f32 0.0, %v6785
      %v6787 = vpop.f32.mrf.mxu0
      %v6788 = vadd.f32 0.0, %v6787
      %6789 = vmatmul.bf16.gmra.mxu0 %v6645
      %v6790 = vpop.f32.mrf.mxu0
      %v6791 = vadd.f32 0.0, %v6790
      %v6792 = vpop.f32.mrf.mxu0
      %v6793 = vadd.f32 0.0, %v6792
      %6794 = vmatmul.bf16.gmra.mxu0 %v6646
      %v6795 = vpop.f32.mrf.mxu0
      %v6796 = vadd.f32 0.0, %v6795
      %v6797 = vpop.f32.mrf.mxu0
      %v6798 = vadd.f32 0.0, %v6797
      %6799 = vdwg.mxu0
      %v6800 = vadd.f32 %v6518, %v6721
      %v6801 = vadd.f32 %v6519, %v6723
      %v6802 = vadd.f32 %v6520, %v6726
      %v6803 = vadd.f32 %v6521, %v6728
      %v6804 = vadd.f32 %v6522, %v6731
      %v6805 = vadd.f32 %v6523, %v6733
      %v6806 = vadd.f32 %v6524, %v6736
      %v6807 = vadd.f32 %v6525, %v6738
      %v6808 = vadd.f32 %v6526, %v6741
      %v6809 = vadd.f32 %v6527, %v6743
      %v6810 = vadd.f32 %v6528, %v6746
      %v6811 = vadd.f32 %v6529, %v6748
      %v6812 = vadd.f32 %v6530, %v6751
      %v6813 = vadd.f32 %v6531, %v6753
      %v6814 = vadd.f32 %v6532, %v6756
      %v6815 = vadd.f32 %v6533, %v6758
      %v6816 = vadd.f32 %v6534, %v6761
      %v6817 = vadd.f32 %v6535, %v6763
      %v6818 = vadd.f32 %v6536, %v6766
      %v6819 = vadd.f32 %v6537, %v6768
      %v6820 = vadd.f32 %v6538, %v6771
      %v6821 = vadd.f32 %v6539, %v6773
      %v6822 = vadd.f32 %v6540, %v6776
      %v6823 = vadd.f32 %v6541, %v6778
      %v6824 = vadd.f32 %v6542, %v6781
      %v6825 = vadd.f32 %v6543, %v6783
      %v6826 = vadd.f32 %v6544, %v6786
      %v6827 = vadd.f32 %v6545, %v6788
      %v6828 = vadd.f32 %v6546, %v6791
      %v6829 = vadd.f32 %v6547, %v6793
      %v6830 = vadd.f32 %v6548, %v6796
      %v6831 = vadd.f32 %v6549, %v6798
      %6832 = vst [vmem:[#allocation2] sm:$0xff] %v6800
      %6833 = vst [vmem:[#allocation2 + $0x8] sm:$0xff] %v6801
      %6834 = vst [vmem:[#allocation2 + $0x10] sm:$0xff] %v6802
      %6835 = vst [vmem:[#allocation2 + $0x18] sm:$0xff] %v6803
      %6836 = vst [vmem:[#allocation2 + $0x20] sm:$0xff] %v6804
      %6837 = vst [vmem:[#allocation2 + $0x28] sm:$0xff] %v6805
      %6838 = vst [vmem:[#allocation2 + $0x30] sm:$0xff] %v6806
      %6839 = vst [vmem:[#allocation2 + $0x38] sm:$0xff] %v6807
      %6840 = vst [vmem:[#allocation2 + $0x40] sm:$0xff] %v6808
      %6841 = vst [vmem:[#allocation2 + $0x48] sm:$0xff] %v6809
      %6842 = vst [vmem:[#allocation2 + $0x50] sm:$0xff] %v6810
      %6843 = vst [vmem:[#allocation2 + $0x58] sm:$0xff] %v6811
      %6844 = vst [vmem:[#allocation2 + $0x60] sm:$0xff] %v6812
      %6845 = vst [vmem:[#allocation2 + $0x68] sm:$0xff] %v6813
      %6846 = vst [vmem:[#allocation2 + $0x70] sm:$0xff] %v6814
      %6847 = vst [vmem:[#allocation2 + $0x78] sm:$0xff] %v6815
      %6848 = vst [vmem:[#allocation2 + $0x80] sm:$0xff] %v6816
      %6849 = vst [vmem:[#allocation2 + $0x88] sm:$0xff] %v6817
      %6850 = vst [vmem:[#allocation2 + $0x90] sm:$0xff] %v6818
      %6851 = vst [vmem:[#allocation2 + $0x98] sm:$0xff] %v6819
      %6852 = vst [vmem:[#allocation2 + $0xa0] sm:$0xff] %v6820
      %6853 = vst [vmem:[#allocation2 + $0xa8] sm:$0xff] %v6821
      %6854 = vst [vmem:[#allocation2 + $0xb0] sm:$0xff] %v6822
      %6855 = vst [vmem:[#allocation2 + $0xb8] sm:$0xff] %v6823
      %6856 = vst [vmem:[#allocation2 + $0xc0] sm:$0xff] %v6824
      %6857 = vst [vmem:[#allocation2 + $0xc8] sm:$0xff] %v6825
      %6858 = vst [vmem:[#allocation2 + $0xd0] sm:$0xff] %v6826
      %6859 = vst [vmem:[#allocation2 + $0xd8] sm:$0xff] %v6827
      %6860 = vst [vmem:[#allocation2 + $0xe0] sm:$0xff] %v6828
      %6861 = vst [vmem:[#allocation2 + $0xe8] sm:$0xff] %v6829
      %6862 = vst [vmem:[#allocation2 + $0xf0] sm:$0xff] %v6830
      %6863 = vst [vmem:[#allocation2 + $0xf8] sm:$0xff] %v6831
      %s6864 = scalar_lea.vmem [#allocation3], 48
      %v6865 = vld [vmem:[%s6864] sm:$0xff]
      %v6866 = vld [vmem:[%s6864 + $0x8] sm:$0xff]
      %v6867 = vld [vmem:[%s6864 + $0x18] sm:$0xff]
      %v6868 = vld [vmem:[%s6864 + $0x20] sm:$0xff]
      %v6869 = vld [vmem:[%s6864 + $0x30] sm:$0xff]
      %v6870 = vld [vmem:[%s6864 + $0x38] sm:$0xff]
      %v6871 = vld [vmem:[%s6864 + $0x48] sm:$0xff]
      %v6872 = vld [vmem:[%s6864 + $0x50] sm:$0xff]
      %v6873 = vld [vmem:[%s6864 + $0x60] sm:$0xff]
      %v6874 = vld [vmem:[%s6864 + $0x68] sm:$0xff]
      %v6875 = vld [vmem:[%s6864 + $0x78] sm:$0xff]
      %v6876 = vld [vmem:[%s6864 + $0x80] sm:$0xff]
      %v6877 = vld [vmem:[%s6864 + $0x90] sm:$0xff]
      %v6878 = vld [vmem:[%s6864 + $0x98] sm:$0xff]
      %v6879 = vld [vmem:[%s6864 + $0xa8] sm:$0xff]
      %v6880 = vld [vmem:[%s6864 + $0xb0] sm:$0xff]
      %v6881 = vld [vmem:[%s6864 + $0xc0] sm:$0xff]
      %v6882 = vld [vmem:[%s6864 + $0xc8] sm:$0xff]
      %v6883 = vld [vmem:[%s6864 + $0xd8] sm:$0xff]
      %v6884 = vld [vmem:[%s6864 + $0xe0] sm:$0xff]
      %v6885 = vld [vmem:[%s6864 + $0xf0] sm:$0xff]
      %v6886 = vld [vmem:[%s6864 + $0xf8] sm:$0xff]
      %v6887 = vld [vmem:[%s6864 + $0x108] sm:$0xff]
      %v6888 = vld [vmem:[%s6864 + $0x110] sm:$0xff]
      %v6889 = vld [vmem:[%s6864 + $0x120] sm:$0xff]
      %v6890 = vld [vmem:[%s6864 + $0x128] sm:$0xff]
      %v6891 = vld [vmem:[%s6864 + $0x138] sm:$0xff]
      %v6892 = vld [vmem:[%s6864 + $0x140] sm:$0xff]
      %v6893 = vld [vmem:[%s6864 + $0x150] sm:$0xff]
      %v6894 = vld [vmem:[%s6864 + $0x158] sm:$0xff]
      %v6895 = vld [vmem:[%s6864 + $0x168] sm:$0xff]
      %v6896 = vld [vmem:[%s6864 + $0x170] sm:$0xff]
      %v6897 = vpack.c.bf16 %v6865, %v6865
      %v6898 = vpack.c.bf16 %v6866, %v6866
      %v6899 = vpack.c.bf16 %v6867, %v6867
      %v6900 = vpack.c.bf16 %v6868, %v6868
      %v6901 = vpack.c.bf16 %v6869, %v6869
      %v6902 = vpack.c.bf16 %v6870, %v6870
      %v6903 = vpack.c.bf16 %v6871, %v6871
      %v6904 = vpack.c.bf16 %v6872, %v6872
      %v6905 = vpack.c.bf16 %v6873, %v6873
      %v6906 = vpack.c.bf16 %v6874, %v6874
      %v6907 = vpack.c.bf16 %v6875, %v6875
      %v6908 = vpack.c.bf16 %v6876, %v6876
      %v6909 = vpack.c.bf16 %v6877, %v6877
      %v6910 = vpack.c.bf16 %v6878, %v6878
      %v6911 = vpack.c.bf16 %v6879, %v6879
      %v6912 = vpack.c.bf16 %v6880, %v6880
      %v6913 = vpack.c.bf16 %v6881, %v6881
      %v6914 = vpack.c.bf16 %v6882, %v6882
      %v6915 = vpack.c.bf16 %v6883, %v6883
      %v6916 = vpack.c.bf16 %v6884, %v6884
      %v6917 = vpack.c.bf16 %v6885, %v6885
      %v6918 = vpack.c.bf16 %v6886, %v6886
      %v6919 = vpack.c.bf16 %v6887, %v6887
      %v6920 = vpack.c.bf16 %v6888, %v6888
      %v6921 = vpack.c.bf16 %v6889, %v6889
      %v6922 = vpack.c.bf16 %v6890, %v6890
      %v6923 = vpack.c.bf16 %v6891, %v6891
      %v6924 = vpack.c.bf16 %v6892, %v6892
      %v6925 = vpack.c.bf16 %v6893, %v6893
      %v6926 = vpack.c.bf16 %v6894, %v6894
      %v6927 = vpack.c.bf16 %v6895, %v6895
      %v6928 = vpack.c.bf16 %v6896, %v6896
      %v6929 = vld [vmem:[#allocation2] sm:$0xff]
      %v6930 = vld [vmem:[#allocation2 + $0x8] sm:$0xff]
      %v6931 = vld [vmem:[#allocation2 + $0x10] sm:$0xff]
      %v6932 = vld [vmem:[#allocation2 + $0x18] sm:$0xff]
      %v6933 = vld [vmem:[#allocation2 + $0x20] sm:$0xff]
      %v6934 = vld [vmem:[#allocation2 + $0x28] sm:$0xff]
      %v6935 = vld [vmem:[#allocation2 + $0x30] sm:$0xff]
      %v6936 = vld [vmem:[#allocation2 + $0x38] sm:$0xff]
      %v6937 = vld [vmem:[#allocation2 + $0x40] sm:$0xff]
      %v6938 = vld [vmem:[#allocation2 + $0x48] sm:$0xff]
      %v6939 = vld [vmem:[#allocation2 + $0x50] sm:$0xff]
      %v6940 = vld [vmem:[#allocation2 + $0x58] sm:$0xff]
      %v6941 = vld [vmem:[#allocation2 + $0x60] sm:$0xff]
      %v6942 = vld [vmem:[#allocation2 + $0x68] sm:$0xff]
      %v6943 = vld [vmem:[#allocation2 + $0x70] sm:$0xff]
      %v6944 = vld [vmem:[#allocation2 + $0x78] sm:$0xff]
      %v6945 = vld [vmem:[#allocation2 + $0x80] sm:$0xff]
      %v6946 = vld [vmem:[#allocation2 + $0x88] sm:$0xff]
      %v6947 = vld [vmem:[#allocation2 + $0x90] sm:$0xff]
      %v6948 = vld [vmem:[#allocation2 + $0x98] sm:$0xff]
      %v6949 = vld [vmem:[#allocation2 + $0xa0] sm:$0xff]
      %v6950 = vld [vmem:[#allocation2 + $0xa8] sm:$0xff]
      %v6951 = vld [vmem:[#allocation2 + $0xb0] sm:$0xff]
      %v6952 = vld [vmem:[#allocation2 + $0xb8] sm:$0xff]
      %v6953 = vld [vmem:[#allocation2 + $0xc0] sm:$0xff]
      %v6954 = vld [vmem:[#allocation2 + $0xc8] sm:$0xff]
      %v6955 = vld [vmem:[#allocation2 + $0xd0] sm:$0xff]
      %v6956 = vld [vmem:[#allocation2 + $0xd8] sm:$0xff]
      %v6957 = vld [vmem:[#allocation2 + $0xe0] sm:$0xff]
      %v6958 = vld [vmem:[#allocation2 + $0xe8] sm:$0xff]
      %v6959 = vld [vmem:[#allocation2 + $0xf0] sm:$0xff]
      %v6960 = vld [vmem:[#allocation2 + $0xf8] sm:$0xff]
      %s6961 = scalar_lea.vmem %s5, 384
      %v6962 = vld [vmem:[%s6961] sm:$0xf]
      %v6963 = vld [vmem:[%s6961 + $0x4] sm:$0xf]
      %v6964 = vld [vmem:[%s6961 + $0x8] sm:$0xf]
      %v6965 = vld [vmem:[%s6961 + $0xc] sm:$0xf]
      %v6966 = vld [vmem:[%s6961 + $0x10] sm:$0xf]
      %v6967 = vld [vmem:[%s6961 + $0x14] sm:$0xf]
      %v6968 = vld [vmem:[%s6961 + $0x18] sm:$0xf]
      %v6969 = vld [vmem:[%s6961 + $0x1c] sm:$0xf]
      %v6970 = vld [vmem:[%s6961 + $0x20] sm:$0xf]
      %v6971 = vld [vmem:[%s6961 + $0x24] sm:$0xf]
      %v6972 = vld [vmem:[%s6961 + $0x28] sm:$0xf]
      %v6973 = vld [vmem:[%s6961 + $0x2c] sm:$0xf]
      %v6974 = vld [vmem:[%s6961 + $0x30] sm:$0xf]
      %v6975 = vld [vmem:[%s6961 + $0x34] sm:$0xf]
      %v6976 = vld [vmem:[%s6961 + $0x38] sm:$0xf]
      %v6977 = vld [vmem:[%s6961 + $0x3c] sm:$0xf]
      %v7010 = vunpack.c.l.b16 %v6897
      %v7011 = vunpack.c.l.b16 %v6898
      %v7012 = vunpack.c.l.b16 %v6899
      %v7013 = vunpack.c.l.b16 %v6900
      %v7014 = vunpack.c.l.b16 %v6901
      %v7015 = vunpack.c.l.b16 %v6902
      %v7016 = vunpack.c.l.b16 %v6903
      %v7017 = vunpack.c.l.b16 %v6904
      %v7018 = vunpack.c.l.b16 %v6905
      %v7019 = vunpack.c.l.b16 %v6906
      %v7020 = vunpack.c.l.b16 %v6907
      %v7021 = vunpack.c.l.b16 %v6908
      %v7022 = vunpack.c.l.b16 %v6909
      %v7023 = vunpack.c.l.b16 %v6910
      %v7024 = vunpack.c.l.b16 %v6911
      %v7025 = vunpack.c.l.b16 %v6912
      %v7026 = vunpack.c.l.b16 %v6913
      %v7027 = vunpack.c.l.b16 %v6914
      %v7028 = vunpack.c.l.b16 %v6915
      %v7029 = vunpack.c.l.b16 %v6916
      %v7030 = vunpack.c.l.b16 %v6917
      %v7031 = vunpack.c.l.b16 %v6918
      %v7032 = vunpack.c.l.b16 %v6919
      %v7033 = vunpack.c.l.b16 %v6920
      %v7034 = vunpack.c.l.b16 %v6921
      %v7035 = vunpack.c.l.b16 %v6922
      %v7036 = vunpack.c.l.b16 %v6923
      %v7037 = vunpack.c.l.b16 %v6924
      %v7038 = vunpack.c.l.b16 %v6925
      %v7039 = vunpack.c.l.b16 %v6926
      %v7040 = vunpack.c.l.b16 %v6927
      %v7041 = vunpack.c.l.b16 %v6928
      %v7042 = vpack.c.b16 %v7011, %v7010
      %v7043 = vpack.c.b16 %v7013, %v7012
      %v7044 = vpack.c.b16 %v7015, %v7014
      %v7045 = vpack.c.b16 %v7017, %v7016
      %v7046 = vpack.c.b16 %v7019, %v7018
      %v7047 = vpack.c.b16 %v7021, %v7020
      %v7048 = vpack.c.b16 %v7023, %v7022
      %v7049 = vpack.c.b16 %v7025, %v7024
      %v7050 = vpack.c.b16 %v7027, %v7026
      %v7051 = vpack.c.b16 %v7029, %v7028
      %v7052 = vpack.c.b16 %v7031, %v7030
      %v7053 = vpack.c.b16 %v7033, %v7032
      %v7054 = vpack.c.b16 %v7035, %v7034
      %v7055 = vpack.c.b16 %v7037, %v7036
      %v7056 = vpack.c.b16 %v7039, %v7038
      %v7057 = vpack.c.b16 %v7041, %v7040
      %v7090 = vunpack.c.l.b16 %v6962
      %v7091 = vunpack.c.l.b16 %v6963
      %v7092 = vunpack.c.l.b16 %v6964
      %v7093 = vunpack.c.l.b16 %v6965
      %v7094 = vunpack.c.l.b16 %v6966
      %v7095 = vunpack.c.l.b16 %v6967
      %v7096 = vunpack.c.l.b16 %v6968
      %v7097 = vunpack.c.l.b16 %v6969
      %v7098 = vunpack.c.l.b16 %v6970
      %v7099 = vunpack.c.l.b16 %v6971
      %v7100 = vunpack.c.l.b16 %v6972
      %v7101 = vunpack.c.l.b16 %v6973
      %v7102 = vunpack.c.l.b16 %v6974
      %v7103 = vunpack.c.l.b16 %v6975
      %v7104 = vunpack.c.l.b16 %v6976
      %v7105 = vunpack.c.l.b16 %v6977
      %v7106 = vpack.c.b16 %v7091, %v7090
      %v7107 = vpack.c.b16 %v7093, %v7092
      %v7108 = vpack.c.b16 %v7095, %v7094
      %v7109 = vpack.c.b16 %v7097, %v7096
      %v7110 = vpack.c.b16 %v7099, %v7098
      %v7111 = vpack.c.b16 %v7101, %v7100
      %v7112 = vpack.c.b16 %v7103, %v7102
      %v7113 = vpack.c.b16 %v7105, %v7104
      %7122 = vmatpush.bf16.msra.mxu0 %v7113
      %7123 = vmatpush.bf16.msra.mxu0 %v7112
      %7124 = vmatpush.bf16.msra.mxu0 %v7111
      %7125 = vmatpush.bf16.msra.mxu0 %v7110
      %7126 = vmatpush.bf16.msra.mxu0 %v7109
      %7127 = vmatpush.bf16.msra.mxu0 %v7108
      %7128 = vmatpush.bf16.msra.mxu0 %v7107
      %7129 = vmatpush.bf16.msra.mxu0 %v7106
      %7130 = vmatmul.bf16.gmra.mxu0 %v7042
      %v7131 = vpop.f32.mrf.mxu0
      %v7132 = vadd.f32 0.0, %v7131
      %v7133 = vpop.f32.mrf.mxu0
      %v7134 = vadd.f32 0.0, %v7133
      %7135 = vmatmul.bf16.gmra.mxu0 %v7043
      %v7136 = vpop.f32.mrf.mxu0
      %v7137 = vadd.f32 0.0, %v7136
      %v7138 = vpop.f32.mrf.mxu0
      %v7139 = vadd.f32 0.0, %v7138
      %7140 = vmatmul.bf16.gmra.mxu0 %v7044
      %v7141 = vpop.f32.mrf.mxu0
      %v7142 = vadd.f32 0.0, %v7141
      %v7143 = vpop.f32.mrf.mxu0
      %v7144 = vadd.f32 0.0, %v7143
      %7145 = vmatmul.bf16.gmra.mxu0 %v7045
      %v7146 = vpop.f32.mrf.mxu0
      %v7147 = vadd.f32 0.0, %v7146
      %v7148 = vpop.f32.mrf.mxu0
      %v7149 = vadd.f32 0.0, %v7148
      %7150 = vmatmul.bf16.gmra.mxu0 %v7046
      %v7151 = vpop.f32.mrf.mxu0
      %v7152 = vadd.f32 0.0, %v7151
      %v7153 = vpop.f32.mrf.mxu0
      %v7154 = vadd.f32 0.0, %v7153
      %7155 = vmatmul.bf16.gmra.mxu0 %v7047
      %v7156 = vpop.f32.mrf.mxu0
      %v7157 = vadd.f32 0.0, %v7156
      %v7158 = vpop.f32.mrf.mxu0
      %v7159 = vadd.f32 0.0, %v7158
      %7160 = vmatmul.bf16.gmra.mxu0 %v7048
      %v7161 = vpop.f32.mrf.mxu0
      %v7162 = vadd.f32 0.0, %v7161
      %v7163 = vpop.f32.mrf.mxu0
      %v7164 = vadd.f32 0.0, %v7163
      %7165 = vmatmul.bf16.gmra.mxu0 %v7049
      %v7166 = vpop.f32.mrf.mxu0
      %v7167 = vadd.f32 0.0, %v7166
      %v7168 = vpop.f32.mrf.mxu0
      %v7169 = vadd.f32 0.0, %v7168
      %7170 = vmatmul.bf16.gmra.mxu0 %v7050
      %v7171 = vpop.f32.mrf.mxu0
      %v7172 = vadd.f32 0.0, %v7171
      %v7173 = vpop.f32.mrf.mxu0
      %v7174 = vadd.f32 0.0, %v7173
      %7175 = vmatmul.bf16.gmra.mxu0 %v7051
      %v7176 = vpop.f32.mrf.mxu0
      %v7177 = vadd.f32 0.0, %v7176
      %v7178 = vpop.f32.mrf.mxu0
      %v7179 = vadd.f32 0.0, %v7178
      %7180 = vmatmul.bf16.gmra.mxu0 %v7052
      %v7181 = vpop.f32.mrf.mxu0
      %v7182 = vadd.f32 0.0, %v7181
      %v7183 = vpop.f32.mrf.mxu0
      %v7184 = vadd.f32 0.0, %v7183
      %7185 = vmatmul.bf16.gmra.mxu0 %v7053
      %v7186 = vpop.f32.mrf.mxu0
      %v7187 = vadd.f32 0.0, %v7186
      %v7188 = vpop.f32.mrf.mxu0
      %v7189 = vadd.f32 0.0, %v7188
      %7190 = vmatmul.bf16.gmra.mxu0 %v7054
      %v7191 = vpop.f32.mrf.mxu0
      %v7192 = vadd.f32 0.0, %v7191
      %v7193 = vpop.f32.mrf.mxu0
      %v7194 = vadd.f32 0.0, %v7193
      %7195 = vmatmul.bf16.gmra.mxu0 %v7055
      %v7196 = vpop.f32.mrf.mxu0
      %v7197 = vadd.f32 0.0, %v7196
      %v7198 = vpop.f32.mrf.mxu0
      %v7199 = vadd.f32 0.0, %v7198
      %7200 = vmatmul.bf16.gmra.mxu0 %v7056
      %v7201 = vpop.f32.mrf.mxu0
      %v7202 = vadd.f32 0.0, %v7201
      %v7203 = vpop.f32.mrf.mxu0
      %v7204 = vadd.f32 0.0, %v7203
      %7205 = vmatmul.bf16.gmra.mxu0 %v7057
      %v7206 = vpop.f32.mrf.mxu0
      %v7207 = vadd.f32 0.0, %v7206
      %v7208 = vpop.f32.mrf.mxu0
      %v7209 = vadd.f32 0.0, %v7208
      %7210 = vdwg.mxu0
      %v7211 = vadd.f32 %v6929, %v7132
      %v7212 = vadd.f32 %v6930, %v7134
      %v7213 = vadd.f32 %v6931, %v7137
      %v7214 = vadd.f32 %v6932, %v7139
      %v7215 = vadd.f32 %v6933, %v7142
      %v7216 = vadd.f32 %v6934, %v7144
      %v7217 = vadd.f32 %v6935, %v7147
      %v7218 = vadd.f32 %v6936, %v7149
      %v7219 = vadd.f32 %v6937, %v7152
      %v7220 = vadd.f32 %v6938, %v7154
      %v7221 = vadd.f32 %v6939, %v7157
      %v7222 = vadd.f32 %v6940, %v7159
      %v7223 = vadd.f32 %v6941, %v7162
      %v7224 = vadd.f32 %v6942, %v7164
      %v7225 = vadd.f32 %v6943, %v7167
      %v7226 = vadd.f32 %v6944, %v7169
      %v7227 = vadd.f32 %v6945, %v7172
      %v7228 = vadd.f32 %v6946, %v7174
      %v7229 = vadd.f32 %v6947, %v7177
      %v7230 = vadd.f32 %v6948, %v7179
      %v7231 = vadd.f32 %v6949, %v7182
      %v7232 = vadd.f32 %v6950, %v7184
      %v7233 = vadd.f32 %v6951, %v7187
      %v7234 = vadd.f32 %v6952, %v7189
      %v7235 = vadd.f32 %v6953, %v7192
      %v7236 = vadd.f32 %v6954, %v7194
      %v7237 = vadd.f32 %v6955, %v7197
      %v7238 = vadd.f32 %v6956, %v7199
      %v7239 = vadd.f32 %v6957, %v7202
      %v7240 = vadd.f32 %v6958, %v7204
      %v7241 = vadd.f32 %v6959, %v7207
      %v7242 = vadd.f32 %v6960, %v7209
      %7243 = vst [vmem:[#allocation2] sm:$0xff] %v7211
      %7244 = vst [vmem:[#allocation2 + $0x8] sm:$0xff] %v7212
      %7245 = vst [vmem:[#allocation2 + $0x10] sm:$0xff] %v7213
      %7246 = vst [vmem:[#allocation2 + $0x18] sm:$0xff] %v7214
      %7247 = vst [vmem:[#allocation2 + $0x20] sm:$0xff] %v7215
      %7248 = vst [vmem:[#allocation2 + $0x28] sm:$0xff] %v7216
      %7249 = vst [vmem:[#allocation2 + $0x30] sm:$0xff] %v7217
      %7250 = vst [vmem:[#allocation2 + $0x38] sm:$0xff] %v7218
      %7251 = vst [vmem:[#allocation2 + $0x40] sm:$0xff] %v7219
      %7252 = vst [vmem:[#allocation2 + $0x48] sm:$0xff] %v7220
      %7253 = vst [vmem:[#allocation2 + $0x50] sm:$0xff] %v7221
      %7254 = vst [vmem:[#allocation2 + $0x58] sm:$0xff] %v7222
      %7255 = vst [vmem:[#allocation2 + $0x60] sm:$0xff] %v7223
      %7256 = vst [vmem:[#allocation2 + $0x68] sm:$0xff] %v7224
      %7257 = vst [vmem:[#allocation2 + $0x70] sm:$0xff] %v7225
      %7258 = vst [vmem:[#allocation2 + $0x78] sm:$0xff] %v7226
      %7259 = vst [vmem:[#allocation2 + $0x80] sm:$0xff] %v7227
      %7260 = vst [vmem:[#allocation2 + $0x88] sm:$0xff] %v7228
      %7261 = vst [vmem:[#allocation2 + $0x90] sm:$0xff] %v7229
      %7262 = vst [vmem:[#allocation2 + $0x98] sm:$0xff] %v7230
      %7263 = vst [vmem:[#allocation2 + $0xa0] sm:$0xff] %v7231
      %7264 = vst [vmem:[#allocation2 + $0xa8] sm:$0xff] %v7232
      %7265 = vst [vmem:[#allocation2 + $0xb0] sm:$0xff] %v7233
      %7266 = vst [vmem:[#allocation2 + $0xb8] sm:$0xff] %v7234
      %7267 = vst [vmem:[#allocation2 + $0xc0] sm:$0xff] %v7235
      %7268 = vst [vmem:[#allocation2 + $0xc8] sm:$0xff] %v7236
      %7269 = vst [vmem:[#allocation2 + $0xd0] sm:$0xff] %v7237
      %7270 = vst [vmem:[#allocation2 + $0xd8] sm:$0xff] %v7238
      %7271 = vst [vmem:[#allocation2 + $0xe0] sm:$0xff] %v7239
      %7272 = vst [vmem:[#allocation2 + $0xe8] sm:$0xff] %v7240
      %7273 = vst [vmem:[#allocation2 + $0xf0] sm:$0xff] %v7241
      %7274 = vst [vmem:[#allocation2 + $0xf8] sm:$0xff] %v7242
      %v7275 = vld [vmem:[%s6864 + $0x1] sm:$0xff]
      %v7276 = vld [vmem:[%s6864 + $0x9] sm:$0xff]
      %v7277 = vld [vmem:[%s6864 + $0x19] sm:$0xff]
      %v7278 = vld [vmem:[%s6864 + $0x21] sm:$0xff]
      %v7279 = vld [vmem:[%s6864 + $0x31] sm:$0xff]
      %v7280 = vld [vmem:[%s6864 + $0x39] sm:$0xff]
      %v7281 = vld [vmem:[%s6864 + $0x49] sm:$0xff]
      %v7282 = vld [vmem:[%s6864 + $0x51] sm:$0xff]
      %v7283 = vld [vmem:[%s6864 + $0x61] sm:$0xff]
      %v7284 = vld [vmem:[%s6864 + $0x69] sm:$0xff]
      %v7285 = vld [vmem:[%s6864 + $0x79] sm:$0xff]
      %v7286 = vld [vmem:[%s6864 + $0x81] sm:$0xff]
      %v7287 = vld [vmem:[%s6864 + $0x91] sm:$0xff]
      %v7288 = vld [vmem:[%s6864 + $0x99] sm:$0xff]
      %v7289 = vld [vmem:[%s6864 + $0xa9] sm:$0xff]
      %v7290 = vld [vmem:[%s6864 + $0xb1] sm:$0xff]
      %v7291 = vld [vmem:[%s6864 + $0xc1] sm:$0xff]
      %v7292 = vld [vmem:[%s6864 + $0xc9] sm:$0xff]
      %v7293 = vld [vmem:[%s6864 + $0xd9] sm:$0xff]
      %v7294 = vld [vmem:[%s6864 + $0xe1] sm:$0xff]
      %v7295 = vld [vmem:[%s6864 + $0xf1] sm:$0xff]
      %v7296 = vld [vmem:[%s6864 + $0xf9] sm:$0xff]
      %v7297 = vld [vmem:[%s6864 + $0x109] sm:$0xff]
      %v7298 = vld [vmem:[%s6864 + $0x111] sm:$0xff]
      %v7299 = vld [vmem:[%s6864 + $0x121] sm:$0xff]
      %v7300 = vld [vmem:[%s6864 + $0x129] sm:$0xff]
      %v7301 = vld [vmem:[%s6864 + $0x139] sm:$0xff]
      %v7302 = vld [vmem:[%s6864 + $0x141] sm:$0xff]
      %v7303 = vld [vmem:[%s6864 + $0x151] sm:$0xff]
      %v7304 = vld [vmem:[%s6864 + $0x159] sm:$0xff]
      %v7305 = vld [vmem:[%s6864 + $0x169] sm:$0xff]
      %v7306 = vld [vmem:[%s6864 + $0x171] sm:$0xff]
      %v7307 = vpack.c.bf16 %v7275, %v7275
      %v7308 = vpack.c.bf16 %v7276, %v7276
      %v7309 = vpack.c.bf16 %v7277, %v7277
      %v7310 = vpack.c.bf16 %v7278, %v7278
      %v7311 = vpack.c.bf16 %v7279, %v7279
      %v7312 = vpack.c.bf16 %v7280, %v7280
      %v7313 = vpack.c.bf16 %v7281, %v7281
      %v7314 = vpack.c.bf16 %v7282, %v7282
      %v7315 = vpack.c.bf16 %v7283, %v7283
      %v7316 = vpack.c.bf16 %v7284, %v7284
      %v7317 = vpack.c.bf16 %v7285, %v7285
      %v7318 = vpack.c.bf16 %v7286, %v7286
      %v7319 = vpack.c.bf16 %v7287, %v7287
      %v7320 = vpack.c.bf16 %v7288, %v7288
      %v7321 = vpack.c.bf16 %v7289, %v7289
      %v7322 = vpack.c.bf16 %v7290, %v7290
      %v7323 = vpack.c.bf16 %v7291, %v7291
      %v7324 = vpack.c.bf16 %v7292, %v7292
      %v7325 = vpack.c.bf16 %v7293, %v7293
      %v7326 = vpack.c.bf16 %v7294, %v7294
      %v7327 = vpack.c.bf16 %v7295, %v7295
      %v7328 = vpack.c.bf16 %v7296, %v7296
      %v7329 = vpack.c.bf16 %v7297, %v7297
      %v7330 = vpack.c.bf16 %v7298, %v7298
      %v7331 = vpack.c.bf16 %v7299, %v7299
      %v7332 = vpack.c.bf16 %v7300, %v7300
      %v7333 = vpack.c.bf16 %v7301, %v7301
      %v7334 = vpack.c.bf16 %v7302, %v7302
      %v7335 = vpack.c.bf16 %v7303, %v7303
      %v7336 = vpack.c.bf16 %v7304, %v7304
      %v7337 = vpack.c.bf16 %v7305, %v7305
      %v7338 = vpack.c.bf16 %v7306, %v7306
      %v7339 = vld [vmem:[#allocation2] sm:$0xff]
      %v7340 = vld [vmem:[#allocation2 + $0x8] sm:$0xff]
      %v7341 = vld [vmem:[#allocation2 + $0x10] sm:$0xff]
      %v7342 = vld [vmem:[#allocation2 + $0x18] sm:$0xff]
      %v7343 = vld [vmem:[#allocation2 + $0x20] sm:$0xff]
      %v7344 = vld [vmem:[#allocation2 + $0x28] sm:$0xff]
      %v7345 = vld [vmem:[#allocation2 + $0x30] sm:$0xff]
      %v7346 = vld [vmem:[#allocation2 + $0x38] sm:$0xff]
      %v7347 = vld [vmem:[#allocation2 + $0x40] sm:$0xff]
      %v7348 = vld [vmem:[#allocation2 + $0x48] sm:$0xff]
      %v7349 = vld [vmem:[#allocation2 + $0x50] sm:$0xff]
      %v7350 = vld [vmem:[#allocation2 + $0x58] sm:$0xff]
      %v7351 = vld [vmem:[#allocation2 + $0x60] sm:$0xff]
      %v7352 = vld [vmem:[#allocation2 + $0x68] sm:$0xff]
      %v7353 = vld [vmem:[#allocation2 + $0x70] sm:$0xff]
      %v7354 = vld [vmem:[#allocation2 + $0x78] sm:$0xff]
      %v7355 = vld [vmem:[#allocation2 + $0x80] sm:$0xff]
      %v7356 = vld [vmem:[#allocation2 + $0x88] sm:$0xff]
      %v7357 = vld [vmem:[#allocation2 + $0x90] sm:$0xff]
      %v7358 = vld [vmem:[#allocation2 + $0x98] sm:$0xff]
      %v7359 = vld [vmem:[#allocation2 + $0xa0] sm:$0xff]
      %v7360 = vld [vmem:[#allocation2 + $0xa8] sm:$0xff]
      %v7361 = vld [vmem:[#allocation2 + $0xb0] sm:$0xff]
      %v7362 = vld [vmem:[#allocation2 + $0xb8] sm:$0xff]
      %v7363 = vld [vmem:[#allocation2 + $0xc0] sm:$0xff]
      %v7364 = vld [vmem:[#allocation2 + $0xc8] sm:$0xff]
      %v7365 = vld [vmem:[#allocation2 + $0xd0] sm:$0xff]
      %v7366 = vld [vmem:[#allocation2 + $0xd8] sm:$0xff]
      %v7367 = vld [vmem:[#allocation2 + $0xe0] sm:$0xff]
      %v7368 = vld [vmem:[#allocation2 + $0xe8] sm:$0xff]
      %v7369 = vld [vmem:[#allocation2 + $0xf0] sm:$0xff]
      %v7370 = vld [vmem:[#allocation2 + $0xf8] sm:$0xff]
      %s7371 = scalar_lea.vmem %s5, 448
      %v7372 = vld [vmem:[%s7371] sm:$0xf]
      %v7373 = vld [vmem:[%s7371 + $0x4] sm:$0xf]
      %v7374 = vld [vmem:[%s7371 + $0x8] sm:$0xf]
      %v7375 = vld [vmem:[%s7371 + $0xc] sm:$0xf]
      %v7376 = vld [vmem:[%s7371 + $0x10] sm:$0xf]
      %v7377 = vld [vmem:[%s7371 + $0x14] sm:$0xf]
      %v7378 = vld [vmem:[%s7371 + $0x18] sm:$0xf]
      %v7379 = vld [vmem:[%s7371 + $0x1c] sm:$0xf]
      %v7380 = vld [vmem:[%s7371 + $0x20] sm:$0xf]
      %v7381 = vld [vmem:[%s7371 + $0x24] sm:$0xf]
      %v7382 = vld [vmem:[%s7371 + $0x28] sm:$0xf]
      %v7383 = vld [vmem:[%s7371 + $0x2c] sm:$0xf]
      %v7384 = vld [vmem:[%s7371 + $0x30] sm:$0xf]
      %v7385 = vld [vmem:[%s7371 + $0x34] sm:$0xf]
      %v7386 = vld [vmem:[%s7371 + $0x38] sm:$0xf]
      %v7387 = vld [vmem:[%s7371 + $0x3c] sm:$0xf]
      %v7420 = vunpack.c.l.b16 %v7307
      %v7421 = vunpack.c.l.b16 %v7308
      %v7422 = vunpack.c.l.b16 %v7309
      %v7423 = vunpack.c.l.b16 %v7310
      %v7424 = vunpack.c.l.b16 %v7311
      %v7425 = vunpack.c.l.b16 %v7312
      %v7426 = vunpack.c.l.b16 %v7313
      %v7427 = vunpack.c.l.b16 %v7314
      %v7428 = vunpack.c.l.b16 %v7315
      %v7429 = vunpack.c.l.b16 %v7316
      %v7430 = vunpack.c.l.b16 %v7317
      %v7431 = vunpack.c.l.b16 %v7318
      %v7432 = vunpack.c.l.b16 %v7319
      %v7433 = vunpack.c.l.b16 %v7320
      %v7434 = vunpack.c.l.b16 %v7321
      %v7435 = vunpack.c.l.b16 %v7322
      %v7436 = vunpack.c.l.b16 %v7323
      %v7437 = vunpack.c.l.b16 %v7324
      %v7438 = vunpack.c.l.b16 %v7325
      %v7439 = vunpack.c.l.b16 %v7326
      %v7440 = vunpack.c.l.b16 %v7327
      %v7441 = vunpack.c.l.b16 %v7328
      %v7442 = vunpack.c.l.b16 %v7329
      %v7443 = vunpack.c.l.b16 %v7330
      %v7444 = vunpack.c.l.b16 %v7331
      %v7445 = vunpack.c.l.b16 %v7332
      %v7446 = vunpack.c.l.b16 %v7333
      %v7447 = vunpack.c.l.b16 %v7334
      %v7448 = vunpack.c.l.b16 %v7335
      %v7449 = vunpack.c.l.b16 %v7336
      %v7450 = vunpack.c.l.b16 %v7337
      %v7451 = vunpack.c.l.b16 %v7338
      %v7452 = vpack.c.b16 %v7421, %v7420
      %v7453 = vpack.c.b16 %v7423, %v7422
      %v7454 = vpack.c.b16 %v7425, %v7424
      %v7455 = vpack.c.b16 %v7427, %v7426
      %v7456 = vpack.c.b16 %v7429, %v7428
      %v7457 = vpack.c.b16 %v7431, %v7430
      %v7458 = vpack.c.b16 %v7433, %v7432
      %v7459 = vpack.c.b16 %v7435, %v7434
      %v7460 = vpack.c.b16 %v7437, %v7436
      %v7461 = vpack.c.b16 %v7439, %v7438
      %v7462 = vpack.c.b16 %v7441, %v7440
      %v7463 = vpack.c.b16 %v7443, %v7442
      %v7464 = vpack.c.b16 %v7445, %v7444
      %v7465 = vpack.c.b16 %v7447, %v7446
      %v7466 = vpack.c.b16 %v7449, %v7448
      %v7467 = vpack.c.b16 %v7451, %v7450
      %v7500 = vunpack.c.l.b16 %v7372
      %v7501 = vunpack.c.l.b16 %v7373
      %v7502 = vunpack.c.l.b16 %v7374
      %v7503 = vunpack.c.l.b16 %v7375
      %v7504 = vunpack.c.l.b16 %v7376
      %v7505 = vunpack.c.l.b16 %v7377
      %v7506 = vunpack.c.l.b16 %v7378
      %v7507 = vunpack.c.l.b16 %v7379
      %v7508 = vunpack.c.l.b16 %v7380
      %v7509 = vunpack.c.l.b16 %v7381
      %v7510 = vunpack.c.l.b16 %v7382
      %v7511 = vunpack.c.l.b16 %v7383
      %v7512 = vunpack.c.l.b16 %v7384
      %v7513 = vunpack.c.l.b16 %v7385
      %v7514 = vunpack.c.l.b16 %v7386
      %v7515 = vunpack.c.l.b16 %v7387
      %v7516 = vpack.c.b16 %v7501, %v7500
      %v7517 = vpack.c.b16 %v7503, %v7502
      %v7518 = vpack.c.b16 %v7505, %v7504
      %v7519 = vpack.c.b16 %v7507, %v7506
      %v7520 = vpack.c.b16 %v7509, %v7508
      %v7521 = vpack.c.b16 %v7511, %v7510
      %v7522 = vpack.c.b16 %v7513, %v7512
      %v7523 = vpack.c.b16 %v7515, %v7514
      %7532 = vmatpush.bf16.msra.mxu0 %v7523
      %7533 = vmatpush.bf16.msra.mxu0 %v7522
      %7534 = vmatpush.bf16.msra.mxu0 %v7521
      %7535 = vmatpush.bf16.msra.mxu0 %v7520
      %7536 = vmatpush.bf16.msra.mxu0 %v7519
      %7537 = vmatpush.bf16.msra.mxu0 %v7518
      %7538 = vmatpush.bf16.msra.mxu0 %v7517
      %7539 = vmatpush.bf16.msra.mxu0 %v7516
      %7540 = vmatmul.bf16.gmra.mxu0 %v7452
      %v7541 = vpop.f32.mrf.mxu0
      %v7542 = vadd.f32 0.0, %v7541
      %v7543 = vpop.f32.mrf.mxu0
      %v7544 = vadd.f32 0.0, %v7543
      %7545 = vmatmul.bf16.gmra.mxu0 %v7453
      %v7546 = vpop.f32.mrf.mxu0
      %v7547 = vadd.f32 0.0, %v7546
      %v7548 = vpop.f32.mrf.mxu0
      %v7549 = vadd.f32 0.0, %v7548
      %7550 = vmatmul.bf16.gmra.mxu0 %v7454
      %v7551 = vpop.f32.mrf.mxu0
      %v7552 = vadd.f32 0.0, %v7551
      %v7553 = vpop.f32.mrf.mxu0
      %v7554 = vadd.f32 0.0, %v7553
      %7555 = vmatmul.bf16.gmra.mxu0 %v7455
      %v7556 = vpop.f32.mrf.mxu0
      %v7557 = vadd.f32 0.0, %v7556
      %v7558 = vpop.f32.mrf.mxu0
      %v7559 = vadd.f32 0.0, %v7558
      %7560 = vmatmul.bf16.gmra.mxu0 %v7456
      %v7561 = vpop.f32.mrf.mxu0
      %v7562 = vadd.f32 0.0, %v7561
      %v7563 = vpop.f32.mrf.mxu0
      %v7564 = vadd.f32 0.0, %v7563
      %7565 = vmatmul.bf16.gmra.mxu0 %v7457
      %v7566 = vpop.f32.mrf.mxu0
      %v7567 = vadd.f32 0.0, %v7566
      %v7568 = vpop.f32.mrf.mxu0
      %v7569 = vadd.f32 0.0, %v7568
      %7570 = vmatmul.bf16.gmra.mxu0 %v7458
      %v7571 = vpop.f32.mrf.mxu0
      %v7572 = vadd.f32 0.0, %v7571
      %v7573 = vpop.f32.mrf.mxu0
      %v7574 = vadd.f32 0.0, %v7573
      %7575 = vmatmul.bf16.gmra.mxu0 %v7459
      %v7576 = vpop.f32.mrf.mxu0
      %v7577 = vadd.f32 0.0, %v7576
      %v7578 = vpop.f32.mrf.mxu0
      %v7579 = vadd.f32 0.0, %v7578
      %7580 = vmatmul.bf16.gmra.mxu0 %v7460
      %v7581 = vpop.f32.mrf.mxu0
      %v7582 = vadd.f32 0.0, %v7581
      %v7583 = vpop.f32.mrf.mxu0
      %v7584 = vadd.f32 0.0, %v7583
      %7585 = vmatmul.bf16.gmra.mxu0 %v7461
      %v7586 = vpop.f32.mrf.mxu0
      %v7587 = vadd.f32 0.0, %v7586
      %v7588 = vpop.f32.mrf.mxu0
      %v7589 = vadd.f32 0.0, %v7588
      %7590 = vmatmul.bf16.gmra.mxu0 %v7462
      %v7591 = vpop.f32.mrf.mxu0
      %v7592 = vadd.f32 0.0, %v7591
      %v7593 = vpop.f32.mrf.mxu0
      %v7594 = vadd.f32 0.0, %v7593
      %7595 = vmatmul.bf16.gmra.mxu0 %v7463
      %v7596 = vpop.f32.mrf.mxu0
      %v7597 = vadd.f32 0.0, %v7596
      %v7598 = vpop.f32.mrf.mxu0
      %v7599 = vadd.f32 0.0, %v7598
      %7600 = vmatmul.bf16.gmra.mxu0 %v7464
      %v7601 = vpop.f32.mrf.mxu0
      %v7602 = vadd.f32 0.0, %v7601
      %v7603 = vpop.f32.mrf.mxu0
      %v7604 = vadd.f32 0.0, %v7603
      %7605 = vmatmul.bf16.gmra.mxu0 %v7465
      %v7606 = vpop.f32.mrf.mxu0
      %v7607 = vadd.f32 0.0, %v7606
      %v7608 = vpop.f32.mrf.mxu0
      %v7609 = vadd.f32 0.0, %v7608
      %7610 = vmatmul.bf16.gmra.mxu0 %v7466
      %v7611 = vpop.f32.mrf.mxu0
      %v7612 = vadd.f32 0.0, %v7611
      %v7613 = vpop.f32.mrf.mxu0
      %v7614 = vadd.f32 0.0, %v7613
      %7615 = vmatmul.bf16.gmra.mxu0 %v7467
      %v7616 = vpop.f32.mrf.mxu0
      %v7617 = vadd.f32 0.0, %v7616
      %v7618 = vpop.f32.mrf.mxu0
      %v7619 = vadd.f32 0.0, %v7618
      %7620 = vdwg.mxu0
      %v7621 = vadd.f32 %v7339, %v7542
      %v7622 = vadd.f32 %v7340, %v7544
      %v7623 = vadd.f32 %v7341, %v7547
      %v7624 = vadd.f32 %v7342, %v7549
      %v7625 = vadd.f32 %v7343, %v7552
      %v7626 = vadd.f32 %v7344, %v7554
      %v7627 = vadd.f32 %v7345, %v7557
      %v7628 = vadd.f32 %v7346, %v7559
      %v7629 = vadd.f32 %v7347, %v7562
      %v7630 = vadd.f32 %v7348, %v7564
      %v7631 = vadd.f32 %v7349, %v7567
      %v7632 = vadd.f32 %v7350, %v7569
      %v7633 = vadd.f32 %v7351, %v7572
      %v7634 = vadd.f32 %v7352, %v7574
      %v7635 = vadd.f32 %v7353, %v7577
      %v7636 = vadd.f32 %v7354, %v7579
      %v7637 = vadd.f32 %v7355, %v7582
      %v7638 = vadd.f32 %v7356, %v7584
      %v7639 = vadd.f32 %v7357, %v7587
      %v7640 = vadd.f32 %v7358, %v7589
      %v7641 = vadd.f32 %v7359, %v7592
      %v7642 = vadd.f32 %v7360, %v7594
      %v7643 = vadd.f32 %v7361, %v7597
      %v7644 = vadd.f32 %v7362, %v7599
      %v7645 = vadd.f32 %v7363, %v7602
      %v7646 = vadd.f32 %v7364, %v7604
      %v7647 = vadd.f32 %v7365, %v7607
      %v7648 = vadd.f32 %v7366, %v7609
      %v7649 = vadd.f32 %v7367, %v7612
      %v7650 = vadd.f32 %v7368, %v7614
      %v7651 = vadd.f32 %v7369, %v7617
      %v7652 = vadd.f32 %v7370, %v7619
      %7653 = vst [vmem:[#allocation2] sm:$0xff] %v7621
      %7654 = vst [vmem:[#allocation2 + $0x8] sm:$0xff] %v7622
      %7655 = vst [vmem:[#allocation2 + $0x10] sm:$0xff] %v7623
      %7656 = vst [vmem:[#allocation2 + $0x18] sm:$0xff] %v7624
      %7657 = vst [vmem:[#allocation2 + $0x20] sm:$0xff] %v7625
      %7658 = vst [vmem:[#allocation2 + $0x28] sm:$0xff] %v7626
      %7659 = vst [vmem:[#allocation2 + $0x30] sm:$0xff] %v7627
      %7660 = vst [vmem:[#allocation2 + $0x38] sm:$0xff] %v7628
      %7661 = vst [vmem:[#allocation2 + $0x40] sm:$0xff] %v7629
      %7662 = vst [vmem:[#allocation2 + $0x48] sm:$0xff] %v7630
      %7663 = vst [vmem:[#allocation2 + $0x50] sm:$0xff] %v7631
      %7664 = vst [vmem:[#allocation2 + $0x58] sm:$0xff] %v7632
      %7665 = vst [vmem:[#allocation2 + $0x60] sm:$0xff] %v7633
      %7666 = vst [vmem:[#allocation2 + $0x68] sm:$0xff] %v7634
      %7667 = vst [vmem:[#allocation2 + $0x70] sm:$0xff] %v7635
      %7668 = vst [vmem:[#allocation2 + $0x78] sm:$0xff] %v7636
      %7669 = vst [vmem:[#allocation2 + $0x80] sm:$0xff] %v7637
      %7670 = vst [vmem:[#allocation2 + $0x88] sm:$0xff] %v7638
      %7671 = vst [vmem:[#allocation2 + $0x90] sm:$0xff] %v7639
      %7672 = vst [vmem:[#allocation2 + $0x98] sm:$0xff] %v7640
      %7673 = vst [vmem:[#allocation2 + $0xa0] sm:$0xff] %v7641
      %7674 = vst [vmem:[#allocation2 + $0xa8] sm:$0xff] %v7642
      %7675 = vst [vmem:[#allocation2 + $0xb0] sm:$0xff] %v7643
      %7676 = vst [vmem:[#allocation2 + $0xb8] sm:$0xff] %v7644
      %7677 = vst [vmem:[#allocation2 + $0xc0] sm:$0xff] %v7645
      %7678 = vst [vmem:[#allocation2 + $0xc8] sm:$0xff] %v7646
      %7679 = vst [vmem:[#allocation2 + $0xd0] sm:$0xff] %v7647
      %7680 = vst [vmem:[#allocation2 + $0xd8] sm:$0xff] %v7648
      %7681 = vst [vmem:[#allocation2 + $0xe0] sm:$0xff] %v7649
      %7682 = vst [vmem:[#allocation2 + $0xe8] sm:$0xff] %v7650
      %7683 = vst [vmem:[#allocation2 + $0xf0] sm:$0xff] %v7651
      %7684 = vst [vmem:[#allocation2 + $0xf8] sm:$0xff] %v7652
      %v7685 = vld [vmem:[%s6864 + $0x2] sm:$0xff]
      %v7686 = vld [vmem:[%s6864 + $0xa] sm:$0xff]
      %v7687 = vld [vmem:[%s6864 + $0x1a] sm:$0xff]
      %v7688 = vld [vmem:[%s6864 + $0x22] sm:$0xff]
      %v7689 = vld [vmem:[%s6864 + $0x32] sm:$0xff]
      %v7690 = vld [vmem:[%s6864 + $0x3a] sm:$0xff]
      %v7691 = vld [vmem:[%s6864 + $0x4a] sm:$0xff]
      %v7692 = vld [vmem:[%s6864 + $0x52] sm:$0xff]
      %v7693 = vld [vmem:[%s6864 + $0x62] sm:$0xff]
      %v7694 = vld [vmem:[%s6864 + $0x6a] sm:$0xff]
      %v7695 = vld [vmem:[%s6864 + $0x7a] sm:$0xff]
      %v7696 = vld [vmem:[%s6864 + $0x82] sm:$0xff]
      %v7697 = vld [vmem:[%s6864 + $0x92] sm:$0xff]
      %v7698 = vld [vmem:[%s6864 + $0x9a] sm:$0xff]
      %v7699 = vld [vmem:[%s6864 + $0xaa] sm:$0xff]
      %v7700 = vld [vmem:[%s6864 + $0xb2] sm:$0xff]
      %v7701 = vld [vmem:[%s6864 + $0xc2] sm:$0xff]
      %v7702 = vld [vmem:[%s6864 + $0xca] sm:$0xff]
      %v7703 = vld [vmem:[%s6864 + $0xda] sm:$0xff]
      %v7704 = vld [vmem:[%s6864 + $0xe2] sm:$0xff]
      %v7705 = vld [vmem:[%s6864 + $0xf2] sm:$0xff]
      %v7706 = vld [vmem:[%s6864 + $0xfa] sm:$0xff]
      %v7707 = vld [vmem:[%s6864 + $0x10a] sm:$0xff]
      %v7708 = vld [vmem:[%s6864 + $0x112] sm:$0xff]
      %v7709 = vld [vmem:[%s6864 + $0x122] sm:$0xff]
      %v7710 = vld [vmem:[%s6864 + $0x12a] sm:$0xff]
      %v7711 = vld [vmem:[%s6864 + $0x13a] sm:$0xff]
      %v7712 = vld [vmem:[%s6864 + $0x142] sm:$0xff]
      %v7713 = vld [vmem:[%s6864 + $0x152] sm:$0xff]
      %v7714 = vld [vmem:[%s6864 + $0x15a] sm:$0xff]
      %v7715 = vld [vmem:[%s6864 + $0x16a] sm:$0xff]
      %v7716 = vld [vmem:[%s6864 + $0x172] sm:$0xff]
      %v7717 = vpack.c.bf16 %v7685, %v7685
      %v7718 = vpack.c.bf16 %v7686, %v7686
      %v7719 = vpack.c.bf16 %v7687, %v7687
      %v7720 = vpack.c.bf16 %v7688, %v7688
      %v7721 = vpack.c.bf16 %v7689, %v7689
      %v7722 = vpack.c.bf16 %v7690, %v7690
      %v7723 = vpack.c.bf16 %v7691, %v7691
      %v7724 = vpack.c.bf16 %v7692, %v7692
      %v7725 = vpack.c.bf16 %v7693, %v7693
      %v7726 = vpack.c.bf16 %v7694, %v7694
      %v7727 = vpack.c.bf16 %v7695, %v7695
      %v7728 = vpack.c.bf16 %v7696, %v7696
      %v7729 = vpack.c.bf16 %v7697, %v7697
      %v7730 = vpack.c.bf16 %v7698, %v7698
      %v7731 = vpack.c.bf16 %v7699, %v7699
      %v7732 = vpack.c.bf16 %v7700, %v7700
      %v7733 = vpack.c.bf16 %v7701, %v7701
      %v7734 = vpack.c.bf16 %v7702, %v7702
      %v7735 = vpack.c.bf16 %v7703, %v7703
      %v7736 = vpack.c.bf16 %v7704, %v7704
      %v7737 = vpack.c.bf16 %v7705, %v7705
      %v7738 = vpack.c.bf16 %v7706, %v7706
      %v7739 = vpack.c.bf16 %v7707, %v7707
      %v7740 = vpack.c.bf16 %v7708, %v7708
      %v7741 = vpack.c.bf16 %v7709, %v7709
      %v7742 = vpack.c.bf16 %v7710, %v7710
      %v7743 = vpack.c.bf16 %v7711, %v7711
      %v7744 = vpack.c.bf16 %v7712, %v7712
      %v7745 = vpack.c.bf16 %v7713, %v7713
      %v7746 = vpack.c.bf16 %v7714, %v7714
      %v7747 = vpack.c.bf16 %v7715, %v7715
      %v7748 = vpack.c.bf16 %v7716, %v7716
      %v7749 = vld [vmem:[#allocation2] sm:$0xff]
      %v7750 = vld [vmem:[#allocation2 + $0x8] sm:$0xff]
      %v7751 = vld [vmem:[#allocation2 + $0x10] sm:$0xff]
      %v7752 = vld [vmem:[#allocation2 + $0x18] sm:$0xff]
      %v7753 = vld [vmem:[#allocation2 + $0x20] sm:$0xff]
      %v7754 = vld [vmem:[#allocation2 + $0x28] sm:$0xff]
      %v7755 = vld [vmem:[#allocation2 + $0x30] sm:$0xff]
      %v7756 = vld [vmem:[#allocation2 + $0x38] sm:$0xff]
      %v7757 = vld [vmem:[#allocation2 + $0x40] sm:$0xff]
      %v7758 = vld [vmem:[#allocation2 + $0x48] sm:$0xff]
      %v7759 = vld [vmem:[#allocation2 + $0x50] sm:$0xff]
      %v7760 = vld [vmem:[#allocation2 + $0x58] sm:$0xff]
      %v7761 = vld [vmem:[#allocation2 + $0x60] sm:$0xff]
      %v7762 = vld [vmem:[#allocation2 + $0x68] sm:$0xff]
      %v7763 = vld [vmem:[#allocation2 + $0x70] sm:$0xff]
      %v7764 = vld [vmem:[#allocation2 + $0x78] sm:$0xff]
      %v7765 = vld [vmem:[#allocation2 + $0x80] sm:$0xff]
      %v7766 = vld [vmem:[#allocation2 + $0x88] sm:$0xff]
      %v7767 = vld [vmem:[#allocation2 + $0x90] sm:$0xff]
      %v7768 = vld [vmem:[#allocation2 + $0x98] sm:$0xff]
      %v7769 = vld [vmem:[#allocation2 + $0xa0] sm:$0xff]
      %v7770 = vld [vmem:[#allocation2 + $0xa8] sm:$0xff]
      %v7771 = vld [vmem:[#allocation2 + $0xb0] sm:$0xff]
      %v7772 = vld [vmem:[#allocation2 + $0xb8] sm:$0xff]
      %v7773 = vld [vmem:[#allocation2 + $0xc0] sm:$0xff]
      %v7774 = vld [vmem:[#allocation2 + $0xc8] sm:$0xff]
      %v7775 = vld [vmem:[#allocation2 + $0xd0] sm:$0xff]
      %v7776 = vld [vmem:[#allocation2 + $0xd8] sm:$0xff]
      %v7777 = vld [vmem:[#allocation2 + $0xe0] sm:$0xff]
      %v7778 = vld [vmem:[#allocation2 + $0xe8] sm:$0xff]
      %v7779 = vld [vmem:[#allocation2 + $0xf0] sm:$0xff]
      %v7780 = vld [vmem:[#allocation2 + $0xf8] sm:$0xff]
      %s7781 = scalar_lea.vmem %s5, 512
      %v7782 = vld [vmem:[%s7781] sm:$0xf]
      %v7783 = vld [vmem:[%s7781 + $0x4] sm:$0xf]
      %v7784 = vld [vmem:[%s7781 + $0x8] sm:$0xf]
      %v7785 = vld [vmem:[%s7781 + $0xc] sm:$0xf]
      %v7786 = vld [vmem:[%s7781 + $0x10] sm:$0xf]
      %v7787 = vld [vmem:[%s7781 + $0x14] sm:$0xf]
      %v7788 = vld [vmem:[%s7781 + $0x18] sm:$0xf]
      %v7789 = vld [vmem:[%s7781 + $0x1c] sm:$0xf]
      %v7790 = vld [vmem:[%s7781 + $0x20] sm:$0xf]
      %v7791 = vld [vmem:[%s7781 + $0x24] sm:$0xf]
      %v7792 = vld [vmem:[%s7781 + $0x28] sm:$0xf]
      %v7793 = vld [vmem:[%s7781 + $0x2c] sm:$0xf]
      %v7794 = vld [vmem:[%s7781 + $0x30] sm:$0xf]
      %v7795 = vld [vmem:[%s7781 + $0x34] sm:$0xf]
      %v7796 = vld [vmem:[%s7781 + $0x38] sm:$0xf]
      %v7797 = vld [vmem:[%s7781 + $0x3c] sm:$0xf]
      %v7830 = vunpack.c.l.b16 %v7717
      %v7831 = vunpack.c.l.b16 %v7718
      %v7832 = vunpack.c.l.b16 %v7719
      %v7833 = vunpack.c.l.b16 %v7720
      %v7834 = vunpack.c.l.b16 %v7721
      %v7835 = vunpack.c.l.b16 %v7722
      %v7836 = vunpack.c.l.b16 %v7723
      %v7837 = vunpack.c.l.b16 %v7724
      %v7838 = vunpack.c.l.b16 %v7725
      %v7839 = vunpack.c.l.b16 %v7726
      %v7840 = vunpack.c.l.b16 %v7727
      %v7841 = vunpack.c.l.b16 %v7728
      %v7842 = vunpack.c.l.b16 %v7729
      %v7843 = vunpack.c.l.b16 %v7730
      %v7844 = vunpack.c.l.b16 %v7731
      %v7845 = vunpack.c.l.b16 %v7732
      %v7846 = vunpack.c.l.b16 %v7733
      %v7847 = vunpack.c.l.b16 %v7734
      %v7848 = vunpack.c.l.b16 %v7735
      %v7849 = vunpack.c.l.b16 %v7736
      %v7850 = vunpack.c.l.b16 %v7737
      %v7851 = vunpack.c.l.b16 %v7738
      %v7852 = vunpack.c.l.b16 %v7739
      %v7853 = vunpack.c.l.b16 %v7740
      %v7854 = vunpack.c.l.b16 %v7741
      %v7855 = vunpack.c.l.b16 %v7742
      %v7856 = vunpack.c.l.b16 %v7743
      %v7857 = vunpack.c.l.b16 %v7744
      %v7858 = vunpack.c.l.b16 %v7745
      %v7859 = vunpack.c.l.b16 %v7746
      %v7860 = vunpack.c.l.b16 %v7747
      %v7861 = vunpack.c.l.b16 %v7748
      %v7862 = vpack.c.b16 %v7831, %v7830
      %v7863 = vpack.c.b16 %v7833, %v7832
      %v7864 = vpack.c.b16 %v7835, %v7834
      %v7865 = vpack.c.b16 %v7837, %v7836
      %v7866 = vpack.c.b16 %v7839, %v7838
      %v7867 = vpack.c.b16 %v7841, %v7840
      %v7868 = vpack.c.b16 %v7843, %v7842
      %v7869 = vpack.c.b16 %v7845, %v7844
      %v7870 = vpack.c.b16 %v7847, %v7846
      %v7871 = vpack.c.b16 %v7849, %v7848
      %v7872 = vpack.c.b16 %v7851, %v7850
      %v7873 = vpack.c.b16 %v7853, %v7852
      %v7874 = vpack.c.b16 %v7855, %v7854
      %v7875 = vpack.c.b16 %v7857, %v7856
      %v7876 = vpack.c.b16 %v7859, %v7858
      %v7877 = vpack.c.b16 %v7861, %v7860
      %v7910 = vunpack.c.l.b16 %v7782
      %v7911 = vunpack.c.l.b16 %v7783
      %v7912 = vunpack.c.l.b16 %v7784
      %v7913 = vunpack.c.l.b16 %v7785
      %v7914 = vunpack.c.l.b16 %v7786
      %v7915 = vunpack.c.l.b16 %v7787
      %v7916 = vunpack.c.l.b16 %v7788
      %v7917 = vunpack.c.l.b16 %v7789
      %v7918 = vunpack.c.l.b16 %v7790
      %v7919 = vunpack.c.l.b16 %v7791
      %v7920 = vunpack.c.l.b16 %v7792
      %v7921 = vunpack.c.l.b16 %v7793
      %v7922 = vunpack.c.l.b16 %v7794
      %v7923 = vunpack.c.l.b16 %v7795
      %v7924 = vunpack.c.l.b16 %v7796
      %v7925 = vunpack.c.l.b16 %v7797
      %v7926 = vpack.c.b16 %v7911, %v7910
      %v7927 = vpack.c.b16 %v7913, %v7912
      %v7928 = vpack.c.b16 %v7915, %v7914
      %v7929 = vpack.c.b16 %v7917, %v7916
      %v7930 = vpack.c.b16 %v7919, %v7918
      %v7931 = vpack.c.b16 %v7921, %v7920
      %v7932 = vpack.c.b16 %v7923, %v7922
      %v7933 = vpack.c.b16 %v7925, %v7924
      %7942 = vmatpush.bf16.msra.mxu0 %v7933
      %7943 = vmatpush.bf16.msra.mxu0 %v7932
      %7944 = vmatpush.bf16.msra.mxu0 %v7931
      %7945 = vmatpush.bf16.msra.mxu0 %v7930
      %7946 = vmatpush.bf16.msra.mxu0 %v7929
      %7947 = vmatpush.bf16.msra.mxu0 %v7928
      %7948 = vmatpush.bf16.msra.mxu0 %v7927
      %7949 = vmatpush.bf16.msra.mxu0 %v7926
      %7950 = vmatmul.bf16.gmra.mxu0 %v7862
      %v7951 = vpop.f32.mrf.mxu0
      %v7952 = vadd.f32 0.0, %v7951
      %v7953 = vpop.f32.mrf.mxu0
      %v7954 = vadd.f32 0.0, %v7953
      %7955 = vmatmul.bf16.gmra.mxu0 %v7863
      %v7956 = vpop.f32.mrf.mxu0
      %v7957 = vadd.f32 0.0, %v7956
      %v7958 = vpop.f32.mrf.mxu0
      %v7959 = vadd.f32 0.0, %v7958
      %7960 = vmatmul.bf16.gmra.mxu0 %v7864
      %v7961 = vpop.f32.mrf.mxu0
      %v7962 = vadd.f32 0.0, %v7961
      %v7963 = vpop.f32.mrf.mxu0
      %v7964 = vadd.f32 0.0, %v7963
      %7965 = vmatmul.bf16.gmra.mxu0 %v7865
      %v7966 = vpop.f32.mrf.mxu0
      %v7967 = vadd.f32 0.0, %v7966
      %v7968 = vpop.f32.mrf.mxu0
      %v7969 = vadd.f32 0.0, %v7968
      %7970 = vmatmul.bf16.gmra.mxu0 %v7866
      %v7971 = vpop.f32.mrf.mxu0
      %v7972 = vadd.f32 0.0, %v7971
      %v7973 = vpop.f32.mrf.mxu0
      %v7974 = vadd.f32 0.0, %v7973
      %7975 = vmatmul.bf16.gmra.mxu0 %v7867
      %v7976 = vpop.f32.mrf.mxu0
      %v7977 = vadd.f32 0.0, %v7976
      %v7978 = vpop.f32.mrf.mxu0
      %v7979 = vadd.f32 0.0, %v7978
      %7980 = vmatmul.bf16.gmra.mxu0 %v7868
      %v7981 = vpop.f32.mrf.mxu0
      %v7982 = vadd.f32 0.0, %v7981
      %v7983 = vpop.f32.mrf.mxu0
      %v7984 = vadd.f32 0.0, %v7983
      %7985 = vmatmul.bf16.gmra.mxu0 %v7869
      %v7986 = vpop.f32.mrf.mxu0
      %v7987 = vadd.f32 0.0, %v7986
      %v7988 = vpop.f32.mrf.mxu0
      %v7989 = vadd.f32 0.0, %v7988
      %7990 = vmatmul.bf16.gmra.mxu0 %v7870
      %v7991 = vpop.f32.mrf.mxu0
      %v7992 = vadd.f32 0.0, %v7991
      %v7993 = vpop.f32.mrf.mxu0
      %v7994 = vadd.f32 0.0, %v7993
      %7995 = vmatmul.bf16.gmra.mxu0 %v7871
      %v7996 = vpop.f32.mrf.mxu0
      %v7997 = vadd.f32 0.0, %v7996
      %v7998 = vpop.f32.mrf.mxu0
      %v7999 = vadd.f32 0.0, %v7998
      %8000 = vmatmul.bf16.gmra.mxu0 %v7872
      %v8001 = vpop.f32.mrf.mxu0
      %v8002 = vadd.f32 0.0, %v8001
      %v8003 = vpop.f32.mrf.mxu0
      %v8004 = vadd.f32 0.0, %v8003
      %8005 = vmatmul.bf16.gmra.mxu0 %v7873
      %v8006 = vpop.f32.mrf.mxu0
      %v8007 = vadd.f32 0.0, %v8006
      %v8008 = vpop.f32.mrf.mxu0
      %v8009 = vadd.f32 0.0, %v8008
      %8010 = vmatmul.bf16.gmra.mxu0 %v7874
      %v8011 = vpop.f32.mrf.mxu0
      %v8012 = vadd.f32 0.0, %v8011
      %v8013 = vpop.f32.mrf.mxu0
      %v8014 = vadd.f32 0.0, %v8013
      %8015 = vmatmul.bf16.gmra.mxu0 %v7875
      %v8016 = vpop.f32.mrf.mxu0
      %v8017 = vadd.f32 0.0, %v8016
      %v8018 = vpop.f32.mrf.mxu0
      %v8019 = vadd.f32 0.0, %v8018
      %8020 = vmatmul.bf16.gmra.mxu0 %v7876
      %v8021 = vpop.f32.mrf.mxu0
      %v8022 = vadd.f32 0.0, %v8021
      %v8023 = vpop.f32.mrf.mxu0
      %v8024 = vadd.f32 0.0, %v8023
      %8025 = vmatmul.bf16.gmra.mxu0 %v7877
      %v8026 = vpop.f32.mrf.mxu0
      %v8027 = vadd.f32 0.0, %v8026
      %v8028 = vpop.f32.mrf.mxu0
      %v8029 = vadd.f32 0.0, %v8028
      %8030 = vdwg.mxu0
      %v8031 = vadd.f32 %v7749, %v7952
      %v8032 = vadd.f32 %v7750, %v7954
      %v8033 = vadd.f32 %v7751, %v7957
      %v8034 = vadd.f32 %v7752, %v7959
      %v8035 = vadd.f32 %v7753, %v7962
      %v8036 = vadd.f32 %v7754, %v7964
      %v8037 = vadd.f32 %v7755, %v7967
      %v8038 = vadd.f32 %v7756, %v7969
      %v8039 = vadd.f32 %v7757, %v7972
      %v8040 = vadd.f32 %v7758, %v7974
      %v8041 = vadd.f32 %v7759, %v7977
      %v8042 = vadd.f32 %v7760, %v7979
      %v8043 = vadd.f32 %v7761, %v7982
      %v8044 = vadd.f32 %v7762, %v7984
      %v8045 = vadd.f32 %v7763, %v7987
      %v8046 = vadd.f32 %v7764, %v7989
      %v8047 = vadd.f32 %v7765, %v7992
      %v8048 = vadd.f32 %v7766, %v7994
      %v8049 = vadd.f32 %v7767, %v7997
      %v8050 = vadd.f32 %v7768, %v7999
      %v8051 = vadd.f32 %v7769, %v8002
      %v8052 = vadd.f32 %v7770, %v8004
      %v8053 = vadd.f32 %v7771, %v8007
      %v8054 = vadd.f32 %v7772, %v8009
      %v8055 = vadd.f32 %v7773, %v8012
      %v8056 = vadd.f32 %v7774, %v8014
      %v8057 = vadd.f32 %v7775, %v8017
      %v8058 = vadd.f32 %v7776, %v8019
      %v8059 = vadd.f32 %v7777, %v8022
      %v8060 = vadd.f32 %v7778, %v8024
      %v8061 = vadd.f32 %v7779, %v8027
      %v8062 = vadd.f32 %v7780, %v8029
      %8063 = vst [vmem:[#allocation2] sm:$0xff] %v8031
      %8064 = vst [vmem:[#allocation2 + $0x8] sm:$0xff] %v8032
      %8065 = vst [vmem:[#allocation2 + $0x10] sm:$0xff] %v8033
      %8066 = vst [vmem:[#allocation2 + $0x18] sm:$0xff] %v8034
      %8067 = vst [vmem:[#allocation2 + $0x20] sm:$0xff] %v8035
      %8068 = vst [vmem:[#allocation2 + $0x28] sm:$0xff] %v8036
      %8069 = vst [vmem:[#allocation2 + $0x30] sm:$0xff] %v8037
      %8070 = vst [vmem:[#allocation2 + $0x38] sm:$0xff] %v8038
      %8071 = vst [vmem:[#allocation2 + $0x40] sm:$0xff] %v8039
      %8072 = vst [vmem:[#allocation2 + $0x48] sm:$0xff] %v8040
      %8073 = vst [vmem:[#allocation2 + $0x50] sm:$0xff] %v8041
      %8074 = vst [vmem:[#allocation2 + $0x58] sm:$0xff] %v8042
      %8075 = vst [vmem:[#allocation2 + $0x60] sm:$0xff] %v8043
      %8076 = vst [vmem:[#allocation2 + $0x68] sm:$0xff] %v8044
      %8077 = vst [vmem:[#allocation2 + $0x70] sm:$0xff] %v8045
      %8078 = vst [vmem:[#allocation2 + $0x78] sm:$0xff] %v8046
      %8079 = vst [vmem:[#allocation2 + $0x80] sm:$0xff] %v8047
      %8080 = vst [vmem:[#allocation2 + $0x88] sm:$0xff] %v8048
      %8081 = vst [vmem:[#allocation2 + $0x90] sm:$0xff] %v8049
      %8082 = vst [vmem:[#allocation2 + $0x98] sm:$0xff] %v8050
      %8083 = vst [vmem:[#allocation2 + $0xa0] sm:$0xff] %v8051
      %8084 = vst [vmem:[#allocation2 + $0xa8] sm:$0xff] %v8052
      %8085 = vst [vmem:[#allocation2 + $0xb0] sm:$0xff] %v8053
      %8086 = vst [vmem:[#allocation2 + $0xb8] sm:$0xff] %v8054
      %8087 = vst [vmem:[#allocation2 + $0xc0] sm:$0xff] %v8055
      %8088 = vst [vmem:[#allocation2 + $0xc8] sm:$0xff] %v8056
      %8089 = vst [vmem:[#allocation2 + $0xd0] sm:$0xff] %v8057
      %8090 = vst [vmem:[#allocation2 + $0xd8] sm:$0xff] %v8058
      %8091 = vst [vmem:[#allocation2 + $0xe0] sm:$0xff] %v8059
      %8092 = vst [vmem:[#allocation2 + $0xe8] sm:$0xff] %v8060
      %8093 = vst [vmem:[#allocation2 + $0xf0] sm:$0xff] %v8061
      %8094 = vst [vmem:[#allocation2 + $0xf8] sm:$0xff] %v8062
      %v8095 = vld [vmem:[#allocation2] sm:$0xff]
      %v8096 = vld [vmem:[#allocation2 + $0x8] sm:$0xff]
      %v8097 = vld [vmem:[#allocation2 + $0x10] sm:$0xff]
      %v8098 = vld [vmem:[#allocation2 + $0x18] sm:$0xff]
      %v8099 = vld [vmem:[#allocation2 + $0x20] sm:$0xff]
      %v8100 = vld [vmem:[#allocation2 + $0x28] sm:$0xff]
      %v8101 = vld [vmem:[#allocation2 + $0x30] sm:$0xff]
      %v8102 = vld [vmem:[#allocation2 + $0x38] sm:$0xff]
      %v8103 = vld [vmem:[#allocation2 + $0x40] sm:$0xff]
      %v8104 = vld [vmem:[#allocation2 + $0x48] sm:$0xff]
      %v8105 = vld [vmem:[#allocation2 + $0x50] sm:$0xff]
      %v8106 = vld [vmem:[#allocation2 + $0x58] sm:$0xff]
      %v8107 = vld [vmem:[#allocation2 + $0x60] sm:$0xff]
      %v8108 = vld [vmem:[#allocation2 + $0x68] sm:$0xff]
      %v8109 = vld [vmem:[#allocation2 + $0x70] sm:$0xff]
      %v8110 = vld [vmem:[#allocation2 + $0x78] sm:$0xff]
      %v8111 = vld [vmem:[#allocation2 + $0x80] sm:$0xff]
      %v8112 = vld [vmem:[#allocation2 + $0x88] sm:$0xff]
      %v8113 = vld [vmem:[#allocation2 + $0x90] sm:$0xff]
      %v8114 = vld [vmem:[#allocation2 + $0x98] sm:$0xff]
      %v8115 = vld [vmem:[#allocation2 + $0xa0] sm:$0xff]
      %v8116 = vld [vmem:[#allocation2 + $0xa8] sm:$0xff]
      %v8117 = vld [vmem:[#allocation2 + $0xb0] sm:$0xff]
      %v8118 = vld [vmem:[#allocation2 + $0xb8] sm:$0xff]
      %v8119 = vld [vmem:[#allocation2 + $0xc0] sm:$0xff]
      %v8120 = vld [vmem:[#allocation2 + $0xc8] sm:$0xff]
      %v8121 = vld [vmem:[#allocation2 + $0xd0] sm:$0xff]
      %v8122 = vld [vmem:[#allocation2 + $0xd8] sm:$0xff]
      %v8123 = vld [vmem:[#allocation2 + $0xe0] sm:$0xff]
      %v8124 = vld [vmem:[#allocation2 + $0xe8] sm:$0xff]
      %v8125 = vld [vmem:[#allocation2 + $0xf0] sm:$0xff]
      %v8126 = vld [vmem:[#allocation2 + $0xf8] sm:$0xff]
      %v8127 = vpack.c.bf16 %v8096, %v8095
      %v8128 = vpack.c.bf16 %v8098, %v8097
      %v8129 = vpack.c.bf16 %v8100, %v8099
      %v8130 = vpack.c.bf16 %v8102, %v8101
      %v8131 = vpack.c.bf16 %v8104, %v8103
      %v8132 = vpack.c.bf16 %v8106, %v8105
      %v8133 = vpack.c.bf16 %v8108, %v8107
      %v8134 = vpack.c.bf16 %v8110, %v8109
      %v8135 = vpack.c.bf16 %v8112, %v8111
      %v8136 = vpack.c.bf16 %v8114, %v8113
      %v8137 = vpack.c.bf16 %v8116, %v8115
      %v8138 = vpack.c.bf16 %v8118, %v8117
      %v8139 = vpack.c.bf16 %v8120, %v8119
      %v8140 = vpack.c.bf16 %v8122, %v8121
      %v8141 = vpack.c.bf16 %v8124, %v8123
      %v8142 = vpack.c.bf16 %v8126, %v8125
      %v8143 = vld [vmem:[%s6] sm:$0xf]
      %v8144 = vld [vmem:[%s6 + $0x4] sm:$0xf]
      %v8145 = vld [vmem:[%s6 + $0x8] sm:$0xf]
      %v8146 = vld [vmem:[%s6 + $0xc] sm:$0xf]
      %v8147 = vld [vmem:[%s6 + $0x10] sm:$0xf]
      %v8148 = vld [vmem:[%s6 + $0x14] sm:$0xf]
      %v8149 = vld [vmem:[%s6 + $0x18] sm:$0xf]
      %v8150 = vld [vmem:[%s6 + $0x1c] sm:$0xf]
      %v8151 = vld [vmem:[%s6 + $0x20] sm:$0xf]
      %v8152 = vld [vmem:[%s6 + $0x24] sm:$0xf]
      %v8153 = vld [vmem:[%s6 + $0x28] sm:$0xf]
      %v8154 = vld [vmem:[%s6 + $0x2c] sm:$0xf]
      %v8155 = vld [vmem:[%s6 + $0x30] sm:$0xf]
      %v8156 = vld [vmem:[%s6 + $0x34] sm:$0xf]
      %v8157 = vld [vmem:[%s6 + $0x38] sm:$0xf]
      %v8158 = vld [vmem:[%s6 + $0x3c] sm:$0xf]
      %v8159 = vld [vmem:[%s7] sm:$0x1]
      %v8161 = vperm.slane %v8159, 0
      %v8179 = vunpack.c.l.b16 %v8143
      %v8180 = vunpack.c.l.b16 %v8144
      %v8181 = vunpack.c.l.b16 %v8145
      %v8182 = vunpack.c.l.b16 %v8146
      %v8183 = vunpack.c.l.b16 %v8147
      %v8184 = vunpack.c.l.b16 %v8148
      %v8185 = vunpack.c.l.b16 %v8149
      %v8186 = vunpack.c.l.b16 %v8150
      %v8187 = vunpack.c.l.b16 %v8151
      %v8188 = vunpack.c.l.b16 %v8152
      %v8189 = vunpack.c.l.b16 %v8153
      %v8190 = vunpack.c.l.b16 %v8154
      %v8191 = vunpack.c.l.b16 %v8155
      %v8192 = vunpack.c.l.b16 %v8156
      %v8193 = vunpack.c.l.b16 %v8157
      %v8194 = vunpack.c.l.b16 %v8158
      %v8195 = vpack.c.b16 %v8180, %v8179
      %v8196 = vpack.c.b16 %v8182, %v8181
      %v8197 = vpack.c.b16 %v8184, %v8183
      %v8198 = vpack.c.b16 %v8186, %v8185
      %v8199 = vpack.c.b16 %v8188, %v8187
      %v8200 = vpack.c.b16 %v8190, %v8189
      %v8201 = vpack.c.b16 %v8192, %v8191
      %v8202 = vpack.c.b16 %v8194, %v8193
      %8211 = vmatpush.bf16.msra.mxu0 %v8202
      %8212 = vmatpush.bf16.msra.mxu0 %v8201
      %8213 = vmatpush.bf16.msra.mxu0 %v8200
      %8214 = vmatpush.bf16.msra.mxu0 %v8199
      %8215 = vmatpush.bf16.msra.mxu0 %v8198
      %8216 = vmatpush.bf16.msra.mxu0 %v8197
      %8217 = vmatpush.bf16.msra.mxu0 %v8196
      %8218 = vmatpush.bf16.msra.mxu0 %v8195
      %8219 = vmatmul.bf16.gmra.mxu0 %v8127
      %v8220 = vpop.f32.mrf.mxu0
      %v8221 = vadd.f32 %v8161, %v8220
      %v8222 = vpop.f32.mrf.mxu0
      %v8223 = vadd.f32 %v8161, %v8222
      %8224 = vmatmul.bf16.gmra.mxu0 %v8128
      %v8225 = vpop.f32.mrf.mxu0
      %v8226 = vadd.f32 %v8161, %v8225
      %v8227 = vpop.f32.mrf.mxu0
      %v8228 = vadd.f32 %v8161, %v8227
      %8229 = vmatmul.bf16.gmra.mxu0 %v8129
      %v8230 = vpop.f32.mrf.mxu0
      %v8231 = vadd.f32 %v8161, %v8230
      %v8232 = vpop.f32.mrf.mxu0
      %v8233 = vadd.f32 %v8161, %v8232
      %8234 = vmatmul.bf16.gmra.mxu0 %v8130
      %v8235 = vpop.f32.mrf.mxu0
      %v8236 = vadd.f32 %v8161, %v8235
      %v8237 = vpop.f32.mrf.mxu0
      %v8238 = vadd.f32 %v8161, %v8237
      %8239 = vmatmul.bf16.gmra.mxu0 %v8131
      %v8240 = vpop.f32.mrf.mxu0
      %v8241 = vadd.f32 %v8161, %v8240
      %v8242 = vpop.f32.mrf.mxu0
      %v8243 = vadd.f32 %v8161, %v8242
      %8244 = vmatmul.bf16.gmra.mxu0 %v8132
      %v8245 = vpop.f32.mrf.mxu0
      %v8246 = vadd.f32 %v8161, %v8245
      %v8247 = vpop.f32.mrf.mxu0
      %v8248 = vadd.f32 %v8161, %v8247
      %8249 = vmatmul.bf16.gmra.mxu0 %v8133
      %v8250 = vpop.f32.mrf.mxu0
      %v8251 = vadd.f32 %v8161, %v8250
      %v8252 = vpop.f32.mrf.mxu0
      %v8253 = vadd.f32 %v8161, %v8252
      %8254 = vmatmul.bf16.gmra.mxu0 %v8134
      %v8255 = vpop.f32.mrf.mxu0
      %v8256 = vadd.f32 %v8161, %v8255
      %v8257 = vpop.f32.mrf.mxu0
      %v8258 = vadd.f32 %v8161, %v8257
      %8259 = vmatmul.bf16.gmra.mxu0 %v8135
      %v8260 = vpop.f32.mrf.mxu0
      %v8261 = vadd.f32 %v8161, %v8260
      %v8262 = vpop.f32.mrf.mxu0
      %v8263 = vadd.f32 %v8161, %v8262
      %8264 = vmatmul.bf16.gmra.mxu0 %v8136
      %v8265 = vpop.f32.mrf.mxu0
      %v8266 = vadd.f32 %v8161, %v8265
      %v8267 = vpop.f32.mrf.mxu0
      %v8268 = vadd.f32 %v8161, %v8267
      %8269 = vmatmul.bf16.gmra.mxu0 %v8137
      %v8270 = vpop.f32.mrf.mxu0
      %v8271 = vadd.f32 %v8161, %v8270
      %v8272 = vpop.f32.mrf.mxu0
      %v8273 = vadd.f32 %v8161, %v8272
      %8274 = vmatmul.bf16.gmra.mxu0 %v8138
      %v8275 = vpop.f32.mrf.mxu0
      %v8276 = vadd.f32 %v8161, %v8275
      %v8277 = vpop.f32.mrf.mxu0
      %v8278 = vadd.f32 %v8161, %v8277
      %8279 = vmatmul.bf16.gmra.mxu0 %v8139
      %v8280 = vpop.f32.mrf.mxu0
      %v8281 = vadd.f32 %v8161, %v8280
      %v8282 = vpop.f32.mrf.mxu0
      %v8283 = vadd.f32 %v8161, %v8282
      %8284 = vmatmul.bf16.gmra.mxu0 %v8140
      %v8285 = vpop.f32.mrf.mxu0
      %v8286 = vadd.f32 %v8161, %v8285
      %v8287 = vpop.f32.mrf.mxu0
      %v8288 = vadd.f32 %v8161, %v8287
      %8289 = vmatmul.bf16.gmra.mxu0 %v8141
      %v8290 = vpop.f32.mrf.mxu0
      %v8291 = vadd.f32 %v8161, %v8290
      %v8292 = vpop.f32.mrf.mxu0
      %v8293 = vadd.f32 %v8161, %v8292
      %8294 = vmatmul.bf16.gmra.mxu0 %v8142
      %v8295 = vpop.f32.mrf.mxu0
      %v8296 = vadd.f32 %v8161, %v8295
      %v8297 = vpop.f32.mrf.mxu0
      %v8298 = vadd.f32 %v8161, %v8297
      %8299 = vdwg.mxu0
      %v8300 = vld [vmem:[%s320] sm:$0xff]
      %v8301 = vld [vmem:[%s320 + $0x8] sm:$0xff]
      %v8302 = vld [vmem:[%s320 + $0x10] sm:$0xff]
      %v8303 = vld [vmem:[%s320 + $0x18] sm:$0xff]
      %v8304 = vld [vmem:[%s320 + $0x20] sm:$0xff]
      %v8305 = vld [vmem:[%s320 + $0x28] sm:$0xff]
      %v8306 = vld [vmem:[%s320 + $0x30] sm:$0xff]
      %v8307 = vld [vmem:[%s320 + $0x38] sm:$0xff]
      %v8308 = vld [vmem:[%s320 + $0x40] sm:$0xff]
      %v8309 = vld [vmem:[%s320 + $0x48] sm:$0xff]
      %v8310 = vld [vmem:[%s320 + $0x50] sm:$0xff]
      %v8311 = vld [vmem:[%s320 + $0x58] sm:$0xff]
      %v8312 = vld [vmem:[%s320 + $0x60] sm:$0xff]
      %v8313 = vld [vmem:[%s320 + $0x68] sm:$0xff]
      %v8314 = vld [vmem:[%s320 + $0x70] sm:$0xff]
      %v8315 = vld [vmem:[%s320 + $0x78] sm:$0xff]
      %v8316 = vld [vmem:[%s320 + $0x80] sm:$0xff]
      %v8317 = vld [vmem:[%s320 + $0x88] sm:$0xff]
      %v8318 = vld [vmem:[%s320 + $0x90] sm:$0xff]
      %v8319 = vld [vmem:[%s320 + $0x98] sm:$0xff]
      %v8320 = vld [vmem:[%s320 + $0xa0] sm:$0xff]
      %v8321 = vld [vmem:[%s320 + $0xa8] sm:$0xff]
      %v8322 = vld [vmem:[%s320 + $0xb0] sm:$0xff]
      %v8323 = vld [vmem:[%s320 + $0xb8] sm:$0xff]
      %v8324 = vld [vmem:[%s320 + $0xc0] sm:$0xff]
      %v8325 = vld [vmem:[%s320 + $0xc8] sm:$0xff]
      %v8326 = vld [vmem:[%s320 + $0xd0] sm:$0xff]
      %v8327 = vld [vmem:[%s320 + $0xd8] sm:$0xff]
      %v8328 = vld [vmem:[%s320 + $0xe0] sm:$0xff]
      %v8329 = vld [vmem:[%s320 + $0xe8] sm:$0xff]
      %v8330 = vld [vmem:[%s320 + $0xf0] sm:$0xff]
      %v8331 = vld [vmem:[%s320 + $0xf8] sm:$0xff]
      %v8332 = vadd.f32 %v8221, %v8300
      %v8333 = vadd.f32 %v8223, %v8301
      %v8334 = vadd.f32 %v8226, %v8302
      %v8335 = vadd.f32 %v8228, %v8303
      %v8336 = vadd.f32 %v8231, %v8304
      %v8337 = vadd.f32 %v8233, %v8305
      %v8338 = vadd.f32 %v8236, %v8306
      %v8339 = vadd.f32 %v8238, %v8307
      %v8340 = vadd.f32 %v8241, %v8308
      %v8341 = vadd.f32 %v8243, %v8309
      %v8342 = vadd.f32 %v8246, %v8310
      %v8343 = vadd.f32 %v8248, %v8311
      %v8344 = vadd.f32 %v8251, %v8312
      %v8345 = vadd.f32 %v8253, %v8313
      %v8346 = vadd.f32 %v8256, %v8314
      %v8347 = vadd.f32 %v8258, %v8315
      %v8348 = vadd.f32 %v8261, %v8316
      %v8349 = vadd.f32 %v8263, %v8317
      %v8350 = vadd.f32 %v8266, %v8318
      %v8351 = vadd.f32 %v8268, %v8319
      %v8352 = vadd.f32 %v8271, %v8320
      %v8353 = vadd.f32 %v8273, %v8321
      %v8354 = vadd.f32 %v8276, %v8322
      %v8355 = vadd.f32 %v8278, %v8323
      %v8356 = vadd.f32 %v8281, %v8324
      %v8357 = vadd.f32 %v8283, %v8325
      %v8358 = vadd.f32 %v8286, %v8326
      %v8359 = vadd.f32 %v8288, %v8327
      %v8360 = vadd.f32 %v8291, %v8328
      %v8361 = vadd.f32 %v8293, %v8329
      %v8362 = vadd.f32 %v8296, %v8330
      %v8363 = vadd.f32 %v8298, %v8331
      %v8364 = vmax.f32 %v8332, 0.0
      %v8365 = vmax.f32 %v8333, 0.0
      %v8366 = vmax.f32 %v8334, 0.0
      %v8367 = vmax.f32 %v8335, 0.0
      %v8368 = vmax.f32 %v8336, 0.0
      %v8369 = vmax.f32 %v8337, 0.0
      %v8370 = vmax.f32 %v8338, 0.0
      %v8371 = vmax.f32 %v8339, 0.0
      %v8372 = vmax.f32 %v8340, 0.0
      %v8373 = vmax.f32 %v8341, 0.0
      %v8374 = vmax.f32 %v8342, 0.0
      %v8375 = vmax.f32 %v8343, 0.0
      %v8376 = vmax.f32 %v8344, 0.0
      %v8377 = vmax.f32 %v8345, 0.0
      %v8378 = vmax.f32 %v8346, 0.0
      %v8379 = vmax.f32 %v8347, 0.0
      %v8380 = vmax.f32 %v8348, 0.0
      %v8381 = vmax.f32 %v8349, 0.0
      %v8382 = vmax.f32 %v8350, 0.0
      %v8383 = vmax.f32 %v8351, 0.0
      %v8384 = vmax.f32 %v8352, 0.0
      %v8385 = vmax.f32 %v8353, 0.0
      %v8386 = vmax.f32 %v8354, 0.0
      %v8387 = vmax.f32 %v8355, 0.0
      %v8388 = vmax.f32 %v8356, 0.0
      %v8389 = vmax.f32 %v8357, 0.0
      %v8390 = vmax.f32 %v8358, 0.0
      %v8391 = vmax.f32 %v8359, 0.0
      %v8392 = vmax.f32 %v8360, 0.0
      %v8393 = vmax.f32 %v8361, 0.0
      %v8394 = vmax.f32 %v8362, 0.0
      %v8395 = vmax.f32 %v8363, 0.0
      %8396 = vst [vmem:[%s325] sm:$0xff] %v8364
      %8397 = vst [vmem:[%s325 + $0x8] sm:$0xff] %v8365
      %8398 = vst [vmem:[%s325 + $0x10] sm:$0xff] %v8366
      %8399 = vst [vmem:[%s325 + $0x18] sm:$0xff] %v8367
      %8400 = vst [vmem:[%s325 + $0x20] sm:$0xff] %v8368
      %8401 = vst [vmem:[%s325 + $0x28] sm:$0xff] %v8369
      %8402 = vst [vmem:[%s325 + $0x30] sm:$0xff] %v8370
      %8403 = vst [vmem:[%s325 + $0x38] sm:$0xff] %v8371
      %8404 = vst [vmem:[%s325 + $0x40] sm:$0xff] %v8372
      %8405 = vst [vmem:[%s325 + $0x48] sm:$0xff] %v8373
      %8406 = vst [vmem:[%s325 + $0x50] sm:$0xff] %v8374
      %8407 = vst [vmem:[%s325 + $0x58] sm:$0xff] %v8375
      %8408 = vst [vmem:[%s325 + $0x60] sm:$0xff] %v8376
      %8409 = vst [vmem:[%s325 + $0x68] sm:$0xff] %v8377
      %8410 = vst [vmem:[%s325 + $0x70] sm:$0xff] %v8378
      %8411 = vst [vmem:[%s325 + $0x78] sm:$0xff] %v8379
      %8412 = vst [vmem:[%s325 + $0x80] sm:$0xff] %v8380
      %8413 = vst [vmem:[%s325 + $0x88] sm:$0xff] %v8381
      %8414 = vst [vmem:[%s325 + $0x90] sm:$0xff] %v8382
      %8415 = vst [vmem:[%s325 + $0x98] sm:$0xff] %v8383
      %8416 = vst [vmem:[%s325 + $0xa0] sm:$0xff] %v8384
      %8417 = vst [vmem:[%s325 + $0xa8] sm:$0xff] %v8385
      %8418 = vst [vmem:[%s325 + $0xb0] sm:$0xff] %v8386
      %8419 = vst [vmem:[%s325 + $0xb8] sm:$0xff] %v8387
      %8420 = vst [vmem:[%s325 + $0xc0] sm:$0xff] %v8388
      %8421 = vst [vmem:[%s325 + $0xc8] sm:$0xff] %v8389
      %8422 = vst [vmem:[%s325 + $0xd0] sm:$0xff] %v8390
      %8423 = vst [vmem:[%s325 + $0xd8] sm:$0xff] %v8391
      %8424 = vst [vmem:[%s325 + $0xe0] sm:$0xff] %v8392
      %8425 = vst [vmem:[%s325 + $0xe8] sm:$0xff] %v8393
      %8426 = vst [vmem:[%s325 + $0xf0] sm:$0xff] %v8394
      %8427 = vst [vmem:[%s325 + $0xf8] sm:$0xff] %v8395
      %p8428 = scmp.lt.s32.totalorder %s19, 1
      %s8429 = scalar_select %p8428, %s19, 1
      %s8430 = smul.addr %s8429, 32
      %s8431 = smul.addr %s8430, 8
      %s8432 = scalar_lea.vmem %s8, %s8431
      // Predicated region
      $region53: #{basic_block_nonshared.1} parent=51 // pred_check
        %p8433 = pneg %p215
      $region54: #{basic_block_nonshared.1} parent=51 // pred_check_branch
        %8435 = sbr.rel (%p8433) target = $region56
      $region55: #{basic_block_nonshared.1} parent=51 // pred_region
        _
      $region56: #{basic_block_nonshared.1} parent=51 // pred_fallthru
        _
    $region52: #{basic_block_nonshared.1} parent=5 // pred_fallthru
      _
    %p8436 = scmp.le.s32.totalorder 2, %s14
    // Predicated region
    $region57: #{basic_block_nonshared.1} parent=5 // pred_check
      %p8437 = pneg %p8436
    $region58: #{basic_block_nonshared.1} parent=5 // pred_check_branch
      %8439 = sbr.rel (%p8437) target = $region60
    $region59: #{basic_block_nonshared.1} parent=5 // pred_region
      %s8440 = ssub.s32 %s14, 2
      // Predicated region
      $region61: #{basic_block_nonshared.1} parent=59 // pred_check
        %p8441 = pneg %p221
      $region62: #{basic_block_nonshared.1} parent=59 // pred_check_branch
        %8443 = sbr.rel (%p8441) target = $region64
      $region63: #{basic_block_nonshared.1} parent=59 // pred_region
        %p8444 = scmp.lt.s32.totalorder %s20, 1
        %s8445 = scalar_select %p8444, %s20, 1
        %s8446 = smul.addr %s8445, 32
        %s8447 = smul.addr %s8446, 8
        %s8448 = scalar_lea.vmem %s8, %s8447
      $region64: #{basic_block_nonshared.1} parent=59 // pred_fallthru
        _
    $region60: #{basic_block_nonshared.1} parent=5 // pred_fallthru
      _
  $region6: #{basic_block_nonshared.1} parent=0 // loop_footer
    %s18 = sadd.s32 1, %s14
  $region7: #{basic_block_nonshared.1} parent=0 // loop_footer_branch
    %13 = sbr.rel target = $region3
  $region8: #{basic_block_nonshared.1} parent=0 // loop_exit
    _

</llo_original>
